<compile_context>
chip_gen: v7x
topology: tpu7x:2x2x1
jax: 0.10.0
libtpu: 0.0.40
codegen_flags: <defaults>
</compile_context>

<pallas_src>
import jax
import jax.numpy as jnp
from jax.experimental import pallas as pl
from jax.experimental.pallas import tpu as pltpu


# ----------------------------------------------------------------------------
# Fused FlowHead kernel: out = conv2_3x3(relu(conv1_3x3(x)))
# ----------------------------------------------------------------------------
def _make_flow_head_kernel(H, W, Cin, Cmid, Cout):
    KH = KW = 3
    Hp, Wp = H + KH - 1, W + KW - 1

    def kernel(x_ref, w1_ref, b1_ref, w2_ref, b2_ref, o_ref,
               xpad, xsh, ypad, ysh, acc1):
        # x_ref : (1, H, W, Cin)  f32
        # w1_ref: (9, Cin, Cmid)  bf16    b1_ref: (1, Cmid) f32
        # w2_ref: (9, Cmid, Cout) bf16    b2_ref: (1, Cout) f32
        # o_ref : (1, H, W, Cout) f32
        # xpad  : VMEM (Hp, Wp, Cin)     f32   zero-padded input
        # xsh   : VMEM (KW, Hp, W, Cin)  bf16  W-shifted copies of xpad
        # ypad  : VMEM (Hp, Wp, Cmid)    f32   zero-padded relu(conv1) result
        # ysh   : VMEM (KW, Hp, W, Cmid) bf16  W-shifted copies of ypad
        # acc1  : VMEM (H*W, Cmid)       f32   conv1 accumulator

        # ------------------ stage 1: y = relu(conv1(x)) ------------------
        xpad[...] = jnp.zeros_like(xpad)
        xpad[1:H + 1, 1:W + 1, :] = x_ref[0]
        # Pre-shift along W once (KW copies) so the tap loop below only slices
        # rows, which is layout-contiguous (no per-tap relayout copies).
        for dx in range(KW):
            xsh[dx] = xpad[:, dx:dx + W, :].astype(jnp.bfloat16)

        acc1[...] = jnp.zeros_like(acc1)
        for dy in range(KH):
            for dx in range(KW):
                xs = xsh[dx, dy:dy + H, :, :].reshape(H * W, Cin)
                acc1[...] += jnp.dot(xs, w1_ref[dy * KW + dx],
                                     preferred_element_type=jnp.float32)
        y = jnp.maximum(acc1[...] + b1_ref[...], 0.0)   # f32, stays in VMEM

        # ------------------ stage 2: out = conv2(y) ----------------------
        ypad[...] = jnp.zeros_like(ypad)
        ypad[1:H + 1, 1:W + 1, :] = y.reshape(H, W, Cmid)
        for dx in range(KW):
            ysh[dx] = ypad[:, dx:dx + W, :].astype(jnp.bfloat16)

        acc2 = jnp.zeros((H * W, Cout), jnp.float32)    # tiny (H*W, 2)
        for dy in range(KH):
            for dx in range(KW):
                ys = ysh[dx, dy:dy + H, :, :].reshape(H * W, Cmid)
                acc2 = acc2 + jnp.dot(ys, w2_ref[dy * KW + dx],
                                      preferred_element_type=jnp.float32)
        acc2 = acc2 + b2_ref[...]
        o_ref[...] = acc2.reshape(1, H, W, Cout).astype(o_ref.dtype)

    return kernel


def flow_head(x, w1, b1, w2, b2):
    """Fused FlowHead.  x: (B,H,W,Cin) f32 NHWC; w: (9,Cin,Cout); b: (Cout,)."""
    B, H, W, Cin = x.shape
    Cmid = w1.shape[-1]
    Cout = w2.shape[-1]
    KH = KW = 3
    Hp, Wp = H + KH - 1, W + KW - 1
    kernel = _make_flow_head_kernel(H, W, Cin, Cmid, Cout)

    return pl.pallas_call(
        kernel,
        out_shape=jax.ShapeDtypeStruct((B, H, W, Cout), jnp.float32),
        grid_spec=pltpu.PrefetchScalarGridSpec(
            num_scalar_prefetch=0,
            grid=(B,),
            in_specs=[
                pl.BlockSpec((1, H, W, Cin), lambda b: (b, 0, 0, 0)),
                pl.BlockSpec((KH * KW, Cin, Cmid), lambda b: (0, 0, 0)),
                pl.BlockSpec((1, Cmid), lambda b: (0, 0)),
                pl.BlockSpec((KH * KW, Cmid, Cout), lambda b: (0, 0, 0)),
                pl.BlockSpec((1, Cout), lambda b: (0, 0)),
            ],
            out_specs=pl.BlockSpec((1, H, W, Cout), lambda b: (b, 0, 0, 0)),
            scratch_shapes=[
                pltpu.VMEM((Hp, Wp, Cin), jnp.float32),       # xpad
                pltpu.VMEM((KW, Hp, W, Cin), jnp.bfloat16),   # xsh
                pltpu.VMEM((Hp, Wp, Cmid), jnp.float32),      # ypad
                pltpu.VMEM((KW, Hp, W, Cmid), jnp.bfloat16),  # ysh
                pltpu.VMEM((H * W, Cmid), jnp.float32),       # acc1
            ],
        ),
        compiler_params=pltpu.CompilerParams(
            dimension_semantics=("parallel",)),
    )(x,
      w1.astype(jnp.bfloat16), b1.reshape(1, Cmid).astype(jnp.float32),
      w2.astype(jnp.bfloat16), b2.reshape(1, Cout).astype(jnp.float32))


# ----------------------------------------------------------------------------
# Pure-JAX f32 reference (same math as the PyTorch FlowHead)
# ----------------------------------------------------------------------------
def reference_flow_head(x, w1, b1, w2, b2):
    dn = ("NHWC", "HWIO", "NHWC")
    y = jax.lax.conv_general_dilated(
        x, w1.reshape(3, 3, w1.shape[1], w1.shape[2]),
        window_strides=(1, 1), padding="SAME", dimension_numbers=dn) + b1
    y = jnp.maximum(y, 0.0)
    out = jax.lax.conv_general_dilated(
        y, w2.reshape(3, 3, w2.shape[1], w2.shape[2]),
        window_strides=(1, 1), padding="SAME", dimension_numbers=dn) + b2
    return out


# ----------------------------------------------------------------------------
# Main
# ----------------------------------------------------------------------------
if __name__ == "__main__":
    B, H, W = 2, 16, 16
    Cin, Cmid, Cout = 128, 256, 2        # FlowHead(input_dim=128, hidden_dim=256)

    key = jax.random.PRNGKey(0)
    kx, kw1, kb1, kw2, kb2 = jax.random.split(key, 5)

    # Input in PyTorch NCHW convention, transposed to NHWC for the kernel.
    x_nchw = jax.random.normal(kx, (B, Cin, H, W), jnp.float32)
    x = jnp.transpose(x_nchw, (0, 2, 3, 1))

    fan1 = 9 * Cin
    w1 = jax.random.normal(kw1, (9, Cin, Cmid), jnp.float32) / jnp.sqrt(fan1)
    b1 = jax.random.normal(kb1, (Cmid,), jnp.float32) * 0.01
    fan2 = 9 * Cmid
    w2 = jax.random.normal(kw2, (9, Cmid, Cout), jnp.float32) / jnp.sqrt(fan2)
    b2 = jax.random.normal(kb2, (Cout,), jnp.float32) * 0.01

    fwd = jax.jit(flow_head)
    out = fwd(x, w1, b1, w2, b2)
    jax.block_until_ready(out)

    ref = reference_flow_head(x, w1, b1, w2, b2)
    jax.block_until_ready(ref)

    assert out.shape == (B, H, W, Cout)
    assert bool(jnp.isfinite(out).all())
    rel_err = float(jnp.linalg.norm(out - ref) / (jnp.linalg.norm(ref) + 1e-12))
    # bf16 matmul operands with f32 accumulation -> expect < ~1% relative error.
    assert rel_err < 5e-2, f"relative L2 error too large: {rel_err}"

    print("KERNEL_OK")
</pallas_src>

<mosaic_0001>
module attributes {stable_mosaic.version = 11 : i64} {
  func.func @kernel(%arg0: i32, %arg1: memref<1x16x16x128xf32, #tpu.memory_space<vmem>>, %arg2: memref<9x128x256xbf16, #tpu.memory_space<vmem>>, %arg3: memref<1x256xf32, #tpu.memory_space<vmem>>, %arg4: memref<9x256x2xbf16, #tpu.memory_space<vmem>>, %arg5: memref<1x2xf32, #tpu.memory_space<vmem>>, %arg6: memref<1x16x16x2xf32, #tpu.memory_space<vmem>>, %arg7: memref<18x18x128xf32, #tpu.memory_space<vmem>>, %arg8: memref<3x18x16x128xbf16, #tpu.memory_space<vmem>>, %arg9: memref<18x18x256xf32, #tpu.memory_space<vmem>>, %arg10: memref<3x18x16x256xbf16, #tpu.memory_space<vmem>>, %arg11: memref<256x256xf32, #tpu.memory_space<vmem>>) attributes {dimension_semantics = [#tpu.dimension_semantics<parallel>], iteration_bounds = array<i64: 2>, scalar_prefetch = 0 : i64, scratch_operands = 5 : i64, tpu.core_type = #tpu.core_type<tc>, window_params = [{transform_indices = @transform_0, window_bounds = array<i64: 1, 16, 16, 128>}, {pipeline_mode = #tpu.pipeline_mode<synchronous>, transform_indices = @transform_1, window_bounds = array<i64: 9, 128, 256>}, {pipeline_mode = #tpu.pipeline_mode<synchronous>, transform_indices = @transform_2, window_bounds = array<i64: 1, 256>}, {pipeline_mode = #tpu.pipeline_mode<synchronous>, transform_indices = @transform_3, window_bounds = array<i64: 9, 256, 2>}, {pipeline_mode = #tpu.pipeline_mode<synchronous>, transform_indices = @transform_4, window_bounds = array<i64: 1, 2>}, {transform_indices = @transform_5, window_bounds = array<i64: 1, 16, 16, 2>}]} {
    %cst = arith.constant 0.000000e+00 : f32
    %0 = vector.broadcast %cst : f32 to vector<18x18x128xf32>
    %c0 = arith.constant 0 : index
    %c0_0 = arith.constant 0 : index
    %c0_1 = arith.constant 0 : index
    %1 = vector.load %arg7[%c0, %c0_0, %c0_1] : memref<18x18x128xf32, #tpu.memory_space<vmem>>, vector<18x18x128xf32>
    tpu.vector_store %arg7[%c0, %c0_0, %c0_1], %0 {strides = array<i32>} : memref<18x18x128xf32, #tpu.memory_space<vmem>>, vector<18x18x128xf32>,
    %c0_2 = arith.constant 0 : index
    %c0_3 = arith.constant 0 : index
    %c0_4 = arith.constant 0 : index
    %c0_5 = arith.constant 0 : index
    %2 = vector.load %arg1[%c0_2, %c0_3, %c0_4, %c0_5] : memref<1x16x16x128xf32, #tpu.memory_space<vmem>>, vector<1x16x16x128xf32>
    %3 = vector.shape_cast %2 : vector<1x16x16x128xf32> to vector<16x16x128xf32>
    %c1 = arith.constant 1 : index
    %c1_6 = arith.constant 1 : index
    %c0_7 = arith.constant 0 : index
    %4 = vector.load %arg7[%c1, %c1_6, %c0_7] : memref<18x18x128xf32, #tpu.memory_space<vmem>>, vector<16x16x128xf32>
    tpu.vector_store %arg7[%c1, %c1_6, %c0_7], %3 {strides = array<i32>} : memref<18x18x128xf32, #tpu.memory_space<vmem>>, vector<16x16x128xf32>,
    %c0_8 = arith.constant 0 : index
    %c0_9 = arith.constant 0 : index
    %c0_10 = arith.constant 0 : index
    %5 = vector.load %arg7[%c0_8, %c0_9, %c0_10] : memref<18x18x128xf32, #tpu.memory_space<vmem>>, vector<18x16x128xf32>
    %6 = arith.truncf %5 : vector<18x16x128xf32> to vector<18x16x128xbf16>
    %c0_11 = arith.constant 0 : index
    %c0_12 = arith.constant 0 : index
    %c0_13 = arith.constant 0 : index
    %c0_14 = arith.constant 0 : index
    %7 = vector.load %arg8[%c0_11, %c0_12, %c0_13, %c0_14] : memref<3x18x16x128xbf16, #tpu.memory_space<vmem>>, vector<1x18x16x128xbf16>
    %8 = vector.shape_cast %7 : vector<1x18x16x128xbf16> to vector<18x16x128xbf16>
    %9 = vector.shape_cast %6 : vector<18x16x128xbf16> to vector<1x18x16x128xbf16>
    tpu.vector_store %arg8[%c0_11, %c0_12, %c0_13, %c0_14], %9 {strides = array<i32>} : memref<3x18x16x128xbf16, #tpu.memory_space<vmem>>, vector<1x18x16x128xbf16>,
    %c0_15 = arith.constant 0 : index
    %c1_16 = arith.constant 1 : index
    %c0_17 = arith.constant 0 : index
    %10 = vector.load %arg7[%c0_15, %c1_16, %c0_17] : memref<18x18x128xf32, #tpu.memory_space<vmem>>, vector<18x16x128xf32>
    %11 = arith.truncf %10 : vector<18x16x128xf32> to vector<18x16x128xbf16>
    %c1_18 = arith.constant 1 : index
    %c0_19 = arith.constant 0 : index
    %c0_20 = arith.constant 0 : index
    %c0_21 = arith.constant 0 : index
    %12 = vector.load %arg8[%c1_18, %c0_19, %c0_20, %c0_21] : memref<3x18x16x128xbf16, #tpu.memory_space<vmem>>, vector<1x18x16x128xbf16>
    %13 = vector.shape_cast %12 : vector<1x18x16x128xbf16> to vector<18x16x128xbf16>
    %14 = vector.shape_cast %11 : vector<18x16x128xbf16> to vector<1x18x16x128xbf16>
    tpu.vector_store %arg8[%c1_18, %c0_19, %c0_20, %c0_21], %14 {strides = array<i32>} : memref<3x18x16x128xbf16, #tpu.memory_space<vmem>>, vector<1x18x16x128xbf16>,
    %c0_22 = arith.constant 0 : index
    %c2 = arith.constant 2 : index
    %c0_23 = arith.constant 0 : index
    %15 = vector.load %arg7[%c0_22, %c2, %c0_23] : memref<18x18x128xf32, #tpu.memory_space<vmem>>, vector<18x16x128xf32>
    %16 = arith.truncf %15 : vector<18x16x128xf32> to vector<18x16x128xbf16>
    %c2_24 = arith.constant 2 : index
    %c0_25 = arith.constant 0 : index
    %c0_26 = arith.constant 0 : index
    %c0_27 = arith.constant 0 : index
    %17 = vector.load %arg8[%c2_24, %c0_25, %c0_26, %c0_27] : memref<3x18x16x128xbf16, #tpu.memory_space<vmem>>, vector<1x18x16x128xbf16>
    %18 = vector.shape_cast %17 : vector<1x18x16x128xbf16> to vector<18x16x128xbf16>
    %19 = vector.shape_cast %16 : vector<18x16x128xbf16> to vector<1x18x16x128xbf16>
    tpu.vector_store %arg8[%c2_24, %c0_25, %c0_26, %c0_27], %19 {strides = array<i32>} : memref<3x18x16x128xbf16, #tpu.memory_space<vmem>>, vector<1x18x16x128xbf16>,
    %cst_28 = arith.constant 0.000000e+00 : f32
    %20 = vector.broadcast %cst_28 : f32 to vector<256x256xf32>
    %c0_29 = arith.constant 0 : index
    %c0_30 = arith.constant 0 : index
    %21 = vector.load %arg11[%c0_29, %c0_30] : memref<256x256xf32, #tpu.memory_space<vmem>>, vector<256x256xf32>
    tpu.vector_store %arg11[%c0_29, %c0_30], %20 {strides = array<i32>} : memref<256x256xf32, #tpu.memory_space<vmem>>, vector<256x256xf32>,
    %c0_31 = arith.constant 0 : index
    %c0_32 = arith.constant 0 : index
    %c0_33 = arith.constant 0 : index
    %c0_34 = arith.constant 0 : index
    %22 = vector.load %arg8[%c0_31, %c0_32, %c0_33, %c0_34] : memref<3x18x16x128xbf16, #tpu.memory_space<vmem>>, vector<1x16x16x128xbf16>
    %23 = vector.shape_cast %22 : vector<1x16x16x128xbf16> to vector<16x16x128xbf16>
    %24 = vector.shape_cast %23 : vector<16x16x128xbf16> to vector<256x128xbf16>
    %c0_35 = arith.constant 0 : index
    %c0_36 = arith.constant 0 : index
    %25 = vector.load %arg11[%c0_35, %c0_36] : memref<256x256xf32, #tpu.memory_space<vmem>>, vector<256x256xf32>
    %c0_37 = arith.constant 0 : index
    %c0_38 = arith.constant 0 : index
    %c0_39 = arith.constant 0 : index
    %26 = vector.load %arg2[%c0_37, %c0_38, %c0_39] : memref<9x128x256xbf16, #tpu.memory_space<vmem>>, vector<1x128x256xbf16>
    %27 = vector.shape_cast %26 : vector<1x128x256xbf16> to vector<128x256xbf16>
    %cst_40 = arith.constant dense<0.000000e+00> : vector<256x256xf32>
    %28 = tpu.matmul %24, %27, %cst_40 {dimension_numbers = #tpu.dot_dimension_numbers<[1], [0], [0], [1], [0, 0, 1, 1], [], []>} : vector<256x128xbf16>, vector<128x256xbf16>, vector<256x256xf32> -> vector<256x256xf32>
    %29 = arith.addf %25, %28 : vector<256x256xf32>
    %c0_41 = arith.constant 0 : index
    %c0_42 = arith.constant 0 : index
    %30 = vector.load %arg11[%c0_41, %c0_42] : memref<256x256xf32, #tpu.memory_space<vmem>>, vector<256x256xf32>
    tpu.vector_store %arg11[%c0_41, %c0_42], %29 {strides = array<i32>} : memref<256x256xf32, #tpu.memory_space<vmem>>, vector<256x256xf32>,
    %c1_43 = arith.constant 1 : index
    %c0_44 = arith.constant 0 : index
    %c0_45 = arith.constant 0 : index
    %c0_46 = arith.constant 0 : index
    %31 = vector.load %arg8[%c1_43, %c0_44, %c0_45, %c0_46] : memref<3x18x16x128xbf16, #tpu.memory_space<vmem>>, vector<1x16x16x128xbf16>
    %32 = vector.shape_cast %31 : vector<1x16x16x128xbf16> to vector<16x16x128xbf16>
    %33 = vector.shape_cast %32 : vector<16x16x128xbf16> to vector<256x128xbf16>
    %c0_47 = arith.constant 0 : index
    %c0_48 = arith.constant 0 : index
    %34 = vector.load %arg11[%c0_47, %c0_48] : memref<256x256xf32, #tpu.memory_space<vmem>>, vector<256x256xf32>
    %c1_49 = arith.constant 1 : index
    %c0_50 = arith.constant 0 : index
    %c0_51 = arith.constant 0 : index
    %35 = vector.load %arg2[%c1_49, %c0_50, %c0_51] : memref<9x128x256xbf16, #tpu.memory_space<vmem>>, vector<1x128x256xbf16>
    %36 = vector.shape_cast %35 : vector<1x128x256xbf16> to vector<128x256xbf16>
    %cst_52 = arith.constant dense<0.000000e+00> : vector<256x256xf32>
    %37 = tpu.matmul %33, %36, %cst_52 {dimension_numbers = #tpu.dot_dimension_numbers<[1], [0], [0], [1], [0, 0, 1, 1], [], []>} : vector<256x128xbf16>, vector<128x256xbf16>, vector<256x256xf32> -> vector<256x256xf32>
    %38 = arith.addf %34, %37 : vector<256x256xf32>
    %c0_53 = arith.constant 0 : index
    %c0_54 = arith.constant 0 : index
    %39 = vector.load %arg11[%c0_53, %c0_54] : memref<256x256xf32, #tpu.memory_space<vmem>>, vector<256x256xf32>
    tpu.vector_store %arg11[%c0_53, %c0_54], %38 {strides = array<i32>} : memref<256x256xf32, #tpu.memory_space<vmem>>, vector<256x256xf32>,
    %c2_55 = arith.constant 2 : index
    %c0_56 = arith.constant 0 : index
    %c0_57 = arith.constant 0 : index
    %c0_58 = arith.constant 0 : index
    %40 = vector.load %arg8[%c2_55, %c0_56, %c0_57, %c0_58] : memref<3x18x16x128xbf16, #tpu.memory_space<vmem>>, vector<1x16x16x128xbf16>
    %41 = vector.shape_cast %40 : vector<1x16x16x128xbf16> to vector<16x16x128xbf16>
    %42 = vector.shape_cast %41 : vector<16x16x128xbf16> to vector<256x128xbf16>
    %c0_59 = arith.constant 0 : index
    %c0_60 = arith.constant 0 : index
    %43 = vector.load %arg11[%c0_59, %c0_60] : memref<256x256xf32, #tpu.memory_space<vmem>>, vector<256x256xf32>
    %c2_61 = arith.constant 2 : index
    %c0_62 = arith.constant 0 : index
    %c0_63 = arith.constant 0 : index
    %44 = vector.load %arg2[%c2_61, %c0_62, %c0_63] : memref<9x128x256xbf16, #tpu.memory_space<vmem>>, vector<1x128x256xbf16>
    %45 = vector.shape_cast %44 : vector<1x128x256xbf16> to vector<128x256xbf16>
    %cst_64 = arith.constant dense<0.000000e+00> : vector<256x256xf32>
    %46 = tpu.matmul %42, %45, %cst_64 {dimension_numbers = #tpu.dot_dimension_numbers<[1], [0], [0], [1], [0, 0, 1, 1], [], []>} : vector<256x128xbf16>, vector<128x256xbf16>, vector<256x256xf32> -> vector<256x256xf32>
    %47 = arith.addf %43, %46 : vector<256x256xf32>
    %c0_65 = arith.constant 0 : index
    %c0_66 = arith.constant 0 : index
    %48 = vector.load %arg11[%c0_65, %c0_66] : memref<256x256xf32, #tpu.memory_space<vmem>>, vector<256x256xf32>
    tpu.vector_store %arg11[%c0_65, %c0_66], %47 {strides = array<i32>} : memref<256x256xf32, #tpu.memory_space<vmem>>, vector<256x256xf32>,
    %c0_67 = arith.constant 0 : index
    %c1_68 = arith.constant 1 : index
    %c0_69 = arith.constant 0 : index
    %c0_70 = arith.constant 0 : index
    %49 = vector.load %arg8[%c0_67, %c1_68, %c0_69, %c0_70] : memref<3x18x16x128xbf16, #tpu.memory_space<vmem>>, vector<1x16x16x128xbf16>
    %50 = vector.shape_cast %49 : vector<1x16x16x128xbf16> to vector<16x16x128xbf16>
    %51 = vector.shape_cast %50 : vector<16x16x128xbf16> to vector<256x128xbf16>
    %c0_71 = arith.constant 0 : index
    %c0_72 = arith.constant 0 : index
    %52 = vector.load %arg11[%c0_71, %c0_72] : memref<256x256xf32, #tpu.memory_space<vmem>>, vector<256x256xf32>
    %c3 = arith.constant 3 : index
    %c0_73 = arith.constant 0 : index
    %c0_74 = arith.constant 0 : index
    %53 = vector.load %arg2[%c3, %c0_73, %c0_74] : memref<9x128x256xbf16, #tpu.memory_space<vmem>>, vector<1x128x256xbf16>
    %54 = vector.shape_cast %53 : vector<1x128x256xbf16> to vector<128x256xbf16>
    %cst_75 = arith.constant dense<0.000000e+00> : vector<256x256xf32>
    %55 = tpu.matmul %51, %54, %cst_75 {dimension_numbers = #tpu.dot_dimension_numbers<[1], [0], [0], [1], [0, 0, 1, 1], [], []>} : vector<256x128xbf16>, vector<128x256xbf16>, vector<256x256xf32> -> vector<256x256xf32>
    %56 = arith.addf %52, %55 : vector<256x256xf32>
    %c0_76 = arith.constant 0 : index
    %c0_77 = arith.constant 0 : index
    %57 = vector.load %arg11[%c0_76, %c0_77] : memref<256x256xf32, #tpu.memory_space<vmem>>, vector<256x256xf32>
    tpu.vector_store %arg11[%c0_76, %c0_77], %56 {strides = array<i32>} : memref<256x256xf32, #tpu.memory_space<vmem>>, vector<256x256xf32>,
    %c1_78 = arith.constant 1 : index
    %c1_79 = arith.constant 1 : index
    %c0_80 = arith.constant 0 : index
    %c0_81 = arith.constant 0 : index
    %58 = vector.load %arg8[%c1_78, %c1_79, %c0_80, %c0_81] : memref<3x18x16x128xbf16, #tpu.memory_space<vmem>>, vector<1x16x16x128xbf16>
    %59 = vector.shape_cast %58 : vector<1x16x16x128xbf16> to vector<16x16x128xbf16>
    %60 = vector.shape_cast %59 : vector<16x16x128xbf16> to vector<256x128xbf16>
    %c0_82 = arith.constant 0 : index
    %c0_83 = arith.constant 0 : index
    %61 = vector.load %arg11[%c0_82, %c0_83] : memref<256x256xf32, #tpu.memory_space<vmem>>, vector<256x256xf32>
    %c4 = arith.constant 4 : index
    %c0_84 = arith.constant 0 : index
    %c0_85 = arith.constant 0 : index
    %62 = vector.load %arg2[%c4, %c0_84, %c0_85] : memref<9x128x256xbf16, #tpu.memory_space<vmem>>, vector<1x128x256xbf16>
    %63 = vector.shape_cast %62 : vector<1x128x256xbf16> to vector<128x256xbf16>
    %cst_86 = arith.constant dense<0.000000e+00> : vector<256x256xf32>
    %64 = tpu.matmul %60, %63, %cst_86 {dimension_numbers = #tpu.dot_dimension_numbers<[1], [0], [0], [1], [0, 0, 1, 1], [], []>} : vector<256x128xbf16>, vector<128x256xbf16>, vector<256x256xf32> -> vector<256x256xf32>
    %65 = arith.addf %61, %64 : vector<256x256xf32>
    %c0_87 = arith.constant 0 : index
    %c0_88 = arith.constant 0 : index
    %66 = vector.load %arg11[%c0_87, %c0_88] : memref<256x256xf32, #tpu.memory_space<vmem>>, vector<256x256xf32>
    tpu.vector_store %arg11[%c0_87, %c0_88], %65 {strides = array<i32>} : memref<256x256xf32, #tpu.memory_space<vmem>>, vector<256x256xf32>,
    %c2_89 = arith.constant 2 : index
    %c1_90 = arith.constant 1 : index
    %c0_91 = arith.constant 0 : index
    %c0_92 = arith.constant 0 : index
    %67 = vector.load %arg8[%c2_89, %c1_90, %c0_91, %c0_92] : memref<3x18x16x128xbf16, #tpu.memory_space<vmem>>, vector<1x16x16x128xbf16>
    %68 = vector.shape_cast %67 : vector<1x16x16x128xbf16> to vector<16x16x128xbf16>
    %69 = vector.shape_cast %68 : vector<16x16x128xbf16> to vector<256x128xbf16>
    %c0_93 = arith.constant 0 : index
    %c0_94 = arith.constant 0 : index
    %70 = vector.load %arg11[%c0_93, %c0_94] : memref<256x256xf32, #tpu.memory_space<vmem>>, vector<256x256xf32>
    %c5 = arith.constant 5 : index
    %c0_95 = arith.constant 0 : index
    %c0_96 = arith.constant 0 : index
    %71 = vector.load %arg2[%c5, %c0_95, %c0_96] : memref<9x128x256xbf16, #tpu.memory_space<vmem>>, vector<1x128x256xbf16>
    %72 = vector.shape_cast %71 : vector<1x128x256xbf16> to vector<128x256xbf16>
    %cst_97 = arith.constant dense<0.000000e+00> : vector<256x256xf32>
    %73 = tpu.matmul %69, %72, %cst_97 {dimension_numbers = #tpu.dot_dimension_numbers<[1], [0], [0], [1], [0, 0, 1, 1], [], []>} : vector<256x128xbf16>, vector<128x256xbf16>, vector<256x256xf32> -> vector<256x256xf32>
    %74 = arith.addf %70, %73 : vector<256x256xf32>
    %c0_98 = arith.constant 0 : index
    %c0_99 = arith.constant 0 : index
    %75 = vector.load %arg11[%c0_98, %c0_99] : memref<256x256xf32, #tpu.memory_space<vmem>>, vector<256x256xf32>
    tpu.vector_store %arg11[%c0_98, %c0_99], %74 {strides = array<i32>} : memref<256x256xf32, #tpu.memory_space<vmem>>, vector<256x256xf32>,
    %c0_100 = arith.constant 0 : index
    %c2_101 = arith.constant 2 : index
    %c0_102 = arith.constant 0 : index
    %c0_103 = arith.constant 0 : index
    %76 = vector.load %arg8[%c0_100, %c2_101, %c0_102, %c0_103] : memref<3x18x16x128xbf16, #tpu.memory_space<vmem>>, vector<1x16x16x128xbf16>
    %77 = vector.shape_cast %76 : vector<1x16x16x128xbf16> to vector<16x16x128xbf16>
    %78 = vector.shape_cast %77 : vector<16x16x128xbf16> to vector<256x128xbf16>
    %c0_104 = arith.constant 0 : index
    %c0_105 = arith.constant 0 : index
    %79 = vector.load %arg11[%c0_104, %c0_105] : memref<256x256xf32, #tpu.memory_space<vmem>>, vector<256x256xf32>
    %c6 = arith.constant 6 : index
    %c0_106 = arith.constant 0 : index
    %c0_107 = arith.constant 0 : index
    %80 = vector.load %arg2[%c6, %c0_106, %c0_107] : memref<9x128x256xbf16, #tpu.memory_space<vmem>>, vector<1x128x256xbf16>
    %81 = vector.shape_cast %80 : vector<1x128x256xbf16> to vector<128x256xbf16>
    %cst_108 = arith.constant dense<0.000000e+00> : vector<256x256xf32>
    %82 = tpu.matmul %78, %81, %cst_108 {dimension_numbers = #tpu.dot_dimension_numbers<[1], [0], [0], [1], [0, 0, 1, 1], [], []>} : vector<256x128xbf16>, vector<128x256xbf16>, vector<256x256xf32> -> vector<256x256xf32>
    %83 = arith.addf %79, %82 : vector<256x256xf32>
    %c0_109 = arith.constant 0 : index
    %c0_110 = arith.constant 0 : index
    %84 = vector.load %arg11[%c0_109, %c0_110] : memref<256x256xf32, #tpu.memory_space<vmem>>, vector<256x256xf32>
    tpu.vector_store %arg11[%c0_109, %c0_110], %83 {strides = array<i32>} : memref<256x256xf32, #tpu.memory_space<vmem>>, vector<256x256xf32>,
    %c1_111 = arith.constant 1 : index
    %c2_112 = arith.constant 2 : index
    %c0_113 = arith.constant 0 : index
    %c0_114 = arith.constant 0 : index
    %85 = vector.load %arg8[%c1_111, %c2_112, %c0_113, %c0_114] : memref<3x18x16x128xbf16, #tpu.memory_space<vmem>>, vector<1x16x16x128xbf16>
    %86 = vector.shape_cast %85 : vector<1x16x16x128xbf16> to vector<16x16x128xbf16>
    %87 = vector.shape_cast %86 : vector<16x16x128xbf16> to vector<256x128xbf16>
    %c0_115 = arith.constant 0 : index
    %c0_116 = arith.constant 0 : index
    %88 = vector.load %arg11[%c0_115, %c0_116] : memref<256x256xf32, #tpu.memory_space<vmem>>, vector<256x256xf32>
    %c7 = arith.constant 7 : index
    %c0_117 = arith.constant 0 : index
    %c0_118 = arith.constant 0 : index
    %89 = vector.load %arg2[%c7, %c0_117, %c0_118] : memref<9x128x256xbf16, #tpu.memory_space<vmem>>, vector<1x128x256xbf16>
    %90 = vector.shape_cast %89 : vector<1x128x256xbf16> to vector<128x256xbf16>
    %cst_119 = arith.constant dense<0.000000e+00> : vector<256x256xf32>
    %91 = tpu.matmul %87, %90, %cst_119 {dimension_numbers = #tpu.dot_dimension_numbers<[1], [0], [0], [1], [0, 0, 1, 1], [], []>} : vector<256x128xbf16>, vector<128x256xbf16>, vector<256x256xf32> -> vector<256x256xf32>
    %92 = arith.addf %88, %91 : vector<256x256xf32>
    %c0_120 = arith.constant 0 : index
    %c0_121 = arith.constant 0 : index
    %93 = vector.load %arg11[%c0_120, %c0_121] : memref<256x256xf32, #tpu.memory_space<vmem>>, vector<256x256xf32>
    tpu.vector_store %arg11[%c0_120, %c0_121], %92 {strides = array<i32>} : memref<256x256xf32, #tpu.memory_space<vmem>>, vector<256x256xf32>,
    %c2_122 = arith.constant 2 : index
    %c2_123 = arith.constant 2 : index
    %c0_124 = arith.constant 0 : index
    %c0_125 = arith.constant 0 : index
    %94 = vector.load %arg8[%c2_122, %c2_123, %c0_124, %c0_125] : memref<3x18x16x128xbf16, #tpu.memory_space<vmem>>, vector<1x16x16x128xbf16>
    %95 = vector.shape_cast %94 : vector<1x16x16x128xbf16> to vector<16x16x128xbf16>
    %96 = vector.shape_cast %95 : vector<16x16x128xbf16> to vector<256x128xbf16>
    %c0_126 = arith.constant 0 : index
    %c0_127 = arith.constant 0 : index
    %97 = vector.load %arg11[%c0_126, %c0_127] : memref<256x256xf32, #tpu.memory_space<vmem>>, vector<256x256xf32>
    %c8 = arith.constant 8 : index
    %c0_128 = arith.constant 0 : index
    %c0_129 = arith.constant 0 : index
    %98 = vector.load %arg2[%c8, %c0_128, %c0_129] : memref<9x128x256xbf16, #tpu.memory_space<vmem>>, vector<1x128x256xbf16>
    %99 = vector.shape_cast %98 : vector<1x128x256xbf16> to vector<128x256xbf16>
    %cst_130 = arith.constant dense<0.000000e+00> : vector<256x256xf32>
    %100 = tpu.matmul %96, %99, %cst_130 {dimension_numbers = #tpu.dot_dimension_numbers<[1], [0], [0], [1], [0, 0, 1, 1], [], []>} : vector<256x128xbf16>, vector<128x256xbf16>, vector<256x256xf32> -> vector<256x256xf32>
    %101 = arith.addf %97, %100 : vector<256x256xf32>
    %c0_131 = arith.constant 0 : index
    %c0_132 = arith.constant 0 : index
    %102 = vector.load %arg11[%c0_131, %c0_132] : memref<256x256xf32, #tpu.memory_space<vmem>>, vector<256x256xf32>
    tpu.vector_store %arg11[%c0_131, %c0_132], %101 {strides = array<i32>} : memref<256x256xf32, #tpu.memory_space<vmem>>, vector<256x256xf32>,
    %c0_133 = arith.constant 0 : index
    %c0_134 = arith.constant 0 : index
    %103 = vector.load %arg11[%c0_133, %c0_134] : memref<256x256xf32, #tpu.memory_space<vmem>>, vector<256x256xf32>
    %c0_135 = arith.constant 0 : index
    %c0_136 = arith.constant 0 : index
    %104 = vector.load %arg3[%c0_135, %c0_136] : memref<1x256xf32, #tpu.memory_space<vmem>>, vector<1x256xf32>
    %105 = vector.broadcast %104 : vector<1x256xf32> to vector<256x256xf32>
    %106 = arith.addf %103, %105 : vector<256x256xf32>
    %cst_137 = arith.constant 0.000000e+00 : f32
    %107 = vector.broadcast %cst_137 : f32 to vector<256x256xf32>
    %108 = arith.maximumf %106, %107 : vector<256x256xf32>
    %cst_138 = arith.constant 0.000000e+00 : f32
    %109 = vector.broadcast %cst_138 : f32 to vector<18x18x256xf32>
    %c0_139 = arith.constant 0 : index
    %c0_140 = arith.constant 0 : index
    %c0_141 = arith.constant 0 : index
    %110 = vector.load %arg9[%c0_139, %c0_140, %c0_141] : memref<18x18x256xf32, #tpu.memory_space<vmem>>, vector<18x18x256xf32>
    tpu.vector_store %arg9[%c0_139, %c0_140, %c0_141], %109 {strides = array<i32>} : memref<18x18x256xf32, #tpu.memory_space<vmem>>, vector<18x18x256xf32>,
    %111 = vector.shape_cast %108 : vector<256x256xf32> to vector<16x16x256xf32>
    %c1_142 = arith.constant 1 : index
    %c1_143 = arith.constant 1 : index
    %c0_144 = arith.constant 0 : index
    %112 = vector.load %arg9[%c1_142, %c1_143, %c0_144] : memref<18x18x256xf32, #tpu.memory_space<vmem>>, vector<16x16x256xf32>
    tpu.vector_store %arg9[%c1_142, %c1_143, %c0_144], %111 {strides = array<i32>} : memref<18x18x256xf32, #tpu.memory_space<vmem>>, vector<16x16x256xf32>,
    %c0_145 = arith.constant 0 : index
    %c0_146 = arith.constant 0 : index
    %c0_147 = arith.constant 0 : index
    %113 = vector.load %arg9[%c0_145, %c0_146, %c0_147] : memref<18x18x256xf32, #tpu.memory_space<vmem>>, vector<18x16x256xf32>
    %114 = arith.truncf %113 : vector<18x16x256xf32> to vector<18x16x256xbf16>
    %c0_148 = arith.constant 0 : index
    %c0_149 = arith.constant 0 : index
    %c0_150 = arith.constant 0 : index
    %c0_151 = arith.constant 0 : index
    %115 = vector.load %arg10[%c0_148, %c0_149, %c0_150, %c0_151] : memref<3x18x16x256xbf16, #tpu.memory_space<vmem>>, vector<1x18x16x256xbf16>
    %116 = vector.shape_cast %115 : vector<1x18x16x256xbf16> to vector<18x16x256xbf16>
    %117 = vector.shape_cast %114 : vector<18x16x256xbf16> to vector<1x18x16x256xbf16>
    tpu.vector_store %arg10[%c0_148, %c0_149, %c0_150, %c0_151], %117 {strides = array<i32>} : memref<3x18x16x256xbf16, #tpu.memory_space<vmem>>, vector<1x18x16x256xbf16>,
    %c0_152 = arith.constant 0 : index
    %c1_153 = arith.constant 1 : index
    %c0_154 = arith.constant 0 : index
    %118 = vector.load %arg9[%c0_152, %c1_153, %c0_154] : memref<18x18x256xf32, #tpu.memory_space<vmem>>, vector<18x16x256xf32>
    %119 = arith.truncf %118 : vector<18x16x256xf32> to vector<18x16x256xbf16>
    %c1_155 = arith.constant 1 : index
    %c0_156 = arith.constant 0 : index
    %c0_157 = arith.constant 0 : index
    %c0_158 = arith.constant 0 : index
    %120 = vector.load %arg10[%c1_155, %c0_156, %c0_157, %c0_158] : memref<3x18x16x256xbf16, #tpu.memory_space<vmem>>, vector<1x18x16x256xbf16>
    %121 = vector.shape_cast %120 : vector<1x18x16x256xbf16> to vector<18x16x256xbf16>
    %122 = vector.shape_cast %119 : vector<18x16x256xbf16> to vector<1x18x16x256xbf16>
    tpu.vector_store %arg10[%c1_155, %c0_156, %c0_157, %c0_158], %122 {strides = array<i32>} : memref<3x18x16x256xbf16, #tpu.memory_space<vmem>>, vector<1x18x16x256xbf16>,
    %c0_159 = arith.constant 0 : index
    %c2_160 = arith.constant 2 : index
    %c0_161 = arith.constant 0 : index
    %123 = vector.load %arg9[%c0_159, %c2_160, %c0_161] : memref<18x18x256xf32, #tpu.memory_space<vmem>>, vector<18x16x256xf32>
    %124 = arith.truncf %123 : vector<18x16x256xf32> to vector<18x16x256xbf16>
    %c2_162 = arith.constant 2 : index
    %c0_163 = arith.constant 0 : index
    %c0_164 = arith.constant 0 : index
    %c0_165 = arith.constant 0 : index
    %125 = vector.load %arg10[%c2_162, %c0_163, %c0_164, %c0_165] : memref<3x18x16x256xbf16, #tpu.memory_space<vmem>>, vector<1x18x16x256xbf16>
    %126 = vector.shape_cast %125 : vector<1x18x16x256xbf16> to vector<18x16x256xbf16>
    %127 = vector.shape_cast %124 : vector<18x16x256xbf16> to vector<1x18x16x256xbf16>
    tpu.vector_store %arg10[%c2_162, %c0_163, %c0_164, %c0_165], %127 {strides = array<i32>} : memref<3x18x16x256xbf16, #tpu.memory_space<vmem>>, vector<1x18x16x256xbf16>,
    %cst_166 = arith.constant 0.000000e+00 : f32
    %128 = vector.broadcast %cst_166 : f32 to vector<256x2xf32>
    %c0_167 = arith.constant 0 : index
    %c0_168 = arith.constant 0 : index
    %c0_169 = arith.constant 0 : index
    %c0_170 = arith.constant 0 : index
    %129 = vector.load %arg10[%c0_167, %c0_168, %c0_169, %c0_170] : memref<3x18x16x256xbf16, #tpu.memory_space<vmem>>, vector<1x16x16x256xbf16>
    %130 = vector.shape_cast %129 : vector<1x16x16x256xbf16> to vector<16x16x256xbf16>
    %131 = vector.shape_cast %130 : vector<16x16x256xbf16> to vector<256x256xbf16>
    %c0_171 = arith.constant 0 : index
    %c0_172 = arith.constant 0 : index
    %c0_173 = arith.constant 0 : index
    %132 = vector.load %arg4[%c0_171, %c0_172, %c0_173] : memref<9x256x2xbf16, #tpu.memory_space<vmem>>, vector<1x256x2xbf16>
    %133 = vector.shape_cast %132 : vector<1x256x2xbf16> to vector<256x2xbf16>
    %cst_174 = arith.constant dense<0.000000e+00> : vector<256x2xf32>
    %134 = tpu.matmul %131, %133, %cst_174 {dimension_numbers = #tpu.dot_dimension_numbers<[1], [0], [0], [1], [0, 0, 1, 1], [], []>} : vector<256x256xbf16>, vector<256x2xbf16>, vector<256x2xf32> -> vector<256x2xf32>
    %135 = arith.addf %128, %134 : vector<256x2xf32>
    %c1_175 = arith.constant 1 : index
    %c0_176 = arith.constant 0 : index
    %c0_177 = arith.constant 0 : index
    %c0_178 = arith.constant 0 : index
    %136 = vector.load %arg10[%c1_175, %c0_176, %c0_177, %c0_178] : memref<3x18x16x256xbf16, #tpu.memory_space<vmem>>, vector<1x16x16x256xbf16>
    %137 = vector.shape_cast %136 : vector<1x16x16x256xbf16> to vector<16x16x256xbf16>
    %138 = vector.shape_cast %137 : vector<16x16x256xbf16> to vector<256x256xbf16>
    %c1_179 = arith.constant 1 : index
    %c0_180 = arith.constant 0 : index
    %c0_181 = arith.constant 0 : index
    %139 = vector.load %arg4[%c1_179, %c0_180, %c0_181] : memref<9x256x2xbf16, #tpu.memory_space<vmem>>, vector<1x256x2xbf16>
    %140 = vector.shape_cast %139 : vector<1x256x2xbf16> to vector<256x2xbf16>
    %cst_182 = arith.constant dense<0.000000e+00> : vector<256x2xf32>
    %141 = tpu.matmul %138, %140, %cst_182 {dimension_numbers = #tpu.dot_dimension_numbers<[1], [0], [0], [1], [0, 0, 1, 1], [], []>} : vector<256x256xbf16>, vector<256x2xbf16>, vector<256x2xf32> -> vector<256x2xf32>
    %142 = arith.addf %135, %141 : vector<256x2xf32>
    %c2_183 = arith.constant 2 : index
    %c0_184 = arith.constant 0 : index
    %c0_185 = arith.constant 0 : index
    %c0_186 = arith.constant 0 : index
    %143 = vector.load %arg10[%c2_183, %c0_184, %c0_185, %c0_186] : memref<3x18x16x256xbf16, #tpu.memory_space<vmem>>, vector<1x16x16x256xbf16>
    %144 = vector.shape_cast %143 : vector<1x16x16x256xbf16> to vector<16x16x256xbf16>
    %145 = vector.shape_cast %144 : vector<16x16x256xbf16> to vector<256x256xbf16>
    %c2_187 = arith.constant 2 : index
    %c0_188 = arith.constant 0 : index
    %c0_189 = arith.constant 0 : index
    %146 = vector.load %arg4[%c2_187, %c0_188, %c0_189] : memref<9x256x2xbf16, #tpu.memory_space<vmem>>, vector<1x256x2xbf16>
    %147 = vector.shape_cast %146 : vector<1x256x2xbf16> to vector<256x2xbf16>
    %cst_190 = arith.constant dense<0.000000e+00> : vector<256x2xf32>
    %148 = tpu.matmul %145, %147, %cst_190 {dimension_numbers = #tpu.dot_dimension_numbers<[1], [0], [0], [1], [0, 0, 1, 1], [], []>} : vector<256x256xbf16>, vector<256x2xbf16>, vector<256x2xf32> -> vector<256x2xf32>
    %149 = arith.addf %142, %148 : vector<256x2xf32>
    %c0_191 = arith.constant 0 : index
    %c1_192 = arith.constant 1 : index
    %c0_193 = arith.constant 0 : index
    %c0_194 = arith.constant 0 : index
    %150 = vector.load %arg10[%c0_191, %c1_192, %c0_193, %c0_194] : memref<3x18x16x256xbf16, #tpu.memory_space<vmem>>, vector<1x16x16x256xbf16>
    %151 = vector.shape_cast %150 : vector<1x16x16x256xbf16> to vector<16x16x256xbf16>
    %152 = vector.shape_cast %151 : vector<16x16x256xbf16> to vector<256x256xbf16>
    %c3_195 = arith.constant 3 : index
    %c0_196 = arith.constant 0 : index
    %c0_197 = arith.constant 0 : index
    %153 = vector.load %arg4[%c3_195, %c0_196, %c0_197] : memref<9x256x2xbf16, #tpu.memory_space<vmem>>, vector<1x256x2xbf16>
    %154 = vector.shape_cast %153 : vector<1x256x2xbf16> to vector<256x2xbf16>
    %cst_198 = arith.constant dense<0.000000e+00> : vector<256x2xf32>
    %155 = tpu.matmul %152, %154, %cst_198 {dimension_numbers = #tpu.dot_dimension_numbers<[1], [0], [0], [1], [0, 0, 1, 1], [], []>} : vector<256x256xbf16>, vector<256x2xbf16>, vector<256x2xf32> -> vector<256x2xf32>
    %156 = arith.addf %149, %155 : vector<256x2xf32>
    %c1_199 = arith.constant 1 : index
    %c1_200 = arith.constant 1 : index
    %c0_201 = arith.constant 0 : index
    %c0_202 = arith.constant 0 : index
    %157 = vector.load %arg10[%c1_199, %c1_200, %c0_201, %c0_202] : memref<3x18x16x256xbf16, #tpu.memory_space<vmem>>, vector<1x16x16x256xbf16>
    %158 = vector.shape_cast %157 : vector<1x16x16x256xbf16> to vector<16x16x256xbf16>
    %159 = vector.shape_cast %158 : vector<16x16x256xbf16> to vector<256x256xbf16>
    %c4_203 = arith.constant 4 : index
    %c0_204 = arith.constant 0 : index
    %c0_205 = arith.constant 0 : index
    %160 = vector.load %arg4[%c4_203, %c0_204, %c0_205] : memref<9x256x2xbf16, #tpu.memory_space<vmem>>, vector<1x256x2xbf16>
    %161 = vector.shape_cast %160 : vector<1x256x2xbf16> to vector<256x2xbf16>
    %cst_206 = arith.constant dense<0.000000e+00> : vector<256x2xf32>
    %162 = tpu.matmul %159, %161, %cst_206 {dimension_numbers = #tpu.dot_dimension_numbers<[1], [0], [0], [1], [0, 0, 1, 1], [], []>} : vector<256x256xbf16>, vector<256x2xbf16>, vector<256x2xf32> -> vector<256x2xf32>
    %163 = arith.addf %156, %162 : vector<256x2xf32>
    %c2_207 = arith.constant 2 : index
    %c1_208 = arith.constant 1 : index
    %c0_209 = arith.constant 0 : index
    %c0_210 = arith.constant 0 : index
    %164 = vector.load %arg10[%c2_207, %c1_208, %c0_209, %c0_210] : memref<3x18x16x256xbf16, #tpu.memory_space<vmem>>, vector<1x16x16x256xbf16>
    %165 = vector.shape_cast %164 : vector<1x16x16x256xbf16> to vector<16x16x256xbf16>
    %166 = vector.shape_cast %165 : vector<16x16x256xbf16> to vector<256x256xbf16>
    %c5_211 = arith.constant 5 : index
    %c0_212 = arith.constant 0 : index
    %c0_213 = arith.constant 0 : index
    %167 = vector.load %arg4[%c5_211, %c0_212, %c0_213] : memref<9x256x2xbf16, #tpu.memory_space<vmem>>, vector<1x256x2xbf16>
    %168 = vector.shape_cast %167 : vector<1x256x2xbf16> to vector<256x2xbf16>
    %cst_214 = arith.constant dense<0.000000e+00> : vector<256x2xf32>
    %169 = tpu.matmul %166, %168, %cst_214 {dimension_numbers = #tpu.dot_dimension_numbers<[1], [0], [0], [1], [0, 0, 1, 1], [], []>} : vector<256x256xbf16>, vector<256x2xbf16>, vector<256x2xf32> -> vector<256x2xf32>
    %170 = arith.addf %163, %169 : vector<256x2xf32>
    %c0_215 = arith.constant 0 : index
    %c2_216 = arith.constant 2 : index
    %c0_217 = arith.constant 0 : index
    %c0_218 = arith.constant 0 : index
    %171 = vector.load %arg10[%c0_215, %c2_216, %c0_217, %c0_218] : memref<3x18x16x256xbf16, #tpu.memory_space<vmem>>, vector<1x16x16x256xbf16>
    %172 = vector.shape_cast %171 : vector<1x16x16x256xbf16> to vector<16x16x256xbf16>
    %173 = vector.shape_cast %172 : vector<16x16x256xbf16> to vector<256x256xbf16>
    %c6_219 = arith.constant 6 : index
    %c0_220 = arith.constant 0 : index
    %c0_221 = arith.constant 0 : index
    %174 = vector.load %arg4[%c6_219, %c0_220, %c0_221] : memref<9x256x2xbf16, #tpu.memory_space<vmem>>, vector<1x256x2xbf16>
    %175 = vector.shape_cast %174 : vector<1x256x2xbf16> to vector<256x2xbf16>
    %cst_222 = arith.constant dense<0.000000e+00> : vector<256x2xf32>
    %176 = tpu.matmul %173, %175, %cst_222 {dimension_numbers = #tpu.dot_dimension_numbers<[1], [0], [0], [1], [0, 0, 1, 1], [], []>} : vector<256x256xbf16>, vector<256x2xbf16>, vector<256x2xf32> -> vector<256x2xf32>
    %177 = arith.addf %170, %176 : vector<256x2xf32>
    %c1_223 = arith.constant 1 : index
    %c2_224 = arith.constant 2 : index
    %c0_225 = arith.constant 0 : index
    %c0_226 = arith.constant 0 : index
    %178 = vector.load %arg10[%c1_223, %c2_224, %c0_225, %c0_226] : memref<3x18x16x256xbf16, #tpu.memory_space<vmem>>, vector<1x16x16x256xbf16>
    %179 = vector.shape_cast %178 : vector<1x16x16x256xbf16> to vector<16x16x256xbf16>
    %180 = vector.shape_cast %179 : vector<16x16x256xbf16> to vector<256x256xbf16>
    %c7_227 = arith.constant 7 : index
    %c0_228 = arith.constant 0 : index
    %c0_229 = arith.constant 0 : index
    %181 = vector.load %arg4[%c7_227, %c0_228, %c0_229] : memref<9x256x2xbf16, #tpu.memory_space<vmem>>, vector<1x256x2xbf16>
    %182 = vector.shape_cast %181 : vector<1x256x2xbf16> to vector<256x2xbf16>
    %cst_230 = arith.constant dense<0.000000e+00> : vector<256x2xf32>
    %183 = tpu.matmul %180, %182, %cst_230 {dimension_numbers = #tpu.dot_dimension_numbers<[1], [0], [0], [1], [0, 0, 1, 1], [], []>} : vector<256x256xbf16>, vector<256x2xbf16>, vector<256x2xf32> -> vector<256x2xf32>
    %184 = arith.addf %177, %183 : vector<256x2xf32>
    %c2_231 = arith.constant 2 : index
    %c2_232 = arith.constant 2 : index
    %c0_233 = arith.constant 0 : index
    %c0_234 = arith.constant 0 : index
    %185 = vector.load %arg10[%c2_231, %c2_232, %c0_233, %c0_234] : memref<3x18x16x256xbf16, #tpu.memory_space<vmem>>, vector<1x16x16x256xbf16>
    %186 = vector.shape_cast %185 : vector<1x16x16x256xbf16> to vector<16x16x256xbf16>
    %187 = vector.shape_cast %186 : vector<16x16x256xbf16> to vector<256x256xbf16>
    %c8_235 = arith.constant 8 : index
    %c0_236 = arith.constant 0 : index
    %c0_237 = arith.constant 0 : index
    %188 = vector.load %arg4[%c8_235, %c0_236, %c0_237] : memref<9x256x2xbf16, #tpu.memory_space<vmem>>, vector<1x256x2xbf16>
    %189 = vector.shape_cast %188 : vector<1x256x2xbf16> to vector<256x2xbf16>
    %cst_238 = arith.constant dense<0.000000e+00> : vector<256x2xf32>
    %190 = tpu.matmul %187, %189, %cst_238 {dimension_numbers = #tpu.dot_dimension_numbers<[1], [0], [0], [1], [0, 0, 1, 1], [], []>} : vector<256x256xbf16>, vector<256x2xbf16>, vector<256x2xf32> -> vector<256x2xf32>
    %191 = arith.addf %184, %190 : vector<256x2xf32>
    %c0_239 = arith.constant 0 : index
    %c0_240 = arith.constant 0 : index
    %192 = vector.load %arg5[%c0_239, %c0_240] : memref<1x2xf32, #tpu.memory_space<vmem>>, vector<1x2xf32>
    %193 = vector.broadcast %192 : vector<1x2xf32> to vector<256x2xf32>
    %194 = arith.addf %191, %193 : vector<256x2xf32>
    %195 = vector.shape_cast %194 : vector<256x2xf32> to vector<1x16x16x2xf32>
    %c0_241 = arith.constant 0 : index
    %c0_242 = arith.constant 0 : index
    %c0_243 = arith.constant 0 : index
    %c0_244 = arith.constant 0 : index
    %196 = vector.load %arg6[%c0_241, %c0_242, %c0_243, %c0_244] : memref<1x16x16x2xf32, #tpu.memory_space<vmem>>, vector<1x16x16x2xf32>
    tpu.vector_store %arg6[%c0_241, %c0_242, %c0_243, %c0_244], %195 {strides = array<i32>} : memref<1x16x16x2xf32, #tpu.memory_space<vmem>>, vector<1x16x16x2xf32>,
    return
  }
  func.func @transform_0(%arg0: i32) -> (i32, i32, i32, i32) {
    %c0_i32 = arith.constant 0 : i32
    %c0_i32_0 = arith.constant 0 : i32
    %c0_i32_1 = arith.constant 0 : i32
    %c0_i32_2 = arith.constant 0 : i32
    return %arg0, %c0_i32, %c0_i32_0, %c0_i32_1 : i32, i32, i32, i32
  }
  func.func @transform_1(%arg0: i32) -> (i32, i32, i32) {
    %c0_i32 = arith.constant 0 : i32
    %c0_i32_0 = arith.constant 0 : i32
    %c0_i32_1 = arith.constant 0 : i32
    %c0_i32_2 = arith.constant 0 : i32
    return %c0_i32, %c0_i32_0, %c0_i32_1 : i32, i32, i32
  }
  func.func @transform_2(%arg0: i32) -> (i32, i32) {
    %c0_i32 = arith.constant 0 : i32
    %c0_i32_0 = arith.constant 0 : i32
    %c0_i32_1 = arith.constant 0 : i32
    return %c0_i32, %c0_i32_0 : i32, i32
  }
  func.func @transform_3(%arg0: i32) -> (i32, i32, i32) {
    %c0_i32 = arith.constant 0 : i32
    %c0_i32_0 = arith.constant 0 : i32
    %c0_i32_1 = arith.constant 0 : i32
    %c0_i32_2 = arith.constant 0 : i32
    return %c0_i32, %c0_i32_0, %c0_i32_1 : i32, i32, i32
  }
  func.func @transform_4(%arg0: i32) -> (i32, i32) {
    %c0_i32 = arith.constant 0 : i32
    %c0_i32_0 = arith.constant 0 : i32
    %c0_i32_1 = arith.constant 0 : i32
    return %c0_i32, %c0_i32_0 : i32, i32
  }
  func.func @transform_5(%arg0: i32) -> (i32, i32, i32, i32) {
    %c0_i32 = arith.constant 0 : i32
    %c0_i32_0 = arith.constant 0 : i32
    %c0_i32_1 = arith.constant 0 : i32
    %c0_i32_2 = arith.constant 0 : i32
    return %arg0, %c0_i32, %c0_i32_0, %c0_i32_1 : i32, i32, i32, i32
  }
}

</mosaic_0001>

<llo_original>
// kernel: flow_head.1
$region0: #{flow_head.1}
  #allocation0 [shape = 'u32[]', space=smem, size = 0x4, offset = 0x4, fixed_abs, tag = 'smem constant byte address 0x4 - core index']
  #allocation1 [shape = 'u32[144,128]{1,0:T(1,128)}', space=vmem, size = 0x12000, scoped, tag = 'internal scratch']
  #allocation2 [shape = 'f32[18,18,128]{2,1,0:T(8,128)}', space=vmem, size = 0x36000, scoped, tag = 'scratch operand']
  #allocation3 [shape = 'bf16[3,18,16,128]{3,2,1,0:T(16,128)(2,1)}', space=vmem, size = 0x36000, scoped, tag = 'scratch operand']
  #allocation4 [shape = 'f32[18,18,256]{2,1,0:T(8,128)}', space=vmem, size = 0x6c000, scoped, tag = 'scratch operand']
  #allocation5 [shape = 'bf16[3,18,16,256]{3,2,1,0:T(16,128)(2,1)}', space=vmem, size = 0x6c000, scoped, tag = 'scratch operand']
  #allocation6 [shape = 'f32[256,256]{1,0:T(8,128)}', space=vmem, size = 0x40000, scoped, tag = 'scratch operand']
  %s0 = inlined_call_operand.vmem [shape: f32[2,16,16,128], index: 0, kind: input, shape index: {}]
  %s1 = inlined_call_operand.vmem [shape: bf16[9,128,256], index: 1, kind: input, shape index: {}]
  %s2 = inlined_call_operand.vmem [shape: f32[1,256], index: 2, kind: input, shape index: {}]
  %s3 = inlined_call_operand.vmem [shape: bf16[9,256,2], index: 3, kind: input, shape index: {}]
  %s4 = inlined_call_operand.vmem [shape: f32[1,2], index: 4, kind: input, shape index: {}]
  %s5 = inlined_call_operand.vmem [shape: f32[2,16,16,2], index: 5, kind: output, shape index: {}]
  %s6 = sld [smem:[#allocation0]]
  $region53: #{flow_head.1} parent=0
    _
  %s8 = ssub.s32 1, %s6
  %s9 = scalar_select 0, %s8, %s6
  loop: start=0, step=1, limit=4
  $region2: #{flow_head.1} parent=0 // loop_pre_header
    _
  $region3: #{flow_head.1} parent=0 // loop_header
    %s11 = sphi 0, %s15
    %p12 = scmp.ge.s32.totalorder %s11, 4
    %s21 = sphi 0, %s23
    %s24 = sphi 0, %s21
    %s25 = sphi 0, %s24
    %s41 = sphi 0, %s25
    %s45 = sphi 0, %s45
    %s47 = sphi 0, %s45
    %s48 = sphi 0, %s47
    %s62 = sphi 0, %s48
    %s66 = sphi 0, %s66
    %s68 = sphi 0, %s66
    %s69 = sphi 0, %s68
    %s83 = sphi 0, %s69
    %s87 = sphi 0, %s87
    %s89 = sphi 0, %s87
    %s90 = sphi 0, %s89
    %s104 = sphi 0, %s90
    %s108 = sphi 0, %s108
    %s110 = sphi 0, %s108
    %s111 = sphi 0, %s110
    %s125 = sphi 0, %s111
    %s131 = sphi 0, %s133
    %s134 = sphi 0, %s131
    %s135 = sphi 0, %s134
    %s151 = sphi 0, %s135
  $region4: #{flow_head.1} parent=0 // loop_header_branch
    %14 = sbr.rel (%p12) target = $region8
  $region5: #{flow_head.1} parent=0 // loop_body
    %s16 = ssub.s32 %s11, 1
    %s17 = ssub.s32 %s11, 2
    %s18 = sadd.s32 %s11, 1
    %s19 = ssub.s32 %s11, %s18
    %p20 = scmp.eq.s32.totalorder %s19, 0
    %s22 = sadd.s32 %s21, 1
    %s23 = scalar_select %p20, %s21, %s22
    %p26 = pneg %p20
    %p27 = scmp.eq.s32.totalorder %s11, 1
    %p28 = por %p26, %p27
    %p29 = scmp.ne.s32.totalorder %s21, %s24
    %p30 = scmp.eq.s32.totalorder %s11, 0
    %p31 = por %p29, %p30
    %p32 = scmp.ne.s32.totalorder %s21, %s24
    %p33 = scmp.eq.s32.totalorder %s16, 1
    %p34 = por %p32, %p33
    %p35 = scmp.ne.s32.totalorder %s24, %s25
    %p36 = scmp.eq.s32.totalorder %s16, 0
    %p37 = por %p35, %p36
    %p38 = scmp.ne.s32.totalorder %s24, %s25
    %p39 = scmp.eq.s32.totalorder %s17, 1
    %p40 = por %p38, %p39
    %p42 = scmp.ne.s32.totalorder %s25, %s41
    %p43 = scmp.eq.s32.totalorder %s17, 0
    %p44 = por %p42, %p43
    %s46 = sadd.s32 %s45, 1
    %p49 = scmp.eq.s32.totalorder %s11, 1
    %p50 = scmp.ne.s32.totalorder %s45, %s47
    %p51 = scmp.eq.s32.totalorder %s11, 0
    %p52 = por %p50, %p51
    %p53 = scmp.ne.s32.totalorder %s45, %s47
    %p54 = scmp.eq.s32.totalorder %s16, 1
    %p55 = por %p53, %p54
    %p56 = scmp.ne.s32.totalorder %s47, %s48
    %p57 = scmp.eq.s32.totalorder %s16, 0
    %p58 = por %p56, %p57
    %p59 = scmp.ne.s32.totalorder %s47, %s48
    %p60 = scmp.eq.s32.totalorder %s17, 1
    %p61 = por %p59, %p60
    %p63 = scmp.ne.s32.totalorder %s48, %s62
    %p64 = scmp.eq.s32.totalorder %s17, 0
    %p65 = por %p63, %p64
    %s67 = sadd.s32 %s66, 1
    %p70 = scmp.eq.s32.totalorder %s11, 1
    %p71 = scmp.ne.s32.totalorder %s66, %s68
    %p72 = scmp.eq.s32.totalorder %s11, 0
    %p73 = por %p71, %p72
    %p74 = scmp.ne.s32.totalorder %s66, %s68
    %p75 = scmp.eq.s32.totalorder %s16, 1
    %p76 = por %p74, %p75
    %p77 = scmp.ne.s32.totalorder %s68, %s69
    %p78 = scmp.eq.s32.totalorder %s16, 0
    %p79 = por %p77, %p78
    %p80 = scmp.ne.s32.totalorder %s68, %s69
    %p81 = scmp.eq.s32.totalorder %s17, 1
    %p82 = por %p80, %p81
    %p84 = scmp.ne.s32.totalorder %s69, %s83
    %p85 = scmp.eq.s32.totalorder %s17, 0
    %p86 = por %p84, %p85
    %s88 = sadd.s32 %s87, 1
    %p91 = scmp.eq.s32.totalorder %s11, 1
    %p92 = scmp.ne.s32.totalorder %s87, %s89
    %p93 = scmp.eq.s32.totalorder %s11, 0
    %p94 = por %p92, %p93
    %p95 = scmp.ne.s32.totalorder %s87, %s89
    %p96 = scmp.eq.s32.totalorder %s16, 1
    %p97 = por %p95, %p96
    %p98 = scmp.ne.s32.totalorder %s89, %s90
    %p99 = scmp.eq.s32.totalorder %s16, 0
    %p100 = por %p98, %p99
    %p101 = scmp.ne.s32.totalorder %s89, %s90
    %p102 = scmp.eq.s32.totalorder %s17, 1
    %p103 = por %p101, %p102
    %p105 = scmp.ne.s32.totalorder %s90, %s104
    %p106 = scmp.eq.s32.totalorder %s17, 0
    %p107 = por %p105, %p106
    %s109 = sadd.s32 %s108, 1
    %p112 = scmp.eq.s32.totalorder %s11, 1
    %p113 = scmp.ne.s32.totalorder %s108, %s110
    %p114 = scmp.eq.s32.totalorder %s11, 0
    %p115 = por %p113, %p114
    %p116 = scmp.ne.s32.totalorder %s108, %s110
    %p117 = scmp.eq.s32.totalorder %s16, 1
    %p118 = por %p116, %p117
    %p119 = scmp.ne.s32.totalorder %s110, %s111
    %p120 = scmp.eq.s32.totalorder %s16, 0
    %p121 = por %p119, %p120
    %p122 = scmp.ne.s32.totalorder %s110, %s111
    %p123 = scmp.eq.s32.totalorder %s17, 1
    %p124 = por %p122, %p123
    %p126 = scmp.ne.s32.totalorder %s111, %s125
    %p127 = scmp.eq.s32.totalorder %s17, 0
    %p128 = por %p126, %p127
    %s129 = ssub.s32 %s11, %s18
    %p130 = scmp.eq.s32.totalorder %s129, 0
    %s132 = sadd.s32 %s131, 1
    %s133 = scalar_select %p130, %s131, %s132
    %p136 = pneg %p130
    %p137 = scmp.eq.s32.totalorder %s11, 1
    %p138 = por %p136, %p137
    %p139 = scmp.ne.s32.totalorder %s131, %s134
    %p140 = scmp.eq.s32.totalorder %s11, 0
    %p141 = por %p139, %p140
    %p142 = scmp.ne.s32.totalorder %s131, %s134
    %p143 = scmp.eq.s32.totalorder %s16, 1
    %p144 = por %p142, %p143
    %p145 = scmp.ne.s32.totalorder %s134, %s135
    %p146 = scmp.eq.s32.totalorder %s16, 0
    %p147 = por %p145, %p146
    %p148 = scmp.ne.s32.totalorder %s134, %s135
    %p149 = scmp.eq.s32.totalorder %s17, 1
    %p150 = por %p148, %p149
    %p152 = scmp.ne.s32.totalorder %s135, %s151
    %p153 = scmp.eq.s32.totalorder %s17, 0
    %p154 = por %p152, %p153
    %p155 = scmp.le.s32.totalorder 1, %s11
    %p156 = scmp.lt.s32.totalorder %s11, 3
    %p157 = pnand %p155, %p156
    %p158 = pneg %p157
    // Predicated region
    $region9: #{flow_head.1} parent=5 // pred_check
      _
    $region10: #{flow_head.1} parent=5 // pred_check_branch
      %160 = sbr.rel (%p157) target = $region12
    $region11: #{flow_head.1} parent=5 // pred_region
      %s161 = ssub.s32 %s11, 1
      // Predicated region
      $region13: #{flow_head.1} parent=11 // pred_check
        %p162 = pneg %p58
      $region14: #{flow_head.1} parent=11 // pred_check_branch
        %164 = sbr.rel (%p162) target = $region16
      $region15: #{flow_head.1} parent=11 // pred_region
        _
      $region16: #{flow_head.1} parent=11 // pred_fallthru
        _
      // Predicated region
      $region17: #{flow_head.1} parent=11 // pred_check
        %p165 = pneg %p79
      $region18: #{flow_head.1} parent=11 // pred_check_branch
        %167 = sbr.rel (%p165) target = $region20
      $region19: #{flow_head.1} parent=11 // pred_region
        _
      $region20: #{flow_head.1} parent=11 // pred_fallthru
        _
      // Predicated region
      $region21: #{flow_head.1} parent=11 // pred_check
        %p168 = pneg %p100
      $region22: #{flow_head.1} parent=11 // pred_check_branch
        %170 = sbr.rel (%p168) target = $region24
      $region23: #{flow_head.1} parent=11 // pred_region
        _
      $region24: #{flow_head.1} parent=11 // pred_fallthru
        _
      // Predicated region
      $region25: #{flow_head.1} parent=11 // pred_check
        %p171 = pneg %p121
      $region26: #{flow_head.1} parent=11 // pred_check_branch
        %173 = sbr.rel (%p171) target = $region28
      $region27: #{flow_head.1} parent=11 // pred_region
        _
      $region28: #{flow_head.1} parent=11 // pred_fallthru
        _
    $region12: #{flow_head.1} parent=5 // pred_fallthru
      _
    %p174 = scmp.lt.s32.totalorder %s11, 2
    // Predicated region
    $region29: #{flow_head.1} parent=5 // pred_check
      %p175 = pneg %p174
    $region30: #{flow_head.1} parent=5 // pred_check_branch
      %177 = sbr.rel (%p175) target = $region32
    $region31: #{flow_head.1} parent=5 // pred_region
      // Predicated region
      $region33: #{flow_head.1} parent=31 // pred_check
        %p178 = pneg %p31
      $region34: #{flow_head.1} parent=31 // pred_check_branch
        %180 = sbr.rel (%p178) target = $region36
      $region35: #{flow_head.1} parent=31 // pred_region
        %p181 = scmp.lt.s32.totalorder %s11, 1
        %s182 = scalar_select %p181, %s11, 1
        %s183 = smul.addr %s182, 32
        %s184 = smul.addr %s183, 8
        %s185 = scalar_lea.vmem %s0, %s184
      $region36: #{flow_head.1} parent=31 // pred_fallthru
        _
    $region32: #{flow_head.1} parent=5 // pred_fallthru
      _
    %p186 = scmp.le.s32.totalorder 1, %s11
    %p187 = scmp.lt.s32.totalorder %s11, 3
    %p188 = pnand %p186, %p187
    %p189 = pneg %p188
    // Predicated region
    $region37: #{flow_head.1} parent=5 // pred_check
      _
    $region38: #{flow_head.1} parent=5 // pred_check_branch
      %191 = sbr.rel (%p188) target = $region40
    $region39: #{flow_head.1} parent=5 // pred_region
      %s192 = ssub.s32 %s11, 1
      %p193 = scmp.lt.s32.totalorder %s16, 1
      %s194 = scalar_select %p193, %s16, 1
      %s195 = smul.addr %s194, 32
      %s196 = smul.addr %s195, 8
      %s197 = scalar_lea.vmem %s0, %s196
      %p198 = pneg %p37
      %p199 = pneg %p34
      %p200 = pneg %p58
      %p201 = pneg %p55
      %p202 = pneg %p79
      %p203 = pneg %p76
      %p204 = pneg %p100
      %p205 = pneg %p97
      %p206 = pneg %p121
      %p207 = pneg %p118
      %p208 = pneg %p147
      %p209 = pneg %p144
      %p210 = scmp.lt.s32.totalorder %s16, 1
      %s211 = scalar_select %p210, %s16, 1
      %s212 = smul.addr %s211, 32
      %s213 = smul.addr %s212, 8
      %s214 = scalar_lea.vmem %s5, %s213
      %p215 = scmp.lt.s32.totalorder %s16, 1
      %s216 = scalar_select %p215, %s16, 1
      %s217 = smul.addr %s216, 32
      %s218 = smul.addr %s217, 8
      %s219 = scalar_lea.vmem %s0, %s218
      %p220 = scmp.lt.s32.totalorder %s16, 1
      %s221 = scalar_select %p220, %s16, 1
      %s222 = smul.addr %s221, 32
      %s223 = smul.addr %s222, 8
      %s224 = scalar_lea.vmem %s5, %s223
      %226 = vst [vmem:[#allocation2] sm:$0xff] 0.0
      %227 = vst [vmem:[#allocation2 + $0x8] sm:$0xff] 0.0
      %228 = vst [vmem:[#allocation2 + $0x10] sm:$0x3] 0.0
      %229 = vst [vmem:[#allocation2 + $0x18] sm:$0xff] 0.0
      %230 = vst [vmem:[#allocation2 + $0x20] sm:$0xff] 0.0
      %231 = vst [vmem:[#allocation2 + $0x28] sm:$0x3] 0.0
      %232 = vst [vmem:[#allocation2 + $0x30] sm:$0xff] 0.0
      %233 = vst [vmem:[#allocation2 + $0x38] sm:$0xff] 0.0
      %234 = vst [vmem:[#allocation2 + $0x40] sm:$0x3] 0.0
      %235 = vst [vmem:[#allocation2 + $0x48] sm:$0xff] 0.0
      %236 = vst [vmem:[#allocation2 + $0x50] sm:$0xff] 0.0
      %237 = vst [vmem:[#allocation2 + $0x58] sm:$0x3] 0.0
      %238 = vst [vmem:[#allocation2 + $0x60] sm:$0xff] 0.0
      %239 = vst [vmem:[#allocation2 + $0x68] sm:$0xff] 0.0
      %240 = vst [vmem:[#allocation2 + $0x70] sm:$0x3] 0.0
      %241 = vst [vmem:[#allocation2 + $0x78] sm:$0xff] 0.0
      %242 = vst [vmem:[#allocation2 + $0x80] sm:$0xff] 0.0
      %243 = vst [vmem:[#allocation2 + $0x88] sm:$0x3] 0.0
      %244 = vst [vmem:[#allocation2 + $0x90] sm:$0xff] 0.0
      %245 = vst [vmem:[#allocation2 + $0x98] sm:$0xff] 0.0
      %246 = vst [vmem:[#allocation2 + $0xa0] sm:$0x3] 0.0
      %247 = vst [vmem:[#allocation2 + $0xa8] sm:$0xff] 0.0
      %248 = vst [vmem:[#allocation2 + $0xb0] sm:$0xff] 0.0
      %249 = vst [vmem:[#allocation2 + $0xb8] sm:$0x3] 0.0
      %250 = vst [vmem:[#allocation2 + $0xc0] sm:$0xff] 0.0
      %251 = vst [vmem:[#allocation2 + $0xc8] sm:$0xff] 0.0
      %252 = vst [vmem:[#allocation2 + $0xd0] sm:$0x3] 0.0
      %253 = vst [vmem:[#allocation2 + $0xd8] sm:$0xff] 0.0
      %254 = vst [vmem:[#allocation2 + $0xe0] sm:$0xff] 0.0
      %255 = vst [vmem:[#allocation2 + $0xe8] sm:$0x3] 0.0
      %256 = vst [vmem:[#allocation2 + $0xf0] sm:$0xff] 0.0
      %257 = vst [vmem:[#allocation2 + $0xf8] sm:$0xff] 0.0
      %258 = vst [vmem:[#allocation2 + $0x100] sm:$0x3] 0.0
      %259 = vst [vmem:[#allocation2 + $0x108] sm:$0xff] 0.0
      %260 = vst [vmem:[#allocation2 + $0x110] sm:$0xff] 0.0
      %261 = vst [vmem:[#allocation2 + $0x118] sm:$0x3] 0.0
      %262 = vst [vmem:[#allocation2 + $0x120] sm:$0xff] 0.0
      %263 = vst [vmem:[#allocation2 + $0x128] sm:$0xff] 0.0
      %264 = vst [vmem:[#allocation2 + $0x130] sm:$0x3] 0.0
      %265 = vst [vmem:[#allocation2 + $0x138] sm:$0xff] 0.0
      %266 = vst [vmem:[#allocation2 + $0x140] sm:$0xff] 0.0
      %267 = vst [vmem:[#allocation2 + $0x148] sm:$0x3] 0.0
      %268 = vst [vmem:[#allocation2 + $0x150] sm:$0xff] 0.0
      %269 = vst [vmem:[#allocation2 + $0x158] sm:$0xff] 0.0
      %270 = vst [vmem:[#allocation2 + $0x160] sm:$0x3] 0.0
      %271 = vst [vmem:[#allocation2 + $0x168] sm:$0xff] 0.0
      %272 = vst [vmem:[#allocation2 + $0x170] sm:$0xff] 0.0
      %273 = vst [vmem:[#allocation2 + $0x178] sm:$0x3] 0.0
      %274 = vst [vmem:[#allocation2 + $0x180] sm:$0xff] 0.0
      %275 = vst [vmem:[#allocation2 + $0x188] sm:$0xff] 0.0
      %276 = vst [vmem:[#allocation2 + $0x190] sm:$0x3] 0.0
      %277 = vst [vmem:[#allocation2 + $0x198] sm:$0xff] 0.0
      %278 = vst [vmem:[#allocation2 + $0x1a0] sm:$0xff] 0.0
      %279 = vst [vmem:[#allocation2 + $0x1a8] sm:$0x3] 0.0
      %v280 = vld [vmem:[%s219] sm:$0xff]
      %v281 = vld [vmem:[%s219 + $0x8] sm:$0xff]
      %v282 = vld [vmem:[%s219 + $0x10] sm:$0xff]
      %v283 = vld [vmem:[%s219 + $0x18] sm:$0xff]
      %v284 = vld [vmem:[%s219 + $0x20] sm:$0xff]
      %v285 = vld [vmem:[%s219 + $0x28] sm:$0xff]
      %v286 = vld [vmem:[%s219 + $0x30] sm:$0xff]
      %v287 = vld [vmem:[%s219 + $0x38] sm:$0xff]
      %v288 = vld [vmem:[%s219 + $0x40] sm:$0xff]
      %v289 = vld [vmem:[%s219 + $0x48] sm:$0xff]
      %v290 = vld [vmem:[%s219 + $0x50] sm:$0xff]
      %v291 = vld [vmem:[%s219 + $0x58] sm:$0xff]
      %v292 = vld [vmem:[%s219 + $0x60] sm:$0xff]
      %v293 = vld [vmem:[%s219 + $0x68] sm:$0xff]
      %v294 = vld [vmem:[%s219 + $0x70] sm:$0xff]
      %v295 = vld [vmem:[%s219 + $0x78] sm:$0xff]
      %v296 = vld [vmem:[%s219 + $0x80] sm:$0xff]
      %v297 = vld [vmem:[%s219 + $0x88] sm:$0xff]
      %v298 = vld [vmem:[%s219 + $0x90] sm:$0xff]
      %v299 = vld [vmem:[%s219 + $0x98] sm:$0xff]
      %v300 = vld [vmem:[%s219 + $0xa0] sm:$0xff]
      %v301 = vld [vmem:[%s219 + $0xa8] sm:$0xff]
      %v302 = vld [vmem:[%s219 + $0xb0] sm:$0xff]
      %v303 = vld [vmem:[%s219 + $0xb8] sm:$0xff]
      %v304 = vld [vmem:[%s219 + $0xc0] sm:$0xff]
      %v305 = vld [vmem:[%s219 + $0xc8] sm:$0xff]
      %v306 = vld [vmem:[%s219 + $0xd0] sm:$0xff]
      %v307 = vld [vmem:[%s219 + $0xd8] sm:$0xff]
      %v308 = vld [vmem:[%s219 + $0xe0] sm:$0xff]
      %v309 = vld [vmem:[%s219 + $0xe8] sm:$0xff]
      %v310 = vld [vmem:[%s219 + $0xf0] sm:$0xff]
      %v311 = vld [vmem:[%s219 + $0xf8] sm:$0xff]
      %s312 = scalar_lea.vmem [#allocation2], 24
      %313 = vst [vmem:[%s312 + $0x1] sm:$0xff] %v280
      %314 = vst [vmem:[%s312 + $0x9] sm:$0xff] %v281
      %315 = vst [vmem:[%s312 + $0x19] sm:$0xff] %v282
      %316 = vst [vmem:[%s312 + $0x21] sm:$0xff] %v283
      %317 = vst [vmem:[%s312 + $0x31] sm:$0xff] %v284
      %318 = vst [vmem:[%s312 + $0x39] sm:$0xff] %v285
      %319 = vst [vmem:[%s312 + $0x49] sm:$0xff] %v286
      %320 = vst [vmem:[%s312 + $0x51] sm:$0xff] %v287
      %321 = vst [vmem:[%s312 + $0x61] sm:$0xff] %v288
      %322 = vst [vmem:[%s312 + $0x69] sm:$0xff] %v289
      %323 = vst [vmem:[%s312 + $0x79] sm:$0xff] %v290
      %324 = vst [vmem:[%s312 + $0x81] sm:$0xff] %v291
      %325 = vst [vmem:[%s312 + $0x91] sm:$0xff] %v292
      %326 = vst [vmem:[%s312 + $0x99] sm:$0xff] %v293
      %327 = vst [vmem:[%s312 + $0xa9] sm:$0xff] %v294
      %328 = vst [vmem:[%s312 + $0xb1] sm:$0xff] %v295
      %329 = vst [vmem:[%s312 + $0xc1] sm:$0xff] %v296
      %330 = vst [vmem:[%s312 + $0xc9] sm:$0xff] %v297
      %331 = vst [vmem:[%s312 + $0xd9] sm:$0xff] %v298
      %332 = vst [vmem:[%s312 + $0xe1] sm:$0xff] %v299
      %333 = vst [vmem:[%s312 + $0xf1] sm:$0xff] %v300
      %334 = vst [vmem:[%s312 + $0xf9] sm:$0xff] %v301
      %335 = vst [vmem:[%s312 + $0x109] sm:$0xff] %v302
      %336 = vst [vmem:[%s312 + $0x111] sm:$0xff] %v303
      %337 = vst [vmem:[%s312 + $0x121] sm:$0xff] %v304
      %338 = vst [vmem:[%s312 + $0x129] sm:$0xff] %v305
      %339 = vst [vmem:[%s312 + $0x139] sm:$0xff] %v306
      %340 = vst [vmem:[%s312 + $0x141] sm:$0xff] %v307
      %341 = vst [vmem:[%s312 + $0x151] sm:$0xff] %v308
      %342 = vst [vmem:[%s312 + $0x159] sm:$0xff] %v309
      %343 = vst [vmem:[%s312 + $0x169] sm:$0xff] %v310
      %344 = vst [vmem:[%s312 + $0x171] sm:$0xff] %v311
      %v345 = vld [vmem:[#allocation2] sm:$0xff]
      %v346 = vld [vmem:[#allocation2 + $0x8] sm:$0xff]
      %v347 = vld [vmem:[#allocation2 + $0x18] sm:$0xff]
      %v348 = vld [vmem:[#allocation2 + $0x20] sm:$0xff]
      %v349 = vld [vmem:[#allocation2 + $0x30] sm:$0xff]
      %v350 = vld [vmem:[#allocation2 + $0x38] sm:$0xff]
      %v351 = vld [vmem:[#allocation2 + $0x48] sm:$0xff]
      %v352 = vld [vmem:[#allocation2 + $0x50] sm:$0xff]
      %v353 = vld [vmem:[#allocation2 + $0x60] sm:$0xff]
      %v354 = vld [vmem:[#allocation2 + $0x68] sm:$0xff]
      %v355 = vld [vmem:[#allocation2 + $0x78] sm:$0xff]
      %v356 = vld [vmem:[#allocation2 + $0x80] sm:$0xff]
      %v357 = vld [vmem:[#allocation2 + $0x90] sm:$0xff]
      %v358 = vld [vmem:[#allocation2 + $0x98] sm:$0xff]
      %v359 = vld [vmem:[#allocation2 + $0xa8] sm:$0xff]
      %v360 = vld [vmem:[#allocation2 + $0xb0] sm:$0xff]
      %v361 = vld [vmem:[#allocation2 + $0xc0] sm:$0xff]
      %v362 = vld [vmem:[#allocation2 + $0xc8] sm:$0xff]
      %v363 = vld [vmem:[#allocation2 + $0xd8] sm:$0xff]
      %v364 = vld [vmem:[#allocation2 + $0xe0] sm:$0xff]
      %v365 = vld [vmem:[#allocation2 + $0xf0] sm:$0xff]
      %v366 = vld [vmem:[#allocation2 + $0xf8] sm:$0xff]
      %v367 = vld [vmem:[#allocation2 + $0x108] sm:$0xff]
      %v368 = vld [vmem:[#allocation2 + $0x110] sm:$0xff]
      %v369 = vld [vmem:[#allocation2 + $0x120] sm:$0xff]
      %v370 = vld [vmem:[#allocation2 + $0x128] sm:$0xff]
      %v371 = vld [vmem:[#allocation2 + $0x138] sm:$0xff]
      %v372 = vld [vmem:[#allocation2 + $0x140] sm:$0xff]
      %v373 = vld [vmem:[#allocation2 + $0x150] sm:$0xff]
      %v374 = vld [vmem:[#allocation2 + $0x158] sm:$0xff]
      %v375 = vld [vmem:[#allocation2 + $0x168] sm:$0xff]
      %v376 = vld [vmem:[#allocation2 + $0x170] sm:$0xff]
      %v377 = vld [vmem:[#allocation2 + $0x180] sm:$0xff]
      %v378 = vld [vmem:[#allocation2 + $0x188] sm:$0xff]
      %v379 = vld [vmem:[#allocation2 + $0x198] sm:$0xff]
      %v380 = vld [vmem:[#allocation2 + $0x1a0] sm:$0xff]
      %v381 = vpack.c.bf16 %v346, %v345
      %v382 = vpack.c.bf16 %v348, %v347
      %v383 = vpack.c.bf16 %v350, %v349
      %v384 = vpack.c.bf16 %v352, %v351
      %v385 = vpack.c.bf16 %v354, %v353
      %v386 = vpack.c.bf16 %v356, %v355
      %v387 = vpack.c.bf16 %v358, %v357
      %v388 = vpack.c.bf16 %v360, %v359
      %v389 = vpack.c.bf16 %v362, %v361
      %v390 = vpack.c.bf16 %v364, %v363
      %v391 = vpack.c.bf16 %v366, %v365
      %v392 = vpack.c.bf16 %v368, %v367
      %v393 = vpack.c.bf16 %v370, %v369
      %v394 = vpack.c.bf16 %v372, %v371
      %v395 = vpack.c.bf16 %v374, %v373
      %v396 = vpack.c.bf16 %v376, %v375
      %v397 = vpack.c.bf16 %v378, %v377
      %v398 = vpack.c.bf16 %v380, %v379
      %399 = vst [vmem:[#allocation3] sm:$0xff] %v381
      %400 = vst [vmem:[#allocation3 + $0x8] sm:$0xff] %v382
      %401 = vst [vmem:[#allocation3 + $0x10] sm:$0xff] %v383
      %402 = vst [vmem:[#allocation3 + $0x18] sm:$0xff] %v384
      %403 = vst [vmem:[#allocation3 + $0x20] sm:$0xff] %v385
      %404 = vst [vmem:[#allocation3 + $0x28] sm:$0xff] %v386
      %405 = vst [vmem:[#allocation3 + $0x30] sm:$0xff] %v387
      %406 = vst [vmem:[#allocation3 + $0x38] sm:$0xff] %v388
      %407 = vst [vmem:[#allocation3 + $0x40] sm:$0xff] %v389
      %408 = vst [vmem:[#allocation3 + $0x48] sm:$0xff] %v390
      %409 = vst [vmem:[#allocation3 + $0x50] sm:$0xff] %v391
      %410 = vst [vmem:[#allocation3 + $0x58] sm:$0xff] %v392
      %411 = vst [vmem:[#allocation3 + $0x60] sm:$0xff] %v393
      %412 = vst [vmem:[#allocation3 + $0x68] sm:$0xff] %v394
      %413 = vst [vmem:[#allocation3 + $0x70] sm:$0xff] %v395
      %414 = vst [vmem:[#allocation3 + $0x78] sm:$0xff] %v396
      %415 = vst [vmem:[#allocation3 + $0x80] sm:$0xff] %v397
      %416 = vst [vmem:[#allocation3 + $0x88] sm:$0xff] %v398
      %v417 = vld [vmem:[#allocation2 + $0x1] sm:$0xff]
      %v418 = vld [vmem:[#allocation2 + $0x9] sm:$0xff]
      %v419 = vld [vmem:[#allocation2 + $0x19] sm:$0xff]
      %v420 = vld [vmem:[#allocation2 + $0x21] sm:$0xff]
      %v421 = vld [vmem:[#allocation2 + $0x31] sm:$0xff]
      %v422 = vld [vmem:[#allocation2 + $0x39] sm:$0xff]
      %v423 = vld [vmem:[#allocation2 + $0x49] sm:$0xff]
      %v424 = vld [vmem:[#allocation2 + $0x51] sm:$0xff]
      %v425 = vld [vmem:[#allocation2 + $0x61] sm:$0xff]
      %v426 = vld [vmem:[#allocation2 + $0x69] sm:$0xff]
      %v427 = vld [vmem:[#allocation2 + $0x79] sm:$0xff]
      %v428 = vld [vmem:[#allocation2 + $0x81] sm:$0xff]
      %v429 = vld [vmem:[#allocation2 + $0x91] sm:$0xff]
      %v430 = vld [vmem:[#allocation2 + $0x99] sm:$0xff]
      %v431 = vld [vmem:[#allocation2 + $0xa9] sm:$0xff]
      %v432 = vld [vmem:[#allocation2 + $0xb1] sm:$0xff]
      %v433 = vld [vmem:[#allocation2 + $0xc1] sm:$0xff]
      %v434 = vld [vmem:[#allocation2 + $0xc9] sm:$0xff]
      %v435 = vld [vmem:[#allocation2 + $0xd9] sm:$0xff]
      %v436 = vld [vmem:[#allocation2 + $0xe1] sm:$0xff]
      %v437 = vld [vmem:[#allocation2 + $0xf1] sm:$0xff]
      %v438 = vld [vmem:[#allocation2 + $0xf9] sm:$0xff]
      %v439 = vld [vmem:[#allocation2 + $0x109] sm:$0xff]
      %v440 = vld [vmem:[#allocation2 + $0x111] sm:$0xff]
      %v441 = vld [vmem:[#allocation2 + $0x121] sm:$0xff]
      %v442 = vld [vmem:[#allocation2 + $0x129] sm:$0xff]
      %v443 = vld [vmem:[#allocation2 + $0x139] sm:$0xff]
      %v444 = vld [vmem:[#allocation2 + $0x141] sm:$0xff]
      %v445 = vld [vmem:[#allocation2 + $0x151] sm:$0xff]
      %v446 = vld [vmem:[#allocation2 + $0x159] sm:$0xff]
      %v447 = vld [vmem:[#allocation2 + $0x169] sm:$0xff]
      %v448 = vld [vmem:[#allocation2 + $0x171] sm:$0xff]
      %v449 = vld [vmem:[#allocation2 + $0x181] sm:$0xff]
      %v450 = vld [vmem:[#allocation2 + $0x189] sm:$0xff]
      %v451 = vld [vmem:[#allocation2 + $0x199] sm:$0xff]
      %v452 = vld [vmem:[#allocation2 + $0x1a1] sm:$0xff]
      %v453 = vpack.c.bf16 %v418, %v417
      %v454 = vpack.c.bf16 %v420, %v419
      %v455 = vpack.c.bf16 %v422, %v421
      %v456 = vpack.c.bf16 %v424, %v423
      %v457 = vpack.c.bf16 %v426, %v425
      %v458 = vpack.c.bf16 %v428, %v427
      %v459 = vpack.c.bf16 %v430, %v429
      %v460 = vpack.c.bf16 %v432, %v431
      %v461 = vpack.c.bf16 %v434, %v433
      %v462 = vpack.c.bf16 %v436, %v435
      %v463 = vpack.c.bf16 %v438, %v437
      %v464 = vpack.c.bf16 %v440, %v439
      %v465 = vpack.c.bf16 %v442, %v441
      %v466 = vpack.c.bf16 %v444, %v443
      %v467 = vpack.c.bf16 %v446, %v445
      %v468 = vpack.c.bf16 %v448, %v447
      %v469 = vpack.c.bf16 %v450, %v449
      %v470 = vpack.c.bf16 %v452, %v451
      %s471 = scalar_lea.vmem [#allocation3], 144
      %472 = vst [vmem:[%s471] sm:$0xff] %v453
      %473 = vst [vmem:[%s471 + $0x8] sm:$0xff] %v454
      %474 = vst [vmem:[%s471 + $0x10] sm:$0xff] %v455
      %475 = vst [vmem:[%s471 + $0x18] sm:$0xff] %v456
      %476 = vst [vmem:[%s471 + $0x20] sm:$0xff] %v457
      %477 = vst [vmem:[%s471 + $0x28] sm:$0xff] %v458
      %478 = vst [vmem:[%s471 + $0x30] sm:$0xff] %v459
      %479 = vst [vmem:[%s471 + $0x38] sm:$0xff] %v460
      %480 = vst [vmem:[%s471 + $0x40] sm:$0xff] %v461
      %481 = vst [vmem:[%s471 + $0x48] sm:$0xff] %v462
      %482 = vst [vmem:[%s471 + $0x50] sm:$0xff] %v463
      %483 = vst [vmem:[%s471 + $0x58] sm:$0xff] %v464
      %484 = vst [vmem:[%s471 + $0x60] sm:$0xff] %v465
      %485 = vst [vmem:[%s471 + $0x68] sm:$0xff] %v466
      %486 = vst [vmem:[%s471 + $0x70] sm:$0xff] %v467
      %487 = vst [vmem:[%s471 + $0x78] sm:$0xff] %v468
      %488 = vst [vmem:[%s471 + $0x80] sm:$0xff] %v469
      %489 = vst [vmem:[%s471 + $0x88] sm:$0xff] %v470
      %v490 = vld [vmem:[#allocation2 + $0x2] sm:$0xff]
      %v491 = vld [vmem:[#allocation2 + $0xa] sm:$0xff]
      %v492 = vld [vmem:[#allocation2 + $0x1a] sm:$0xff]
      %v493 = vld [vmem:[#allocation2 + $0x22] sm:$0xff]
      %v494 = vld [vmem:[#allocation2 + $0x32] sm:$0xff]
      %v495 = vld [vmem:[#allocation2 + $0x3a] sm:$0xff]
      %v496 = vld [vmem:[#allocation2 + $0x4a] sm:$0xff]
      %v497 = vld [vmem:[#allocation2 + $0x52] sm:$0xff]
      %v498 = vld [vmem:[#allocation2 + $0x62] sm:$0xff]
      %v499 = vld [vmem:[#allocation2 + $0x6a] sm:$0xff]
      %v500 = vld [vmem:[#allocation2 + $0x7a] sm:$0xff]
      %v501 = vld [vmem:[#allocation2 + $0x82] sm:$0xff]
      %v502 = vld [vmem:[#allocation2 + $0x92] sm:$0xff]
      %v503 = vld [vmem:[#allocation2 + $0x9a] sm:$0xff]
      %v504 = vld [vmem:[#allocation2 + $0xaa] sm:$0xff]
      %v505 = vld [vmem:[#allocation2 + $0xb2] sm:$0xff]
      %v506 = vld [vmem:[#allocation2 + $0xc2] sm:$0xff]
      %v507 = vld [vmem:[#allocation2 + $0xca] sm:$0xff]
      %v508 = vld [vmem:[#allocation2 + $0xda] sm:$0xff]
      %v509 = vld [vmem:[#allocation2 + $0xe2] sm:$0xff]
      %v510 = vld [vmem:[#allocation2 + $0xf2] sm:$0xff]
      %v511 = vld [vmem:[#allocation2 + $0xfa] sm:$0xff]
      %v512 = vld [vmem:[#allocation2 + $0x10a] sm:$0xff]
      %v513 = vld [vmem:[#allocation2 + $0x112] sm:$0xff]
      %v514 = vld [vmem:[#allocation2 + $0x122] sm:$0xff]
      %v515 = vld [vmem:[#allocation2 + $0x12a] sm:$0xff]
      %v516 = vld [vmem:[#allocation2 + $0x13a] sm:$0xff]
      %v517 = vld [vmem:[#allocation2 + $0x142] sm:$0xff]
      %v518 = vld [vmem:[#allocation2 + $0x152] sm:$0xff]
      %v519 = vld [vmem:[#allocation2 + $0x15a] sm:$0xff]
      %v520 = vld [vmem:[#allocation2 + $0x16a] sm:$0xff]
      %v521 = vld [vmem:[#allocation2 + $0x172] sm:$0xff]
      %v522 = vld [vmem:[#allocation2 + $0x182] sm:$0xff]
      %v523 = vld [vmem:[#allocation2 + $0x18a] sm:$0xff]
      %v524 = vld [vmem:[#allocation2 + $0x19a] sm:$0xff]
      %v525 = vld [vmem:[#allocation2 + $0x1a2] sm:$0xff]
      %v526 = vpack.c.bf16 %v491, %v490
      %v527 = vpack.c.bf16 %v493, %v492
      %v528 = vpack.c.bf16 %v495, %v494
      %v529 = vpack.c.bf16 %v497, %v496
      %v530 = vpack.c.bf16 %v499, %v498
      %v531 = vpack.c.bf16 %v501, %v500
      %v532 = vpack.c.bf16 %v503, %v502
      %v533 = vpack.c.bf16 %v505, %v504
      %v534 = vpack.c.bf16 %v507, %v506
      %v535 = vpack.c.bf16 %v509, %v508
      %v536 = vpack.c.bf16 %v511, %v510
      %v537 = vpack.c.bf16 %v513, %v512
      %v538 = vpack.c.bf16 %v515, %v514
      %v539 = vpack.c.bf16 %v517, %v516
      %v540 = vpack.c.bf16 %v519, %v518
      %v541 = vpack.c.bf16 %v521, %v520
      %v542 = vpack.c.bf16 %v523, %v522
      %v543 = vpack.c.bf16 %v525, %v524
      %s544 = scalar_lea.vmem [#allocation3], 288
      %545 = vst [vmem:[%s544] sm:$0xff] %v526
      %546 = vst [vmem:[%s544 + $0x8] sm:$0xff] %v527
      %547 = vst [vmem:[%s544 + $0x10] sm:$0xff] %v528
      %548 = vst [vmem:[%s544 + $0x18] sm:$0xff] %v529
      %549 = vst [vmem:[%s544 + $0x20] sm:$0xff] %v530
      %550 = vst [vmem:[%s544 + $0x28] sm:$0xff] %v531
      %551 = vst [vmem:[%s544 + $0x30] sm:$0xff] %v532
      %552 = vst [vmem:[%s544 + $0x38] sm:$0xff] %v533
      %553 = vst [vmem:[%s544 + $0x40] sm:$0xff] %v534
      %554 = vst [vmem:[%s544 + $0x48] sm:$0xff] %v535
      %555 = vst [vmem:[%s544 + $0x50] sm:$0xff] %v536
      %556 = vst [vmem:[%s544 + $0x58] sm:$0xff] %v537
      %557 = vst [vmem:[%s544 + $0x60] sm:$0xff] %v538
      %558 = vst [vmem:[%s544 + $0x68] sm:$0xff] %v539
      %559 = vst [vmem:[%s544 + $0x70] sm:$0xff] %v540
      %560 = vst [vmem:[%s544 + $0x78] sm:$0xff] %v541
      %561 = vst [vmem:[%s544 + $0x80] sm:$0xff] %v542
      %562 = vst [vmem:[%s544 + $0x88] sm:$0xff] %v543
      %563 = vst [vmem:[#allocation6] sm:$0xff] 0.0
      %564 = vst [vmem:[#allocation6 + $0x8] sm:$0xff] 0.0
      %565 = vst [vmem:[#allocation6 + $0x10] sm:$0xff] 0.0
      %566 = vst [vmem:[#allocation6 + $0x18] sm:$0xff] 0.0
      %567 = vst [vmem:[#allocation6 + $0x20] sm:$0xff] 0.0
      %568 = vst [vmem:[#allocation6 + $0x28] sm:$0xff] 0.0
      %569 = vst [vmem:[#allocation6 + $0x30] sm:$0xff] 0.0
      %570 = vst [vmem:[#allocation6 + $0x38] sm:$0xff] 0.0
      %571 = vst [vmem:[#allocation6 + $0x40] sm:$0xff] 0.0
      %572 = vst [vmem:[#allocation6 + $0x48] sm:$0xff] 0.0
      %573 = vst [vmem:[#allocation6 + $0x50] sm:$0xff] 0.0
      %574 = vst [vmem:[#allocation6 + $0x58] sm:$0xff] 0.0
      %575 = vst [vmem:[#allocation6 + $0x60] sm:$0xff] 0.0
      %576 = vst [vmem:[#allocation6 + $0x68] sm:$0xff] 0.0
      %577 = vst [vmem:[#allocation6 + $0x70] sm:$0xff] 0.0
      %578 = vst [vmem:[#allocation6 + $0x78] sm:$0xff] 0.0
      %579 = vst [vmem:[#allocation6 + $0x80] sm:$0xff] 0.0
      %580 = vst [vmem:[#allocation6 + $0x88] sm:$0xff] 0.0
      %581 = vst [vmem:[#allocation6 + $0x90] sm:$0xff] 0.0
      %582 = vst [vmem:[#allocation6 + $0x98] sm:$0xff] 0.0
      %583 = vst [vmem:[#allocation6 + $0xa0] sm:$0xff] 0.0
      %584 = vst [vmem:[#allocation6 + $0xa8] sm:$0xff] 0.0
      %585 = vst [vmem:[#allocation6 + $0xb0] sm:$0xff] 0.0
      %586 = vst [vmem:[#allocation6 + $0xb8] sm:$0xff] 0.0
      %587 = vst [vmem:[#allocation6 + $0xc0] sm:$0xff] 0.0
      %588 = vst [vmem:[#allocation6 + $0xc8] sm:$0xff] 0.0
      %589 = vst [vmem:[#allocation6 + $0xd0] sm:$0xff] 0.0
      %590 = vst [vmem:[#allocation6 + $0xd8] sm:$0xff] 0.0
      %591 = vst [vmem:[#allocation6 + $0xe0] sm:$0xff] 0.0
      %592 = vst [vmem:[#allocation6 + $0xe8] sm:$0xff] 0.0
      %593 = vst [vmem:[#allocation6 + $0xf0] sm:$0xff] 0.0
      %594 = vst [vmem:[#allocation6 + $0xf8] sm:$0xff] 0.0
      %595 = vst [vmem:[#allocation6 + $0x100] sm:$0xff] 0.0
      %596 = vst [vmem:[#allocation6 + $0x108] sm:$0xff] 0.0
      %597 = vst [vmem:[#allocation6 + $0x110] sm:$0xff] 0.0
      %598 = vst [vmem:[#allocation6 + $0x118] sm:$0xff] 0.0
      %599 = vst [vmem:[#allocation6 + $0x120] sm:$0xff] 0.0
      %600 = vst [vmem:[#allocation6 + $0x128] sm:$0xff] 0.0
      %601 = vst [vmem:[#allocation6 + $0x130] sm:$0xff] 0.0
      %602 = vst [vmem:[#allocation6 + $0x138] sm:$0xff] 0.0
      %603 = vst [vmem:[#allocation6 + $0x140] sm:$0xff] 0.0
      %604 = vst [vmem:[#allocation6 + $0x148] sm:$0xff] 0.0
      %605 = vst [vmem:[#allocation6 + $0x150] sm:$0xff] 0.0
      %606 = vst [vmem:[#allocation6 + $0x158] sm:$0xff] 0.0
      %607 = vst [vmem:[#allocation6 + $0x160] sm:$0xff] 0.0
      %608 = vst [vmem:[#allocation6 + $0x168] sm:$0xff] 0.0
      %609 = vst [vmem:[#allocation6 + $0x170] sm:$0xff] 0.0
      %610 = vst [vmem:[#allocation6 + $0x178] sm:$0xff] 0.0
      %611 = vst [vmem:[#allocation6 + $0x180] sm:$0xff] 0.0
      %612 = vst [vmem:[#allocation6 + $0x188] sm:$0xff] 0.0
      %613 = vst [vmem:[#allocation6 + $0x190] sm:$0xff] 0.0
      %614 = vst [vmem:[#allocation6 + $0x198] sm:$0xff] 0.0
      %615 = vst [vmem:[#allocation6 + $0x1a0] sm:$0xff] 0.0
      %616 = vst [vmem:[#allocation6 + $0x1a8] sm:$0xff] 0.0
      %617 = vst [vmem:[#allocation6 + $0x1b0] sm:$0xff] 0.0
      %618 = vst [vmem:[#allocation6 + $0x1b8] sm:$0xff] 0.0
      %619 = vst [vmem:[#allocation6 + $0x1c0] sm:$0xff] 0.0
      %620 = vst [vmem:[#allocation6 + $0x1c8] sm:$0xff] 0.0
      %621 = vst [vmem:[#allocation6 + $0x1d0] sm:$0xff] 0.0
      %622 = vst [vmem:[#allocation6 + $0x1d8] sm:$0xff] 0.0
      %623 = vst [vmem:[#allocation6 + $0x1e0] sm:$0xff] 0.0
      %624 = vst [vmem:[#allocation6 + $0x1e8] sm:$0xff] 0.0
      %625 = vst [vmem:[#allocation6 + $0x1f0] sm:$0xff] 0.0
      %626 = vst [vmem:[#allocation6 + $0x1f8] sm:$0xff] 0.0
      %v627 = vld [vmem:[#allocation3] sm:$0xff]
      %v628 = vld [vmem:[#allocation3 + $0x8] sm:$0xff]
      %v629 = vld [vmem:[#allocation3 + $0x10] sm:$0xff]
      %v630 = vld [vmem:[#allocation3 + $0x18] sm:$0xff]
      %v631 = vld [vmem:[#allocation3 + $0x20] sm:$0xff]
      %v632 = vld [vmem:[#allocation3 + $0x28] sm:$0xff]
      %v633 = vld [vmem:[#allocation3 + $0x30] sm:$0xff]
      %v634 = vld [vmem:[#allocation3 + $0x38] sm:$0xff]
      %v635 = vld [vmem:[#allocation3 + $0x40] sm:$0xff]
      %v636 = vld [vmem:[#allocation3 + $0x48] sm:$0xff]
      %v637 = vld [vmem:[#allocation3 + $0x50] sm:$0xff]
      %v638 = vld [vmem:[#allocation3 + $0x58] sm:$0xff]
      %v639 = vld [vmem:[#allocation3 + $0x60] sm:$0xff]
      %v640 = vld [vmem:[#allocation3 + $0x68] sm:$0xff]
      %v641 = vld [vmem:[#allocation3 + $0x70] sm:$0xff]
      %v642 = vld [vmem:[#allocation3 + $0x78] sm:$0xff]
      %v643 = vld [vmem:[#allocation6] sm:$0xff]
      %v644 = vld [vmem:[#allocation6 + $0x8] sm:$0xff]
      %v645 = vld [vmem:[#allocation6 + $0x10] sm:$0xff]
      %v646 = vld [vmem:[#allocation6 + $0x18] sm:$0xff]
      %v647 = vld [vmem:[#allocation6 + $0x20] sm:$0xff]
      %v648 = vld [vmem:[#allocation6 + $0x28] sm:$0xff]
      %v649 = vld [vmem:[#allocation6 + $0x30] sm:$0xff]
      %v650 = vld [vmem:[#allocation6 + $0x38] sm:$0xff]
      %v651 = vld [vmem:[#allocation6 + $0x40] sm:$0xff]
      %v652 = vld [vmem:[#allocation6 + $0x48] sm:$0xff]
      %v653 = vld [vmem:[#allocation6 + $0x50] sm:$0xff]
      %v654 = vld [vmem:[#allocation6 + $0x58] sm:$0xff]
      %v655 = vld [vmem:[#allocation6 + $0x60] sm:$0xff]
      %v656 = vld [vmem:[#allocation6 + $0x68] sm:$0xff]
      %v657 = vld [vmem:[#allocation6 + $0x70] sm:$0xff]
      %v658 = vld [vmem:[#allocation6 + $0x78] sm:$0xff]
      %v659 = vld [vmem:[#allocation6 + $0x80] sm:$0xff]
      %v660 = vld [vmem:[#allocation6 + $0x88] sm:$0xff]
      %v661 = vld [vmem:[#allocation6 + $0x90] sm:$0xff]
      %v662 = vld [vmem:[#allocation6 + $0x98] sm:$0xff]
      %v663 = vld [vmem:[#allocation6 + $0xa0] sm:$0xff]
      %v664 = vld [vmem:[#allocation6 + $0xa8] sm:$0xff]
      %v665 = vld [vmem:[#allocation6 + $0xb0] sm:$0xff]
      %v666 = vld [vmem:[#allocation6 + $0xb8] sm:$0xff]
      %v667 = vld [vmem:[#allocation6 + $0xc0] sm:$0xff]
      %v668 = vld [vmem:[#allocation6 + $0xc8] sm:$0xff]
      %v669 = vld [vmem:[#allocation6 + $0xd0] sm:$0xff]
      %v670 = vld [vmem:[#allocation6 + $0xd8] sm:$0xff]
      %v671 = vld [vmem:[#allocation6 + $0xe0] sm:$0xff]
      %v672 = vld [vmem:[#allocation6 + $0xe8] sm:$0xff]
      %v673 = vld [vmem:[#allocation6 + $0xf0] sm:$0xff]
      %v674 = vld [vmem:[#allocation6 + $0xf8] sm:$0xff]
      %v675 = vld [vmem:[#allocation6 + $0x100] sm:$0xff]
      %v676 = vld [vmem:[#allocation6 + $0x108] sm:$0xff]
      %v677 = vld [vmem:[#allocation6 + $0x110] sm:$0xff]
      %v678 = vld [vmem:[#allocation6 + $0x118] sm:$0xff]
      %v679 = vld [vmem:[#allocation6 + $0x120] sm:$0xff]
      %v680 = vld [vmem:[#allocation6 + $0x128] sm:$0xff]
      %v681 = vld [vmem:[#allocation6 + $0x130] sm:$0xff]
      %v682 = vld [vmem:[#allocation6 + $0x138] sm:$0xff]
      %v683 = vld [vmem:[#allocation6 + $0x140] sm:$0xff]
      %v684 = vld [vmem:[#allocation6 + $0x148] sm:$0xff]
      %v685 = vld [vmem:[#allocation6 + $0x150] sm:$0xff]
      %v686 = vld [vmem:[#allocation6 + $0x158] sm:$0xff]
      %v687 = vld [vmem:[#allocation6 + $0x160] sm:$0xff]
      %v688 = vld [vmem:[#allocation6 + $0x168] sm:$0xff]
      %v689 = vld [vmem:[#allocation6 + $0x170] sm:$0xff]
      %v690 = vld [vmem:[#allocation6 + $0x178] sm:$0xff]
      %v691 = vld [vmem:[#allocation6 + $0x180] sm:$0xff]
      %v692 = vld [vmem:[#allocation6 + $0x188] sm:$0xff]
      %v693 = vld [vmem:[#allocation6 + $0x190] sm:$0xff]
      %v694 = vld [vmem:[#allocation6 + $0x198] sm:$0xff]
      %v695 = vld [vmem:[#allocation6 + $0x1a0] sm:$0xff]
      %v696 = vld [vmem:[#allocation6 + $0x1a8] sm:$0xff]
      %v697 = vld [vmem:[#allocation6 + $0x1b0] sm:$0xff]
      %v698 = vld [vmem:[#allocation6 + $0x1b8] sm:$0xff]
      %v699 = vld [vmem:[#allocation6 + $0x1c0] sm:$0xff]
      %v700 = vld [vmem:[#allocation6 + $0x1c8] sm:$0xff]
      %v701 = vld [vmem:[#allocation6 + $0x1d0] sm:$0xff]
      %v702 = vld [vmem:[#allocation6 + $0x1d8] sm:$0xff]
      %v703 = vld [vmem:[#allocation6 + $0x1e0] sm:$0xff]
      %v704 = vld [vmem:[#allocation6 + $0x1e8] sm:$0xff]
      %v705 = vld [vmem:[#allocation6 + $0x1f0] sm:$0xff]
      %v706 = vld [vmem:[#allocation6 + $0x1f8] sm:$0xff]
      %v707 = vld [vmem:[%s1] sm:$0xff]
      %v708 = vld [vmem:[%s1 + $0x8] sm:$0xff]
      %v709 = vld [vmem:[%s1 + $0x10] sm:$0xff]
      %v710 = vld [vmem:[%s1 + $0x18] sm:$0xff]
      %v711 = vld [vmem:[%s1 + $0x20] sm:$0xff]
      %v712 = vld [vmem:[%s1 + $0x28] sm:$0xff]
      %v713 = vld [vmem:[%s1 + $0x30] sm:$0xff]
      %v714 = vld [vmem:[%s1 + $0x38] sm:$0xff]
      %v715 = vld [vmem:[%s1 + $0x40] sm:$0xff]
      %v716 = vld [vmem:[%s1 + $0x48] sm:$0xff]
      %v717 = vld [vmem:[%s1 + $0x50] sm:$0xff]
      %v718 = vld [vmem:[%s1 + $0x58] sm:$0xff]
      %v719 = vld [vmem:[%s1 + $0x60] sm:$0xff]
      %v720 = vld [vmem:[%s1 + $0x68] sm:$0xff]
      %v721 = vld [vmem:[%s1 + $0x70] sm:$0xff]
      %v722 = vld [vmem:[%s1 + $0x78] sm:$0xff]
      %v739 = vunpack.c.l.b16 %v707
      %v740 = vunpack.c.h.b16 %v707
      %v741 = vunpack.c.l.b16 %v708
      %v742 = vunpack.c.h.b16 %v708
      %v743 = vunpack.c.l.b16 %v709
      %v744 = vunpack.c.h.b16 %v709
      %v745 = vunpack.c.l.b16 %v710
      %v746 = vunpack.c.h.b16 %v710
      %v747 = vunpack.c.l.b16 %v711
      %v748 = vunpack.c.h.b16 %v711
      %v749 = vunpack.c.l.b16 %v712
      %v750 = vunpack.c.h.b16 %v712
      %v751 = vunpack.c.l.b16 %v713
      %v752 = vunpack.c.h.b16 %v713
      %v753 = vunpack.c.l.b16 %v714
      %v754 = vunpack.c.h.b16 %v714
      %v755 = vunpack.c.l.b16 %v715
      %v756 = vunpack.c.h.b16 %v715
      %v757 = vunpack.c.l.b16 %v716
      %v758 = vunpack.c.h.b16 %v716
      %v759 = vunpack.c.l.b16 %v717
      %v760 = vunpack.c.h.b16 %v717
      %v761 = vunpack.c.l.b16 %v718
      %v762 = vunpack.c.h.b16 %v718
      %v763 = vunpack.c.l.b16 %v719
      %v764 = vunpack.c.h.b16 %v719
      %v765 = vunpack.c.l.b16 %v720
      %v766 = vunpack.c.h.b16 %v720
      %v767 = vunpack.c.l.b16 %v721
      %v768 = vunpack.c.h.b16 %v721
      %v769 = vunpack.c.l.b16 %v722
      %v770 = vunpack.c.h.b16 %v722
      %v771 = vpack.c.b16 %v741, %v739
      %v772 = vpack.c.b16 %v742, %v740
      %v773 = vpack.c.b16 %v745, %v743
      %v774 = vpack.c.b16 %v746, %v744
      %v775 = vpack.c.b16 %v749, %v747
      %v776 = vpack.c.b16 %v750, %v748
      %v777 = vpack.c.b16 %v753, %v751
      %v778 = vpack.c.b16 %v754, %v752
      %v779 = vpack.c.b16 %v757, %v755
      %v780 = vpack.c.b16 %v758, %v756
      %v781 = vpack.c.b16 %v761, %v759
      %v782 = vpack.c.b16 %v762, %v760
      %v783 = vpack.c.b16 %v765, %v763
      %v784 = vpack.c.b16 %v766, %v764
      %v785 = vpack.c.b16 %v769, %v767
      %v786 = vpack.c.b16 %v770, %v768
      %803 = vmatprep.subr.bf16.mxu0 %v772
      %804 = vmatpush1.bf16.msra.mxu0 %v771
      %805 = vmatprep.subr.bf16.mxu0 %v774
      %806 = vmatpush1.bf16.msra.mxu0 %v773
      %807 = vmatprep.subr.bf16.mxu0 %v776
      %808 = vmatpush1.bf16.msra.mxu0 %v775
      %809 = vmatprep.subr.bf16.mxu0 %v778
      %810 = vmatpush1.bf16.msra.mxu0 %v777
      %811 = vmatprep.subr.bf16.mxu0 %v780
      %812 = vmatpush1.bf16.msra.mxu0 %v779
      %813 = vmatprep.subr.bf16.mxu0 %v782
      %814 = vmatpush1.bf16.msra.mxu0 %v781
      %815 = vmatprep.subr.bf16.mxu0 %v784
      %816 = vmatpush1.bf16.msra.mxu0 %v783
      %817 = vmatprep.subr.bf16.mxu0 %v786
      %818 = vmatpush1.bf16.msra.mxu0 %v785
      %819 = vmatprep.subr.bf16.mxu0 0
      %820 = vmatpush1.bf16.msra.mxu0 0
      %821 = vmatprep.subr.bf16.mxu0 0
      %822 = vmatpush1.bf16.msra.mxu0 0
      %823 = vmatprep.subr.bf16.mxu0 0
      %824 = vmatpush1.bf16.msra.mxu0 0
      %825 = vmatprep.subr.bf16.mxu0 0
      %826 = vmatpush1.bf16.msra.mxu0 0
      %827 = vmatprep.subr.bf16.mxu0 0
      %828 = vmatpush1.bf16.msra.mxu0 0
      %829 = vmatprep.subr.bf16.mxu0 0
      %830 = vmatpush1.bf16.msra.mxu0 0
      %831 = vmatprep.subr.bf16.mxu0 0
      %832 = vmatpush1.bf16.msra.mxu0 0
      %833 = vmatprep.subr.bf16.mxu0 0
      %834 = vmatpush1.bf16.msra.mxu0 0
      %835 = vmatprep.mubr.bf16.mxu0 0
      %836 = vmatmul.mubr.bf16.gmra.mrb[0].mxu0 %v627
      %v837 = vpop.f32.mrb[0].mxu0
      %v838 = vadd.f32 0.0, %v837
      %v839 = vpop.f32.mrb[0].mxu0
      %v840 = vadd.f32 0.0, %v839
      %v841 = vpop.f32.mrb[0].mxu0
      %v842 = vadd.f32 0.0, %v841
      %v843 = vpop.f32.mrb[0].mxu0
      %v844 = vadd.f32 0.0, %v843
      %845 = vmatprep.mubr.bf16.mxu0 0
      %846 = vmatmul.mubr.bf16.gmra.mrb[0].mxu0 %v628
      %v847 = vpop.f32.mrb[0].mxu0
      %v848 = vadd.f32 0.0, %v847
      %v849 = vpop.f32.mrb[0].mxu0
      %v850 = vadd.f32 0.0, %v849
      %v851 = vpop.f32.mrb[0].mxu0
      %v852 = vadd.f32 0.0, %v851
      %v853 = vpop.f32.mrb[0].mxu0
      %v854 = vadd.f32 0.0, %v853
      %855 = vmatprep.mubr.bf16.mxu0 0
      %856 = vmatmul.mubr.bf16.gmra.mrb[0].mxu0 %v629
      %v857 = vpop.f32.mrb[0].mxu0
      %v858 = vadd.f32 0.0, %v857
      %v859 = vpop.f32.mrb[0].mxu0
      %v860 = vadd.f32 0.0, %v859
      %v861 = vpop.f32.mrb[0].mxu0
      %v862 = vadd.f32 0.0, %v861
      %v863 = vpop.f32.mrb[0].mxu0
      %v864 = vadd.f32 0.0, %v863
      %865 = vmatprep.mubr.bf16.mxu0 0
      %866 = vmatmul.mubr.bf16.gmra.mrb[0].mxu0 %v630
      %v867 = vpop.f32.mrb[0].mxu0
      %v868 = vadd.f32 0.0, %v867
      %v869 = vpop.f32.mrb[0].mxu0
      %v870 = vadd.f32 0.0, %v869
      %v871 = vpop.f32.mrb[0].mxu0
      %v872 = vadd.f32 0.0, %v871
      %v873 = vpop.f32.mrb[0].mxu0
      %v874 = vadd.f32 0.0, %v873
      %875 = vmatprep.mubr.bf16.mxu0 0
      %876 = vmatmul.mubr.bf16.gmra.mrb[0].mxu0 %v631
      %v877 = vpop.f32.mrb[0].mxu0
      %v878 = vadd.f32 0.0, %v877
      %v879 = vpop.f32.mrb[0].mxu0
      %v880 = vadd.f32 0.0, %v879
      %v881 = vpop.f32.mrb[0].mxu0
      %v882 = vadd.f32 0.0, %v881
      %v883 = vpop.f32.mrb[0].mxu0
      %v884 = vadd.f32 0.0, %v883
      %885 = vmatprep.mubr.bf16.mxu0 0
      %886 = vmatmul.mubr.bf16.gmra.mrb[0].mxu0 %v632
      %v887 = vpop.f32.mrb[0].mxu0
      %v888 = vadd.f32 0.0, %v887
      %v889 = vpop.f32.mrb[0].mxu0
      %v890 = vadd.f32 0.0, %v889
      %v891 = vpop.f32.mrb[0].mxu0
      %v892 = vadd.f32 0.0, %v891
      %v893 = vpop.f32.mrb[0].mxu0
      %v894 = vadd.f32 0.0, %v893
      %895 = vmatprep.mubr.bf16.mxu0 0
      %896 = vmatmul.mubr.bf16.gmra.mrb[0].mxu0 %v633
      %v897 = vpop.f32.mrb[0].mxu0
      %v898 = vadd.f32 0.0, %v897
      %v899 = vpop.f32.mrb[0].mxu0
      %v900 = vadd.f32 0.0, %v899
      %v901 = vpop.f32.mrb[0].mxu0
      %v902 = vadd.f32 0.0, %v901
      %v903 = vpop.f32.mrb[0].mxu0
      %v904 = vadd.f32 0.0, %v903
      %905 = vmatprep.mubr.bf16.mxu0 0
      %906 = vmatmul.mubr.bf16.gmra.mrb[0].mxu0 %v634
      %v907 = vpop.f32.mrb[0].mxu0
      %v908 = vadd.f32 0.0, %v907
      %v909 = vpop.f32.mrb[0].mxu0
      %v910 = vadd.f32 0.0, %v909
      %v911 = vpop.f32.mrb[0].mxu0
      %v912 = vadd.f32 0.0, %v911
      %v913 = vpop.f32.mrb[0].mxu0
      %v914 = vadd.f32 0.0, %v913
      %915 = vmatprep.mubr.bf16.mxu0 0
      %916 = vmatmul.mubr.bf16.gmra.mrb[0].mxu0 %v635
      %v917 = vpop.f32.mrb[0].mxu0
      %v918 = vadd.f32 0.0, %v917
      %v919 = vpop.f32.mrb[0].mxu0
      %v920 = vadd.f32 0.0, %v919
      %v921 = vpop.f32.mrb[0].mxu0
      %v922 = vadd.f32 0.0, %v921
      %v923 = vpop.f32.mrb[0].mxu0
      %v924 = vadd.f32 0.0, %v923
      %925 = vmatprep.mubr.bf16.mxu0 0
      %926 = vmatmul.mubr.bf16.gmra.mrb[0].mxu0 %v636
      %v927 = vpop.f32.mrb[0].mxu0
      %v928 = vadd.f32 0.0, %v927
      %v929 = vpop.f32.mrb[0].mxu0
      %v930 = vadd.f32 0.0, %v929
      %v931 = vpop.f32.mrb[0].mxu0
      %v932 = vadd.f32 0.0, %v931
      %v933 = vpop.f32.mrb[0].mxu0
      %v934 = vadd.f32 0.0, %v933
      %935 = vmatprep.mubr.bf16.mxu0 0
      %936 = vmatmul.mubr.bf16.gmra.mrb[0].mxu0 %v637
      %v937 = vpop.f32.mrb[0].mxu0
      %v938 = vadd.f32 0.0, %v937
      %v939 = vpop.f32.mrb[0].mxu0
      %v940 = vadd.f32 0.0, %v939
      %v941 = vpop.f32.mrb[0].mxu0
      %v942 = vadd.f32 0.0, %v941
      %v943 = vpop.f32.mrb[0].mxu0
      %v944 = vadd.f32 0.0, %v943
      %945 = vmatprep.mubr.bf16.mxu0 0
      %946 = vmatmul.mubr.bf16.gmra.mrb[0].mxu0 %v638
      %v947 = vpop.f32.mrb[0].mxu0
      %v948 = vadd.f32 0.0, %v947
      %v949 = vpop.f32.mrb[0].mxu0
      %v950 = vadd.f32 0.0, %v949
      %v951 = vpop.f32.mrb[0].mxu0
      %v952 = vadd.f32 0.0, %v951
      %v953 = vpop.f32.mrb[0].mxu0
      %v954 = vadd.f32 0.0, %v953
      %955 = vmatprep.mubr.bf16.mxu0 0
      %956 = vmatmul.mubr.bf16.gmra.mrb[0].mxu0 %v639
      %v957 = vpop.f32.mrb[0].mxu0
      %v958 = vadd.f32 0.0, %v957
      %v959 = vpop.f32.mrb[0].mxu0
      %v960 = vadd.f32 0.0, %v959
      %v961 = vpop.f32.mrb[0].mxu0
      %v962 = vadd.f32 0.0, %v961
      %v963 = vpop.f32.mrb[0].mxu0
      %v964 = vadd.f32 0.0, %v963
      %965 = vmatprep.mubr.bf16.mxu0 0
      %966 = vmatmul.mubr.bf16.gmra.mrb[0].mxu0 %v640
      %v967 = vpop.f32.mrb[0].mxu0
      %v968 = vadd.f32 0.0, %v967
      %v969 = vpop.f32.mrb[0].mxu0
      %v970 = vadd.f32 0.0, %v969
      %v971 = vpop.f32.mrb[0].mxu0
      %v972 = vadd.f32 0.0, %v971
      %v973 = vpop.f32.mrb[0].mxu0
      %v974 = vadd.f32 0.0, %v973
      %975 = vmatprep.mubr.bf16.mxu0 0
      %976 = vmatmul.mubr.bf16.gmra.mrb[0].mxu0 %v641
      %v977 = vpop.f32.mrb[0].mxu0
      %v978 = vadd.f32 0.0, %v977
      %v979 = vpop.f32.mrb[0].mxu0
      %v980 = vadd.f32 0.0, %v979
      %v981 = vpop.f32.mrb[0].mxu0
      %v982 = vadd.f32 0.0, %v981
      %v983 = vpop.f32.mrb[0].mxu0
      %v984 = vadd.f32 0.0, %v983
      %985 = vmatprep.mubr.bf16.mxu0 0
      %986 = vmatmul.mubr.bf16.gmra.mrb[0].mxu0 %v642
      %v987 = vpop.f32.mrb[0].mxu0
      %v988 = vadd.f32 0.0, %v987
      %v989 = vpop.f32.mrb[0].mxu0
      %v990 = vadd.f32 0.0, %v989
      %v991 = vpop.f32.mrb[0].mxu0
      %v992 = vadd.f32 0.0, %v991
      %v993 = vpop.f32.mrb[0].mxu0
      %v994 = vadd.f32 0.0, %v993
      %995 = vdwg.mxu0
      %v996 = vadd.f32 %v643, %v838
      %v997 = vadd.f32 %v644, %v840
      %v998 = vadd.f32 %v645, %v842
      %v999 = vadd.f32 %v646, %v844
      %v1000 = vadd.f32 %v647, %v848
      %v1001 = vadd.f32 %v648, %v850
      %v1002 = vadd.f32 %v649, %v852
      %v1003 = vadd.f32 %v650, %v854
      %v1004 = vadd.f32 %v651, %v858
      %v1005 = vadd.f32 %v652, %v860
      %v1006 = vadd.f32 %v653, %v862
      %v1007 = vadd.f32 %v654, %v864
      %v1008 = vadd.f32 %v655, %v868
      %v1009 = vadd.f32 %v656, %v870
      %v1010 = vadd.f32 %v657, %v872
      %v1011 = vadd.f32 %v658, %v874
      %v1012 = vadd.f32 %v659, %v878
      %v1013 = vadd.f32 %v660, %v880
      %v1014 = vadd.f32 %v661, %v882
      %v1015 = vadd.f32 %v662, %v884
      %v1016 = vadd.f32 %v663, %v888
      %v1017 = vadd.f32 %v664, %v890
      %v1018 = vadd.f32 %v665, %v892
      %v1019 = vadd.f32 %v666, %v894
      %v1020 = vadd.f32 %v667, %v898
      %v1021 = vadd.f32 %v668, %v900
      %v1022 = vadd.f32 %v669, %v902
      %v1023 = vadd.f32 %v670, %v904
      %v1024 = vadd.f32 %v671, %v908
      %v1025 = vadd.f32 %v672, %v910
      %v1026 = vadd.f32 %v673, %v912
      %v1027 = vadd.f32 %v674, %v914
      %v1028 = vadd.f32 %v675, %v918
      %v1029 = vadd.f32 %v676, %v920
      %v1030 = vadd.f32 %v677, %v922
      %v1031 = vadd.f32 %v678, %v924
      %v1032 = vadd.f32 %v679, %v928
      %v1033 = vadd.f32 %v680, %v930
      %v1034 = vadd.f32 %v681, %v932
      %v1035 = vadd.f32 %v682, %v934
      %v1036 = vadd.f32 %v683, %v938
      %v1037 = vadd.f32 %v684, %v940
      %v1038 = vadd.f32 %v685, %v942
      %v1039 = vadd.f32 %v686, %v944
      %v1040 = vadd.f32 %v687, %v948
      %v1041 = vadd.f32 %v688, %v950
      %v1042 = vadd.f32 %v689, %v952
      %v1043 = vadd.f32 %v690, %v954
      %v1044 = vadd.f32 %v691, %v958
      %v1045 = vadd.f32 %v692, %v960
      %v1046 = vadd.f32 %v693, %v962
      %v1047 = vadd.f32 %v694, %v964
      %v1048 = vadd.f32 %v695, %v968
      %v1049 = vadd.f32 %v696, %v970
      %v1050 = vadd.f32 %v697, %v972
      %v1051 = vadd.f32 %v698, %v974
      %v1052 = vadd.f32 %v699, %v978
      %v1053 = vadd.f32 %v700, %v980
      %v1054 = vadd.f32 %v701, %v982
      %v1055 = vadd.f32 %v702, %v984
      %v1056 = vadd.f32 %v703, %v988
      %v1057 = vadd.f32 %v704, %v990
      %v1058 = vadd.f32 %v705, %v992
      %v1059 = vadd.f32 %v706, %v994
      %1060 = vst [vmem:[#allocation6] sm:$0xff] %v996
      %1061 = vst [vmem:[#allocation6 + $0x8] sm:$0xff] %v997
      %1062 = vst [vmem:[#allocation6 + $0x10] sm:$0xff] %v998
      %1063 = vst [vmem:[#allocation6 + $0x18] sm:$0xff] %v999
      %1064 = vst [vmem:[#allocation6 + $0x20] sm:$0xff] %v1000
      %1065 = vst [vmem:[#allocation6 + $0x28] sm:$0xff] %v1001
      %1066 = vst [vmem:[#allocation6 + $0x30] sm:$0xff] %v1002
      %1067 = vst [vmem:[#allocation6 + $0x38] sm:$0xff] %v1003
      %1068 = vst [vmem:[#allocation6 + $0x40] sm:$0xff] %v1004
      %1069 = vst [vmem:[#allocation6 + $0x48] sm:$0xff] %v1005
      %1070 = vst [vmem:[#allocation6 + $0x50] sm:$0xff] %v1006
      %1071 = vst [vmem:[#allocation6 + $0x58] sm:$0xff] %v1007
      %1072 = vst [vmem:[#allocation6 + $0x60] sm:$0xff] %v1008
      %1073 = vst [vmem:[#allocation6 + $0x68] sm:$0xff] %v1009
      %1074 = vst [vmem:[#allocation6 + $0x70] sm:$0xff] %v1010
      %1075 = vst [vmem:[#allocation6 + $0x78] sm:$0xff] %v1011
      %1076 = vst [vmem:[#allocation6 + $0x80] sm:$0xff] %v1012
      %1077 = vst [vmem:[#allocation6 + $0x88] sm:$0xff] %v1013
      %1078 = vst [vmem:[#allocation6 + $0x90] sm:$0xff] %v1014
      %1079 = vst [vmem:[#allocation6 + $0x98] sm:$0xff] %v1015
      %1080 = vst [vmem:[#allocation6 + $0xa0] sm:$0xff] %v1016
      %1081 = vst [vmem:[#allocation6 + $0xa8] sm:$0xff] %v1017
      %1082 = vst [vmem:[#allocation6 + $0xb0] sm:$0xff] %v1018
      %1083 = vst [vmem:[#allocation6 + $0xb8] sm:$0xff] %v1019
      %1084 = vst [vmem:[#allocation6 + $0xc0] sm:$0xff] %v1020
      %1085 = vst [vmem:[#allocation6 + $0xc8] sm:$0xff] %v1021
      %1086 = vst [vmem:[#allocation6 + $0xd0] sm:$0xff] %v1022
      %1087 = vst [vmem:[#allocation6 + $0xd8] sm:$0xff] %v1023
      %1088 = vst [vmem:[#allocation6 + $0xe0] sm:$0xff] %v1024
      %1089 = vst [vmem:[#allocation6 + $0xe8] sm:$0xff] %v1025
      %1090 = vst [vmem:[#allocation6 + $0xf0] sm:$0xff] %v1026
      %1091 = vst [vmem:[#allocation6 + $0xf8] sm:$0xff] %v1027
      %1092 = vst [vmem:[#allocation6 + $0x100] sm:$0xff] %v1028
      %1093 = vst [vmem:[#allocation6 + $0x108] sm:$0xff] %v1029
      %1094 = vst [vmem:[#allocation6 + $0x110] sm:$0xff] %v1030
      %1095 = vst [vmem:[#allocation6 + $0x118] sm:$0xff] %v1031
      %1096 = vst [vmem:[#allocation6 + $0x120] sm:$0xff] %v1032
      %1097 = vst [vmem:[#allocation6 + $0x128] sm:$0xff] %v1033
      %1098 = vst [vmem:[#allocation6 + $0x130] sm:$0xff] %v1034
      %1099 = vst [vmem:[#allocation6 + $0x138] sm:$0xff] %v1035
      %1100 = vst [vmem:[#allocation6 + $0x140] sm:$0xff] %v1036
      %1101 = vst [vmem:[#allocation6 + $0x148] sm:$0xff] %v1037
      %1102 = vst [vmem:[#allocation6 + $0x150] sm:$0xff] %v1038
      %1103 = vst [vmem:[#allocation6 + $0x158] sm:$0xff] %v1039
      %1104 = vst [vmem:[#allocation6 + $0x160] sm:$0xff] %v1040
      %1105 = vst [vmem:[#allocation6 + $0x168] sm:$0xff] %v1041
      %1106 = vst [vmem:[#allocation6 + $0x170] sm:$0xff] %v1042
      %1107 = vst [vmem:[#allocation6 + $0x178] sm:$0xff] %v1043
      %1108 = vst [vmem:[#allocation6 + $0x180] sm:$0xff] %v1044
      %1109 = vst [vmem:[#allocation6 + $0x188] sm:$0xff] %v1045
      %1110 = vst [vmem:[#allocation6 + $0x190] sm:$0xff] %v1046
      %1111 = vst [vmem:[#allocation6 + $0x198] sm:$0xff] %v1047
      %1112 = vst [vmem:[#allocation6 + $0x1a0] sm:$0xff] %v1048
      %1113 = vst [vmem:[#allocation6 + $0x1a8] sm:$0xff] %v1049
      %1114 = vst [vmem:[#allocation6 + $0x1b0] sm:$0xff] %v1050
      %1115 = vst [vmem:[#allocation6 + $0x1b8] sm:$0xff] %v1051
      %1116 = vst [vmem:[#allocation6 + $0x1c0] sm:$0xff] %v1052
      %1117 = vst [vmem:[#allocation6 + $0x1c8] sm:$0xff] %v1053
      %1118 = vst [vmem:[#allocation6 + $0x1d0] sm:$0xff] %v1054
      %1119 = vst [vmem:[#allocation6 + $0x1d8] sm:$0xff] %v1055
      %1120 = vst [vmem:[#allocation6 + $0x1e0] sm:$0xff] %v1056
      %1121 = vst [vmem:[#allocation6 + $0x1e8] sm:$0xff] %v1057
      %1122 = vst [vmem:[#allocation6 + $0x1f0] sm:$0xff] %v1058
      %1123 = vst [vmem:[#allocation6 + $0x1f8] sm:$0xff] %v1059
      %v1124 = vld [vmem:[%s471] sm:$0xff]
      %v1125 = vld [vmem:[%s471 + $0x8] sm:$0xff]
      %v1126 = vld [vmem:[%s471 + $0x10] sm:$0xff]
      %v1127 = vld [vmem:[%s471 + $0x18] sm:$0xff]
      %v1128 = vld [vmem:[%s471 + $0x20] sm:$0xff]
      %v1129 = vld [vmem:[%s471 + $0x28] sm:$0xff]
      %v1130 = vld [vmem:[%s471 + $0x30] sm:$0xff]
      %v1131 = vld [vmem:[%s471 + $0x38] sm:$0xff]
      %v1132 = vld [vmem:[%s471 + $0x40] sm:$0xff]
      %v1133 = vld [vmem:[%s471 + $0x48] sm:$0xff]
      %v1134 = vld [vmem:[%s471 + $0x50] sm:$0xff]
      %v1135 = vld [vmem:[%s471 + $0x58] sm:$0xff]
      %v1136 = vld [vmem:[%s471 + $0x60] sm:$0xff]
      %v1137 = vld [vmem:[%s471 + $0x68] sm:$0xff]
      %v1138 = vld [vmem:[%s471 + $0x70] sm:$0xff]
      %v1139 = vld [vmem:[%s471 + $0x78] sm:$0xff]
      %v1140 = vld [vmem:[#allocation6] sm:$0xff]
      %v1141 = vld [vmem:[#allocation6 + $0x8] sm:$0xff]
      %v1142 = vld [vmem:[#allocation6 + $0x10] sm:$0xff]
      %v1143 = vld [vmem:[#allocation6 + $0x18] sm:$0xff]
      %v1144 = vld [vmem:[#allocation6 + $0x20] sm:$0xff]
      %v1145 = vld [vmem:[#allocation6 + $0x28] sm:$0xff]
      %v1146 = vld [vmem:[#allocation6 + $0x30] sm:$0xff]
      %v1147 = vld [vmem:[#allocation6 + $0x38] sm:$0xff]
      %v1148 = vld [vmem:[#allocation6 + $0x40] sm:$0xff]
      %v1149 = vld [vmem:[#allocation6 + $0x48] sm:$0xff]
      %v1150 = vld [vmem:[#allocation6 + $0x50] sm:$0xff]
      %v1151 = vld [vmem:[#allocation6 + $0x58] sm:$0xff]
      %v1152 = vld [vmem:[#allocation6 + $0x60] sm:$0xff]
      %v1153 = vld [vmem:[#allocation6 + $0x68] sm:$0xff]
      %v1154 = vld [vmem:[#allocation6 + $0x70] sm:$0xff]
      %v1155 = vld [vmem:[#allocation6 + $0x78] sm:$0xff]
      %v1156 = vld [vmem:[#allocation6 + $0x80] sm:$0xff]
      %v1157 = vld [vmem:[#allocation6 + $0x88] sm:$0xff]
      %v1158 = vld [vmem:[#allocation6 + $0x90] sm:$0xff]
      %v1159 = vld [vmem:[#allocation6 + $0x98] sm:$0xff]
      %v1160 = vld [vmem:[#allocation6 + $0xa0] sm:$0xff]
      %v1161 = vld [vmem:[#allocation6 + $0xa8] sm:$0xff]
      %v1162 = vld [vmem:[#allocation6 + $0xb0] sm:$0xff]
      %v1163 = vld [vmem:[#allocation6 + $0xb8] sm:$0xff]
      %v1164 = vld [vmem:[#allocation6 + $0xc0] sm:$0xff]
      %v1165 = vld [vmem:[#allocation6 + $0xc8] sm:$0xff]
      %v1166 = vld [vmem:[#allocation6 + $0xd0] sm:$0xff]
      %v1167 = vld [vmem:[#allocation6 + $0xd8] sm:$0xff]
      %v1168 = vld [vmem:[#allocation6 + $0xe0] sm:$0xff]
      %v1169 = vld [vmem:[#allocation6 + $0xe8] sm:$0xff]
      %v1170 = vld [vmem:[#allocation6 + $0xf0] sm:$0xff]
      %v1171 = vld [vmem:[#allocation6 + $0xf8] sm:$0xff]
      %v1172 = vld [vmem:[#allocation6 + $0x100] sm:$0xff]
      %v1173 = vld [vmem:[#allocation6 + $0x108] sm:$0xff]
      %v1174 = vld [vmem:[#allocation6 + $0x110] sm:$0xff]
      %v1175 = vld [vmem:[#allocation6 + $0x118] sm:$0xff]
      %v1176 = vld [vmem:[#allocation6 + $0x120] sm:$0xff]
      %v1177 = vld [vmem:[#allocation6 + $0x128] sm:$0xff]
      %v1178 = vld [vmem:[#allocation6 + $0x130] sm:$0xff]
      %v1179 = vld [vmem:[#allocation6 + $0x138] sm:$0xff]
      %v1180 = vld [vmem:[#allocation6 + $0x140] sm:$0xff]
      %v1181 = vld [vmem:[#allocation6 + $0x148] sm:$0xff]
      %v1182 = vld [vmem:[#allocation6 + $0x150] sm:$0xff]
      %v1183 = vld [vmem:[#allocation6 + $0x158] sm:$0xff]
      %v1184 = vld [vmem:[#allocation6 + $0x160] sm:$0xff]
      %v1185 = vld [vmem:[#allocation6 + $0x168] sm:$0xff]
      %v1186 = vld [vmem:[#allocation6 + $0x170] sm:$0xff]
      %v1187 = vld [vmem:[#allocation6 + $0x178] sm:$0xff]
      %v1188 = vld [vmem:[#allocation6 + $0x180] sm:$0xff]
      %v1189 = vld [vmem:[#allocation6 + $0x188] sm:$0xff]
      %v1190 = vld [vmem:[#allocation6 + $0x190] sm:$0xff]
      %v1191 = vld [vmem:[#allocation6 + $0x198] sm:$0xff]
      %v1192 = vld [vmem:[#allocation6 + $0x1a0] sm:$0xff]
      %v1193 = vld [vmem:[#allocation6 + $0x1a8] sm:$0xff]
      %v1194 = vld [vmem:[#allocation6 + $0x1b0] sm:$0xff]
      %v1195 = vld [vmem:[#allocation6 + $0x1b8] sm:$0xff]
      %v1196 = vld [vmem:[#allocation6 + $0x1c0] sm:$0xff]
      %v1197 = vld [vmem:[#allocation6 + $0x1c8] sm:$0xff]
      %v1198 = vld [vmem:[#allocation6 + $0x1d0] sm:$0xff]
      %v1199 = vld [vmem:[#allocation6 + $0x1d8] sm:$0xff]
      %v1200 = vld [vmem:[#allocation6 + $0x1e0] sm:$0xff]
      %v1201 = vld [vmem:[#allocation6 + $0x1e8] sm:$0xff]
      %v1202 = vld [vmem:[#allocation6 + $0x1f0] sm:$0xff]
      %v1203 = vld [vmem:[#allocation6 + $0x1f8] sm:$0xff]
      %s1204 = scalar_lea.vmem %s1, 128
      %v1205 = vld [vmem:[%s1204] sm:$0xff]
      %v1206 = vld [vmem:[%s1204 + $0x8] sm:$0xff]
      %v1207 = vld [vmem:[%s1204 + $0x10] sm:$0xff]
      %v1208 = vld [vmem:[%s1204 + $0x18] sm:$0xff]
      %v1209 = vld [vmem:[%s1204 + $0x20] sm:$0xff]
      %v1210 = vld [vmem:[%s1204 + $0x28] sm:$0xff]
      %v1211 = vld [vmem:[%s1204 + $0x30] sm:$0xff]
      %v1212 = vld [vmem:[%s1204 + $0x38] sm:$0xff]
      %v1213 = vld [vmem:[%s1204 + $0x40] sm:$0xff]
      %v1214 = vld [vmem:[%s1204 + $0x48] sm:$0xff]
      %v1215 = vld [vmem:[%s1204 + $0x50] sm:$0xff]
      %v1216 = vld [vmem:[%s1204 + $0x58] sm:$0xff]
      %v1217 = vld [vmem:[%s1204 + $0x60] sm:$0xff]
      %v1218 = vld [vmem:[%s1204 + $0x68] sm:$0xff]
      %v1219 = vld [vmem:[%s1204 + $0x70] sm:$0xff]
      %v1220 = vld [vmem:[%s1204 + $0x78] sm:$0xff]
      %v1237 = vunpack.c.l.b16 %v1205
      %v1238 = vunpack.c.h.b16 %v1205
      %v1239 = vunpack.c.l.b16 %v1206
      %v1240 = vunpack.c.h.b16 %v1206
      %v1241 = vunpack.c.l.b16 %v1207
      %v1242 = vunpack.c.h.b16 %v1207
      %v1243 = vunpack.c.l.b16 %v1208
      %v1244 = vunpack.c.h.b16 %v1208
      %v1245 = vunpack.c.l.b16 %v1209
      %v1246 = vunpack.c.h.b16 %v1209
      %v1247 = vunpack.c.l.b16 %v1210
      %v1248 = vunpack.c.h.b16 %v1210
      %v1249 = vunpack.c.l.b16 %v1211
      %v1250 = vunpack.c.h.b16 %v1211
      %v1251 = vunpack.c.l.b16 %v1212
      %v1252 = vunpack.c.h.b16 %v1212
      %v1253 = vunpack.c.l.b16 %v1213
      %v1254 = vunpack.c.h.b16 %v1213
      %v1255 = vunpack.c.l.b16 %v1214
      %v1256 = vunpack.c.h.b16 %v1214
      %v1257 = vunpack.c.l.b16 %v1215
      %v1258 = vunpack.c.h.b16 %v1215
      %v1259 = vunpack.c.l.b16 %v1216
      %v1260 = vunpack.c.h.b16 %v1216
      %v1261 = vunpack.c.l.b16 %v1217
      %v1262 = vunpack.c.h.b16 %v1217
      %v1263 = vunpack.c.l.b16 %v1218
      %v1264 = vunpack.c.h.b16 %v1218
      %v1265 = vunpack.c.l.b16 %v1219
      %v1266 = vunpack.c.h.b16 %v1219
      %v1267 = vunpack.c.l.b16 %v1220
      %v1268 = vunpack.c.h.b16 %v1220
      %v1269 = vpack.c.b16 %v1239, %v1237
      %v1270 = vpack.c.b16 %v1240, %v1238
      %v1271 = vpack.c.b16 %v1243, %v1241
      %v1272 = vpack.c.b16 %v1244, %v1242
      %v1273 = vpack.c.b16 %v1247, %v1245
      %v1274 = vpack.c.b16 %v1248, %v1246
      %v1275 = vpack.c.b16 %v1251, %v1249
      %v1276 = vpack.c.b16 %v1252, %v1250
      %v1277 = vpack.c.b16 %v1255, %v1253
      %v1278 = vpack.c.b16 %v1256, %v1254
      %v1279 = vpack.c.b16 %v1259, %v1257
      %v1280 = vpack.c.b16 %v1260, %v1258
      %v1281 = vpack.c.b16 %v1263, %v1261
      %v1282 = vpack.c.b16 %v1264, %v1262
      %v1283 = vpack.c.b16 %v1267, %v1265
      %v1284 = vpack.c.b16 %v1268, %v1266
      %1301 = vmatprep.subr.bf16.mxu0 %v1270
      %1302 = vmatpush1.bf16.msra.mxu0 %v1269
      %1303 = vmatprep.subr.bf16.mxu0 %v1272
      %1304 = vmatpush1.bf16.msra.mxu0 %v1271
      %1305 = vmatprep.subr.bf16.mxu0 %v1274
      %1306 = vmatpush1.bf16.msra.mxu0 %v1273
      %1307 = vmatprep.subr.bf16.mxu0 %v1276
      %1308 = vmatpush1.bf16.msra.mxu0 %v1275
      %1309 = vmatprep.subr.bf16.mxu0 %v1278
      %1310 = vmatpush1.bf16.msra.mxu0 %v1277
      %1311 = vmatprep.subr.bf16.mxu0 %v1280
      %1312 = vmatpush1.bf16.msra.mxu0 %v1279
      %1313 = vmatprep.subr.bf16.mxu0 %v1282
      %1314 = vmatpush1.bf16.msra.mxu0 %v1281
      %1315 = vmatprep.subr.bf16.mxu0 %v1284
      %1316 = vmatpush1.bf16.msra.mxu0 %v1283
      %1317 = vmatprep.subr.bf16.mxu0 0
      %1318 = vmatpush1.bf16.msra.mxu0 0
      %1319 = vmatprep.subr.bf16.mxu0 0
      %1320 = vmatpush1.bf16.msra.mxu0 0
      %1321 = vmatprep.subr.bf16.mxu0 0
      %1322 = vmatpush1.bf16.msra.mxu0 0
      %1323 = vmatprep.subr.bf16.mxu0 0
      %1324 = vmatpush1.bf16.msra.mxu0 0
      %1325 = vmatprep.subr.bf16.mxu0 0
      %1326 = vmatpush1.bf16.msra.mxu0 0
      %1327 = vmatprep.subr.bf16.mxu0 0
      %1328 = vmatpush1.bf16.msra.mxu0 0
      %1329 = vmatprep.subr.bf16.mxu0 0
      %1330 = vmatpush1.bf16.msra.mxu0 0
      %1331 = vmatprep.subr.bf16.mxu0 0
      %1332 = vmatpush1.bf16.msra.mxu0 0
      %1333 = vmatprep.mubr.bf16.mxu0 0
      %1334 = vmatmul.mubr.bf16.gmra.mrb[0].mxu0 %v1124
      %v1335 = vpop.f32.mrb[0].mxu0
      %v1336 = vadd.f32 0.0, %v1335
      %v1337 = vpop.f32.mrb[0].mxu0
      %v1338 = vadd.f32 0.0, %v1337
      %v1339 = vpop.f32.mrb[0].mxu0
      %v1340 = vadd.f32 0.0, %v1339
      %v1341 = vpop.f32.mrb[0].mxu0
      %v1342 = vadd.f32 0.0, %v1341
      %1343 = vmatprep.mubr.bf16.mxu0 0
      %1344 = vmatmul.mubr.bf16.gmra.mrb[0].mxu0 %v1125
      %v1345 = vpop.f32.mrb[0].mxu0
      %v1346 = vadd.f32 0.0, %v1345
      %v1347 = vpop.f32.mrb[0].mxu0
      %v1348 = vadd.f32 0.0, %v1347
      %v1349 = vpop.f32.mrb[0].mxu0
      %v1350 = vadd.f32 0.0, %v1349
      %v1351 = vpop.f32.mrb[0].mxu0
      %v1352 = vadd.f32 0.0, %v1351
      %1353 = vmatprep.mubr.bf16.mxu0 0
      %1354 = vmatmul.mubr.bf16.gmra.mrb[0].mxu0 %v1126
      %v1355 = vpop.f32.mrb[0].mxu0
      %v1356 = vadd.f32 0.0, %v1355
      %v1357 = vpop.f32.mrb[0].mxu0
      %v1358 = vadd.f32 0.0, %v1357
      %v1359 = vpop.f32.mrb[0].mxu0
      %v1360 = vadd.f32 0.0, %v1359
      %v1361 = vpop.f32.mrb[0].mxu0
      %v1362 = vadd.f32 0.0, %v1361
      %1363 = vmatprep.mubr.bf16.mxu0 0
      %1364 = vmatmul.mubr.bf16.gmra.mrb[0].mxu0 %v1127
      %v1365 = vpop.f32.mrb[0].mxu0
      %v1366 = vadd.f32 0.0, %v1365
      %v1367 = vpop.f32.mrb[0].mxu0
      %v1368 = vadd.f32 0.0, %v1367
      %v1369 = vpop.f32.mrb[0].mxu0
      %v1370 = vadd.f32 0.0, %v1369
      %v1371 = vpop.f32.mrb[0].mxu0
      %v1372 = vadd.f32 0.0, %v1371
      %1373 = vmatprep.mubr.bf16.mxu0 0
      %1374 = vmatmul.mubr.bf16.gmra.mrb[0].mxu0 %v1128
      %v1375 = vpop.f32.mrb[0].mxu0
      %v1376 = vadd.f32 0.0, %v1375
      %v1377 = vpop.f32.mrb[0].mxu0
      %v1378 = vadd.f32 0.0, %v1377
      %v1379 = vpop.f32.mrb[0].mxu0
      %v1380 = vadd.f32 0.0, %v1379
      %v1381 = vpop.f32.mrb[0].mxu0
      %v1382 = vadd.f32 0.0, %v1381
      %1383 = vmatprep.mubr.bf16.mxu0 0
      %1384 = vmatmul.mubr.bf16.gmra.mrb[0].mxu0 %v1129
      %v1385 = vpop.f32.mrb[0].mxu0
      %v1386 = vadd.f32 0.0, %v1385
      %v1387 = vpop.f32.mrb[0].mxu0
      %v1388 = vadd.f32 0.0, %v1387
      %v1389 = vpop.f32.mrb[0].mxu0
      %v1390 = vadd.f32 0.0, %v1389
      %v1391 = vpop.f32.mrb[0].mxu0
      %v1392 = vadd.f32 0.0, %v1391
      %1393 = vmatprep.mubr.bf16.mxu0 0
      %1394 = vmatmul.mubr.bf16.gmra.mrb[0].mxu0 %v1130
      %v1395 = vpop.f32.mrb[0].mxu0
      %v1396 = vadd.f32 0.0, %v1395
      %v1397 = vpop.f32.mrb[0].mxu0
      %v1398 = vadd.f32 0.0, %v1397
      %v1399 = vpop.f32.mrb[0].mxu0
      %v1400 = vadd.f32 0.0, %v1399
      %v1401 = vpop.f32.mrb[0].mxu0
      %v1402 = vadd.f32 0.0, %v1401
      %1403 = vmatprep.mubr.bf16.mxu0 0
      %1404 = vmatmul.mubr.bf16.gmra.mrb[0].mxu0 %v1131
      %v1405 = vpop.f32.mrb[0].mxu0
      %v1406 = vadd.f32 0.0, %v1405
      %v1407 = vpop.f32.mrb[0].mxu0
      %v1408 = vadd.f32 0.0, %v1407
      %v1409 = vpop.f32.mrb[0].mxu0
      %v1410 = vadd.f32 0.0, %v1409
      %v1411 = vpop.f32.mrb[0].mxu0
      %v1412 = vadd.f32 0.0, %v1411
      %1413 = vmatprep.mubr.bf16.mxu0 0
      %1414 = vmatmul.mubr.bf16.gmra.mrb[0].mxu0 %v1132
      %v1415 = vpop.f32.mrb[0].mxu0
      %v1416 = vadd.f32 0.0, %v1415
      %v1417 = vpop.f32.mrb[0].mxu0
      %v1418 = vadd.f32 0.0, %v1417
      %v1419 = vpop.f32.mrb[0].mxu0
      %v1420 = vadd.f32 0.0, %v1419
      %v1421 = vpop.f32.mrb[0].mxu0
      %v1422 = vadd.f32 0.0, %v1421
      %1423 = vmatprep.mubr.bf16.mxu0 0
      %1424 = vmatmul.mubr.bf16.gmra.mrb[0].mxu0 %v1133
      %v1425 = vpop.f32.mrb[0].mxu0
      %v1426 = vadd.f32 0.0, %v1425
      %v1427 = vpop.f32.mrb[0].mxu0
      %v1428 = vadd.f32 0.0, %v1427
      %v1429 = vpop.f32.mrb[0].mxu0
      %v1430 = vadd.f32 0.0, %v1429
      %v1431 = vpop.f32.mrb[0].mxu0
      %v1432 = vadd.f32 0.0, %v1431
      %1433 = vmatprep.mubr.bf16.mxu0 0
      %1434 = vmatmul.mubr.bf16.gmra.mrb[0].mxu0 %v1134
      %v1435 = vpop.f32.mrb[0].mxu0
      %v1436 = vadd.f32 0.0, %v1435
      %v1437 = vpop.f32.mrb[0].mxu0
      %v1438 = vadd.f32 0.0, %v1437
      %v1439 = vpop.f32.mrb[0].mxu0
      %v1440 = vadd.f32 0.0, %v1439
      %v1441 = vpop.f32.mrb[0].mxu0
      %v1442 = vadd.f32 0.0, %v1441
      %1443 = vmatprep.mubr.bf16.mxu0 0
      %1444 = vmatmul.mubr.bf16.gmra.mrb[0].mxu0 %v1135
      %v1445 = vpop.f32.mrb[0].mxu0
      %v1446 = vadd.f32 0.0, %v1445
      %v1447 = vpop.f32.mrb[0].mxu0
      %v1448 = vadd.f32 0.0, %v1447
      %v1449 = vpop.f32.mrb[0].mxu0
      %v1450 = vadd.f32 0.0, %v1449
      %v1451 = vpop.f32.mrb[0].mxu0
      %v1452 = vadd.f32 0.0, %v1451
      %1453 = vmatprep.mubr.bf16.mxu0 0
      %1454 = vmatmul.mubr.bf16.gmra.mrb[0].mxu0 %v1136
      %v1455 = vpop.f32.mrb[0].mxu0
      %v1456 = vadd.f32 0.0, %v1455
      %v1457 = vpop.f32.mrb[0].mxu0
      %v1458 = vadd.f32 0.0, %v1457
      %v1459 = vpop.f32.mrb[0].mxu0
      %v1460 = vadd.f32 0.0, %v1459
      %v1461 = vpop.f32.mrb[0].mxu0
      %v1462 = vadd.f32 0.0, %v1461
      %1463 = vmatprep.mubr.bf16.mxu0 0
      %1464 = vmatmul.mubr.bf16.gmra.mrb[0].mxu0 %v1137
      %v1465 = vpop.f32.mrb[0].mxu0
      %v1466 = vadd.f32 0.0, %v1465
      %v1467 = vpop.f32.mrb[0].mxu0
      %v1468 = vadd.f32 0.0, %v1467
      %v1469 = vpop.f32.mrb[0].mxu0
      %v1470 = vadd.f32 0.0, %v1469
      %v1471 = vpop.f32.mrb[0].mxu0
      %v1472 = vadd.f32 0.0, %v1471
      %1473 = vmatprep.mubr.bf16.mxu0 0
      %1474 = vmatmul.mubr.bf16.gmra.mrb[0].mxu0 %v1138
      %v1475 = vpop.f32.mrb[0].mxu0
      %v1476 = vadd.f32 0.0, %v1475
      %v1477 = vpop.f32.mrb[0].mxu0
      %v1478 = vadd.f32 0.0, %v1477
      %v1479 = vpop.f32.mrb[0].mxu0
      %v1480 = vadd.f32 0.0, %v1479
      %v1481 = vpop.f32.mrb[0].mxu0
      %v1482 = vadd.f32 0.0, %v1481
      %1483 = vmatprep.mubr.bf16.mxu0 0
      %1484 = vmatmul.mubr.bf16.gmra.mrb[0].mxu0 %v1139
      %v1485 = vpop.f32.mrb[0].mxu0
      %v1486 = vadd.f32 0.0, %v1485
      %v1487 = vpop.f32.mrb[0].mxu0
      %v1488 = vadd.f32 0.0, %v1487
      %v1489 = vpop.f32.mrb[0].mxu0
      %v1490 = vadd.f32 0.0, %v1489
      %v1491 = vpop.f32.mrb[0].mxu0
      %v1492 = vadd.f32 0.0, %v1491
      %1493 = vdwg.mxu0
      %v1494 = vadd.f32 %v1140, %v1336
      %v1495 = vadd.f32 %v1141, %v1338
      %v1496 = vadd.f32 %v1142, %v1340
      %v1497 = vadd.f32 %v1143, %v1342
      %v1498 = vadd.f32 %v1144, %v1346
      %v1499 = vadd.f32 %v1145, %v1348
      %v1500 = vadd.f32 %v1146, %v1350
      %v1501 = vadd.f32 %v1147, %v1352
      %v1502 = vadd.f32 %v1148, %v1356
      %v1503 = vadd.f32 %v1149, %v1358
      %v1504 = vadd.f32 %v1150, %v1360
      %v1505 = vadd.f32 %v1151, %v1362
      %v1506 = vadd.f32 %v1152, %v1366
      %v1507 = vadd.f32 %v1153, %v1368
      %v1508 = vadd.f32 %v1154, %v1370
      %v1509 = vadd.f32 %v1155, %v1372
      %v1510 = vadd.f32 %v1156, %v1376
      %v1511 = vadd.f32 %v1157, %v1378
      %v1512 = vadd.f32 %v1158, %v1380
      %v1513 = vadd.f32 %v1159, %v1382
      %v1514 = vadd.f32 %v1160, %v1386
      %v1515 = vadd.f32 %v1161, %v1388
      %v1516 = vadd.f32 %v1162, %v1390
      %v1517 = vadd.f32 %v1163, %v1392
      %v1518 = vadd.f32 %v1164, %v1396
      %v1519 = vadd.f32 %v1165, %v1398
      %v1520 = vadd.f32 %v1166, %v1400
      %v1521 = vadd.f32 %v1167, %v1402
      %v1522 = vadd.f32 %v1168, %v1406
      %v1523 = vadd.f32 %v1169, %v1408
      %v1524 = vadd.f32 %v1170, %v1410
      %v1525 = vadd.f32 %v1171, %v1412
      %v1526 = vadd.f32 %v1172, %v1416
      %v1527 = vadd.f32 %v1173, %v1418
      %v1528 = vadd.f32 %v1174, %v1420
      %v1529 = vadd.f32 %v1175, %v1422
      %v1530 = vadd.f32 %v1176, %v1426
      %v1531 = vadd.f32 %v1177, %v1428
      %v1532 = vadd.f32 %v1178, %v1430
      %v1533 = vadd.f32 %v1179, %v1432
      %v1534 = vadd.f32 %v1180, %v1436
      %v1535 = vadd.f32 %v1181, %v1438
      %v1536 = vadd.f32 %v1182, %v1440
      %v1537 = vadd.f32 %v1183, %v1442
      %v1538 = vadd.f32 %v1184, %v1446
      %v1539 = vadd.f32 %v1185, %v1448
      %v1540 = vadd.f32 %v1186, %v1450
      %v1541 = vadd.f32 %v1187, %v1452
      %v1542 = vadd.f32 %v1188, %v1456
      %v1543 = vadd.f32 %v1189, %v1458
      %v1544 = vadd.f32 %v1190, %v1460
      %v1545 = vadd.f32 %v1191, %v1462
      %v1546 = vadd.f32 %v1192, %v1466
      %v1547 = vadd.f32 %v1193, %v1468
      %v1548 = vadd.f32 %v1194, %v1470
      %v1549 = vadd.f32 %v1195, %v1472
      %v1550 = vadd.f32 %v1196, %v1476
      %v1551 = vadd.f32 %v1197, %v1478
      %v1552 = vadd.f32 %v1198, %v1480
      %v1553 = vadd.f32 %v1199, %v1482
      %v1554 = vadd.f32 %v1200, %v1486
      %v1555 = vadd.f32 %v1201, %v1488
      %v1556 = vadd.f32 %v1202, %v1490
      %v1557 = vadd.f32 %v1203, %v1492
      %1558 = vst [vmem:[#allocation6] sm:$0xff] %v1494
      %1559 = vst [vmem:[#allocation6 + $0x8] sm:$0xff] %v1495
      %1560 = vst [vmem:[#allocation6 + $0x10] sm:$0xff] %v1496
      %1561 = vst [vmem:[#allocation6 + $0x18] sm:$0xff] %v1497
      %1562 = vst [vmem:[#allocation6 + $0x20] sm:$0xff] %v1498
      %1563 = vst [vmem:[#allocation6 + $0x28] sm:$0xff] %v1499
      %1564 = vst [vmem:[#allocation6 + $0x30] sm:$0xff] %v1500
      %1565 = vst [vmem:[#allocation6 + $0x38] sm:$0xff] %v1501
      %1566 = vst [vmem:[#allocation6 + $0x40] sm:$0xff] %v1502
      %1567 = vst [vmem:[#allocation6 + $0x48] sm:$0xff] %v1503
      %1568 = vst [vmem:[#allocation6 + $0x50] sm:$0xff] %v1504
      %1569 = vst [vmem:[#allocation6 + $0x58] sm:$0xff] %v1505
      %1570 = vst [vmem:[#allocation6 + $0x60] sm:$0xff] %v1506
      %1571 = vst [vmem:[#allocation6 + $0x68] sm:$0xff] %v1507
      %1572 = vst [vmem:[#allocation6 + $0x70] sm:$0xff] %v1508
      %1573 = vst [vmem:[#allocation6 + $0x78] sm:$0xff] %v1509
      %1574 = vst [vmem:[#allocation6 + $0x80] sm:$0xff] %v1510
      %1575 = vst [vmem:[#allocation6 + $0x88] sm:$0xff] %v1511
      %1576 = vst [vmem:[#allocation6 + $0x90] sm:$0xff] %v1512
      %1577 = vst [vmem:[#allocation6 + $0x98] sm:$0xff] %v1513
      %1578 = vst [vmem:[#allocation6 + $0xa0] sm:$0xff] %v1514
      %1579 = vst [vmem:[#allocation6 + $0xa8] sm:$0xff] %v1515
      %1580 = vst [vmem:[#allocation6 + $0xb0] sm:$0xff] %v1516
      %1581 = vst [vmem:[#allocation6 + $0xb8] sm:$0xff] %v1517
      %1582 = vst [vmem:[#allocation6 + $0xc0] sm:$0xff] %v1518
      %1583 = vst [vmem:[#allocation6 + $0xc8] sm:$0xff] %v1519
      %1584 = vst [vmem:[#allocation6 + $0xd0] sm:$0xff] %v1520
      %1585 = vst [vmem:[#allocation6 + $0xd8] sm:$0xff] %v1521
      %1586 = vst [vmem:[#allocation6 + $0xe0] sm:$0xff] %v1522
      %1587 = vst [vmem:[#allocation6 + $0xe8] sm:$0xff] %v1523
      %1588 = vst [vmem:[#allocation6 + $0xf0] sm:$0xff] %v1524
      %1589 = vst [vmem:[#allocation6 + $0xf8] sm:$0xff] %v1525
      %1590 = vst [vmem:[#allocation6 + $0x100] sm:$0xff] %v1526
      %1591 = vst [vmem:[#allocation6 + $0x108] sm:$0xff] %v1527
      %1592 = vst [vmem:[#allocation6 + $0x110] sm:$0xff] %v1528
      %1593 = vst [vmem:[#allocation6 + $0x118] sm:$0xff] %v1529
      %1594 = vst [vmem:[#allocation6 + $0x120] sm:$0xff] %v1530
      %1595 = vst [vmem:[#allocation6 + $0x128] sm:$0xff] %v1531
      %1596 = vst [vmem:[#allocation6 + $0x130] sm:$0xff] %v1532
      %1597 = vst [vmem:[#allocation6 + $0x138] sm:$0xff] %v1533
      %1598 = vst [vmem:[#allocation6 + $0x140] sm:$0xff] %v1534
      %1599 = vst [vmem:[#allocation6 + $0x148] sm:$0xff] %v1535
      %1600 = vst [vmem:[#allocation6 + $0x150] sm:$0xff] %v1536
      %1601 = vst [vmem:[#allocation6 + $0x158] sm:$0xff] %v1537
      %1602 = vst [vmem:[#allocation6 + $0x160] sm:$0xff] %v1538
      %1603 = vst [vmem:[#allocation6 + $0x168] sm:$0xff] %v1539
      %1604 = vst [vmem:[#allocation6 + $0x170] sm:$0xff] %v1540
      %1605 = vst [vmem:[#allocation6 + $0x178] sm:$0xff] %v1541
      %1606 = vst [vmem:[#allocation6 + $0x180] sm:$0xff] %v1542
      %1607 = vst [vmem:[#allocation6 + $0x188] sm:$0xff] %v1543
      %1608 = vst [vmem:[#allocation6 + $0x190] sm:$0xff] %v1544
      %1609 = vst [vmem:[#allocation6 + $0x198] sm:$0xff] %v1545
      %1610 = vst [vmem:[#allocation6 + $0x1a0] sm:$0xff] %v1546
      %1611 = vst [vmem:[#allocation6 + $0x1a8] sm:$0xff] %v1547
      %1612 = vst [vmem:[#allocation6 + $0x1b0] sm:$0xff] %v1548
      %1613 = vst [vmem:[#allocation6 + $0x1b8] sm:$0xff] %v1549
      %1614 = vst [vmem:[#allocation6 + $0x1c0] sm:$0xff] %v1550
      %1615 = vst [vmem:[#allocation6 + $0x1c8] sm:$0xff] %v1551
      %1616 = vst [vmem:[#allocation6 + $0x1d0] sm:$0xff] %v1552
      %1617 = vst [vmem:[#allocation6 + $0x1d8] sm:$0xff] %v1553
      %1618 = vst [vmem:[#allocation6 + $0x1e0] sm:$0xff] %v1554
      %1619 = vst [vmem:[#allocation6 + $0x1e8] sm:$0xff] %v1555
      %1620 = vst [vmem:[#allocation6 + $0x1f0] sm:$0xff] %v1556
      %1621 = vst [vmem:[#allocation6 + $0x1f8] sm:$0xff] %v1557
      %v1622 = vld [vmem:[%s544] sm:$0xff]
      %v1623 = vld [vmem:[%s544 + $0x8] sm:$0xff]
      %v1624 = vld [vmem:[%s544 + $0x10] sm:$0xff]
      %v1625 = vld [vmem:[%s544 + $0x18] sm:$0xff]
      %v1626 = vld [vmem:[%s544 + $0x20] sm:$0xff]
      %v1627 = vld [vmem:[%s544 + $0x28] sm:$0xff]
      %v1628 = vld [vmem:[%s544 + $0x30] sm:$0xff]
      %v1629 = vld [vmem:[%s544 + $0x38] sm:$0xff]
      %v1630 = vld [vmem:[%s544 + $0x40] sm:$0xff]
      %v1631 = vld [vmem:[%s544 + $0x48] sm:$0xff]
      %v1632 = vld [vmem:[%s544 + $0x50] sm:$0xff]
      %v1633 = vld [vmem:[%s544 + $0x58] sm:$0xff]
      %v1634 = vld [vmem:[%s544 + $0x60] sm:$0xff]
      %v1635 = vld [vmem:[%s544 + $0x68] sm:$0xff]
      %v1636 = vld [vmem:[%s544 + $0x70] sm:$0xff]
      %v1637 = vld [vmem:[%s544 + $0x78] sm:$0xff]
      %v1638 = vld [vmem:[#allocation6] sm:$0xff]
      %v1639 = vld [vmem:[#allocation6 + $0x8] sm:$0xff]
      %v1640 = vld [vmem:[#allocation6 + $0x10] sm:$0xff]
      %v1641 = vld [vmem:[#allocation6 + $0x18] sm:$0xff]
      %v1642 = vld [vmem:[#allocation6 + $0x20] sm:$0xff]
      %v1643 = vld [vmem:[#allocation6 + $0x28] sm:$0xff]
      %v1644 = vld [vmem:[#allocation6 + $0x30] sm:$0xff]
      %v1645 = vld [vmem:[#allocation6 + $0x38] sm:$0xff]
      %v1646 = vld [vmem:[#allocation6 + $0x40] sm:$0xff]
      %v1647 = vld [vmem:[#allocation6 + $0x48] sm:$0xff]
      %v1648 = vld [vmem:[#allocation6 + $0x50] sm:$0xff]
      %v1649 = vld [vmem:[#allocation6 + $0x58] sm:$0xff]
      %v1650 = vld [vmem:[#allocation6 + $0x60] sm:$0xff]
      %v1651 = vld [vmem:[#allocation6 + $0x68] sm:$0xff]
      %v1652 = vld [vmem:[#allocation6 + $0x70] sm:$0xff]
      %v1653 = vld [vmem:[#allocation6 + $0x78] sm:$0xff]
      %v1654 = vld [vmem:[#allocation6 + $0x80] sm:$0xff]
      %v1655 = vld [vmem:[#allocation6 + $0x88] sm:$0xff]
      %v1656 = vld [vmem:[#allocation6 + $0x90] sm:$0xff]
      %v1657 = vld [vmem:[#allocation6 + $0x98] sm:$0xff]
      %v1658 = vld [vmem:[#allocation6 + $0xa0] sm:$0xff]
      %v1659 = vld [vmem:[#allocation6 + $0xa8] sm:$0xff]
      %v1660 = vld [vmem:[#allocation6 + $0xb0] sm:$0xff]
      %v1661 = vld [vmem:[#allocation6 + $0xb8] sm:$0xff]
      %v1662 = vld [vmem:[#allocation6 + $0xc0] sm:$0xff]
      %v1663 = vld [vmem:[#allocation6 + $0xc8] sm:$0xff]
      %v1664 = vld [vmem:[#allocation6 + $0xd0] sm:$0xff]
      %v1665 = vld [vmem:[#allocation6 + $0xd8] sm:$0xff]
      %v1666 = vld [vmem:[#allocation6 + $0xe0] sm:$0xff]
      %v1667 = vld [vmem:[#allocation6 + $0xe8] sm:$0xff]
      %v1668 = vld [vmem:[#allocation6 + $0xf0] sm:$0xff]
      %v1669 = vld [vmem:[#allocation6 + $0xf8] sm:$0xff]
      %v1670 = vld [vmem:[#allocation6 + $0x100] sm:$0xff]
      %v1671 = vld [vmem:[#allocation6 + $0x108] sm:$0xff]
      %v1672 = vld [vmem:[#allocation6 + $0x110] sm:$0xff]
      %v1673 = vld [vmem:[#allocation6 + $0x118] sm:$0xff]
      %v1674 = vld [vmem:[#allocation6 + $0x120] sm:$0xff]
      %v1675 = vld [vmem:[#allocation6 + $0x128] sm:$0xff]
      %v1676 = vld [vmem:[#allocation6 + $0x130] sm:$0xff]
      %v1677 = vld [vmem:[#allocation6 + $0x138] sm:$0xff]
      %v1678 = vld [vmem:[#allocation6 + $0x140] sm:$0xff]
      %v1679 = vld [vmem:[#allocation6 + $0x148] sm:$0xff]
      %v1680 = vld [vmem:[#allocation6 + $0x150] sm:$0xff]
      %v1681 = vld [vmem:[#allocation6 + $0x158] sm:$0xff]
      %v1682 = vld [vmem:[#allocation6 + $0x160] sm:$0xff]
      %v1683 = vld [vmem:[#allocation6 + $0x168] sm:$0xff]
      %v1684 = vld [vmem:[#allocation6 + $0x170] sm:$0xff]
      %v1685 = vld [vmem:[#allocation6 + $0x178] sm:$0xff]
      %v1686 = vld [vmem:[#allocation6 + $0x180] sm:$0xff]
      %v1687 = vld [vmem:[#allocation6 + $0x188] sm:$0xff]
      %v1688 = vld [vmem:[#allocation6 + $0x190] sm:$0xff]
      %v1689 = vld [vmem:[#allocation6 + $0x198] sm:$0xff]
      %v1690 = vld [vmem:[#allocation6 + $0x1a0] sm:$0xff]
      %v1691 = vld [vmem:[#allocation6 + $0x1a8] sm:$0xff]
      %v1692 = vld [vmem:[#allocation6 + $0x1b0] sm:$0xff]
      %v1693 = vld [vmem:[#allocation6 + $0x1b8] sm:$0xff]
      %v1694 = vld [vmem:[#allocation6 + $0x1c0] sm:$0xff]
      %v1695 = vld [vmem:[#allocation6 + $0x1c8] sm:$0xff]
      %v1696 = vld [vmem:[#allocation6 + $0x1d0] sm:$0xff]
      %v1697 = vld [vmem:[#allocation6 + $0x1d8] sm:$0xff]
      %v1698 = vld [vmem:[#allocation6 + $0x1e0] sm:$0xff]
      %v1699 = vld [vmem:[#allocation6 + $0x1e8] sm:$0xff]
      %v1700 = vld [vmem:[#allocation6 + $0x1f0] sm:$0xff]
      %v1701 = vld [vmem:[#allocation6 + $0x1f8] sm:$0xff]
      %s1702 = scalar_lea.vmem %s1, 256
      %v1703 = vld [vmem:[%s1702] sm:$0xff]
      %v1704 = vld [vmem:[%s1702 + $0x8] sm:$0xff]
      %v1705 = vld [vmem:[%s1702 + $0x10] sm:$0xff]
      %v1706 = vld [vmem:[%s1702 + $0x18] sm:$0xff]
      %v1707 = vld [vmem:[%s1702 + $0x20] sm:$0xff]
      %v1708 = vld [vmem:[%s1702 + $0x28] sm:$0xff]
      %v1709 = vld [vmem:[%s1702 + $0x30] sm:$0xff]
      %v1710 = vld [vmem:[%s1702 + $0x38] sm:$0xff]
      %v1711 = vld [vmem:[%s1702 + $0x40] sm:$0xff]
      %v1712 = vld [vmem:[%s1702 + $0x48] sm:$0xff]
      %v1713 = vld [vmem:[%s1702 + $0x50] sm:$0xff]
      %v1714 = vld [vmem:[%s1702 + $0x58] sm:$0xff]
      %v1715 = vld [vmem:[%s1702 + $0x60] sm:$0xff]
      %v1716 = vld [vmem:[%s1702 + $0x68] sm:$0xff]
      %v1717 = vld [vmem:[%s1702 + $0x70] sm:$0xff]
      %v1718 = vld [vmem:[%s1702 + $0x78] sm:$0xff]
      %v1735 = vunpack.c.l.b16 %v1703
      %v1736 = vunpack.c.h.b16 %v1703
      %v1737 = vunpack.c.l.b16 %v1704
      %v1738 = vunpack.c.h.b16 %v1704
      %v1739 = vunpack.c.l.b16 %v1705
      %v1740 = vunpack.c.h.b16 %v1705
      %v1741 = vunpack.c.l.b16 %v1706
      %v1742 = vunpack.c.h.b16 %v1706
      %v1743 = vunpack.c.l.b16 %v1707
      %v1744 = vunpack.c.h.b16 %v1707
      %v1745 = vunpack.c.l.b16 %v1708
      %v1746 = vunpack.c.h.b16 %v1708
      %v1747 = vunpack.c.l.b16 %v1709
      %v1748 = vunpack.c.h.b16 %v1709
      %v1749 = vunpack.c.l.b16 %v1710
      %v1750 = vunpack.c.h.b16 %v1710
      %v1751 = vunpack.c.l.b16 %v1711
      %v1752 = vunpack.c.h.b16 %v1711
      %v1753 = vunpack.c.l.b16 %v1712
      %v1754 = vunpack.c.h.b16 %v1712
      %v1755 = vunpack.c.l.b16 %v1713
      %v1756 = vunpack.c.h.b16 %v1713
      %v1757 = vunpack.c.l.b16 %v1714
      %v1758 = vunpack.c.h.b16 %v1714
      %v1759 = vunpack.c.l.b16 %v1715
      %v1760 = vunpack.c.h.b16 %v1715
      %v1761 = vunpack.c.l.b16 %v1716
      %v1762 = vunpack.c.h.b16 %v1716
      %v1763 = vunpack.c.l.b16 %v1717
      %v1764 = vunpack.c.h.b16 %v1717
      %v1765 = vunpack.c.l.b16 %v1718
      %v1766 = vunpack.c.h.b16 %v1718
      %v1767 = vpack.c.b16 %v1737, %v1735
      %v1768 = vpack.c.b16 %v1738, %v1736
      %v1769 = vpack.c.b16 %v1741, %v1739
      %v1770 = vpack.c.b16 %v1742, %v1740
      %v1771 = vpack.c.b16 %v1745, %v1743
      %v1772 = vpack.c.b16 %v1746, %v1744
      %v1773 = vpack.c.b16 %v1749, %v1747
      %v1774 = vpack.c.b16 %v1750, %v1748
      %v1775 = vpack.c.b16 %v1753, %v1751
      %v1776 = vpack.c.b16 %v1754, %v1752
      %v1777 = vpack.c.b16 %v1757, %v1755
      %v1778 = vpack.c.b16 %v1758, %v1756
      %v1779 = vpack.c.b16 %v1761, %v1759
      %v1780 = vpack.c.b16 %v1762, %v1760
      %v1781 = vpack.c.b16 %v1765, %v1763
      %v1782 = vpack.c.b16 %v1766, %v1764
      %1799 = vmatprep.subr.bf16.mxu0 %v1768
      %1800 = vmatpush1.bf16.msra.mxu0 %v1767
      %1801 = vmatprep.subr.bf16.mxu0 %v1770
      %1802 = vmatpush1.bf16.msra.mxu0 %v1769
      %1803 = vmatprep.subr.bf16.mxu0 %v1772
      %1804 = vmatpush1.bf16.msra.mxu0 %v1771
      %1805 = vmatprep.subr.bf16.mxu0 %v1774
      %1806 = vmatpush1.bf16.msra.mxu0 %v1773
      %1807 = vmatprep.subr.bf16.mxu0 %v1776
      %1808 = vmatpush1.bf16.msra.mxu0 %v1775
      %1809 = vmatprep.subr.bf16.mxu0 %v1778
      %1810 = vmatpush1.bf16.msra.mxu0 %v1777
      %1811 = vmatprep.subr.bf16.mxu0 %v1780
      %1812 = vmatpush1.bf16.msra.mxu0 %v1779
      %1813 = vmatprep.subr.bf16.mxu0 %v1782
      %1814 = vmatpush1.bf16.msra.mxu0 %v1781
      %1815 = vmatprep.subr.bf16.mxu0 0
      %1816 = vmatpush1.bf16.msra.mxu0 0
      %1817 = vmatprep.subr.bf16.mxu0 0
      %1818 = vmatpush1.bf16.msra.mxu0 0
      %1819 = vmatprep.subr.bf16.mxu0 0
      %1820 = vmatpush1.bf16.msra.mxu0 0
      %1821 = vmatprep.subr.bf16.mxu0 0
      %1822 = vmatpush1.bf16.msra.mxu0 0
      %1823 = vmatprep.subr.bf16.mxu0 0
      %1824 = vmatpush1.bf16.msra.mxu0 0
      %1825 = vmatprep.subr.bf16.mxu0 0
      %1826 = vmatpush1.bf16.msra.mxu0 0
      %1827 = vmatprep.subr.bf16.mxu0 0
      %1828 = vmatpush1.bf16.msra.mxu0 0
      %1829 = vmatprep.subr.bf16.mxu0 0
      %1830 = vmatpush1.bf16.msra.mxu0 0
      %1831 = vmatprep.mubr.bf16.mxu0 0
      %1832 = vmatmul.mubr.bf16.gmra.mrb[0].mxu0 %v1622
      %v1833 = vpop.f32.mrb[0].mxu0
      %v1834 = vadd.f32 0.0, %v1833
      %v1835 = vpop.f32.mrb[0].mxu0
      %v1836 = vadd.f32 0.0, %v1835
      %v1837 = vpop.f32.mrb[0].mxu0
      %v1838 = vadd.f32 0.0, %v1837
      %v1839 = vpop.f32.mrb[0].mxu0
      %v1840 = vadd.f32 0.0, %v1839
      %1841 = vmatprep.mubr.bf16.mxu0 0
      %1842 = vmatmul.mubr.bf16.gmra.mrb[0].mxu0 %v1623
      %v1843 = vpop.f32.mrb[0].mxu0
      %v1844 = vadd.f32 0.0, %v1843
      %v1845 = vpop.f32.mrb[0].mxu0
      %v1846 = vadd.f32 0.0, %v1845
      %v1847 = vpop.f32.mrb[0].mxu0
      %v1848 = vadd.f32 0.0, %v1847
      %v1849 = vpop.f32.mrb[0].mxu0
      %v1850 = vadd.f32 0.0, %v1849
      %1851 = vmatprep.mubr.bf16.mxu0 0
      %1852 = vmatmul.mubr.bf16.gmra.mrb[0].mxu0 %v1624
      %v1853 = vpop.f32.mrb[0].mxu0
      %v1854 = vadd.f32 0.0, %v1853
      %v1855 = vpop.f32.mrb[0].mxu0
      %v1856 = vadd.f32 0.0, %v1855
      %v1857 = vpop.f32.mrb[0].mxu0
      %v1858 = vadd.f32 0.0, %v1857
      %v1859 = vpop.f32.mrb[0].mxu0
      %v1860 = vadd.f32 0.0, %v1859
      %1861 = vmatprep.mubr.bf16.mxu0 0
      %1862 = vmatmul.mubr.bf16.gmra.mrb[0].mxu0 %v1625
      %v1863 = vpop.f32.mrb[0].mxu0
      %v1864 = vadd.f32 0.0, %v1863
      %v1865 = vpop.f32.mrb[0].mxu0
      %v1866 = vadd.f32 0.0, %v1865
      %v1867 = vpop.f32.mrb[0].mxu0
      %v1868 = vadd.f32 0.0, %v1867
      %v1869 = vpop.f32.mrb[0].mxu0
      %v1870 = vadd.f32 0.0, %v1869
      %1871 = vmatprep.mubr.bf16.mxu0 0
      %1872 = vmatmul.mubr.bf16.gmra.mrb[0].mxu0 %v1626
      %v1873 = vpop.f32.mrb[0].mxu0
      %v1874 = vadd.f32 0.0, %v1873
      %v1875 = vpop.f32.mrb[0].mxu0
      %v1876 = vadd.f32 0.0, %v1875
      %v1877 = vpop.f32.mrb[0].mxu0
      %v1878 = vadd.f32 0.0, %v1877
      %v1879 = vpop.f32.mrb[0].mxu0
      %v1880 = vadd.f32 0.0, %v1879
      %1881 = vmatprep.mubr.bf16.mxu0 0
      %1882 = vmatmul.mubr.bf16.gmra.mrb[0].mxu0 %v1627
      %v1883 = vpop.f32.mrb[0].mxu0
      %v1884 = vadd.f32 0.0, %v1883
      %v1885 = vpop.f32.mrb[0].mxu0
      %v1886 = vadd.f32 0.0, %v1885
      %v1887 = vpop.f32.mrb[0].mxu0
      %v1888 = vadd.f32 0.0, %v1887
      %v1889 = vpop.f32.mrb[0].mxu0
      %v1890 = vadd.f32 0.0, %v1889
      %1891 = vmatprep.mubr.bf16.mxu0 0
      %1892 = vmatmul.mubr.bf16.gmra.mrb[0].mxu0 %v1628
      %v1893 = vpop.f32.mrb[0].mxu0
      %v1894 = vadd.f32 0.0, %v1893
      %v1895 = vpop.f32.mrb[0].mxu0
      %v1896 = vadd.f32 0.0, %v1895
      %v1897 = vpop.f32.mrb[0].mxu0
      %v1898 = vadd.f32 0.0, %v1897
      %v1899 = vpop.f32.mrb[0].mxu0
      %v1900 = vadd.f32 0.0, %v1899
      %1901 = vmatprep.mubr.bf16.mxu0 0
      %1902 = vmatmul.mubr.bf16.gmra.mrb[0].mxu0 %v1629
      %v1903 = vpop.f32.mrb[0].mxu0
      %v1904 = vadd.f32 0.0, %v1903
      %v1905 = vpop.f32.mrb[0].mxu0
      %v1906 = vadd.f32 0.0, %v1905
      %v1907 = vpop.f32.mrb[0].mxu0
      %v1908 = vadd.f32 0.0, %v1907
      %v1909 = vpop.f32.mrb[0].mxu0
      %v1910 = vadd.f32 0.0, %v1909
      %1911 = vmatprep.mubr.bf16.mxu0 0
      %1912 = vmatmul.mubr.bf16.gmra.mrb[0].mxu0 %v1630
      %v1913 = vpop.f32.mrb[0].mxu0
      %v1914 = vadd.f32 0.0, %v1913
      %v1915 = vpop.f32.mrb[0].mxu0
      %v1916 = vadd.f32 0.0, %v1915
      %v1917 = vpop.f32.mrb[0].mxu0
      %v1918 = vadd.f32 0.0, %v1917
      %v1919 = vpop.f32.mrb[0].mxu0
      %v1920 = vadd.f32 0.0, %v1919
      %1921 = vmatprep.mubr.bf16.mxu0 0
      %1922 = vmatmul.mubr.bf16.gmra.mrb[0].mxu0 %v1631
      %v1923 = vpop.f32.mrb[0].mxu0
      %v1924 = vadd.f32 0.0, %v1923
      %v1925 = vpop.f32.mrb[0].mxu0
      %v1926 = vadd.f32 0.0, %v1925
      %v1927 = vpop.f32.mrb[0].mxu0
      %v1928 = vadd.f32 0.0, %v1927
      %v1929 = vpop.f32.mrb[0].mxu0
      %v1930 = vadd.f32 0.0, %v1929
      %1931 = vmatprep.mubr.bf16.mxu0 0
      %1932 = vmatmul.mubr.bf16.gmra.mrb[0].mxu0 %v1632
      %v1933 = vpop.f32.mrb[0].mxu0
      %v1934 = vadd.f32 0.0, %v1933
      %v1935 = vpop.f32.mrb[0].mxu0
      %v1936 = vadd.f32 0.0, %v1935
      %v1937 = vpop.f32.mrb[0].mxu0
      %v1938 = vadd.f32 0.0, %v1937
      %v1939 = vpop.f32.mrb[0].mxu0
      %v1940 = vadd.f32 0.0, %v1939
      %1941 = vmatprep.mubr.bf16.mxu0 0
      %1942 = vmatmul.mubr.bf16.gmra.mrb[0].mxu0 %v1633
      %v1943 = vpop.f32.mrb[0].mxu0
      %v1944 = vadd.f32 0.0, %v1943
      %v1945 = vpop.f32.mrb[0].mxu0
      %v1946 = vadd.f32 0.0, %v1945
      %v1947 = vpop.f32.mrb[0].mxu0
      %v1948 = vadd.f32 0.0, %v1947
      %v1949 = vpop.f32.mrb[0].mxu0
      %v1950 = vadd.f32 0.0, %v1949
      %1951 = vmatprep.mubr.bf16.mxu0 0
      %1952 = vmatmul.mubr.bf16.gmra.mrb[0].mxu0 %v1634
      %v1953 = vpop.f32.mrb[0].mxu0
      %v1954 = vadd.f32 0.0, %v1953
      %v1955 = vpop.f32.mrb[0].mxu0
      %v1956 = vadd.f32 0.0, %v1955
      %v1957 = vpop.f32.mrb[0].mxu0
      %v1958 = vadd.f32 0.0, %v1957
      %v1959 = vpop.f32.mrb[0].mxu0
      %v1960 = vadd.f32 0.0, %v1959
      %1961 = vmatprep.mubr.bf16.mxu0 0
      %1962 = vmatmul.mubr.bf16.gmra.mrb[0].mxu0 %v1635
      %v1963 = vpop.f32.mrb[0].mxu0
      %v1964 = vadd.f32 0.0, %v1963
      %v1965 = vpop.f32.mrb[0].mxu0
      %v1966 = vadd.f32 0.0, %v1965
      %v1967 = vpop.f32.mrb[0].mxu0
      %v1968 = vadd.f32 0.0, %v1967
      %v1969 = vpop.f32.mrb[0].mxu0
      %v1970 = vadd.f32 0.0, %v1969
      %1971 = vmatprep.mubr.bf16.mxu0 0
      %1972 = vmatmul.mubr.bf16.gmra.mrb[0].mxu0 %v1636
      %v1973 = vpop.f32.mrb[0].mxu0
      %v1974 = vadd.f32 0.0, %v1973
      %v1975 = vpop.f32.mrb[0].mxu0
      %v1976 = vadd.f32 0.0, %v1975
      %v1977 = vpop.f32.mrb[0].mxu0
      %v1978 = vadd.f32 0.0, %v1977
      %v1979 = vpop.f32.mrb[0].mxu0
      %v1980 = vadd.f32 0.0, %v1979
      %1981 = vmatprep.mubr.bf16.mxu0 0
      %1982 = vmatmul.mubr.bf16.gmra.mrb[0].mxu0 %v1637
      %v1983 = vpop.f32.mrb[0].mxu0
      %v1984 = vadd.f32 0.0, %v1983
      %v1985 = vpop.f32.mrb[0].mxu0
      %v1986 = vadd.f32 0.0, %v1985
      %v1987 = vpop.f32.mrb[0].mxu0
      %v1988 = vadd.f32 0.0, %v1987
      %v1989 = vpop.f32.mrb[0].mxu0
      %v1990 = vadd.f32 0.0, %v1989
      %1991 = vdwg.mxu0
      %v1992 = vadd.f32 %v1638, %v1834
      %v1993 = vadd.f32 %v1639, %v1836
      %v1994 = vadd.f32 %v1640, %v1838
      %v1995 = vadd.f32 %v1641, %v1840
      %v1996 = vadd.f32 %v1642, %v1844
      %v1997 = vadd.f32 %v1643, %v1846
      %v1998 = vadd.f32 %v1644, %v1848
      %v1999 = vadd.f32 %v1645, %v1850
      %v2000 = vadd.f32 %v1646, %v1854
      %v2001 = vadd.f32 %v1647, %v1856
      %v2002 = vadd.f32 %v1648, %v1858
      %v2003 = vadd.f32 %v1649, %v1860
      %v2004 = vadd.f32 %v1650, %v1864
      %v2005 = vadd.f32 %v1651, %v1866
      %v2006 = vadd.f32 %v1652, %v1868
      %v2007 = vadd.f32 %v1653, %v1870
      %v2008 = vadd.f32 %v1654, %v1874
      %v2009 = vadd.f32 %v1655, %v1876
      %v2010 = vadd.f32 %v1656, %v1878
      %v2011 = vadd.f32 %v1657, %v1880
      %v2012 = vadd.f32 %v1658, %v1884
      %v2013 = vadd.f32 %v1659, %v1886
      %v2014 = vadd.f32 %v1660, %v1888
      %v2015 = vadd.f32 %v1661, %v1890
      %v2016 = vadd.f32 %v1662, %v1894
      %v2017 = vadd.f32 %v1663, %v1896
      %v2018 = vadd.f32 %v1664, %v1898
      %v2019 = vadd.f32 %v1665, %v1900
      %v2020 = vadd.f32 %v1666, %v1904
      %v2021 = vadd.f32 %v1667, %v1906
      %v2022 = vadd.f32 %v1668, %v1908
      %v2023 = vadd.f32 %v1669, %v1910
      %v2024 = vadd.f32 %v1670, %v1914
      %v2025 = vadd.f32 %v1671, %v1916
      %v2026 = vadd.f32 %v1672, %v1918
      %v2027 = vadd.f32 %v1673, %v1920
      %v2028 = vadd.f32 %v1674, %v1924
      %v2029 = vadd.f32 %v1675, %v1926
      %v2030 = vadd.f32 %v1676, %v1928
      %v2031 = vadd.f32 %v1677, %v1930
      %v2032 = vadd.f32 %v1678, %v1934
      %v2033 = vadd.f32 %v1679, %v1936
      %v2034 = vadd.f32 %v1680, %v1938
      %v2035 = vadd.f32 %v1681, %v1940
      %v2036 = vadd.f32 %v1682, %v1944
      %v2037 = vadd.f32 %v1683, %v1946
      %v2038 = vadd.f32 %v1684, %v1948
      %v2039 = vadd.f32 %v1685, %v1950
      %v2040 = vadd.f32 %v1686, %v1954
      %v2041 = vadd.f32 %v1687, %v1956
      %v2042 = vadd.f32 %v1688, %v1958
      %v2043 = vadd.f32 %v1689, %v1960
      %v2044 = vadd.f32 %v1690, %v1964
      %v2045 = vadd.f32 %v1691, %v1966
      %v2046 = vadd.f32 %v1692, %v1968
      %v2047 = vadd.f32 %v1693, %v1970
      %v2048 = vadd.f32 %v1694, %v1974
      %v2049 = vadd.f32 %v1695, %v1976
      %v2050 = vadd.f32 %v1696, %v1978
      %v2051 = vadd.f32 %v1697, %v1980
      %v2052 = vadd.f32 %v1698, %v1984
      %v2053 = vadd.f32 %v1699, %v1986
      %v2054 = vadd.f32 %v1700, %v1988
      %v2055 = vadd.f32 %v1701, %v1990
      %2056 = vst [vmem:[#allocation6] sm:$0xff] %v1992
      %2057 = vst [vmem:[#allocation6 + $0x8] sm:$0xff] %v1993
      %2058 = vst [vmem:[#allocation6 + $0x10] sm:$0xff] %v1994
      %2059 = vst [vmem:[#allocation6 + $0x18] sm:$0xff] %v1995
      %2060 = vst [vmem:[#allocation6 + $0x20] sm:$0xff] %v1996
      %2061 = vst [vmem:[#allocation6 + $0x28] sm:$0xff] %v1997
      %2062 = vst [vmem:[#allocation6 + $0x30] sm:$0xff] %v1998
      %2063 = vst [vmem:[#allocation6 + $0x38] sm:$0xff] %v1999
      %2064 = vst [vmem:[#allocation6 + $0x40] sm:$0xff] %v2000
      %2065 = vst [vmem:[#allocation6 + $0x48] sm:$0xff] %v2001
      %2066 = vst [vmem:[#allocation6 + $0x50] sm:$0xff] %v2002
      %2067 = vst [vmem:[#allocation6 + $0x58] sm:$0xff] %v2003
      %2068 = vst [vmem:[#allocation6 + $0x60] sm:$0xff] %v2004
      %2069 = vst [vmem:[#allocation6 + $0x68] sm:$0xff] %v2005
      %2070 = vst [vmem:[#allocation6 + $0x70] sm:$0xff] %v2006
      %2071 = vst [vmem:[#allocation6 + $0x78] sm:$0xff] %v2007
      %2072 = vst [vmem:[#allocation6 + $0x80] sm:$0xff] %v2008
      %2073 = vst [vmem:[#allocation6 + $0x88] sm:$0xff] %v2009
      %2074 = vst [vmem:[#allocation6 + $0x90] sm:$0xff] %v2010
      %2075 = vst [vmem:[#allocation6 + $0x98] sm:$0xff] %v2011
      %2076 = vst [vmem:[#allocation6 + $0xa0] sm:$0xff] %v2012
      %2077 = vst [vmem:[#allocation6 + $0xa8] sm:$0xff] %v2013
      %2078 = vst [vmem:[#allocation6 + $0xb0] sm:$0xff] %v2014
      %2079 = vst [vmem:[#allocation6 + $0xb8] sm:$0xff] %v2015
      %2080 = vst [vmem:[#allocation6 + $0xc0] sm:$0xff] %v2016
      %2081 = vst [vmem:[#allocation6 + $0xc8] sm:$0xff] %v2017
      %2082 = vst [vmem:[#allocation6 + $0xd0] sm:$0xff] %v2018
      %2083 = vst [vmem:[#allocation6 + $0xd8] sm:$0xff] %v2019
      %2084 = vst [vmem:[#allocation6 + $0xe0] sm:$0xff] %v2020
      %2085 = vst [vmem:[#allocation6 + $0xe8] sm:$0xff] %v2021
      %2086 = vst [vmem:[#allocation6 + $0xf0] sm:$0xff] %v2022
      %2087 = vst [vmem:[#allocation6 + $0xf8] sm:$0xff] %v2023
      %2088 = vst [vmem:[#allocation6 + $0x100] sm:$0xff] %v2024
      %2089 = vst [vmem:[#allocation6 + $0x108] sm:$0xff] %v2025
      %2090 = vst [vmem:[#allocation6 + $0x110] sm:$0xff] %v2026
      %2091 = vst [vmem:[#allocation6 + $0x118] sm:$0xff] %v2027
      %2092 = vst [vmem:[#allocation6 + $0x120] sm:$0xff] %v2028
      %2093 = vst [vmem:[#allocation6 + $0x128] sm:$0xff] %v2029
      %2094 = vst [vmem:[#allocation6 + $0x130] sm:$0xff] %v2030
      %2095 = vst [vmem:[#allocation6 + $0x138] sm:$0xff] %v2031
      %2096 = vst [vmem:[#allocation6 + $0x140] sm:$0xff] %v2032
      %2097 = vst [vmem:[#allocation6 + $0x148] sm:$0xff] %v2033
      %2098 = vst [vmem:[#allocation6 + $0x150] sm:$0xff] %v2034
      %2099 = vst [vmem:[#allocation6 + $0x158] sm:$0xff] %v2035
      %2100 = vst [vmem:[#allocation6 + $0x160] sm:$0xff] %v2036
      %2101 = vst [vmem:[#allocation6 + $0x168] sm:$0xff] %v2037
      %2102 = vst [vmem:[#allocation6 + $0x170] sm:$0xff] %v2038
      %2103 = vst [vmem:[#allocation6 + $0x178] sm:$0xff] %v2039
      %2104 = vst [vmem:[#allocation6 + $0x180] sm:$0xff] %v2040
      %2105 = vst [vmem:[#allocation6 + $0x188] sm:$0xff] %v2041
      %2106 = vst [vmem:[#allocation6 + $0x190] sm:$0xff] %v2042
      %2107 = vst [vmem:[#allocation6 + $0x198] sm:$0xff] %v2043
      %2108 = vst [vmem:[#allocation6 + $0x1a0] sm:$0xff] %v2044
      %2109 = vst [vmem:[#allocation6 + $0x1a8] sm:$0xff] %v2045
      %2110 = vst [vmem:[#allocation6 + $0x1b0] sm:$0xff] %v2046
      %2111 = vst [vmem:[#allocation6 + $0x1b8] sm:$0xff] %v2047
      %2112 = vst [vmem:[#allocation6 + $0x1c0] sm:$0xff] %v2048
      %2113 = vst [vmem:[#allocation6 + $0x1c8] sm:$0xff] %v2049
      %2114 = vst [vmem:[#allocation6 + $0x1d0] sm:$0xff] %v2050
      %2115 = vst [vmem:[#allocation6 + $0x1d8] sm:$0xff] %v2051
      %2116 = vst [vmem:[#allocation6 + $0x1e0] sm:$0xff] %v2052
      %2117 = vst [vmem:[#allocation6 + $0x1e8] sm:$0xff] %v2053
      %2118 = vst [vmem:[#allocation6 + $0x1f0] sm:$0xff] %v2054
      %2119 = vst [vmem:[#allocation6 + $0x1f8] sm:$0xff] %v2055
      %s2120 = scalar_lea.vmem [#allocation3], 8
      %v2121 = vld [vmem:[%s2120] sm:$0xff]
      %v2122 = vld [vmem:[%s2120 + $0x8] sm:$0xff]
      %v2123 = vld [vmem:[%s2120 + $0x10] sm:$0xff]
      %v2124 = vld [vmem:[%s2120 + $0x18] sm:$0xff]
      %v2125 = vld [vmem:[%s2120 + $0x20] sm:$0xff]
      %v2126 = vld [vmem:[%s2120 + $0x28] sm:$0xff]
      %v2127 = vld [vmem:[%s2120 + $0x30] sm:$0xff]
      %v2128 = vld [vmem:[%s2120 + $0x38] sm:$0xff]
      %v2129 = vld [vmem:[%s2120 + $0x40] sm:$0xff]
      %v2130 = vld [vmem:[%s2120 + $0x48] sm:$0xff]
      %v2131 = vld [vmem:[%s2120 + $0x50] sm:$0xff]
      %v2132 = vld [vmem:[%s2120 + $0x58] sm:$0xff]
      %v2133 = vld [vmem:[%s2120 + $0x60] sm:$0xff]
      %v2134 = vld [vmem:[%s2120 + $0x68] sm:$0xff]
      %v2135 = vld [vmem:[%s2120 + $0x70] sm:$0xff]
      %v2136 = vld [vmem:[%s2120 + $0x78] sm:$0xff]
      %v2137 = vld [vmem:[#allocation6] sm:$0xff]
      %v2138 = vld [vmem:[#allocation6 + $0x8] sm:$0xff]
      %v2139 = vld [vmem:[#allocation6 + $0x10] sm:$0xff]
      %v2140 = vld [vmem:[#allocation6 + $0x18] sm:$0xff]
      %v2141 = vld [vmem:[#allocation6 + $0x20] sm:$0xff]
      %v2142 = vld [vmem:[#allocation6 + $0x28] sm:$0xff]
      %v2143 = vld [vmem:[#allocation6 + $0x30] sm:$0xff]
      %v2144 = vld [vmem:[#allocation6 + $0x38] sm:$0xff]
      %v2145 = vld [vmem:[#allocation6 + $0x40] sm:$0xff]
      %v2146 = vld [vmem:[#allocation6 + $0x48] sm:$0xff]
      %v2147 = vld [vmem:[#allocation6 + $0x50] sm:$0xff]
      %v2148 = vld [vmem:[#allocation6 + $0x58] sm:$0xff]
      %v2149 = vld [vmem:[#allocation6 + $0x60] sm:$0xff]
      %v2150 = vld [vmem:[#allocation6 + $0x68] sm:$0xff]
      %v2151 = vld [vmem:[#allocation6 + $0x70] sm:$0xff]
      %v2152 = vld [vmem:[#allocation6 + $0x78] sm:$0xff]
      %v2153 = vld [vmem:[#allocation6 + $0x80] sm:$0xff]
      %v2154 = vld [vmem:[#allocation6 + $0x88] sm:$0xff]
      %v2155 = vld [vmem:[#allocation6 + $0x90] sm:$0xff]
      %v2156 = vld [vmem:[#allocation6 + $0x98] sm:$0xff]
      %v2157 = vld [vmem:[#allocation6 + $0xa0] sm:$0xff]
      %v2158 = vld [vmem:[#allocation6 + $0xa8] sm:$0xff]
      %v2159 = vld [vmem:[#allocation6 + $0xb0] sm:$0xff]
      %v2160 = vld [vmem:[#allocation6 + $0xb8] sm:$0xff]
      %v2161 = vld [vmem:[#allocation6 + $0xc0] sm:$0xff]
      %v2162 = vld [vmem:[#allocation6 + $0xc8] sm:$0xff]
      %v2163 = vld [vmem:[#allocation6 + $0xd0] sm:$0xff]
      %v2164 = vld [vmem:[#allocation6 + $0xd8] sm:$0xff]
      %v2165 = vld [vmem:[#allocation6 + $0xe0] sm:$0xff]
      %v2166 = vld [vmem:[#allocation6 + $0xe8] sm:$0xff]
      %v2167 = vld [vmem:[#allocation6 + $0xf0] sm:$0xff]
      %v2168 = vld [vmem:[#allocation6 + $0xf8] sm:$0xff]
      %v2169 = vld [vmem:[#allocation6 + $0x100] sm:$0xff]
      %v2170 = vld [vmem:[#allocation6 + $0x108] sm:$0xff]
      %v2171 = vld [vmem:[#allocation6 + $0x110] sm:$0xff]
      %v2172 = vld [vmem:[#allocation6 + $0x118] sm:$0xff]
      %v2173 = vld [vmem:[#allocation6 + $0x120] sm:$0xff]
      %v2174 = vld [vmem:[#allocation6 + $0x128] sm:$0xff]
      %v2175 = vld [vmem:[#allocation6 + $0x130] sm:$0xff]
      %v2176 = vld [vmem:[#allocation6 + $0x138] sm:$0xff]
      %v2177 = vld [vmem:[#allocation6 + $0x140] sm:$0xff]
      %v2178 = vld [vmem:[#allocation6 + $0x148] sm:$0xff]
      %v2179 = vld [vmem:[#allocation6 + $0x150] sm:$0xff]
      %v2180 = vld [vmem:[#allocation6 + $0x158] sm:$0xff]
      %v2181 = vld [vmem:[#allocation6 + $0x160] sm:$0xff]
      %v2182 = vld [vmem:[#allocation6 + $0x168] sm:$0xff]
      %v2183 = vld [vmem:[#allocation6 + $0x170] sm:$0xff]
      %v2184 = vld [vmem:[#allocation6 + $0x178] sm:$0xff]
      %v2185 = vld [vmem:[#allocation6 + $0x180] sm:$0xff]
      %v2186 = vld [vmem:[#allocation6 + $0x188] sm:$0xff]
      %v2187 = vld [vmem:[#allocation6 + $0x190] sm:$0xff]
      %v2188 = vld [vmem:[#allocation6 + $0x198] sm:$0xff]
      %v2189 = vld [vmem:[#allocation6 + $0x1a0] sm:$0xff]
      %v2190 = vld [vmem:[#allocation6 + $0x1a8] sm:$0xff]
      %v2191 = vld [vmem:[#allocation6 + $0x1b0] sm:$0xff]
      %v2192 = vld [vmem:[#allocation6 + $0x1b8] sm:$0xff]
      %v2193 = vld [vmem:[#allocation6 + $0x1c0] sm:$0xff]
      %v2194 = vld [vmem:[#allocation6 + $0x1c8] sm:$0xff]
      %v2195 = vld [vmem:[#allocation6 + $0x1d0] sm:$0xff]
      %v2196 = vld [vmem:[#allocation6 + $0x1d8] sm:$0xff]
      %v2197 = vld [vmem:[#allocation6 + $0x1e0] sm:$0xff]
      %v2198 = vld [vmem:[#allocation6 + $0x1e8] sm:$0xff]
      %v2199 = vld [vmem:[#allocation6 + $0x1f0] sm:$0xff]
      %v2200 = vld [vmem:[#allocation6 + $0x1f8] sm:$0xff]
      %s2201 = scalar_lea.vmem %s1, 384
      %v2202 = vld [vmem:[%s2201] sm:$0xff]
      %v2203 = vld [vmem:[%s2201 + $0x8] sm:$0xff]
      %v2204 = vld [vmem:[%s2201 + $0x10] sm:$0xff]
      %v2205 = vld [vmem:[%s2201 + $0x18] sm:$0xff]
      %v2206 = vld [vmem:[%s2201 + $0x20] sm:$0xff]
      %v2207 = vld [vmem:[%s2201 + $0x28] sm:$0xff]
      %v2208 = vld [vmem:[%s2201 + $0x30] sm:$0xff]
      %v2209 = vld [vmem:[%s2201 + $0x38] sm:$0xff]
      %v2210 = vld [vmem:[%s2201 + $0x40] sm:$0xff]
      %v2211 = vld [vmem:[%s2201 + $0x48] sm:$0xff]
      %v2212 = vld [vmem:[%s2201 + $0x50] sm:$0xff]
      %v2213 = vld [vmem:[%s2201 + $0x58] sm:$0xff]
      %v2214 = vld [vmem:[%s2201 + $0x60] sm:$0xff]
      %v2215 = vld [vmem:[%s2201 + $0x68] sm:$0xff]
      %v2216 = vld [vmem:[%s2201 + $0x70] sm:$0xff]
      %v2217 = vld [vmem:[%s2201 + $0x78] sm:$0xff]
      %v2234 = vunpack.c.l.b16 %v2202
      %v2235 = vunpack.c.h.b16 %v2202
      %v2236 = vunpack.c.l.b16 %v2203
      %v2237 = vunpack.c.h.b16 %v2203
      %v2238 = vunpack.c.l.b16 %v2204
      %v2239 = vunpack.c.h.b16 %v2204
      %v2240 = vunpack.c.l.b16 %v2205
      %v2241 = vunpack.c.h.b16 %v2205
      %v2242 = vunpack.c.l.b16 %v2206
      %v2243 = vunpack.c.h.b16 %v2206
      %v2244 = vunpack.c.l.b16 %v2207
      %v2245 = vunpack.c.h.b16 %v2207
      %v2246 = vunpack.c.l.b16 %v2208
      %v2247 = vunpack.c.h.b16 %v2208
      %v2248 = vunpack.c.l.b16 %v2209
      %v2249 = vunpack.c.h.b16 %v2209
      %v2250 = vunpack.c.l.b16 %v2210
      %v2251 = vunpack.c.h.b16 %v2210
      %v2252 = vunpack.c.l.b16 %v2211
      %v2253 = vunpack.c.h.b16 %v2211
      %v2254 = vunpack.c.l.b16 %v2212
      %v2255 = vunpack.c.h.b16 %v2212
      %v2256 = vunpack.c.l.b16 %v2213
      %v2257 = vunpack.c.h.b16 %v2213
      %v2258 = vunpack.c.l.b16 %v2214
      %v2259 = vunpack.c.h.b16 %v2214
      %v2260 = vunpack.c.l.b16 %v2215
      %v2261 = vunpack.c.h.b16 %v2215
      %v2262 = vunpack.c.l.b16 %v2216
      %v2263 = vunpack.c.h.b16 %v2216
      %v2264 = vunpack.c.l.b16 %v2217
      %v2265 = vunpack.c.h.b16 %v2217
      %v2266 = vpack.c.b16 %v2236, %v2234
      %v2267 = vpack.c.b16 %v2237, %v2235
      %v2268 = vpack.c.b16 %v2240, %v2238
      %v2269 = vpack.c.b16 %v2241, %v2239
      %v2270 = vpack.c.b16 %v2244, %v2242
      %v2271 = vpack.c.b16 %v2245, %v2243
      %v2272 = vpack.c.b16 %v2248, %v2246
      %v2273 = vpack.c.b16 %v2249, %v2247
      %v2274 = vpack.c.b16 %v2252, %v2250
      %v2275 = vpack.c.b16 %v2253, %v2251
      %v2276 = vpack.c.b16 %v2256, %v2254
      %v2277 = vpack.c.b16 %v2257, %v2255
      %v2278 = vpack.c.b16 %v2260, %v2258
      %v2279 = vpack.c.b16 %v2261, %v2259
      %v2280 = vpack.c.b16 %v2264, %v2262
      %v2281 = vpack.c.b16 %v2265, %v2263
      %2298 = vmatprep.subr.bf16.mxu0 %v2267
      %2299 = vmatpush1.bf16.msra.mxu0 %v2266
      %2300 = vmatprep.subr.bf16.mxu0 %v2269
      %2301 = vmatpush1.bf16.msra.mxu0 %v2268
      %2302 = vmatprep.subr.bf16.mxu0 %v2271
      %2303 = vmatpush1.bf16.msra.mxu0 %v2270
      %2304 = vmatprep.subr.bf16.mxu0 %v2273
      %2305 = vmatpush1.bf16.msra.mxu0 %v2272
      %2306 = vmatprep.subr.bf16.mxu0 %v2275
      %2307 = vmatpush1.bf16.msra.mxu0 %v2274
      %2308 = vmatprep.subr.bf16.mxu0 %v2277
      %2309 = vmatpush1.bf16.msra.mxu0 %v2276
      %2310 = vmatprep.subr.bf16.mxu0 %v2279
      %2311 = vmatpush1.bf16.msra.mxu0 %v2278
      %2312 = vmatprep.subr.bf16.mxu0 %v2281
      %2313 = vmatpush1.bf16.msra.mxu0 %v2280
      %2314 = vmatprep.subr.bf16.mxu0 0
      %2315 = vmatpush1.bf16.msra.mxu0 0
      %2316 = vmatprep.subr.bf16.mxu0 0
      %2317 = vmatpush1.bf16.msra.mxu0 0
      %2318 = vmatprep.subr.bf16.mxu0 0
      %2319 = vmatpush1.bf16.msra.mxu0 0
      %2320 = vmatprep.subr.bf16.mxu0 0
      %2321 = vmatpush1.bf16.msra.mxu0 0
      %2322 = vmatprep.subr.bf16.mxu0 0
      %2323 = vmatpush1.bf16.msra.mxu0 0
      %2324 = vmatprep.subr.bf16.mxu0 0
      %2325 = vmatpush1.bf16.msra.mxu0 0
      %2326 = vmatprep.subr.bf16.mxu0 0
      %2327 = vmatpush1.bf16.msra.mxu0 0
      %2328 = vmatprep.subr.bf16.mxu0 0
      %2329 = vmatpush1.bf16.msra.mxu0 0
      %2330 = vmatprep.mubr.bf16.mxu0 0
      %2331 = vmatmul.mubr.bf16.gmra.mrb[0].mxu0 %v2121
      %v2332 = vpop.f32.mrb[0].mxu0
      %v2333 = vadd.f32 0.0, %v2332
      %v2334 = vpop.f32.mrb[0].mxu0
      %v2335 = vadd.f32 0.0, %v2334
      %v2336 = vpop.f32.mrb[0].mxu0
      %v2337 = vadd.f32 0.0, %v2336
      %v2338 = vpop.f32.mrb[0].mxu0
      %v2339 = vadd.f32 0.0, %v2338
      %2340 = vmatprep.mubr.bf16.mxu0 0
      %2341 = vmatmul.mubr.bf16.gmra.mrb[0].mxu0 %v2122
      %v2342 = vpop.f32.mrb[0].mxu0
      %v2343 = vadd.f32 0.0, %v2342
      %v2344 = vpop.f32.mrb[0].mxu0
      %v2345 = vadd.f32 0.0, %v2344
      %v2346 = vpop.f32.mrb[0].mxu0
      %v2347 = vadd.f32 0.0, %v2346
      %v2348 = vpop.f32.mrb[0].mxu0
      %v2349 = vadd.f32 0.0, %v2348
      %2350 = vmatprep.mubr.bf16.mxu0 0
      %2351 = vmatmul.mubr.bf16.gmra.mrb[0].mxu0 %v2123
      %v2352 = vpop.f32.mrb[0].mxu0
      %v2353 = vadd.f32 0.0, %v2352
      %v2354 = vpop.f32.mrb[0].mxu0
      %v2355 = vadd.f32 0.0, %v2354
      %v2356 = vpop.f32.mrb[0].mxu0
      %v2357 = vadd.f32 0.0, %v2356
      %v2358 = vpop.f32.mrb[0].mxu0
      %v2359 = vadd.f32 0.0, %v2358
      %2360 = vmatprep.mubr.bf16.mxu0 0
      %2361 = vmatmul.mubr.bf16.gmra.mrb[0].mxu0 %v2124
      %v2362 = vpop.f32.mrb[0].mxu0
      %v2363 = vadd.f32 0.0, %v2362
      %v2364 = vpop.f32.mrb[0].mxu0
      %v2365 = vadd.f32 0.0, %v2364
      %v2366 = vpop.f32.mrb[0].mxu0
      %v2367 = vadd.f32 0.0, %v2366
      %v2368 = vpop.f32.mrb[0].mxu0
      %v2369 = vadd.f32 0.0, %v2368
      %2370 = vmatprep.mubr.bf16.mxu0 0
      %2371 = vmatmul.mubr.bf16.gmra.mrb[0].mxu0 %v2125
      %v2372 = vpop.f32.mrb[0].mxu0
      %v2373 = vadd.f32 0.0, %v2372
      %v2374 = vpop.f32.mrb[0].mxu0
      %v2375 = vadd.f32 0.0, %v2374
      %v2376 = vpop.f32.mrb[0].mxu0
      %v2377 = vadd.f32 0.0, %v2376
      %v2378 = vpop.f32.mrb[0].mxu0
      %v2379 = vadd.f32 0.0, %v2378
      %2380 = vmatprep.mubr.bf16.mxu0 0
      %2381 = vmatmul.mubr.bf16.gmra.mrb[0].mxu0 %v2126
      %v2382 = vpop.f32.mrb[0].mxu0
      %v2383 = vadd.f32 0.0, %v2382
      %v2384 = vpop.f32.mrb[0].mxu0
      %v2385 = vadd.f32 0.0, %v2384
      %v2386 = vpop.f32.mrb[0].mxu0
      %v2387 = vadd.f32 0.0, %v2386
      %v2388 = vpop.f32.mrb[0].mxu0
      %v2389 = vadd.f32 0.0, %v2388
      %2390 = vmatprep.mubr.bf16.mxu0 0
      %2391 = vmatmul.mubr.bf16.gmra.mrb[0].mxu0 %v2127
      %v2392 = vpop.f32.mrb[0].mxu0
      %v2393 = vadd.f32 0.0, %v2392
      %v2394 = vpop.f32.mrb[0].mxu0
      %v2395 = vadd.f32 0.0, %v2394
      %v2396 = vpop.f32.mrb[0].mxu0
      %v2397 = vadd.f32 0.0, %v2396
      %v2398 = vpop.f32.mrb[0].mxu0
      %v2399 = vadd.f32 0.0, %v2398
      %2400 = vmatprep.mubr.bf16.mxu0 0
      %2401 = vmatmul.mubr.bf16.gmra.mrb[0].mxu0 %v2128
      %v2402 = vpop.f32.mrb[0].mxu0
      %v2403 = vadd.f32 0.0, %v2402
      %v2404 = vpop.f32.mrb[0].mxu0
      %v2405 = vadd.f32 0.0, %v2404
      %v2406 = vpop.f32.mrb[0].mxu0
      %v2407 = vadd.f32 0.0, %v2406
      %v2408 = vpop.f32.mrb[0].mxu0
      %v2409 = vadd.f32 0.0, %v2408
      %2410 = vmatprep.mubr.bf16.mxu0 0
      %2411 = vmatmul.mubr.bf16.gmra.mrb[0].mxu0 %v2129
      %v2412 = vpop.f32.mrb[0].mxu0
      %v2413 = vadd.f32 0.0, %v2412
      %v2414 = vpop.f32.mrb[0].mxu0
      %v2415 = vadd.f32 0.0, %v2414
      %v2416 = vpop.f32.mrb[0].mxu0
      %v2417 = vadd.f32 0.0, %v2416
      %v2418 = vpop.f32.mrb[0].mxu0
      %v2419 = vadd.f32 0.0, %v2418
      %2420 = vmatprep.mubr.bf16.mxu0 0
      %2421 = vmatmul.mubr.bf16.gmra.mrb[0].mxu0 %v2130
      %v2422 = vpop.f32.mrb[0].mxu0
      %v2423 = vadd.f32 0.0, %v2422
      %v2424 = vpop.f32.mrb[0].mxu0
      %v2425 = vadd.f32 0.0, %v2424
      %v2426 = vpop.f32.mrb[0].mxu0
      %v2427 = vadd.f32 0.0, %v2426
      %v2428 = vpop.f32.mrb[0].mxu0
      %v2429 = vadd.f32 0.0, %v2428
      %2430 = vmatprep.mubr.bf16.mxu0 0
      %2431 = vmatmul.mubr.bf16.gmra.mrb[0].mxu0 %v2131
      %v2432 = vpop.f32.mrb[0].mxu0
      %v2433 = vadd.f32 0.0, %v2432
      %v2434 = vpop.f32.mrb[0].mxu0
      %v2435 = vadd.f32 0.0, %v2434
      %v2436 = vpop.f32.mrb[0].mxu0
      %v2437 = vadd.f32 0.0, %v2436
      %v2438 = vpop.f32.mrb[0].mxu0
      %v2439 = vadd.f32 0.0, %v2438
      %2440 = vmatprep.mubr.bf16.mxu0 0
      %2441 = vmatmul.mubr.bf16.gmra.mrb[0].mxu0 %v2132
      %v2442 = vpop.f32.mrb[0].mxu0
      %v2443 = vadd.f32 0.0, %v2442
      %v2444 = vpop.f32.mrb[0].mxu0
      %v2445 = vadd.f32 0.0, %v2444
      %v2446 = vpop.f32.mrb[0].mxu0
      %v2447 = vadd.f32 0.0, %v2446
      %v2448 = vpop.f32.mrb[0].mxu0
      %v2449 = vadd.f32 0.0, %v2448
      %2450 = vmatprep.mubr.bf16.mxu0 0
      %2451 = vmatmul.mubr.bf16.gmra.mrb[0].mxu0 %v2133
      %v2452 = vpop.f32.mrb[0].mxu0
      %v2453 = vadd.f32 0.0, %v2452
      %v2454 = vpop.f32.mrb[0].mxu0
      %v2455 = vadd.f32 0.0, %v2454
      %v2456 = vpop.f32.mrb[0].mxu0
      %v2457 = vadd.f32 0.0, %v2456
      %v2458 = vpop.f32.mrb[0].mxu0
      %v2459 = vadd.f32 0.0, %v2458
      %2460 = vmatprep.mubr.bf16.mxu0 0
      %2461 = vmatmul.mubr.bf16.gmra.mrb[0].mxu0 %v2134
      %v2462 = vpop.f32.mrb[0].mxu0
      %v2463 = vadd.f32 0.0, %v2462
      %v2464 = vpop.f32.mrb[0].mxu0
      %v2465 = vadd.f32 0.0, %v2464
      %v2466 = vpop.f32.mrb[0].mxu0
      %v2467 = vadd.f32 0.0, %v2466
      %v2468 = vpop.f32.mrb[0].mxu0
      %v2469 = vadd.f32 0.0, %v2468
      %2470 = vmatprep.mubr.bf16.mxu0 0
      %2471 = vmatmul.mubr.bf16.gmra.mrb[0].mxu0 %v2135
      %v2472 = vpop.f32.mrb[0].mxu0
      %v2473 = vadd.f32 0.0, %v2472
      %v2474 = vpop.f32.mrb[0].mxu0
      %v2475 = vadd.f32 0.0, %v2474
      %v2476 = vpop.f32.mrb[0].mxu0
      %v2477 = vadd.f32 0.0, %v2476
      %v2478 = vpop.f32.mrb[0].mxu0
      %v2479 = vadd.f32 0.0, %v2478
      %2480 = vmatprep.mubr.bf16.mxu0 0
      %2481 = vmatmul.mubr.bf16.gmra.mrb[0].mxu0 %v2136
      %v2482 = vpop.f32.mrb[0].mxu0
      %v2483 = vadd.f32 0.0, %v2482
      %v2484 = vpop.f32.mrb[0].mxu0
      %v2485 = vadd.f32 0.0, %v2484
      %v2486 = vpop.f32.mrb[0].mxu0
      %v2487 = vadd.f32 0.0, %v2486
      %v2488 = vpop.f32.mrb[0].mxu0
      %v2489 = vadd.f32 0.0, %v2488
      %2490 = vdwg.mxu0
      %v2491 = vadd.f32 %v2137, %v2333
      %v2492 = vadd.f32 %v2138, %v2335
      %v2493 = vadd.f32 %v2139, %v2337
      %v2494 = vadd.f32 %v2140, %v2339
      %v2495 = vadd.f32 %v2141, %v2343
      %v2496 = vadd.f32 %v2142, %v2345
      %v2497 = vadd.f32 %v2143, %v2347
      %v2498 = vadd.f32 %v2144, %v2349
      %v2499 = vadd.f32 %v2145, %v2353
      %v2500 = vadd.f32 %v2146, %v2355
      %v2501 = vadd.f32 %v2147, %v2357
      %v2502 = vadd.f32 %v2148, %v2359
      %v2503 = vadd.f32 %v2149, %v2363
      %v2504 = vadd.f32 %v2150, %v2365
      %v2505 = vadd.f32 %v2151, %v2367
      %v2506 = vadd.f32 %v2152, %v2369
      %v2507 = vadd.f32 %v2153, %v2373
      %v2508 = vadd.f32 %v2154, %v2375
      %v2509 = vadd.f32 %v2155, %v2377
      %v2510 = vadd.f32 %v2156, %v2379
      %v2511 = vadd.f32 %v2157, %v2383
      %v2512 = vadd.f32 %v2158, %v2385
      %v2513 = vadd.f32 %v2159, %v2387
      %v2514 = vadd.f32 %v2160, %v2389
      %v2515 = vadd.f32 %v2161, %v2393
      %v2516 = vadd.f32 %v2162, %v2395
      %v2517 = vadd.f32 %v2163, %v2397
      %v2518 = vadd.f32 %v2164, %v2399
      %v2519 = vadd.f32 %v2165, %v2403
      %v2520 = vadd.f32 %v2166, %v2405
      %v2521 = vadd.f32 %v2167, %v2407
      %v2522 = vadd.f32 %v2168, %v2409
      %v2523 = vadd.f32 %v2169, %v2413
      %v2524 = vadd.f32 %v2170, %v2415
      %v2525 = vadd.f32 %v2171, %v2417
      %v2526 = vadd.f32 %v2172, %v2419
      %v2527 = vadd.f32 %v2173, %v2423
      %v2528 = vadd.f32 %v2174, %v2425
      %v2529 = vadd.f32 %v2175, %v2427
      %v2530 = vadd.f32 %v2176, %v2429
      %v2531 = vadd.f32 %v2177, %v2433
      %v2532 = vadd.f32 %v2178, %v2435
      %v2533 = vadd.f32 %v2179, %v2437
      %v2534 = vadd.f32 %v2180, %v2439
      %v2535 = vadd.f32 %v2181, %v2443
      %v2536 = vadd.f32 %v2182, %v2445
      %v2537 = vadd.f32 %v2183, %v2447
      %v2538 = vadd.f32 %v2184, %v2449
      %v2539 = vadd.f32 %v2185, %v2453
      %v2540 = vadd.f32 %v2186, %v2455
      %v2541 = vadd.f32 %v2187, %v2457
      %v2542 = vadd.f32 %v2188, %v2459
      %v2543 = vadd.f32 %v2189, %v2463
      %v2544 = vadd.f32 %v2190, %v2465
      %v2545 = vadd.f32 %v2191, %v2467
      %v2546 = vadd.f32 %v2192, %v2469
      %v2547 = vadd.f32 %v2193, %v2473
      %v2548 = vadd.f32 %v2194, %v2475
      %v2549 = vadd.f32 %v2195, %v2477
      %v2550 = vadd.f32 %v2196, %v2479
      %v2551 = vadd.f32 %v2197, %v2483
      %v2552 = vadd.f32 %v2198, %v2485
      %v2553 = vadd.f32 %v2199, %v2487
      %v2554 = vadd.f32 %v2200, %v2489
      %2555 = vst [vmem:[#allocation6] sm:$0xff] %v2491
      %2556 = vst [vmem:[#allocation6 + $0x8] sm:$0xff] %v2492
      %2557 = vst [vmem:[#allocation6 + $0x10] sm:$0xff] %v2493
      %2558 = vst [vmem:[#allocation6 + $0x18] sm:$0xff] %v2494
      %2559 = vst [vmem:[#allocation6 + $0x20] sm:$0xff] %v2495
      %2560 = vst [vmem:[#allocation6 + $0x28] sm:$0xff] %v2496
      %2561 = vst [vmem:[#allocation6 + $0x30] sm:$0xff] %v2497
      %2562 = vst [vmem:[#allocation6 + $0x38] sm:$0xff] %v2498
      %2563 = vst [vmem:[#allocation6 + $0x40] sm:$0xff] %v2499
      %2564 = vst [vmem:[#allocation6 + $0x48] sm:$0xff] %v2500
      %2565 = vst [vmem:[#allocation6 + $0x50] sm:$0xff] %v2501
      %2566 = vst [vmem:[#allocation6 + $0x58] sm:$0xff] %v2502
      %2567 = vst [vmem:[#allocation6 + $0x60] sm:$0xff] %v2503
      %2568 = vst [vmem:[#allocation6 + $0x68] sm:$0xff] %v2504
      %2569 = vst [vmem:[#allocation6 + $0x70] sm:$0xff] %v2505
      %2570 = vst [vmem:[#allocation6 + $0x78] sm:$0xff] %v2506
      %2571 = vst [vmem:[#allocation6 + $0x80] sm:$0xff] %v2507
      %2572 = vst [vmem:[#allocation6 + $0x88] sm:$0xff] %v2508
      %2573 = vst [vmem:[#allocation6 + $0x90] sm:$0xff] %v2509
      %2574 = vst [vmem:[#allocation6 + $0x98] sm:$0xff] %v2510
      %2575 = vst [vmem:[#allocation6 + $0xa0] sm:$0xff] %v2511
      %2576 = vst [vmem:[#allocation6 + $0xa8] sm:$0xff] %v2512
      %2577 = vst [vmem:[#allocation6 + $0xb0] sm:$0xff] %v2513
      %2578 = vst [vmem:[#allocation6 + $0xb8] sm:$0xff] %v2514
      %2579 = vst [vmem:[#allocation6 + $0xc0] sm:$0xff] %v2515
      %2580 = vst [vmem:[#allocation6 + $0xc8] sm:$0xff] %v2516
      %2581 = vst [vmem:[#allocation6 + $0xd0] sm:$0xff] %v2517
      %2582 = vst [vmem:[#allocation6 + $0xd8] sm:$0xff] %v2518
      %2583 = vst [vmem:[#allocation6 + $0xe0] sm:$0xff] %v2519
      %2584 = vst [vmem:[#allocation6 + $0xe8] sm:$0xff] %v2520
      %2585 = vst [vmem:[#allocation6 + $0xf0] sm:$0xff] %v2521
      %2586 = vst [vmem:[#allocation6 + $0xf8] sm:$0xff] %v2522
      %2587 = vst [vmem:[#allocation6 + $0x100] sm:$0xff] %v2523
      %2588 = vst [vmem:[#allocation6 + $0x108] sm:$0xff] %v2524
      %2589 = vst [vmem:[#allocation6 + $0x110] sm:$0xff] %v2525
      %2590 = vst [vmem:[#allocation6 + $0x118] sm:$0xff] %v2526
      %2591 = vst [vmem:[#allocation6 + $0x120] sm:$0xff] %v2527
      %2592 = vst [vmem:[#allocation6 + $0x128] sm:$0xff] %v2528
      %2593 = vst [vmem:[#allocation6 + $0x130] sm:$0xff] %v2529
      %2594 = vst [vmem:[#allocation6 + $0x138] sm:$0xff] %v2530
      %2595 = vst [vmem:[#allocation6 + $0x140] sm:$0xff] %v2531
      %2596 = vst [vmem:[#allocation6 + $0x148] sm:$0xff] %v2532
      %2597 = vst [vmem:[#allocation6 + $0x150] sm:$0xff] %v2533
      %2598 = vst [vmem:[#allocation6 + $0x158] sm:$0xff] %v2534
      %2599 = vst [vmem:[#allocation6 + $0x160] sm:$0xff] %v2535
      %2600 = vst [vmem:[#allocation6 + $0x168] sm:$0xff] %v2536
      %2601 = vst [vmem:[#allocation6 + $0x170] sm:$0xff] %v2537
      %2602 = vst [vmem:[#allocation6 + $0x178] sm:$0xff] %v2538
      %2603 = vst [vmem:[#allocation6 + $0x180] sm:$0xff] %v2539
      %2604 = vst [vmem:[#allocation6 + $0x188] sm:$0xff] %v2540
      %2605 = vst [vmem:[#allocation6 + $0x190] sm:$0xff] %v2541
      %2606 = vst [vmem:[#allocation6 + $0x198] sm:$0xff] %v2542
      %2607 = vst [vmem:[#allocation6 + $0x1a0] sm:$0xff] %v2543
      %2608 = vst [vmem:[#allocation6 + $0x1a8] sm:$0xff] %v2544
      %2609 = vst [vmem:[#allocation6 + $0x1b0] sm:$0xff] %v2545
      %2610 = vst [vmem:[#allocation6 + $0x1b8] sm:$0xff] %v2546
      %2611 = vst [vmem:[#allocation6 + $0x1c0] sm:$0xff] %v2547
      %2612 = vst [vmem:[#allocation6 + $0x1c8] sm:$0xff] %v2548
      %2613 = vst [vmem:[#allocation6 + $0x1d0] sm:$0xff] %v2549
      %2614 = vst [vmem:[#allocation6 + $0x1d8] sm:$0xff] %v2550
      %2615 = vst [vmem:[#allocation6 + $0x1e0] sm:$0xff] %v2551
      %2616 = vst [vmem:[#allocation6 + $0x1e8] sm:$0xff] %v2552
      %2617 = vst [vmem:[#allocation6 + $0x1f0] sm:$0xff] %v2553
      %2618 = vst [vmem:[#allocation6 + $0x1f8] sm:$0xff] %v2554
      %s2619 = scalar_lea.vmem [#allocation3], 152
      %v2620 = vld [vmem:[%s2619] sm:$0xff]
      %v2621 = vld [vmem:[%s2619 + $0x8] sm:$0xff]
      %v2622 = vld [vmem:[%s2619 + $0x10] sm:$0xff]
      %v2623 = vld [vmem:[%s2619 + $0x18] sm:$0xff]
      %v2624 = vld [vmem:[%s2619 + $0x20] sm:$0xff]
      %v2625 = vld [vmem:[%s2619 + $0x28] sm:$0xff]
      %v2626 = vld [vmem:[%s2619 + $0x30] sm:$0xff]
      %v2627 = vld [vmem:[%s2619 + $0x38] sm:$0xff]
      %v2628 = vld [vmem:[%s2619 + $0x40] sm:$0xff]
      %v2629 = vld [vmem:[%s2619 + $0x48] sm:$0xff]
      %v2630 = vld [vmem:[%s2619 + $0x50] sm:$0xff]
      %v2631 = vld [vmem:[%s2619 + $0x58] sm:$0xff]
      %v2632 = vld [vmem:[%s2619 + $0x60] sm:$0xff]
      %v2633 = vld [vmem:[%s2619 + $0x68] sm:$0xff]
      %v2634 = vld [vmem:[%s2619 + $0x70] sm:$0xff]
      %v2635 = vld [vmem:[%s2619 + $0x78] sm:$0xff]
      %v2636 = vld [vmem:[#allocation6] sm:$0xff]
      %v2637 = vld [vmem:[#allocation6 + $0x8] sm:$0xff]
      %v2638 = vld [vmem:[#allocation6 + $0x10] sm:$0xff]
      %v2639 = vld [vmem:[#allocation6 + $0x18] sm:$0xff]
      %v2640 = vld [vmem:[#allocation6 + $0x20] sm:$0xff]
      %v2641 = vld [vmem:[#allocation6 + $0x28] sm:$0xff]
      %v2642 = vld [vmem:[#allocation6 + $0x30] sm:$0xff]
      %v2643 = vld [vmem:[#allocation6 + $0x38] sm:$0xff]
      %v2644 = vld [vmem:[#allocation6 + $0x40] sm:$0xff]
      %v2645 = vld [vmem:[#allocation6 + $0x48] sm:$0xff]
      %v2646 = vld [vmem:[#allocation6 + $0x50] sm:$0xff]
      %v2647 = vld [vmem:[#allocation6 + $0x58] sm:$0xff]
      %v2648 = vld [vmem:[#allocation6 + $0x60] sm:$0xff]
      %v2649 = vld [vmem:[#allocation6 + $0x68] sm:$0xff]
      %v2650 = vld [vmem:[#allocation6 + $0x70] sm:$0xff]
      %v2651 = vld [vmem:[#allocation6 + $0x78] sm:$0xff]
      %v2652 = vld [vmem:[#allocation6 + $0x80] sm:$0xff]
      %v2653 = vld [vmem:[#allocation6 + $0x88] sm:$0xff]
      %v2654 = vld [vmem:[#allocation6 + $0x90] sm:$0xff]
      %v2655 = vld [vmem:[#allocation6 + $0x98] sm:$0xff]
      %v2656 = vld [vmem:[#allocation6 + $0xa0] sm:$0xff]
      %v2657 = vld [vmem:[#allocation6 + $0xa8] sm:$0xff]
      %v2658 = vld [vmem:[#allocation6 + $0xb0] sm:$0xff]
      %v2659 = vld [vmem:[#allocation6 + $0xb8] sm:$0xff]
      %v2660 = vld [vmem:[#allocation6 + $0xc0] sm:$0xff]
      %v2661 = vld [vmem:[#allocation6 + $0xc8] sm:$0xff]
      %v2662 = vld [vmem:[#allocation6 + $0xd0] sm:$0xff]
      %v2663 = vld [vmem:[#allocation6 + $0xd8] sm:$0xff]
      %v2664 = vld [vmem:[#allocation6 + $0xe0] sm:$0xff]
      %v2665 = vld [vmem:[#allocation6 + $0xe8] sm:$0xff]
      %v2666 = vld [vmem:[#allocation6 + $0xf0] sm:$0xff]
      %v2667 = vld [vmem:[#allocation6 + $0xf8] sm:$0xff]
      %v2668 = vld [vmem:[#allocation6 + $0x100] sm:$0xff]
      %v2669 = vld [vmem:[#allocation6 + $0x108] sm:$0xff]
      %v2670 = vld [vmem:[#allocation6 + $0x110] sm:$0xff]
      %v2671 = vld [vmem:[#allocation6 + $0x118] sm:$0xff]
      %v2672 = vld [vmem:[#allocation6 + $0x120] sm:$0xff]
      %v2673 = vld [vmem:[#allocation6 + $0x128] sm:$0xff]
      %v2674 = vld [vmem:[#allocation6 + $0x130] sm:$0xff]
      %v2675 = vld [vmem:[#allocation6 + $0x138] sm:$0xff]
      %v2676 = vld [vmem:[#allocation6 + $0x140] sm:$0xff]
      %v2677 = vld [vmem:[#allocation6 + $0x148] sm:$0xff]
      %v2678 = vld [vmem:[#allocation6 + $0x150] sm:$0xff]
      %v2679 = vld [vmem:[#allocation6 + $0x158] sm:$0xff]
      %v2680 = vld [vmem:[#allocation6 + $0x160] sm:$0xff]
      %v2681 = vld [vmem:[#allocation6 + $0x168] sm:$0xff]
      %v2682 = vld [vmem:[#allocation6 + $0x170] sm:$0xff]
      %v2683 = vld [vmem:[#allocation6 + $0x178] sm:$0xff]
      %v2684 = vld [vmem:[#allocation6 + $0x180] sm:$0xff]
      %v2685 = vld [vmem:[#allocation6 + $0x188] sm:$0xff]
      %v2686 = vld [vmem:[#allocation6 + $0x190] sm:$0xff]
      %v2687 = vld [vmem:[#allocation6 + $0x198] sm:$0xff]
      %v2688 = vld [vmem:[#allocation6 + $0x1a0] sm:$0xff]
      %v2689 = vld [vmem:[#allocation6 + $0x1a8] sm:$0xff]
      %v2690 = vld [vmem:[#allocation6 + $0x1b0] sm:$0xff]
      %v2691 = vld [vmem:[#allocation6 + $0x1b8] sm:$0xff]
      %v2692 = vld [vmem:[#allocation6 + $0x1c0] sm:$0xff]
      %v2693 = vld [vmem:[#allocation6 + $0x1c8] sm:$0xff]
      %v2694 = vld [vmem:[#allocation6 + $0x1d0] sm:$0xff]
      %v2695 = vld [vmem:[#allocation6 + $0x1d8] sm:$0xff]
      %v2696 = vld [vmem:[#allocation6 + $0x1e0] sm:$0xff]
      %v2697 = vld [vmem:[#allocation6 + $0x1e8] sm:$0xff]
      %v2698 = vld [vmem:[#allocation6 + $0x1f0] sm:$0xff]
      %v2699 = vld [vmem:[#allocation6 + $0x1f8] sm:$0xff]
      %s2700 = scalar_lea.vmem %s1, 512
      %v2701 = vld [vmem:[%s2700] sm:$0xff]
      %v2702 = vld [vmem:[%s2700 + $0x8] sm:$0xff]
      %v2703 = vld [vmem:[%s2700 + $0x10] sm:$0xff]
      %v2704 = vld [vmem:[%s2700 + $0x18] sm:$0xff]
      %v2705 = vld [vmem:[%s2700 + $0x20] sm:$0xff]
      %v2706 = vld [vmem:[%s2700 + $0x28] sm:$0xff]
      %v2707 = vld [vmem:[%s2700 + $0x30] sm:$0xff]
      %v2708 = vld [vmem:[%s2700 + $0x38] sm:$0xff]
      %v2709 = vld [vmem:[%s2700 + $0x40] sm:$0xff]
      %v2710 = vld [vmem:[%s2700 + $0x48] sm:$0xff]
      %v2711 = vld [vmem:[%s2700 + $0x50] sm:$0xff]
      %v2712 = vld [vmem:[%s2700 + $0x58] sm:$0xff]
      %v2713 = vld [vmem:[%s2700 + $0x60] sm:$0xff]
      %v2714 = vld [vmem:[%s2700 + $0x68] sm:$0xff]
      %v2715 = vld [vmem:[%s2700 + $0x70] sm:$0xff]
      %v2716 = vld [vmem:[%s2700 + $0x78] sm:$0xff]
      %v2733 = vunpack.c.l.b16 %v2701
      %v2734 = vunpack.c.h.b16 %v2701
      %v2735 = vunpack.c.l.b16 %v2702
      %v2736 = vunpack.c.h.b16 %v2702
      %v2737 = vunpack.c.l.b16 %v2703
      %v2738 = vunpack.c.h.b16 %v2703
      %v2739 = vunpack.c.l.b16 %v2704
      %v2740 = vunpack.c.h.b16 %v2704
      %v2741 = vunpack.c.l.b16 %v2705
      %v2742 = vunpack.c.h.b16 %v2705
      %v2743 = vunpack.c.l.b16 %v2706
      %v2744 = vunpack.c.h.b16 %v2706
      %v2745 = vunpack.c.l.b16 %v2707
      %v2746 = vunpack.c.h.b16 %v2707
      %v2747 = vunpack.c.l.b16 %v2708
      %v2748 = vunpack.c.h.b16 %v2708
      %v2749 = vunpack.c.l.b16 %v2709
      %v2750 = vunpack.c.h.b16 %v2709
      %v2751 = vunpack.c.l.b16 %v2710
      %v2752 = vunpack.c.h.b16 %v2710
      %v2753 = vunpack.c.l.b16 %v2711
      %v2754 = vunpack.c.h.b16 %v2711
      %v2755 = vunpack.c.l.b16 %v2712
      %v2756 = vunpack.c.h.b16 %v2712
      %v2757 = vunpack.c.l.b16 %v2713
      %v2758 = vunpack.c.h.b16 %v2713
      %v2759 = vunpack.c.l.b16 %v2714
      %v2760 = vunpack.c.h.b16 %v2714
      %v2761 = vunpack.c.l.b16 %v2715
      %v2762 = vunpack.c.h.b16 %v2715
      %v2763 = vunpack.c.l.b16 %v2716
      %v2764 = vunpack.c.h.b16 %v2716
      %v2765 = vpack.c.b16 %v2735, %v2733
      %v2766 = vpack.c.b16 %v2736, %v2734
      %v2767 = vpack.c.b16 %v2739, %v2737
      %v2768 = vpack.c.b16 %v2740, %v2738
      %v2769 = vpack.c.b16 %v2743, %v2741
      %v2770 = vpack.c.b16 %v2744, %v2742
      %v2771 = vpack.c.b16 %v2747, %v2745
      %v2772 = vpack.c.b16 %v2748, %v2746
      %v2773 = vpack.c.b16 %v2751, %v2749
      %v2774 = vpack.c.b16 %v2752, %v2750
      %v2775 = vpack.c.b16 %v2755, %v2753
      %v2776 = vpack.c.b16 %v2756, %v2754
      %v2777 = vpack.c.b16 %v2759, %v2757
      %v2778 = vpack.c.b16 %v2760, %v2758
      %v2779 = vpack.c.b16 %v2763, %v2761
      %v2780 = vpack.c.b16 %v2764, %v2762
      %2797 = vmatprep.subr.bf16.mxu0 %v2766
      %2798 = vmatpush1.bf16.msra.mxu0 %v2765
      %2799 = vmatprep.subr.bf16.mxu0 %v2768
      %2800 = vmatpush1.bf16.msra.mxu0 %v2767
      %2801 = vmatprep.subr.bf16.mxu0 %v2770
      %2802 = vmatpush1.bf16.msra.mxu0 %v2769
      %2803 = vmatprep.subr.bf16.mxu0 %v2772
      %2804 = vmatpush1.bf16.msra.mxu0 %v2771
      %2805 = vmatprep.subr.bf16.mxu0 %v2774
      %2806 = vmatpush1.bf16.msra.mxu0 %v2773
      %2807 = vmatprep.subr.bf16.mxu0 %v2776
      %2808 = vmatpush1.bf16.msra.mxu0 %v2775
      %2809 = vmatprep.subr.bf16.mxu0 %v2778
      %2810 = vmatpush1.bf16.msra.mxu0 %v2777
      %2811 = vmatprep.subr.bf16.mxu0 %v2780
      %2812 = vmatpush1.bf16.msra.mxu0 %v2779
      %2813 = vmatprep.subr.bf16.mxu0 0
      %2814 = vmatpush1.bf16.msra.mxu0 0
      %2815 = vmatprep.subr.bf16.mxu0 0
      %2816 = vmatpush1.bf16.msra.mxu0 0
      %2817 = vmatprep.subr.bf16.mxu0 0
      %2818 = vmatpush1.bf16.msra.mxu0 0
      %2819 = vmatprep.subr.bf16.mxu0 0
      %2820 = vmatpush1.bf16.msra.mxu0 0
      %2821 = vmatprep.subr.bf16.mxu0 0
      %2822 = vmatpush1.bf16.msra.mxu0 0
      %2823 = vmatprep.subr.bf16.mxu0 0
      %2824 = vmatpush1.bf16.msra.mxu0 0
      %2825 = vmatprep.subr.bf16.mxu0 0
      %2826 = vmatpush1.bf16.msra.mxu0 0
      %2827 = vmatprep.subr.bf16.mxu0 0
      %2828 = vmatpush1.bf16.msra.mxu0 0
      %2829 = vmatprep.mubr.bf16.mxu0 0
      %2830 = vmatmul.mubr.bf16.gmra.mrb[0].mxu0 %v2620
      %v2831 = vpop.f32.mrb[0].mxu0
      %v2832 = vadd.f32 0.0, %v2831
      %v2833 = vpop.f32.mrb[0].mxu0
      %v2834 = vadd.f32 0.0, %v2833
      %v2835 = vpop.f32.mrb[0].mxu0
      %v2836 = vadd.f32 0.0, %v2835
      %v2837 = vpop.f32.mrb[0].mxu0
      %v2838 = vadd.f32 0.0, %v2837
      %2839 = vmatprep.mubr.bf16.mxu0 0
      %2840 = vmatmul.mubr.bf16.gmra.mrb[0].mxu0 %v2621
      %v2841 = vpop.f32.mrb[0].mxu0
      %v2842 = vadd.f32 0.0, %v2841
      %v2843 = vpop.f32.mrb[0].mxu0
      %v2844 = vadd.f32 0.0, %v2843
      %v2845 = vpop.f32.mrb[0].mxu0
      %v2846 = vadd.f32 0.0, %v2845
      %v2847 = vpop.f32.mrb[0].mxu0
      %v2848 = vadd.f32 0.0, %v2847
      %2849 = vmatprep.mubr.bf16.mxu0 0
      %2850 = vmatmul.mubr.bf16.gmra.mrb[0].mxu0 %v2622
      %v2851 = vpop.f32.mrb[0].mxu0
      %v2852 = vadd.f32 0.0, %v2851
      %v2853 = vpop.f32.mrb[0].mxu0
      %v2854 = vadd.f32 0.0, %v2853
      %v2855 = vpop.f32.mrb[0].mxu0
      %v2856 = vadd.f32 0.0, %v2855
      %v2857 = vpop.f32.mrb[0].mxu0
      %v2858 = vadd.f32 0.0, %v2857
      %2859 = vmatprep.mubr.bf16.mxu0 0
      %2860 = vmatmul.mubr.bf16.gmra.mrb[0].mxu0 %v2623
      %v2861 = vpop.f32.mrb[0].mxu0
      %v2862 = vadd.f32 0.0, %v2861
      %v2863 = vpop.f32.mrb[0].mxu0
      %v2864 = vadd.f32 0.0, %v2863
      %v2865 = vpop.f32.mrb[0].mxu0
      %v2866 = vadd.f32 0.0, %v2865
      %v2867 = vpop.f32.mrb[0].mxu0
      %v2868 = vadd.f32 0.0, %v2867
      %2869 = vmatprep.mubr.bf16.mxu0 0
      %2870 = vmatmul.mubr.bf16.gmra.mrb[0].mxu0 %v2624
      %v2871 = vpop.f32.mrb[0].mxu0
      %v2872 = vadd.f32 0.0, %v2871
      %v2873 = vpop.f32.mrb[0].mxu0
      %v2874 = vadd.f32 0.0, %v2873
      %v2875 = vpop.f32.mrb[0].mxu0
      %v2876 = vadd.f32 0.0, %v2875
      %v2877 = vpop.f32.mrb[0].mxu0
      %v2878 = vadd.f32 0.0, %v2877
      %2879 = vmatprep.mubr.bf16.mxu0 0
      %2880 = vmatmul.mubr.bf16.gmra.mrb[0].mxu0 %v2625
      %v2881 = vpop.f32.mrb[0].mxu0
      %v2882 = vadd.f32 0.0, %v2881
      %v2883 = vpop.f32.mrb[0].mxu0
      %v2884 = vadd.f32 0.0, %v2883
      %v2885 = vpop.f32.mrb[0].mxu0
      %v2886 = vadd.f32 0.0, %v2885
      %v2887 = vpop.f32.mrb[0].mxu0
      %v2888 = vadd.f32 0.0, %v2887
      %2889 = vmatprep.mubr.bf16.mxu0 0
      %2890 = vmatmul.mubr.bf16.gmra.mrb[0].mxu0 %v2626
      %v2891 = vpop.f32.mrb[0].mxu0
      %v2892 = vadd.f32 0.0, %v2891
      %v2893 = vpop.f32.mrb[0].mxu0
      %v2894 = vadd.f32 0.0, %v2893
      %v2895 = vpop.f32.mrb[0].mxu0
      %v2896 = vadd.f32 0.0, %v2895
      %v2897 = vpop.f32.mrb[0].mxu0
      %v2898 = vadd.f32 0.0, %v2897
      %2899 = vmatprep.mubr.bf16.mxu0 0
      %2900 = vmatmul.mubr.bf16.gmra.mrb[0].mxu0 %v2627
      %v2901 = vpop.f32.mrb[0].mxu0
      %v2902 = vadd.f32 0.0, %v2901
      %v2903 = vpop.f32.mrb[0].mxu0
      %v2904 = vadd.f32 0.0, %v2903
      %v2905 = vpop.f32.mrb[0].mxu0
      %v2906 = vadd.f32 0.0, %v2905
      %v2907 = vpop.f32.mrb[0].mxu0
      %v2908 = vadd.f32 0.0, %v2907
      %2909 = vmatprep.mubr.bf16.mxu0 0
      %2910 = vmatmul.mubr.bf16.gmra.mrb[0].mxu0 %v2628
      %v2911 = vpop.f32.mrb[0].mxu0
      %v2912 = vadd.f32 0.0, %v2911
      %v2913 = vpop.f32.mrb[0].mxu0
      %v2914 = vadd.f32 0.0, %v2913
      %v2915 = vpop.f32.mrb[0].mxu0
      %v2916 = vadd.f32 0.0, %v2915
      %v2917 = vpop.f32.mrb[0].mxu0
      %v2918 = vadd.f32 0.0, %v2917
      %2919 = vmatprep.mubr.bf16.mxu0 0
      %2920 = vmatmul.mubr.bf16.gmra.mrb[0].mxu0 %v2629
      %v2921 = vpop.f32.mrb[0].mxu0
      %v2922 = vadd.f32 0.0, %v2921
      %v2923 = vpop.f32.mrb[0].mxu0
      %v2924 = vadd.f32 0.0, %v2923
      %v2925 = vpop.f32.mrb[0].mxu0
      %v2926 = vadd.f32 0.0, %v2925
      %v2927 = vpop.f32.mrb[0].mxu0
      %v2928 = vadd.f32 0.0, %v2927
      %2929 = vmatprep.mubr.bf16.mxu0 0
      %2930 = vmatmul.mubr.bf16.gmra.mrb[0].mxu0 %v2630
      %v2931 = vpop.f32.mrb[0].mxu0
      %v2932 = vadd.f32 0.0, %v2931
      %v2933 = vpop.f32.mrb[0].mxu0
      %v2934 = vadd.f32 0.0, %v2933
      %v2935 = vpop.f32.mrb[0].mxu0
      %v2936 = vadd.f32 0.0, %v2935
      %v2937 = vpop.f32.mrb[0].mxu0
      %v2938 = vadd.f32 0.0, %v2937
      %2939 = vmatprep.mubr.bf16.mxu0 0
      %2940 = vmatmul.mubr.bf16.gmra.mrb[0].mxu0 %v2631
      %v2941 = vpop.f32.mrb[0].mxu0
      %v2942 = vadd.f32 0.0, %v2941
      %v2943 = vpop.f32.mrb[0].mxu0
      %v2944 = vadd.f32 0.0, %v2943
      %v2945 = vpop.f32.mrb[0].mxu0
      %v2946 = vadd.f32 0.0, %v2945
      %v2947 = vpop.f32.mrb[0].mxu0
      %v2948 = vadd.f32 0.0, %v2947
      %2949 = vmatprep.mubr.bf16.mxu0 0
      %2950 = vmatmul.mubr.bf16.gmra.mrb[0].mxu0 %v2632
      %v2951 = vpop.f32.mrb[0].mxu0
      %v2952 = vadd.f32 0.0, %v2951
      %v2953 = vpop.f32.mrb[0].mxu0
      %v2954 = vadd.f32 0.0, %v2953
      %v2955 = vpop.f32.mrb[0].mxu0
      %v2956 = vadd.f32 0.0, %v2955
      %v2957 = vpop.f32.mrb[0].mxu0
      %v2958 = vadd.f32 0.0, %v2957
      %2959 = vmatprep.mubr.bf16.mxu0 0
      %2960 = vmatmul.mubr.bf16.gmra.mrb[0].mxu0 %v2633
      %v2961 = vpop.f32.mrb[0].mxu0
      %v2962 = vadd.f32 0.0, %v2961
      %v2963 = vpop.f32.mrb[0].mxu0
      %v2964 = vadd.f32 0.0, %v2963
      %v2965 = vpop.f32.mrb[0].mxu0
      %v2966 = vadd.f32 0.0, %v2965
      %v2967 = vpop.f32.mrb[0].mxu0
      %v2968 = vadd.f32 0.0, %v2967
      %2969 = vmatprep.mubr.bf16.mxu0 0
      %2970 = vmatmul.mubr.bf16.gmra.mrb[0].mxu0 %v2634
      %v2971 = vpop.f32.mrb[0].mxu0
      %v2972 = vadd.f32 0.0, %v2971
      %v2973 = vpop.f32.mrb[0].mxu0
      %v2974 = vadd.f32 0.0, %v2973
      %v2975 = vpop.f32.mrb[0].mxu0
      %v2976 = vadd.f32 0.0, %v2975
      %v2977 = vpop.f32.mrb[0].mxu0
      %v2978 = vadd.f32 0.0, %v2977
      %2979 = vmatprep.mubr.bf16.mxu0 0
      %2980 = vmatmul.mubr.bf16.gmra.mrb[0].mxu0 %v2635
      %v2981 = vpop.f32.mrb[0].mxu0
      %v2982 = vadd.f32 0.0, %v2981
      %v2983 = vpop.f32.mrb[0].mxu0
      %v2984 = vadd.f32 0.0, %v2983
      %v2985 = vpop.f32.mrb[0].mxu0
      %v2986 = vadd.f32 0.0, %v2985
      %v2987 = vpop.f32.mrb[0].mxu0
      %v2988 = vadd.f32 0.0, %v2987
      %2989 = vdwg.mxu0
      %v2990 = vadd.f32 %v2636, %v2832
      %v2991 = vadd.f32 %v2637, %v2834
      %v2992 = vadd.f32 %v2638, %v2836
      %v2993 = vadd.f32 %v2639, %v2838
      %v2994 = vadd.f32 %v2640, %v2842
      %v2995 = vadd.f32 %v2641, %v2844
      %v2996 = vadd.f32 %v2642, %v2846
      %v2997 = vadd.f32 %v2643, %v2848
      %v2998 = vadd.f32 %v2644, %v2852
      %v2999 = vadd.f32 %v2645, %v2854
      %v3000 = vadd.f32 %v2646, %v2856
      %v3001 = vadd.f32 %v2647, %v2858
      %v3002 = vadd.f32 %v2648, %v2862
      %v3003 = vadd.f32 %v2649, %v2864
      %v3004 = vadd.f32 %v2650, %v2866
      %v3005 = vadd.f32 %v2651, %v2868
      %v3006 = vadd.f32 %v2652, %v2872
      %v3007 = vadd.f32 %v2653, %v2874
      %v3008 = vadd.f32 %v2654, %v2876
      %v3009 = vadd.f32 %v2655, %v2878
      %v3010 = vadd.f32 %v2656, %v2882
      %v3011 = vadd.f32 %v2657, %v2884
      %v3012 = vadd.f32 %v2658, %v2886
      %v3013 = vadd.f32 %v2659, %v2888
      %v3014 = vadd.f32 %v2660, %v2892
      %v3015 = vadd.f32 %v2661, %v2894
      %v3016 = vadd.f32 %v2662, %v2896
      %v3017 = vadd.f32 %v2663, %v2898
      %v3018 = vadd.f32 %v2664, %v2902
      %v3019 = vadd.f32 %v2665, %v2904
      %v3020 = vadd.f32 %v2666, %v2906
      %v3021 = vadd.f32 %v2667, %v2908
      %v3022 = vadd.f32 %v2668, %v2912
      %v3023 = vadd.f32 %v2669, %v2914
      %v3024 = vadd.f32 %v2670, %v2916
      %v3025 = vadd.f32 %v2671, %v2918
      %v3026 = vadd.f32 %v2672, %v2922
      %v3027 = vadd.f32 %v2673, %v2924
      %v3028 = vadd.f32 %v2674, %v2926
      %v3029 = vadd.f32 %v2675, %v2928
      %v3030 = vadd.f32 %v2676, %v2932
      %v3031 = vadd.f32 %v2677, %v2934
      %v3032 = vadd.f32 %v2678, %v2936
      %v3033 = vadd.f32 %v2679, %v2938
      %v3034 = vadd.f32 %v2680, %v2942
      %v3035 = vadd.f32 %v2681, %v2944
      %v3036 = vadd.f32 %v2682, %v2946
      %v3037 = vadd.f32 %v2683, %v2948
      %v3038 = vadd.f32 %v2684, %v2952
      %v3039 = vadd.f32 %v2685, %v2954
      %v3040 = vadd.f32 %v2686, %v2956
      %v3041 = vadd.f32 %v2687, %v2958
      %v3042 = vadd.f32 %v2688, %v2962
      %v3043 = vadd.f32 %v2689, %v2964
      %v3044 = vadd.f32 %v2690, %v2966
      %v3045 = vadd.f32 %v2691, %v2968
      %v3046 = vadd.f32 %v2692, %v2972
      %v3047 = vadd.f32 %v2693, %v2974
      %v3048 = vadd.f32 %v2694, %v2976
      %v3049 = vadd.f32 %v2695, %v2978
      %v3050 = vadd.f32 %v2696, %v2982
      %v3051 = vadd.f32 %v2697, %v2984
      %v3052 = vadd.f32 %v2698, %v2986
      %v3053 = vadd.f32 %v2699, %v2988
      %3054 = vst [vmem:[#allocation6] sm:$0xff] %v2990
      %3055 = vst [vmem:[#allocation6 + $0x8] sm:$0xff] %v2991
      %3056 = vst [vmem:[#allocation6 + $0x10] sm:$0xff] %v2992
      %3057 = vst [vmem:[#allocation6 + $0x18] sm:$0xff] %v2993
      %3058 = vst [vmem:[#allocation6 + $0x20] sm:$0xff] %v2994
      %3059 = vst [vmem:[#allocation6 + $0x28] sm:$0xff] %v2995
      %3060 = vst [vmem:[#allocation6 + $0x30] sm:$0xff] %v2996
      %3061 = vst [vmem:[#allocation6 + $0x38] sm:$0xff] %v2997
      %3062 = vst [vmem:[#allocation6 + $0x40] sm:$0xff] %v2998
      %3063 = vst [vmem:[#allocation6 + $0x48] sm:$0xff] %v2999
      %3064 = vst [vmem:[#allocation6 + $0x50] sm:$0xff] %v3000
      %3065 = vst [vmem:[#allocation6 + $0x58] sm:$0xff] %v3001
      %3066 = vst [vmem:[#allocation6 + $0x60] sm:$0xff] %v3002
      %3067 = vst [vmem:[#allocation6 + $0x68] sm:$0xff] %v3003
      %3068 = vst [vmem:[#allocation6 + $0x70] sm:$0xff] %v3004
      %3069 = vst [vmem:[#allocation6 + $0x78] sm:$0xff] %v3005
      %3070 = vst [vmem:[#allocation6 + $0x80] sm:$0xff] %v3006
      %3071 = vst [vmem:[#allocation6 + $0x88] sm:$0xff] %v3007
      %3072 = vst [vmem:[#allocation6 + $0x90] sm:$0xff] %v3008
      %3073 = vst [vmem:[#allocation6 + $0x98] sm:$0xff] %v3009
      %3074 = vst [vmem:[#allocation6 + $0xa0] sm:$0xff] %v3010
      %3075 = vst [vmem:[#allocation6 + $0xa8] sm:$0xff] %v3011
      %3076 = vst [vmem:[#allocation6 + $0xb0] sm:$0xff] %v3012
      %3077 = vst [vmem:[#allocation6 + $0xb8] sm:$0xff] %v3013
      %3078 = vst [vmem:[#allocation6 + $0xc0] sm:$0xff] %v3014
      %3079 = vst [vmem:[#allocation6 + $0xc8] sm:$0xff] %v3015
      %3080 = vst [vmem:[#allocation6 + $0xd0] sm:$0xff] %v3016
      %3081 = vst [vmem:[#allocation6 + $0xd8] sm:$0xff] %v3017
      %3082 = vst [vmem:[#allocation6 + $0xe0] sm:$0xff] %v3018
      %3083 = vst [vmem:[#allocation6 + $0xe8] sm:$0xff] %v3019
      %3084 = vst [vmem:[#allocation6 + $0xf0] sm:$0xff] %v3020
      %3085 = vst [vmem:[#allocation6 + $0xf8] sm:$0xff] %v3021
      %3086 = vst [vmem:[#allocation6 + $0x100] sm:$0xff] %v3022
      %3087 = vst [vmem:[#allocation6 + $0x108] sm:$0xff] %v3023
      %3088 = vst [vmem:[#allocation6 + $0x110] sm:$0xff] %v3024
      %3089 = vst [vmem:[#allocation6 + $0x118] sm:$0xff] %v3025
      %3090 = vst [vmem:[#allocation6 + $0x120] sm:$0xff] %v3026
      %3091 = vst [vmem:[#allocation6 + $0x128] sm:$0xff] %v3027
      %3092 = vst [vmem:[#allocation6 + $0x130] sm:$0xff] %v3028
      %3093 = vst [vmem:[#allocation6 + $0x138] sm:$0xff] %v3029
      %3094 = vst [vmem:[#allocation6 + $0x140] sm:$0xff] %v3030
      %3095 = vst [vmem:[#allocation6 + $0x148] sm:$0xff] %v3031
      %3096 = vst [vmem:[#allocation6 + $0x150] sm:$0xff] %v3032
      %3097 = vst [vmem:[#allocation6 + $0x158] sm:$0xff] %v3033
      %3098 = vst [vmem:[#allocation6 + $0x160] sm:$0xff] %v3034
      %3099 = vst [vmem:[#allocation6 + $0x168] sm:$0xff] %v3035
      %3100 = vst [vmem:[#allocation6 + $0x170] sm:$0xff] %v3036
      %3101 = vst [vmem:[#allocation6 + $0x178] sm:$0xff] %v3037
      %3102 = vst [vmem:[#allocation6 + $0x180] sm:$0xff] %v3038
      %3103 = vst [vmem:[#allocation6 + $0x188] sm:$0xff] %v3039
      %3104 = vst [vmem:[#allocation6 + $0x190] sm:$0xff] %v3040
      %3105 = vst [vmem:[#allocation6 + $0x198] sm:$0xff] %v3041
      %3106 = vst [vmem:[#allocation6 + $0x1a0] sm:$0xff] %v3042
      %3107 = vst [vmem:[#allocation6 + $0x1a8] sm:$0xff] %v3043
      %3108 = vst [vmem:[#allocation6 + $0x1b0] sm:$0xff] %v3044
      %3109 = vst [vmem:[#allocation6 + $0x1b8] sm:$0xff] %v3045
      %3110 = vst [vmem:[#allocation6 + $0x1c0] sm:$0xff] %v3046
      %3111 = vst [vmem:[#allocation6 + $0x1c8] sm:$0xff] %v3047
      %3112 = vst [vmem:[#allocation6 + $0x1d0] sm:$0xff] %v3048
      %3113 = vst [vmem:[#allocation6 + $0x1d8] sm:$0xff] %v3049
      %3114 = vst [vmem:[#allocation6 + $0x1e0] sm:$0xff] %v3050
      %3115 = vst [vmem:[#allocation6 + $0x1e8] sm:$0xff] %v3051
      %3116 = vst [vmem:[#allocation6 + $0x1f0] sm:$0xff] %v3052
      %3117 = vst [vmem:[#allocation6 + $0x1f8] sm:$0xff] %v3053
      %s3118 = scalar_lea.vmem [#allocation3], 296
      %v3119 = vld [vmem:[%s3118] sm:$0xff]
      %v3120 = vld [vmem:[%s3118 + $0x8] sm:$0xff]
      %v3121 = vld [vmem:[%s3118 + $0x10] sm:$0xff]
      %v3122 = vld [vmem:[%s3118 + $0x18] sm:$0xff]
      %v3123 = vld [vmem:[%s3118 + $0x20] sm:$0xff]
      %v3124 = vld [vmem:[%s3118 + $0x28] sm:$0xff]
      %v3125 = vld [vmem:[%s3118 + $0x30] sm:$0xff]
      %v3126 = vld [vmem:[%s3118 + $0x38] sm:$0xff]
      %v3127 = vld [vmem:[%s3118 + $0x40] sm:$0xff]
      %v3128 = vld [vmem:[%s3118 + $0x48] sm:$0xff]
      %v3129 = vld [vmem:[%s3118 + $0x50] sm:$0xff]
      %v3130 = vld [vmem:[%s3118 + $0x58] sm:$0xff]
      %v3131 = vld [vmem:[%s3118 + $0x60] sm:$0xff]
      %v3132 = vld [vmem:[%s3118 + $0x68] sm:$0xff]
      %v3133 = vld [vmem:[%s3118 + $0x70] sm:$0xff]
      %v3134 = vld [vmem:[%s3118 + $0x78] sm:$0xff]
      %v3135 = vld [vmem:[#allocation6] sm:$0xff]
      %v3136 = vld [vmem:[#allocation6 + $0x8] sm:$0xff]
      %v3137 = vld [vmem:[#allocation6 + $0x10] sm:$0xff]
      %v3138 = vld [vmem:[#allocation6 + $0x18] sm:$0xff]
      %v3139 = vld [vmem:[#allocation6 + $0x20] sm:$0xff]
      %v3140 = vld [vmem:[#allocation6 + $0x28] sm:$0xff]
      %v3141 = vld [vmem:[#allocation6 + $0x30] sm:$0xff]
      %v3142 = vld [vmem:[#allocation6 + $0x38] sm:$0xff]
      %v3143 = vld [vmem:[#allocation6 + $0x40] sm:$0xff]
      %v3144 = vld [vmem:[#allocation6 + $0x48] sm:$0xff]
      %v3145 = vld [vmem:[#allocation6 + $0x50] sm:$0xff]
      %v3146 = vld [vmem:[#allocation6 + $0x58] sm:$0xff]
      %v3147 = vld [vmem:[#allocation6 + $0x60] sm:$0xff]
      %v3148 = vld [vmem:[#allocation6 + $0x68] sm:$0xff]
      %v3149 = vld [vmem:[#allocation6 + $0x70] sm:$0xff]
      %v3150 = vld [vmem:[#allocation6 + $0x78] sm:$0xff]
      %v3151 = vld [vmem:[#allocation6 + $0x80] sm:$0xff]
      %v3152 = vld [vmem:[#allocation6 + $0x88] sm:$0xff]
      %v3153 = vld [vmem:[#allocation6 + $0x90] sm:$0xff]
      %v3154 = vld [vmem:[#allocation6 + $0x98] sm:$0xff]
      %v3155 = vld [vmem:[#allocation6 + $0xa0] sm:$0xff]
      %v3156 = vld [vmem:[#allocation6 + $0xa8] sm:$0xff]
      %v3157 = vld [vmem:[#allocation6 + $0xb0] sm:$0xff]
      %v3158 = vld [vmem:[#allocation6 + $0xb8] sm:$0xff]
      %v3159 = vld [vmem:[#allocation6 + $0xc0] sm:$0xff]
      %v3160 = vld [vmem:[#allocation6 + $0xc8] sm:$0xff]
      %v3161 = vld [vmem:[#allocation6 + $0xd0] sm:$0xff]
      %v3162 = vld [vmem:[#allocation6 + $0xd8] sm:$0xff]
      %v3163 = vld [vmem:[#allocation6 + $0xe0] sm:$0xff]
      %v3164 = vld [vmem:[#allocation6 + $0xe8] sm:$0xff]
      %v3165 = vld [vmem:[#allocation6 + $0xf0] sm:$0xff]
      %v3166 = vld [vmem:[#allocation6 + $0xf8] sm:$0xff]
      %v3167 = vld [vmem:[#allocation6 + $0x100] sm:$0xff]
      %v3168 = vld [vmem:[#allocation6 + $0x108] sm:$0xff]
      %v3169 = vld [vmem:[#allocation6 + $0x110] sm:$0xff]
      %v3170 = vld [vmem:[#allocation6 + $0x118] sm:$0xff]
      %v3171 = vld [vmem:[#allocation6 + $0x120] sm:$0xff]
      %v3172 = vld [vmem:[#allocation6 + $0x128] sm:$0xff]
      %v3173 = vld [vmem:[#allocation6 + $0x130] sm:$0xff]
      %v3174 = vld [vmem:[#allocation6 + $0x138] sm:$0xff]
      %v3175 = vld [vmem:[#allocation6 + $0x140] sm:$0xff]
      %v3176 = vld [vmem:[#allocation6 + $0x148] sm:$0xff]
      %v3177 = vld [vmem:[#allocation6 + $0x150] sm:$0xff]
      %v3178 = vld [vmem:[#allocation6 + $0x158] sm:$0xff]
      %v3179 = vld [vmem:[#allocation6 + $0x160] sm:$0xff]
      %v3180 = vld [vmem:[#allocation6 + $0x168] sm:$0xff]
      %v3181 = vld [vmem:[#allocation6 + $0x170] sm:$0xff]
      %v3182 = vld [vmem:[#allocation6 + $0x178] sm:$0xff]
      %v3183 = vld [vmem:[#allocation6 + $0x180] sm:$0xff]
      %v3184 = vld [vmem:[#allocation6 + $0x188] sm:$0xff]
      %v3185 = vld [vmem:[#allocation6 + $0x190] sm:$0xff]
      %v3186 = vld [vmem:[#allocation6 + $0x198] sm:$0xff]
      %v3187 = vld [vmem:[#allocation6 + $0x1a0] sm:$0xff]
      %v3188 = vld [vmem:[#allocation6 + $0x1a8] sm:$0xff]
      %v3189 = vld [vmem:[#allocation6 + $0x1b0] sm:$0xff]
      %v3190 = vld [vmem:[#allocation6 + $0x1b8] sm:$0xff]
      %v3191 = vld [vmem:[#allocation6 + $0x1c0] sm:$0xff]
      %v3192 = vld [vmem:[#allocation6 + $0x1c8] sm:$0xff]
      %v3193 = vld [vmem:[#allocation6 + $0x1d0] sm:$0xff]
      %v3194 = vld [vmem:[#allocation6 + $0x1d8] sm:$0xff]
      %v3195 = vld [vmem:[#allocation6 + $0x1e0] sm:$0xff]
      %v3196 = vld [vmem:[#allocation6 + $0x1e8] sm:$0xff]
      %v3197 = vld [vmem:[#allocation6 + $0x1f0] sm:$0xff]
      %v3198 = vld [vmem:[#allocation6 + $0x1f8] sm:$0xff]
      %s3199 = scalar_lea.vmem %s1, 640
      %v3200 = vld [vmem:[%s3199] sm:$0xff]
      %v3201 = vld [vmem:[%s3199 + $0x8] sm:$0xff]
      %v3202 = vld [vmem:[%s3199 + $0x10] sm:$0xff]
      %v3203 = vld [vmem:[%s3199 + $0x18] sm:$0xff]
      %v3204 = vld [vmem:[%s3199 + $0x20] sm:$0xff]
      %v3205 = vld [vmem:[%s3199 + $0x28] sm:$0xff]
      %v3206 = vld [vmem:[%s3199 + $0x30] sm:$0xff]
      %v3207 = vld [vmem:[%s3199 + $0x38] sm:$0xff]
      %v3208 = vld [vmem:[%s3199 + $0x40] sm:$0xff]
      %v3209 = vld [vmem:[%s3199 + $0x48] sm:$0xff]
      %v3210 = vld [vmem:[%s3199 + $0x50] sm:$0xff]
      %v3211 = vld [vmem:[%s3199 + $0x58] sm:$0xff]
      %v3212 = vld [vmem:[%s3199 + $0x60] sm:$0xff]
      %v3213 = vld [vmem:[%s3199 + $0x68] sm:$0xff]
      %v3214 = vld [vmem:[%s3199 + $0x70] sm:$0xff]
      %v3215 = vld [vmem:[%s3199 + $0x78] sm:$0xff]
      %v3232 = vunpack.c.l.b16 %v3200
      %v3233 = vunpack.c.h.b16 %v3200
      %v3234 = vunpack.c.l.b16 %v3201
      %v3235 = vunpack.c.h.b16 %v3201
      %v3236 = vunpack.c.l.b16 %v3202
      %v3237 = vunpack.c.h.b16 %v3202
      %v3238 = vunpack.c.l.b16 %v3203
      %v3239 = vunpack.c.h.b16 %v3203
      %v3240 = vunpack.c.l.b16 %v3204
      %v3241 = vunpack.c.h.b16 %v3204
      %v3242 = vunpack.c.l.b16 %v3205
      %v3243 = vunpack.c.h.b16 %v3205
      %v3244 = vunpack.c.l.b16 %v3206
      %v3245 = vunpack.c.h.b16 %v3206
      %v3246 = vunpack.c.l.b16 %v3207
      %v3247 = vunpack.c.h.b16 %v3207
      %v3248 = vunpack.c.l.b16 %v3208
      %v3249 = vunpack.c.h.b16 %v3208
      %v3250 = vunpack.c.l.b16 %v3209
      %v3251 = vunpack.c.h.b16 %v3209
      %v3252 = vunpack.c.l.b16 %v3210
      %v3253 = vunpack.c.h.b16 %v3210
      %v3254 = vunpack.c.l.b16 %v3211
      %v3255 = vunpack.c.h.b16 %v3211
      %v3256 = vunpack.c.l.b16 %v3212
      %v3257 = vunpack.c.h.b16 %v3212
      %v3258 = vunpack.c.l.b16 %v3213
      %v3259 = vunpack.c.h.b16 %v3213
      %v3260 = vunpack.c.l.b16 %v3214
      %v3261 = vunpack.c.h.b16 %v3214
      %v3262 = vunpack.c.l.b16 %v3215
      %v3263 = vunpack.c.h.b16 %v3215
      %v3264 = vpack.c.b16 %v3234, %v3232
      %v3265 = vpack.c.b16 %v3235, %v3233
      %v3266 = vpack.c.b16 %v3238, %v3236
      %v3267 = vpack.c.b16 %v3239, %v3237
      %v3268 = vpack.c.b16 %v3242, %v3240
      %v3269 = vpack.c.b16 %v3243, %v3241
      %v3270 = vpack.c.b16 %v3246, %v3244
      %v3271 = vpack.c.b16 %v3247, %v3245
      %v3272 = vpack.c.b16 %v3250, %v3248
      %v3273 = vpack.c.b16 %v3251, %v3249
      %v3274 = vpack.c.b16 %v3254, %v3252
      %v3275 = vpack.c.b16 %v3255, %v3253
      %v3276 = vpack.c.b16 %v3258, %v3256
      %v3277 = vpack.c.b16 %v3259, %v3257
      %v3278 = vpack.c.b16 %v3262, %v3260
      %v3279 = vpack.c.b16 %v3263, %v3261
      %3296 = vmatprep.subr.bf16.mxu0 %v3265
      %3297 = vmatpush1.bf16.msra.mxu0 %v3264
      %3298 = vmatprep.subr.bf16.mxu0 %v3267
      %3299 = vmatpush1.bf16.msra.mxu0 %v3266
      %3300 = vmatprep.subr.bf16.mxu0 %v3269
      %3301 = vmatpush1.bf16.msra.mxu0 %v3268
      %3302 = vmatprep.subr.bf16.mxu0 %v3271
      %3303 = vmatpush1.bf16.msra.mxu0 %v3270
      %3304 = vmatprep.subr.bf16.mxu0 %v3273
      %3305 = vmatpush1.bf16.msra.mxu0 %v3272
      %3306 = vmatprep.subr.bf16.mxu0 %v3275
      %3307 = vmatpush1.bf16.msra.mxu0 %v3274
      %3308 = vmatprep.subr.bf16.mxu0 %v3277
      %3309 = vmatpush1.bf16.msra.mxu0 %v3276
      %3310 = vmatprep.subr.bf16.mxu0 %v3279
      %3311 = vmatpush1.bf16.msra.mxu0 %v3278
      %3312 = vmatprep.subr.bf16.mxu0 0
      %3313 = vmatpush1.bf16.msra.mxu0 0
      %3314 = vmatprep.subr.bf16.mxu0 0
      %3315 = vmatpush1.bf16.msra.mxu0 0
      %3316 = vmatprep.subr.bf16.mxu0 0
      %3317 = vmatpush1.bf16.msra.mxu0 0
      %3318 = vmatprep.subr.bf16.mxu0 0
      %3319 = vmatpush1.bf16.msra.mxu0 0
      %3320 = vmatprep.subr.bf16.mxu0 0
      %3321 = vmatpush1.bf16.msra.mxu0 0
      %3322 = vmatprep.subr.bf16.mxu0 0
      %3323 = vmatpush1.bf16.msra.mxu0 0
      %3324 = vmatprep.subr.bf16.mxu0 0
      %3325 = vmatpush1.bf16.msra.mxu0 0
      %3326 = vmatprep.subr.bf16.mxu0 0
      %3327 = vmatpush1.bf16.msra.mxu0 0
      %3328 = vmatprep.mubr.bf16.mxu0 0
      %3329 = vmatmul.mubr.bf16.gmra.mrb[0].mxu0 %v3119
      %v3330 = vpop.f32.mrb[0].mxu0
      %v3331 = vadd.f32 0.0, %v3330
      %v3332 = vpop.f32.mrb[0].mxu0
      %v3333 = vadd.f32 0.0, %v3332
      %v3334 = vpop.f32.mrb[0].mxu0
      %v3335 = vadd.f32 0.0, %v3334
      %v3336 = vpop.f32.mrb[0].mxu0
      %v3337 = vadd.f32 0.0, %v3336
      %3338 = vmatprep.mubr.bf16.mxu0 0
      %3339 = vmatmul.mubr.bf16.gmra.mrb[0].mxu0 %v3120
      %v3340 = vpop.f32.mrb[0].mxu0
      %v3341 = vadd.f32 0.0, %v3340
      %v3342 = vpop.f32.mrb[0].mxu0
      %v3343 = vadd.f32 0.0, %v3342
      %v3344 = vpop.f32.mrb[0].mxu0
      %v3345 = vadd.f32 0.0, %v3344
      %v3346 = vpop.f32.mrb[0].mxu0
      %v3347 = vadd.f32 0.0, %v3346
      %3348 = vmatprep.mubr.bf16.mxu0 0
      %3349 = vmatmul.mubr.bf16.gmra.mrb[0].mxu0 %v3121
      %v3350 = vpop.f32.mrb[0].mxu0
      %v3351 = vadd.f32 0.0, %v3350
      %v3352 = vpop.f32.mrb[0].mxu0
      %v3353 = vadd.f32 0.0, %v3352
      %v3354 = vpop.f32.mrb[0].mxu0
      %v3355 = vadd.f32 0.0, %v3354
      %v3356 = vpop.f32.mrb[0].mxu0
      %v3357 = vadd.f32 0.0, %v3356
      %3358 = vmatprep.mubr.bf16.mxu0 0
      %3359 = vmatmul.mubr.bf16.gmra.mrb[0].mxu0 %v3122
      %v3360 = vpop.f32.mrb[0].mxu0
      %v3361 = vadd.f32 0.0, %v3360
      %v3362 = vpop.f32.mrb[0].mxu0
      %v3363 = vadd.f32 0.0, %v3362
      %v3364 = vpop.f32.mrb[0].mxu0
      %v3365 = vadd.f32 0.0, %v3364
      %v3366 = vpop.f32.mrb[0].mxu0
      %v3367 = vadd.f32 0.0, %v3366
      %3368 = vmatprep.mubr.bf16.mxu0 0
      %3369 = vmatmul.mubr.bf16.gmra.mrb[0].mxu0 %v3123
      %v3370 = vpop.f32.mrb[0].mxu0
      %v3371 = vadd.f32 0.0, %v3370
      %v3372 = vpop.f32.mrb[0].mxu0
      %v3373 = vadd.f32 0.0, %v3372
      %v3374 = vpop.f32.mrb[0].mxu0
      %v3375 = vadd.f32 0.0, %v3374
      %v3376 = vpop.f32.mrb[0].mxu0
      %v3377 = vadd.f32 0.0, %v3376
      %3378 = vmatprep.mubr.bf16.mxu0 0
      %3379 = vmatmul.mubr.bf16.gmra.mrb[0].mxu0 %v3124
      %v3380 = vpop.f32.mrb[0].mxu0
      %v3381 = vadd.f32 0.0, %v3380
      %v3382 = vpop.f32.mrb[0].mxu0
      %v3383 = vadd.f32 0.0, %v3382
      %v3384 = vpop.f32.mrb[0].mxu0
      %v3385 = vadd.f32 0.0, %v3384
      %v3386 = vpop.f32.mrb[0].mxu0
      %v3387 = vadd.f32 0.0, %v3386
      %3388 = vmatprep.mubr.bf16.mxu0 0
      %3389 = vmatmul.mubr.bf16.gmra.mrb[0].mxu0 %v3125
      %v3390 = vpop.f32.mrb[0].mxu0
      %v3391 = vadd.f32 0.0, %v3390
      %v3392 = vpop.f32.mrb[0].mxu0
      %v3393 = vadd.f32 0.0, %v3392
      %v3394 = vpop.f32.mrb[0].mxu0
      %v3395 = vadd.f32 0.0, %v3394
      %v3396 = vpop.f32.mrb[0].mxu0
      %v3397 = vadd.f32 0.0, %v3396
      %3398 = vmatprep.mubr.bf16.mxu0 0
      %3399 = vmatmul.mubr.bf16.gmra.mrb[0].mxu0 %v3126
      %v3400 = vpop.f32.mrb[0].mxu0
      %v3401 = vadd.f32 0.0, %v3400
      %v3402 = vpop.f32.mrb[0].mxu0
      %v3403 = vadd.f32 0.0, %v3402
      %v3404 = vpop.f32.mrb[0].mxu0
      %v3405 = vadd.f32 0.0, %v3404
      %v3406 = vpop.f32.mrb[0].mxu0
      %v3407 = vadd.f32 0.0, %v3406
      %3408 = vmatprep.mubr.bf16.mxu0 0
      %3409 = vmatmul.mubr.bf16.gmra.mrb[0].mxu0 %v3127
      %v3410 = vpop.f32.mrb[0].mxu0
      %v3411 = vadd.f32 0.0, %v3410
      %v3412 = vpop.f32.mrb[0].mxu0
      %v3413 = vadd.f32 0.0, %v3412
      %v3414 = vpop.f32.mrb[0].mxu0
      %v3415 = vadd.f32 0.0, %v3414
      %v3416 = vpop.f32.mrb[0].mxu0
      %v3417 = vadd.f32 0.0, %v3416
      %3418 = vmatprep.mubr.bf16.mxu0 0
      %3419 = vmatmul.mubr.bf16.gmra.mrb[0].mxu0 %v3128
      %v3420 = vpop.f32.mrb[0].mxu0
      %v3421 = vadd.f32 0.0, %v3420
      %v3422 = vpop.f32.mrb[0].mxu0
      %v3423 = vadd.f32 0.0, %v3422
      %v3424 = vpop.f32.mrb[0].mxu0
      %v3425 = vadd.f32 0.0, %v3424
      %v3426 = vpop.f32.mrb[0].mxu0
      %v3427 = vadd.f32 0.0, %v3426
      %3428 = vmatprep.mubr.bf16.mxu0 0
      %3429 = vmatmul.mubr.bf16.gmra.mrb[0].mxu0 %v3129
      %v3430 = vpop.f32.mrb[0].mxu0
      %v3431 = vadd.f32 0.0, %v3430
      %v3432 = vpop.f32.mrb[0].mxu0
      %v3433 = vadd.f32 0.0, %v3432
      %v3434 = vpop.f32.mrb[0].mxu0
      %v3435 = vadd.f32 0.0, %v3434
      %v3436 = vpop.f32.mrb[0].mxu0
      %v3437 = vadd.f32 0.0, %v3436
      %3438 = vmatprep.mubr.bf16.mxu0 0
      %3439 = vmatmul.mubr.bf16.gmra.mrb[0].mxu0 %v3130
      %v3440 = vpop.f32.mrb[0].mxu0
      %v3441 = vadd.f32 0.0, %v3440
      %v3442 = vpop.f32.mrb[0].mxu0
      %v3443 = vadd.f32 0.0, %v3442
      %v3444 = vpop.f32.mrb[0].mxu0
      %v3445 = vadd.f32 0.0, %v3444
      %v3446 = vpop.f32.mrb[0].mxu0
      %v3447 = vadd.f32 0.0, %v3446
      %3448 = vmatprep.mubr.bf16.mxu0 0
      %3449 = vmatmul.mubr.bf16.gmra.mrb[0].mxu0 %v3131
      %v3450 = vpop.f32.mrb[0].mxu0
      %v3451 = vadd.f32 0.0, %v3450
      %v3452 = vpop.f32.mrb[0].mxu0
      %v3453 = vadd.f32 0.0, %v3452
      %v3454 = vpop.f32.mrb[0].mxu0
      %v3455 = vadd.f32 0.0, %v3454
      %v3456 = vpop.f32.mrb[0].mxu0
      %v3457 = vadd.f32 0.0, %v3456
      %3458 = vmatprep.mubr.bf16.mxu0 0
      %3459 = vmatmul.mubr.bf16.gmra.mrb[0].mxu0 %v3132
      %v3460 = vpop.f32.mrb[0].mxu0
      %v3461 = vadd.f32 0.0, %v3460
      %v3462 = vpop.f32.mrb[0].mxu0
      %v3463 = vadd.f32 0.0, %v3462
      %v3464 = vpop.f32.mrb[0].mxu0
      %v3465 = vadd.f32 0.0, %v3464
      %v3466 = vpop.f32.mrb[0].mxu0
      %v3467 = vadd.f32 0.0, %v3466
      %3468 = vmatprep.mubr.bf16.mxu0 0
      %3469 = vmatmul.mubr.bf16.gmra.mrb[0].mxu0 %v3133
      %v3470 = vpop.f32.mrb[0].mxu0
      %v3471 = vadd.f32 0.0, %v3470
      %v3472 = vpop.f32.mrb[0].mxu0
      %v3473 = vadd.f32 0.0, %v3472
      %v3474 = vpop.f32.mrb[0].mxu0
      %v3475 = vadd.f32 0.0, %v3474
      %v3476 = vpop.f32.mrb[0].mxu0
      %v3477 = vadd.f32 0.0, %v3476
      %3478 = vmatprep.mubr.bf16.mxu0 0
      %3479 = vmatmul.mubr.bf16.gmra.mrb[0].mxu0 %v3134
      %v3480 = vpop.f32.mrb[0].mxu0
      %v3481 = vadd.f32 0.0, %v3480
      %v3482 = vpop.f32.mrb[0].mxu0
      %v3483 = vadd.f32 0.0, %v3482
      %v3484 = vpop.f32.mrb[0].mxu0
      %v3485 = vadd.f32 0.0, %v3484
      %v3486 = vpop.f32.mrb[0].mxu0
      %v3487 = vadd.f32 0.0, %v3486
      %3488 = vdwg.mxu0
      %v3489 = vadd.f32 %v3135, %v3331
      %v3490 = vadd.f32 %v3136, %v3333
      %v3491 = vadd.f32 %v3137, %v3335
      %v3492 = vadd.f32 %v3138, %v3337
      %v3493 = vadd.f32 %v3139, %v3341
      %v3494 = vadd.f32 %v3140, %v3343
      %v3495 = vadd.f32 %v3141, %v3345
      %v3496 = vadd.f32 %v3142, %v3347
      %v3497 = vadd.f32 %v3143, %v3351
      %v3498 = vadd.f32 %v3144, %v3353
      %v3499 = vadd.f32 %v3145, %v3355
      %v3500 = vadd.f32 %v3146, %v3357
      %v3501 = vadd.f32 %v3147, %v3361
      %v3502 = vadd.f32 %v3148, %v3363
      %v3503 = vadd.f32 %v3149, %v3365
      %v3504 = vadd.f32 %v3150, %v3367
      %v3505 = vadd.f32 %v3151, %v3371
      %v3506 = vadd.f32 %v3152, %v3373
      %v3507 = vadd.f32 %v3153, %v3375
      %v3508 = vadd.f32 %v3154, %v3377
      %v3509 = vadd.f32 %v3155, %v3381
      %v3510 = vadd.f32 %v3156, %v3383
      %v3511 = vadd.f32 %v3157, %v3385
      %v3512 = vadd.f32 %v3158, %v3387
      %v3513 = vadd.f32 %v3159, %v3391
      %v3514 = vadd.f32 %v3160, %v3393
      %v3515 = vadd.f32 %v3161, %v3395
      %v3516 = vadd.f32 %v3162, %v3397
      %v3517 = vadd.f32 %v3163, %v3401
      %v3518 = vadd.f32 %v3164, %v3403
      %v3519 = vadd.f32 %v3165, %v3405
      %v3520 = vadd.f32 %v3166, %v3407
      %v3521 = vadd.f32 %v3167, %v3411
      %v3522 = vadd.f32 %v3168, %v3413
      %v3523 = vadd.f32 %v3169, %v3415
      %v3524 = vadd.f32 %v3170, %v3417
      %v3525 = vadd.f32 %v3171, %v3421
      %v3526 = vadd.f32 %v3172, %v3423
      %v3527 = vadd.f32 %v3173, %v3425
      %v3528 = vadd.f32 %v3174, %v3427
      %v3529 = vadd.f32 %v3175, %v3431
      %v3530 = vadd.f32 %v3176, %v3433
      %v3531 = vadd.f32 %v3177, %v3435
      %v3532 = vadd.f32 %v3178, %v3437
      %v3533 = vadd.f32 %v3179, %v3441
      %v3534 = vadd.f32 %v3180, %v3443
      %v3535 = vadd.f32 %v3181, %v3445
      %v3536 = vadd.f32 %v3182, %v3447
      %v3537 = vadd.f32 %v3183, %v3451
      %v3538 = vadd.f32 %v3184, %v3453
      %v3539 = vadd.f32 %v3185, %v3455
      %v3540 = vadd.f32 %v3186, %v3457
      %v3541 = vadd.f32 %v3187, %v3461
      %v3542 = vadd.f32 %v3188, %v3463
      %v3543 = vadd.f32 %v3189, %v3465
      %v3544 = vadd.f32 %v3190, %v3467
      %v3545 = vadd.f32 %v3191, %v3471
      %v3546 = vadd.f32 %v3192, %v3473
      %v3547 = vadd.f32 %v3193, %v3475
      %v3548 = vadd.f32 %v3194, %v3477
      %v3549 = vadd.f32 %v3195, %v3481
      %v3550 = vadd.f32 %v3196, %v3483
      %v3551 = vadd.f32 %v3197, %v3485
      %v3552 = vadd.f32 %v3198, %v3487
      %3553 = vst [vmem:[#allocation6] sm:$0xff] %v3489
      %3554 = vst [vmem:[#allocation6 + $0x8] sm:$0xff] %v3490
      %3555 = vst [vmem:[#allocation6 + $0x10] sm:$0xff] %v3491
      %3556 = vst [vmem:[#allocation6 + $0x18] sm:$0xff] %v3492
      %3557 = vst [vmem:[#allocation6 + $0x20] sm:$0xff] %v3493
      %3558 = vst [vmem:[#allocation6 + $0x28] sm:$0xff] %v3494
      %3559 = vst [vmem:[#allocation6 + $0x30] sm:$0xff] %v3495
      %3560 = vst [vmem:[#allocation6 + $0x38] sm:$0xff] %v3496
      %3561 = vst [vmem:[#allocation6 + $0x40] sm:$0xff] %v3497
      %3562 = vst [vmem:[#allocation6 + $0x48] sm:$0xff] %v3498
      %3563 = vst [vmem:[#allocation6 + $0x50] sm:$0xff] %v3499
      %3564 = vst [vmem:[#allocation6 + $0x58] sm:$0xff] %v3500
      %3565 = vst [vmem:[#allocation6 + $0x60] sm:$0xff] %v3501
      %3566 = vst [vmem:[#allocation6 + $0x68] sm:$0xff] %v3502
      %3567 = vst [vmem:[#allocation6 + $0x70] sm:$0xff] %v3503
      %3568 = vst [vmem:[#allocation6 + $0x78] sm:$0xff] %v3504
      %3569 = vst [vmem:[#allocation6 + $0x80] sm:$0xff] %v3505
      %3570 = vst [vmem:[#allocation6 + $0x88] sm:$0xff] %v3506
      %3571 = vst [vmem:[#allocation6 + $0x90] sm:$0xff] %v3507
      %3572 = vst [vmem:[#allocation6 + $0x98] sm:$0xff] %v3508
      %3573 = vst [vmem:[#allocation6 + $0xa0] sm:$0xff] %v3509
      %3574 = vst [vmem:[#allocation6 + $0xa8] sm:$0xff] %v3510
      %3575 = vst [vmem:[#allocation6 + $0xb0] sm:$0xff] %v3511
      %3576 = vst [vmem:[#allocation6 + $0xb8] sm:$0xff] %v3512
      %3577 = vst [vmem:[#allocation6 + $0xc0] sm:$0xff] %v3513
      %3578 = vst [vmem:[#allocation6 + $0xc8] sm:$0xff] %v3514
      %3579 = vst [vmem:[#allocation6 + $0xd0] sm:$0xff] %v3515
      %3580 = vst [vmem:[#allocation6 + $0xd8] sm:$0xff] %v3516
      %3581 = vst [vmem:[#allocation6 + $0xe0] sm:$0xff] %v3517
      %3582 = vst [vmem:[#allocation6 + $0xe8] sm:$0xff] %v3518
      %3583 = vst [vmem:[#allocation6 + $0xf0] sm:$0xff] %v3519
      %3584 = vst [vmem:[#allocation6 + $0xf8] sm:$0xff] %v3520
      %3585 = vst [vmem:[#allocation6 + $0x100] sm:$0xff] %v3521
      %3586 = vst [vmem:[#allocation6 + $0x108] sm:$0xff] %v3522
      %3587 = vst [vmem:[#allocation6 + $0x110] sm:$0xff] %v3523
      %3588 = vst [vmem:[#allocation6 + $0x118] sm:$0xff] %v3524
      %3589 = vst [vmem:[#allocation6 + $0x120] sm:$0xff] %v3525
      %3590 = vst [vmem:[#allocation6 + $0x128] sm:$0xff] %v3526
      %3591 = vst [vmem:[#allocation6 + $0x130] sm:$0xff] %v3527
      %3592 = vst [vmem:[#allocation6 + $0x138] sm:$0xff] %v3528
      %3593 = vst [vmem:[#allocation6 + $0x140] sm:$0xff] %v3529
      %3594 = vst [vmem:[#allocation6 + $0x148] sm:$0xff] %v3530
      %3595 = vst [vmem:[#allocation6 + $0x150] sm:$0xff] %v3531
      %3596 = vst [vmem:[#allocation6 + $0x158] sm:$0xff] %v3532
      %3597 = vst [vmem:[#allocation6 + $0x160] sm:$0xff] %v3533
      %3598 = vst [vmem:[#allocation6 + $0x168] sm:$0xff] %v3534
      %3599 = vst [vmem:[#allocation6 + $0x170] sm:$0xff] %v3535
      %3600 = vst [vmem:[#allocation6 + $0x178] sm:$0xff] %v3536
      %3601 = vst [vmem:[#allocation6 + $0x180] sm:$0xff] %v3537
      %3602 = vst [vmem:[#allocation6 + $0x188] sm:$0xff] %v3538
      %3603 = vst [vmem:[#allocation6 + $0x190] sm:$0xff] %v3539
      %3604 = vst [vmem:[#allocation6 + $0x198] sm:$0xff] %v3540
      %3605 = vst [vmem:[#allocation6 + $0x1a0] sm:$0xff] %v3541
      %3606 = vst [vmem:[#allocation6 + $0x1a8] sm:$0xff] %v3542
      %3607 = vst [vmem:[#allocation6 + $0x1b0] sm:$0xff] %v3543
      %3608 = vst [vmem:[#allocation6 + $0x1b8] sm:$0xff] %v3544
      %3609 = vst [vmem:[#allocation6 + $0x1c0] sm:$0xff] %v3545
      %3610 = vst [vmem:[#allocation6 + $0x1c8] sm:$0xff] %v3546
      %3611 = vst [vmem:[#allocation6 + $0x1d0] sm:$0xff] %v3547
      %3612 = vst [vmem:[#allocation6 + $0x1d8] sm:$0xff] %v3548
      %3613 = vst [vmem:[#allocation6 + $0x1e0] sm:$0xff] %v3549
      %3614 = vst [vmem:[#allocation6 + $0x1e8] sm:$0xff] %v3550
      %3615 = vst [vmem:[#allocation6 + $0x1f0] sm:$0xff] %v3551
      %3616 = vst [vmem:[#allocation6 + $0x1f8] sm:$0xff] %v3552
      %s3617 = scalar_lea.vmem [#allocation3], 16
      %v3618 = vld [vmem:[%s3617] sm:$0xff]
      %v3619 = vld [vmem:[%s3617 + $0x8] sm:$0xff]
      %v3620 = vld [vmem:[%s3617 + $0x10] sm:$0xff]
      %v3621 = vld [vmem:[%s3617 + $0x18] sm:$0xff]
      %v3622 = vld [vmem:[%s3617 + $0x20] sm:$0xff]
      %v3623 = vld [vmem:[%s3617 + $0x28] sm:$0xff]
      %v3624 = vld [vmem:[%s3617 + $0x30] sm:$0xff]
      %v3625 = vld [vmem:[%s3617 + $0x38] sm:$0xff]
      %v3626 = vld [vmem:[%s3617 + $0x40] sm:$0xff]
      %v3627 = vld [vmem:[%s3617 + $0x48] sm:$0xff]
      %v3628 = vld [vmem:[%s3617 + $0x50] sm:$0xff]
      %v3629 = vld [vmem:[%s3617 + $0x58] sm:$0xff]
      %v3630 = vld [vmem:[%s3617 + $0x60] sm:$0xff]
      %v3631 = vld [vmem:[%s3617 + $0x68] sm:$0xff]
      %v3632 = vld [vmem:[%s3617 + $0x70] sm:$0xff]
      %v3633 = vld [vmem:[%s3617 + $0x78] sm:$0xff]
      %v3634 = vld [vmem:[#allocation6] sm:$0xff]
      %v3635 = vld [vmem:[#allocation6 + $0x8] sm:$0xff]
      %v3636 = vld [vmem:[#allocation6 + $0x10] sm:$0xff]
      %v3637 = vld [vmem:[#allocation6 + $0x18] sm:$0xff]
      %v3638 = vld [vmem:[#allocation6 + $0x20] sm:$0xff]
      %v3639 = vld [vmem:[#allocation6 + $0x28] sm:$0xff]
      %v3640 = vld [vmem:[#allocation6 + $0x30] sm:$0xff]
      %v3641 = vld [vmem:[#allocation6 + $0x38] sm:$0xff]
      %v3642 = vld [vmem:[#allocation6 + $0x40] sm:$0xff]
      %v3643 = vld [vmem:[#allocation6 + $0x48] sm:$0xff]
      %v3644 = vld [vmem:[#allocation6 + $0x50] sm:$0xff]
      %v3645 = vld [vmem:[#allocation6 + $0x58] sm:$0xff]
      %v3646 = vld [vmem:[#allocation6 + $0x60] sm:$0xff]
      %v3647 = vld [vmem:[#allocation6 + $0x68] sm:$0xff]
      %v3648 = vld [vmem:[#allocation6 + $0x70] sm:$0xff]
      %v3649 = vld [vmem:[#allocation6 + $0x78] sm:$0xff]
      %v3650 = vld [vmem:[#allocation6 + $0x80] sm:$0xff]
      %v3651 = vld [vmem:[#allocation6 + $0x88] sm:$0xff]
      %v3652 = vld [vmem:[#allocation6 + $0x90] sm:$0xff]
      %v3653 = vld [vmem:[#allocation6 + $0x98] sm:$0xff]
      %v3654 = vld [vmem:[#allocation6 + $0xa0] sm:$0xff]
      %v3655 = vld [vmem:[#allocation6 + $0xa8] sm:$0xff]
      %v3656 = vld [vmem:[#allocation6 + $0xb0] sm:$0xff]
      %v3657 = vld [vmem:[#allocation6 + $0xb8] sm:$0xff]
      %v3658 = vld [vmem:[#allocation6 + $0xc0] sm:$0xff]
      %v3659 = vld [vmem:[#allocation6 + $0xc8] sm:$0xff]
      %v3660 = vld [vmem:[#allocation6 + $0xd0] sm:$0xff]
      %v3661 = vld [vmem:[#allocation6 + $0xd8] sm:$0xff]
      %v3662 = vld [vmem:[#allocation6 + $0xe0] sm:$0xff]
      %v3663 = vld [vmem:[#allocation6 + $0xe8] sm:$0xff]
      %v3664 = vld [vmem:[#allocation6 + $0xf0] sm:$0xff]
      %v3665 = vld [vmem:[#allocation6 + $0xf8] sm:$0xff]
      %v3666 = vld [vmem:[#allocation6 + $0x100] sm:$0xff]
      %v3667 = vld [vmem:[#allocation6 + $0x108] sm:$0xff]
      %v3668 = vld [vmem:[#allocation6 + $0x110] sm:$0xff]
      %v3669 = vld [vmem:[#allocation6 + $0x118] sm:$0xff]
      %v3670 = vld [vmem:[#allocation6 + $0x120] sm:$0xff]
      %v3671 = vld [vmem:[#allocation6 + $0x128] sm:$0xff]
      %v3672 = vld [vmem:[#allocation6 + $0x130] sm:$0xff]
      %v3673 = vld [vmem:[#allocation6 + $0x138] sm:$0xff]
      %v3674 = vld [vmem:[#allocation6 + $0x140] sm:$0xff]
      %v3675 = vld [vmem:[#allocation6 + $0x148] sm:$0xff]
      %v3676 = vld [vmem:[#allocation6 + $0x150] sm:$0xff]
      %v3677 = vld [vmem:[#allocation6 + $0x158] sm:$0xff]
      %v3678 = vld [vmem:[#allocation6 + $0x160] sm:$0xff]
      %v3679 = vld [vmem:[#allocation6 + $0x168] sm:$0xff]
      %v3680 = vld [vmem:[#allocation6 + $0x170] sm:$0xff]
      %v3681 = vld [vmem:[#allocation6 + $0x178] sm:$0xff]
      %v3682 = vld [vmem:[#allocation6 + $0x180] sm:$0xff]
      %v3683 = vld [vmem:[#allocation6 + $0x188] sm:$0xff]
      %v3684 = vld [vmem:[#allocation6 + $0x190] sm:$0xff]
      %v3685 = vld [vmem:[#allocation6 + $0x198] sm:$0xff]
      %v3686 = vld [vmem:[#allocation6 + $0x1a0] sm:$0xff]
      %v3687 = vld [vmem:[#allocation6 + $0x1a8] sm:$0xff]
      %v3688 = vld [vmem:[#allocation6 + $0x1b0] sm:$0xff]
      %v3689 = vld [vmem:[#allocation6 + $0x1b8] sm:$0xff]
      %v3690 = vld [vmem:[#allocation6 + $0x1c0] sm:$0xff]
      %v3691 = vld [vmem:[#allocation6 + $0x1c8] sm:$0xff]
      %v3692 = vld [vmem:[#allocation6 + $0x1d0] sm:$0xff]
      %v3693 = vld [vmem:[#allocation6 + $0x1d8] sm:$0xff]
      %v3694 = vld [vmem:[#allocation6 + $0x1e0] sm:$0xff]
      %v3695 = vld [vmem:[#allocation6 + $0x1e8] sm:$0xff]
      %v3696 = vld [vmem:[#allocation6 + $0x1f0] sm:$0xff]
      %v3697 = vld [vmem:[#allocation6 + $0x1f8] sm:$0xff]
      %s3698 = scalar_lea.vmem %s1, 768
      %v3699 = vld [vmem:[%s3698] sm:$0xff]
      %v3700 = vld [vmem:[%s3698 + $0x8] sm:$0xff]
      %v3701 = vld [vmem:[%s3698 + $0x10] sm:$0xff]
      %v3702 = vld [vmem:[%s3698 + $0x18] sm:$0xff]
      %v3703 = vld [vmem:[%s3698 + $0x20] sm:$0xff]
      %v3704 = vld [vmem:[%s3698 + $0x28] sm:$0xff]
      %v3705 = vld [vmem:[%s3698 + $0x30] sm:$0xff]
      %v3706 = vld [vmem:[%s3698 + $0x38] sm:$0xff]
      %v3707 = vld [vmem:[%s3698 + $0x40] sm:$0xff]
      %v3708 = vld [vmem:[%s3698 + $0x48] sm:$0xff]
      %v3709 = vld [vmem:[%s3698 + $0x50] sm:$0xff]
      %v3710 = vld [vmem:[%s3698 + $0x58] sm:$0xff]
      %v3711 = vld [vmem:[%s3698 + $0x60] sm:$0xff]
      %v3712 = vld [vmem:[%s3698 + $0x68] sm:$0xff]
      %v3713 = vld [vmem:[%s3698 + $0x70] sm:$0xff]
      %v3714 = vld [vmem:[%s3698 + $0x78] sm:$0xff]
      %v3731 = vunpack.c.l.b16 %v3699
      %v3732 = vunpack.c.h.b16 %v3699
      %v3733 = vunpack.c.l.b16 %v3700
      %v3734 = vunpack.c.h.b16 %v3700
      %v3735 = vunpack.c.l.b16 %v3701
      %v3736 = vunpack.c.h.b16 %v3701
      %v3737 = vunpack.c.l.b16 %v3702
      %v3738 = vunpack.c.h.b16 %v3702
      %v3739 = vunpack.c.l.b16 %v3703
      %v3740 = vunpack.c.h.b16 %v3703
      %v3741 = vunpack.c.l.b16 %v3704
      %v3742 = vunpack.c.h.b16 %v3704
      %v3743 = vunpack.c.l.b16 %v3705
      %v3744 = vunpack.c.h.b16 %v3705
      %v3745 = vunpack.c.l.b16 %v3706
      %v3746 = vunpack.c.h.b16 %v3706
      %v3747 = vunpack.c.l.b16 %v3707
      %v3748 = vunpack.c.h.b16 %v3707
      %v3749 = vunpack.c.l.b16 %v3708
      %v3750 = vunpack.c.h.b16 %v3708
      %v3751 = vunpack.c.l.b16 %v3709
      %v3752 = vunpack.c.h.b16 %v3709
      %v3753 = vunpack.c.l.b16 %v3710
      %v3754 = vunpack.c.h.b16 %v3710
      %v3755 = vunpack.c.l.b16 %v3711
      %v3756 = vunpack.c.h.b16 %v3711
      %v3757 = vunpack.c.l.b16 %v3712
      %v3758 = vunpack.c.h.b16 %v3712
      %v3759 = vunpack.c.l.b16 %v3713
      %v3760 = vunpack.c.h.b16 %v3713
      %v3761 = vunpack.c.l.b16 %v3714
      %v3762 = vunpack.c.h.b16 %v3714
      %v3763 = vpack.c.b16 %v3733, %v3731
      %v3764 = vpack.c.b16 %v3734, %v3732
      %v3765 = vpack.c.b16 %v3737, %v3735
      %v3766 = vpack.c.b16 %v3738, %v3736
      %v3767 = vpack.c.b16 %v3741, %v3739
      %v3768 = vpack.c.b16 %v3742, %v3740
      %v3769 = vpack.c.b16 %v3745, %v3743
      %v3770 = vpack.c.b16 %v3746, %v3744
      %v3771 = vpack.c.b16 %v3749, %v3747
      %v3772 = vpack.c.b16 %v3750, %v3748
      %v3773 = vpack.c.b16 %v3753, %v3751
      %v3774 = vpack.c.b16 %v3754, %v3752
      %v3775 = vpack.c.b16 %v3757, %v3755
      %v3776 = vpack.c.b16 %v3758, %v3756
      %v3777 = vpack.c.b16 %v3761, %v3759
      %v3778 = vpack.c.b16 %v3762, %v3760
      %3795 = vmatprep.subr.bf16.mxu0 %v3764
      %3796 = vmatpush1.bf16.msra.mxu0 %v3763
      %3797 = vmatprep.subr.bf16.mxu0 %v3766
      %3798 = vmatpush1.bf16.msra.mxu0 %v3765
      %3799 = vmatprep.subr.bf16.mxu0 %v3768
      %3800 = vmatpush1.bf16.msra.mxu0 %v3767
      %3801 = vmatprep.subr.bf16.mxu0 %v3770
      %3802 = vmatpush1.bf16.msra.mxu0 %v3769
      %3803 = vmatprep.subr.bf16.mxu0 %v3772
      %3804 = vmatpush1.bf16.msra.mxu0 %v3771
      %3805 = vmatprep.subr.bf16.mxu0 %v3774
      %3806 = vmatpush1.bf16.msra.mxu0 %v3773
      %3807 = vmatprep.subr.bf16.mxu0 %v3776
      %3808 = vmatpush1.bf16.msra.mxu0 %v3775
      %3809 = vmatprep.subr.bf16.mxu0 %v3778
      %3810 = vmatpush1.bf16.msra.mxu0 %v3777
      %3811 = vmatprep.subr.bf16.mxu0 0
      %3812 = vmatpush1.bf16.msra.mxu0 0
      %3813 = vmatprep.subr.bf16.mxu0 0
      %3814 = vmatpush1.bf16.msra.mxu0 0
      %3815 = vmatprep.subr.bf16.mxu0 0
      %3816 = vmatpush1.bf16.msra.mxu0 0
      %3817 = vmatprep.subr.bf16.mxu0 0
      %3818 = vmatpush1.bf16.msra.mxu0 0
      %3819 = vmatprep.subr.bf16.mxu0 0
      %3820 = vmatpush1.bf16.msra.mxu0 0
      %3821 = vmatprep.subr.bf16.mxu0 0
      %3822 = vmatpush1.bf16.msra.mxu0 0
      %3823 = vmatprep.subr.bf16.mxu0 0
      %3824 = vmatpush1.bf16.msra.mxu0 0
      %3825 = vmatprep.subr.bf16.mxu0 0
      %3826 = vmatpush1.bf16.msra.mxu0 0
      %3827 = vmatprep.mubr.bf16.mxu0 0
      %3828 = vmatmul.mubr.bf16.gmra.mrb[0].mxu0 %v3618
      %v3829 = vpop.f32.mrb[0].mxu0
      %v3830 = vadd.f32 0.0, %v3829
      %v3831 = vpop.f32.mrb[0].mxu0
      %v3832 = vadd.f32 0.0, %v3831
      %v3833 = vpop.f32.mrb[0].mxu0
      %v3834 = vadd.f32 0.0, %v3833
      %v3835 = vpop.f32.mrb[0].mxu0
      %v3836 = vadd.f32 0.0, %v3835
      %3837 = vmatprep.mubr.bf16.mxu0 0
      %3838 = vmatmul.mubr.bf16.gmra.mrb[0].mxu0 %v3619
      %v3839 = vpop.f32.mrb[0].mxu0
      %v3840 = vadd.f32 0.0, %v3839
      %v3841 = vpop.f32.mrb[0].mxu0
      %v3842 = vadd.f32 0.0, %v3841
      %v3843 = vpop.f32.mrb[0].mxu0
      %v3844 = vadd.f32 0.0, %v3843
      %v3845 = vpop.f32.mrb[0].mxu0
      %v3846 = vadd.f32 0.0, %v3845
      %3847 = vmatprep.mubr.bf16.mxu0 0
      %3848 = vmatmul.mubr.bf16.gmra.mrb[0].mxu0 %v3620
      %v3849 = vpop.f32.mrb[0].mxu0
      %v3850 = vadd.f32 0.0, %v3849
      %v3851 = vpop.f32.mrb[0].mxu0
      %v3852 = vadd.f32 0.0, %v3851
      %v3853 = vpop.f32.mrb[0].mxu0
      %v3854 = vadd.f32 0.0, %v3853
      %v3855 = vpop.f32.mrb[0].mxu0
      %v3856 = vadd.f32 0.0, %v3855
      %3857 = vmatprep.mubr.bf16.mxu0 0
      %3858 = vmatmul.mubr.bf16.gmra.mrb[0].mxu0 %v3621
      %v3859 = vpop.f32.mrb[0].mxu0
      %v3860 = vadd.f32 0.0, %v3859
      %v3861 = vpop.f32.mrb[0].mxu0
      %v3862 = vadd.f32 0.0, %v3861
      %v3863 = vpop.f32.mrb[0].mxu0
      %v3864 = vadd.f32 0.0, %v3863
      %v3865 = vpop.f32.mrb[0].mxu0
      %v3866 = vadd.f32 0.0, %v3865
      %3867 = vmatprep.mubr.bf16.mxu0 0
      %3868 = vmatmul.mubr.bf16.gmra.mrb[0].mxu0 %v3622
      %v3869 = vpop.f32.mrb[0].mxu0
      %v3870 = vadd.f32 0.0, %v3869
      %v3871 = vpop.f32.mrb[0].mxu0
      %v3872 = vadd.f32 0.0, %v3871
      %v3873 = vpop.f32.mrb[0].mxu0
      %v3874 = vadd.f32 0.0, %v3873
      %v3875 = vpop.f32.mrb[0].mxu0
      %v3876 = vadd.f32 0.0, %v3875
      %3877 = vmatprep.mubr.bf16.mxu0 0
      %3878 = vmatmul.mubr.bf16.gmra.mrb[0].mxu0 %v3623
      %v3879 = vpop.f32.mrb[0].mxu0
      %v3880 = vadd.f32 0.0, %v3879
      %v3881 = vpop.f32.mrb[0].mxu0
      %v3882 = vadd.f32 0.0, %v3881
      %v3883 = vpop.f32.mrb[0].mxu0
      %v3884 = vadd.f32 0.0, %v3883
      %v3885 = vpop.f32.mrb[0].mxu0
      %v3886 = vadd.f32 0.0, %v3885
      %3887 = vmatprep.mubr.bf16.mxu0 0
      %3888 = vmatmul.mubr.bf16.gmra.mrb[0].mxu0 %v3624
      %v3889 = vpop.f32.mrb[0].mxu0
      %v3890 = vadd.f32 0.0, %v3889
      %v3891 = vpop.f32.mrb[0].mxu0
      %v3892 = vadd.f32 0.0, %v3891
      %v3893 = vpop.f32.mrb[0].mxu0
      %v3894 = vadd.f32 0.0, %v3893
      %v3895 = vpop.f32.mrb[0].mxu0
      %v3896 = vadd.f32 0.0, %v3895
      %3897 = vmatprep.mubr.bf16.mxu0 0
      %3898 = vmatmul.mubr.bf16.gmra.mrb[0].mxu0 %v3625
      %v3899 = vpop.f32.mrb[0].mxu0
      %v3900 = vadd.f32 0.0, %v3899
      %v3901 = vpop.f32.mrb[0].mxu0
      %v3902 = vadd.f32 0.0, %v3901
      %v3903 = vpop.f32.mrb[0].mxu0
      %v3904 = vadd.f32 0.0, %v3903
      %v3905 = vpop.f32.mrb[0].mxu0
      %v3906 = vadd.f32 0.0, %v3905
      %3907 = vmatprep.mubr.bf16.mxu0 0
      %3908 = vmatmul.mubr.bf16.gmra.mrb[0].mxu0 %v3626
      %v3909 = vpop.f32.mrb[0].mxu0
      %v3910 = vadd.f32 0.0, %v3909
      %v3911 = vpop.f32.mrb[0].mxu0
      %v3912 = vadd.f32 0.0, %v3911
      %v3913 = vpop.f32.mrb[0].mxu0
      %v3914 = vadd.f32 0.0, %v3913
      %v3915 = vpop.f32.mrb[0].mxu0
      %v3916 = vadd.f32 0.0, %v3915
      %3917 = vmatprep.mubr.bf16.mxu0 0
      %3918 = vmatmul.mubr.bf16.gmra.mrb[0].mxu0 %v3627
      %v3919 = vpop.f32.mrb[0].mxu0
      %v3920 = vadd.f32 0.0, %v3919
      %v3921 = vpop.f32.mrb[0].mxu0
      %v3922 = vadd.f32 0.0, %v3921
      %v3923 = vpop.f32.mrb[0].mxu0
      %v3924 = vadd.f32 0.0, %v3923
      %v3925 = vpop.f32.mrb[0].mxu0
      %v3926 = vadd.f32 0.0, %v3925
      %3927 = vmatprep.mubr.bf16.mxu0 0
      %3928 = vmatmul.mubr.bf16.gmra.mrb[0].mxu0 %v3628
      %v3929 = vpop.f32.mrb[0].mxu0
      %v3930 = vadd.f32 0.0, %v3929
      %v3931 = vpop.f32.mrb[0].mxu0
      %v3932 = vadd.f32 0.0, %v3931
      %v3933 = vpop.f32.mrb[0].mxu0
      %v3934 = vadd.f32 0.0, %v3933
      %v3935 = vpop.f32.mrb[0].mxu0
      %v3936 = vadd.f32 0.0, %v3935
      %3937 = vmatprep.mubr.bf16.mxu0 0
      %3938 = vmatmul.mubr.bf16.gmra.mrb[0].mxu0 %v3629
      %v3939 = vpop.f32.mrb[0].mxu0
      %v3940 = vadd.f32 0.0, %v3939
      %v3941 = vpop.f32.mrb[0].mxu0
      %v3942 = vadd.f32 0.0, %v3941
      %v3943 = vpop.f32.mrb[0].mxu0
      %v3944 = vadd.f32 0.0, %v3943
      %v3945 = vpop.f32.mrb[0].mxu0
      %v3946 = vadd.f32 0.0, %v3945
      %3947 = vmatprep.mubr.bf16.mxu0 0
      %3948 = vmatmul.mubr.bf16.gmra.mrb[0].mxu0 %v3630
      %v3949 = vpop.f32.mrb[0].mxu0
      %v3950 = vadd.f32 0.0, %v3949
      %v3951 = vpop.f32.mrb[0].mxu0
      %v3952 = vadd.f32 0.0, %v3951
      %v3953 = vpop.f32.mrb[0].mxu0
      %v3954 = vadd.f32 0.0, %v3953
      %v3955 = vpop.f32.mrb[0].mxu0
      %v3956 = vadd.f32 0.0, %v3955
      %3957 = vmatprep.mubr.bf16.mxu0 0
      %3958 = vmatmul.mubr.bf16.gmra.mrb[0].mxu0 %v3631
      %v3959 = vpop.f32.mrb[0].mxu0
      %v3960 = vadd.f32 0.0, %v3959
      %v3961 = vpop.f32.mrb[0].mxu0
      %v3962 = vadd.f32 0.0, %v3961
      %v3963 = vpop.f32.mrb[0].mxu0
      %v3964 = vadd.f32 0.0, %v3963
      %v3965 = vpop.f32.mrb[0].mxu0
      %v3966 = vadd.f32 0.0, %v3965
      %3967 = vmatprep.mubr.bf16.mxu0 0
      %3968 = vmatmul.mubr.bf16.gmra.mrb[0].mxu0 %v3632
      %v3969 = vpop.f32.mrb[0].mxu0
      %v3970 = vadd.f32 0.0, %v3969
      %v3971 = vpop.f32.mrb[0].mxu0
      %v3972 = vadd.f32 0.0, %v3971
      %v3973 = vpop.f32.mrb[0].mxu0
      %v3974 = vadd.f32 0.0, %v3973
      %v3975 = vpop.f32.mrb[0].mxu0
      %v3976 = vadd.f32 0.0, %v3975
      %3977 = vmatprep.mubr.bf16.mxu0 0
      %3978 = vmatmul.mubr.bf16.gmra.mrb[0].mxu0 %v3633
      %v3979 = vpop.f32.mrb[0].mxu0
      %v3980 = vadd.f32 0.0, %v3979
      %v3981 = vpop.f32.mrb[0].mxu0
      %v3982 = vadd.f32 0.0, %v3981
      %v3983 = vpop.f32.mrb[0].mxu0
      %v3984 = vadd.f32 0.0, %v3983
      %v3985 = vpop.f32.mrb[0].mxu0
      %v3986 = vadd.f32 0.0, %v3985
      %3987 = vdwg.mxu0
      %v3988 = vadd.f32 %v3634, %v3830
      %v3989 = vadd.f32 %v3635, %v3832
      %v3990 = vadd.f32 %v3636, %v3834
      %v3991 = vadd.f32 %v3637, %v3836
      %v3992 = vadd.f32 %v3638, %v3840
      %v3993 = vadd.f32 %v3639, %v3842
      %v3994 = vadd.f32 %v3640, %v3844
      %v3995 = vadd.f32 %v3641, %v3846
      %v3996 = vadd.f32 %v3642, %v3850
      %v3997 = vadd.f32 %v3643, %v3852
      %v3998 = vadd.f32 %v3644, %v3854
      %v3999 = vadd.f32 %v3645, %v3856
      %v4000 = vadd.f32 %v3646, %v3860
      %v4001 = vadd.f32 %v3647, %v3862
      %v4002 = vadd.f32 %v3648, %v3864
      %v4003 = vadd.f32 %v3649, %v3866
      %v4004 = vadd.f32 %v3650, %v3870
      %v4005 = vadd.f32 %v3651, %v3872
      %v4006 = vadd.f32 %v3652, %v3874
      %v4007 = vadd.f32 %v3653, %v3876
      %v4008 = vadd.f32 %v3654, %v3880
      %v4009 = vadd.f32 %v3655, %v3882
      %v4010 = vadd.f32 %v3656, %v3884
      %v4011 = vadd.f32 %v3657, %v3886
      %v4012 = vadd.f32 %v3658, %v3890
      %v4013 = vadd.f32 %v3659, %v3892
      %v4014 = vadd.f32 %v3660, %v3894
      %v4015 = vadd.f32 %v3661, %v3896
      %v4016 = vadd.f32 %v3662, %v3900
      %v4017 = vadd.f32 %v3663, %v3902
      %v4018 = vadd.f32 %v3664, %v3904
      %v4019 = vadd.f32 %v3665, %v3906
      %v4020 = vadd.f32 %v3666, %v3910
      %v4021 = vadd.f32 %v3667, %v3912
      %v4022 = vadd.f32 %v3668, %v3914
      %v4023 = vadd.f32 %v3669, %v3916
      %v4024 = vadd.f32 %v3670, %v3920
      %v4025 = vadd.f32 %v3671, %v3922
      %v4026 = vadd.f32 %v3672, %v3924
      %v4027 = vadd.f32 %v3673, %v3926
      %v4028 = vadd.f32 %v3674, %v3930
      %v4029 = vadd.f32 %v3675, %v3932
      %v4030 = vadd.f32 %v3676, %v3934
      %v4031 = vadd.f32 %v3677, %v3936
      %v4032 = vadd.f32 %v3678, %v3940
      %v4033 = vadd.f32 %v3679, %v3942
      %v4034 = vadd.f32 %v3680, %v3944
      %v4035 = vadd.f32 %v3681, %v3946
      %v4036 = vadd.f32 %v3682, %v3950
      %v4037 = vadd.f32 %v3683, %v3952
      %v4038 = vadd.f32 %v3684, %v3954
      %v4039 = vadd.f32 %v3685, %v3956
      %v4040 = vadd.f32 %v3686, %v3960
      %v4041 = vadd.f32 %v3687, %v3962
      %v4042 = vadd.f32 %v3688, %v3964
      %v4043 = vadd.f32 %v3689, %v3966
      %v4044 = vadd.f32 %v3690, %v3970
      %v4045 = vadd.f32 %v3691, %v3972
      %v4046 = vadd.f32 %v3692, %v3974
      %v4047 = vadd.f32 %v3693, %v3976
      %v4048 = vadd.f32 %v3694, %v3980
      %v4049 = vadd.f32 %v3695, %v3982
      %v4050 = vadd.f32 %v3696, %v3984
      %v4051 = vadd.f32 %v3697, %v3986
      %4052 = vst [vmem:[#allocation6] sm:$0xff] %v3988
      %4053 = vst [vmem:[#allocation6 + $0x8] sm:$0xff] %v3989
      %4054 = vst [vmem:[#allocation6 + $0x10] sm:$0xff] %v3990
      %4055 = vst [vmem:[#allocation6 + $0x18] sm:$0xff] %v3991
      %4056 = vst [vmem:[#allocation6 + $0x20] sm:$0xff] %v3992
      %4057 = vst [vmem:[#allocation6 + $0x28] sm:$0xff] %v3993
      %4058 = vst [vmem:[#allocation6 + $0x30] sm:$0xff] %v3994
      %4059 = vst [vmem:[#allocation6 + $0x38] sm:$0xff] %v3995
      %4060 = vst [vmem:[#allocation6 + $0x40] sm:$0xff] %v3996
      %4061 = vst [vmem:[#allocation6 + $0x48] sm:$0xff] %v3997
      %4062 = vst [vmem:[#allocation6 + $0x50] sm:$0xff] %v3998
      %4063 = vst [vmem:[#allocation6 + $0x58] sm:$0xff] %v3999
      %4064 = vst [vmem:[#allocation6 + $0x60] sm:$0xff] %v4000
      %4065 = vst [vmem:[#allocation6 + $0x68] sm:$0xff] %v4001
      %4066 = vst [vmem:[#allocation6 + $0x70] sm:$0xff] %v4002
      %4067 = vst [vmem:[#allocation6 + $0x78] sm:$0xff] %v4003
      %4068 = vst [vmem:[#allocation6 + $0x80] sm:$0xff] %v4004
      %4069 = vst [vmem:[#allocation6 + $0x88] sm:$0xff] %v4005
      %4070 = vst [vmem:[#allocation6 + $0x90] sm:$0xff] %v4006
      %4071 = vst [vmem:[#allocation6 + $0x98] sm:$0xff] %v4007
      %4072 = vst [vmem:[#allocation6 + $0xa0] sm:$0xff] %v4008
      %4073 = vst [vmem:[#allocation6 + $0xa8] sm:$0xff] %v4009
      %4074 = vst [vmem:[#allocation6 + $0xb0] sm:$0xff] %v4010
      %4075 = vst [vmem:[#allocation6 + $0xb8] sm:$0xff] %v4011
      %4076 = vst [vmem:[#allocation6 + $0xc0] sm:$0xff] %v4012
      %4077 = vst [vmem:[#allocation6 + $0xc8] sm:$0xff] %v4013
      %4078 = vst [vmem:[#allocation6 + $0xd0] sm:$0xff] %v4014
      %4079 = vst [vmem:[#allocation6 + $0xd8] sm:$0xff] %v4015
      %4080 = vst [vmem:[#allocation6 + $0xe0] sm:$0xff] %v4016
      %4081 = vst [vmem:[#allocation6 + $0xe8] sm:$0xff] %v4017
      %4082 = vst [vmem:[#allocation6 + $0xf0] sm:$0xff] %v4018
      %4083 = vst [vmem:[#allocation6 + $0xf8] sm:$0xff] %v4019
      %4084 = vst [vmem:[#allocation6 + $0x100] sm:$0xff] %v4020
      %4085 = vst [vmem:[#allocation6 + $0x108] sm:$0xff] %v4021
      %4086 = vst [vmem:[#allocation6 + $0x110] sm:$0xff] %v4022
      %4087 = vst [vmem:[#allocation6 + $0x118] sm:$0xff] %v4023
      %4088 = vst [vmem:[#allocation6 + $0x120] sm:$0xff] %v4024
      %4089 = vst [vmem:[#allocation6 + $0x128] sm:$0xff] %v4025
      %4090 = vst [vmem:[#allocation6 + $0x130] sm:$0xff] %v4026
      %4091 = vst [vmem:[#allocation6 + $0x138] sm:$0xff] %v4027
      %4092 = vst [vmem:[#allocation6 + $0x140] sm:$0xff] %v4028
      %4093 = vst [vmem:[#allocation6 + $0x148] sm:$0xff] %v4029
      %4094 = vst [vmem:[#allocation6 + $0x150] sm:$0xff] %v4030
      %4095 = vst [vmem:[#allocation6 + $0x158] sm:$0xff] %v4031
      %4096 = vst [vmem:[#allocation6 + $0x160] sm:$0xff] %v4032
      %4097 = vst [vmem:[#allocation6 + $0x168] sm:$0xff] %v4033
      %4098 = vst [vmem:[#allocation6 + $0x170] sm:$0xff] %v4034
      %4099 = vst [vmem:[#allocation6 + $0x178] sm:$0xff] %v4035
      %4100 = vst [vmem:[#allocation6 + $0x180] sm:$0xff] %v4036
      %4101 = vst [vmem:[#allocation6 + $0x188] sm:$0xff] %v4037
      %4102 = vst [vmem:[#allocation6 + $0x190] sm:$0xff] %v4038
      %4103 = vst [vmem:[#allocation6 + $0x198] sm:$0xff] %v4039
      %4104 = vst [vmem:[#allocation6 + $0x1a0] sm:$0xff] %v4040
      %4105 = vst [vmem:[#allocation6 + $0x1a8] sm:$0xff] %v4041
      %4106 = vst [vmem:[#allocation6 + $0x1b0] sm:$0xff] %v4042
      %4107 = vst [vmem:[#allocation6 + $0x1b8] sm:$0xff] %v4043
      %4108 = vst [vmem:[#allocation6 + $0x1c0] sm:$0xff] %v4044
      %4109 = vst [vmem:[#allocation6 + $0x1c8] sm:$0xff] %v4045
      %4110 = vst [vmem:[#allocation6 + $0x1d0] sm:$0xff] %v4046
      %4111 = vst [vmem:[#allocation6 + $0x1d8] sm:$0xff] %v4047
      %4112 = vst [vmem:[#allocation6 + $0x1e0] sm:$0xff] %v4048
      %4113 = vst [vmem:[#allocation6 + $0x1e8] sm:$0xff] %v4049
      %4114 = vst [vmem:[#allocation6 + $0x1f0] sm:$0xff] %v4050
      %4115 = vst [vmem:[#allocation6 + $0x1f8] sm:$0xff] %v4051
      %s4116 = scalar_lea.vmem [#allocation3], 160
      %v4117 = vld [vmem:[%s4116] sm:$0xff]
      %v4118 = vld [vmem:[%s4116 + $0x8] sm:$0xff]
      %v4119 = vld [vmem:[%s4116 + $0x10] sm:$0xff]
      %v4120 = vld [vmem:[%s4116 + $0x18] sm:$0xff]
      %v4121 = vld [vmem:[%s4116 + $0x20] sm:$0xff]
      %v4122 = vld [vmem:[%s4116 + $0x28] sm:$0xff]
      %v4123 = vld [vmem:[%s4116 + $0x30] sm:$0xff]
      %v4124 = vld [vmem:[%s4116 + $0x38] sm:$0xff]
      %v4125 = vld [vmem:[%s4116 + $0x40] sm:$0xff]
      %v4126 = vld [vmem:[%s4116 + $0x48] sm:$0xff]
      %v4127 = vld [vmem:[%s4116 + $0x50] sm:$0xff]
      %v4128 = vld [vmem:[%s4116 + $0x58] sm:$0xff]
      %v4129 = vld [vmem:[%s4116 + $0x60] sm:$0xff]
      %v4130 = vld [vmem:[%s4116 + $0x68] sm:$0xff]
      %v4131 = vld [vmem:[%s4116 + $0x70] sm:$0xff]
      %v4132 = vld [vmem:[%s4116 + $0x78] sm:$0xff]
      %v4133 = vld [vmem:[#allocation6] sm:$0xff]
      %v4134 = vld [vmem:[#allocation6 + $0x8] sm:$0xff]
      %v4135 = vld [vmem:[#allocation6 + $0x10] sm:$0xff]
      %v4136 = vld [vmem:[#allocation6 + $0x18] sm:$0xff]
      %v4137 = vld [vmem:[#allocation6 + $0x20] sm:$0xff]
      %v4138 = vld [vmem:[#allocation6 + $0x28] sm:$0xff]
      %v4139 = vld [vmem:[#allocation6 + $0x30] sm:$0xff]
      %v4140 = vld [vmem:[#allocation6 + $0x38] sm:$0xff]
      %v4141 = vld [vmem:[#allocation6 + $0x40] sm:$0xff]
      %v4142 = vld [vmem:[#allocation6 + $0x48] sm:$0xff]
      %v4143 = vld [vmem:[#allocation6 + $0x50] sm:$0xff]
      %v4144 = vld [vmem:[#allocation6 + $0x58] sm:$0xff]
      %v4145 = vld [vmem:[#allocation6 + $0x60] sm:$0xff]
      %v4146 = vld [vmem:[#allocation6 + $0x68] sm:$0xff]
      %v4147 = vld [vmem:[#allocation6 + $0x70] sm:$0xff]
      %v4148 = vld [vmem:[#allocation6 + $0x78] sm:$0xff]
      %v4149 = vld [vmem:[#allocation6 + $0x80] sm:$0xff]
      %v4150 = vld [vmem:[#allocation6 + $0x88] sm:$0xff]
      %v4151 = vld [vmem:[#allocation6 + $0x90] sm:$0xff]
      %v4152 = vld [vmem:[#allocation6 + $0x98] sm:$0xff]
      %v4153 = vld [vmem:[#allocation6 + $0xa0] sm:$0xff]
      %v4154 = vld [vmem:[#allocation6 + $0xa8] sm:$0xff]
      %v4155 = vld [vmem:[#allocation6 + $0xb0] sm:$0xff]
      %v4156 = vld [vmem:[#allocation6 + $0xb8] sm:$0xff]
      %v4157 = vld [vmem:[#allocation6 + $0xc0] sm:$0xff]
      %v4158 = vld [vmem:[#allocation6 + $0xc8] sm:$0xff]
      %v4159 = vld [vmem:[#allocation6 + $0xd0] sm:$0xff]
      %v4160 = vld [vmem:[#allocation6 + $0xd8] sm:$0xff]
      %v4161 = vld [vmem:[#allocation6 + $0xe0] sm:$0xff]
      %v4162 = vld [vmem:[#allocation6 + $0xe8] sm:$0xff]
      %v4163 = vld [vmem:[#allocation6 + $0xf0] sm:$0xff]
      %v4164 = vld [vmem:[#allocation6 + $0xf8] sm:$0xff]
      %v4165 = vld [vmem:[#allocation6 + $0x100] sm:$0xff]
      %v4166 = vld [vmem:[#allocation6 + $0x108] sm:$0xff]
      %v4167 = vld [vmem:[#allocation6 + $0x110] sm:$0xff]
      %v4168 = vld [vmem:[#allocation6 + $0x118] sm:$0xff]
      %v4169 = vld [vmem:[#allocation6 + $0x120] sm:$0xff]
      %v4170 = vld [vmem:[#allocation6 + $0x128] sm:$0xff]
      %v4171 = vld [vmem:[#allocation6 + $0x130] sm:$0xff]
      %v4172 = vld [vmem:[#allocation6 + $0x138] sm:$0xff]
      %v4173 = vld [vmem:[#allocation6 + $0x140] sm:$0xff]
      %v4174 = vld [vmem:[#allocation6 + $0x148] sm:$0xff]
      %v4175 = vld [vmem:[#allocation6 + $0x150] sm:$0xff]
      %v4176 = vld [vmem:[#allocation6 + $0x158] sm:$0xff]
      %v4177 = vld [vmem:[#allocation6 + $0x160] sm:$0xff]
      %v4178 = vld [vmem:[#allocation6 + $0x168] sm:$0xff]
      %v4179 = vld [vmem:[#allocation6 + $0x170] sm:$0xff]
      %v4180 = vld [vmem:[#allocation6 + $0x178] sm:$0xff]
      %v4181 = vld [vmem:[#allocation6 + $0x180] sm:$0xff]
      %v4182 = vld [vmem:[#allocation6 + $0x188] sm:$0xff]
      %v4183 = vld [vmem:[#allocation6 + $0x190] sm:$0xff]
      %v4184 = vld [vmem:[#allocation6 + $0x198] sm:$0xff]
      %v4185 = vld [vmem:[#allocation6 + $0x1a0] sm:$0xff]
      %v4186 = vld [vmem:[#allocation6 + $0x1a8] sm:$0xff]
      %v4187 = vld [vmem:[#allocation6 + $0x1b0] sm:$0xff]
      %v4188 = vld [vmem:[#allocation6 + $0x1b8] sm:$0xff]
      %v4189 = vld [vmem:[#allocation6 + $0x1c0] sm:$0xff]
      %v4190 = vld [vmem:[#allocation6 + $0x1c8] sm:$0xff]
      %v4191 = vld [vmem:[#allocation6 + $0x1d0] sm:$0xff]
      %v4192 = vld [vmem:[#allocation6 + $0x1d8] sm:$0xff]
      %v4193 = vld [vmem:[#allocation6 + $0x1e0] sm:$0xff]
      %v4194 = vld [vmem:[#allocation6 + $0x1e8] sm:$0xff]
      %v4195 = vld [vmem:[#allocation6 + $0x1f0] sm:$0xff]
      %v4196 = vld [vmem:[#allocation6 + $0x1f8] sm:$0xff]
      %s4197 = scalar_lea.vmem %s1, 896
      %v4198 = vld [vmem:[%s4197] sm:$0xff]
      %v4199 = vld [vmem:[%s4197 + $0x8] sm:$0xff]
      %v4200 = vld [vmem:[%s4197 + $0x10] sm:$0xff]
      %v4201 = vld [vmem:[%s4197 + $0x18] sm:$0xff]
      %v4202 = vld [vmem:[%s4197 + $0x20] sm:$0xff]
      %v4203 = vld [vmem:[%s4197 + $0x28] sm:$0xff]
      %v4204 = vld [vmem:[%s4197 + $0x30] sm:$0xff]
      %v4205 = vld [vmem:[%s4197 + $0x38] sm:$0xff]
      %v4206 = vld [vmem:[%s4197 + $0x40] sm:$0xff]
      %v4207 = vld [vmem:[%s4197 + $0x48] sm:$0xff]
      %v4208 = vld [vmem:[%s4197 + $0x50] sm:$0xff]
      %v4209 = vld [vmem:[%s4197 + $0x58] sm:$0xff]
      %v4210 = vld [vmem:[%s4197 + $0x60] sm:$0xff]
      %v4211 = vld [vmem:[%s4197 + $0x68] sm:$0xff]
      %v4212 = vld [vmem:[%s4197 + $0x70] sm:$0xff]
      %v4213 = vld [vmem:[%s4197 + $0x78] sm:$0xff]
      %v4230 = vunpack.c.l.b16 %v4198
      %v4231 = vunpack.c.h.b16 %v4198
      %v4232 = vunpack.c.l.b16 %v4199
      %v4233 = vunpack.c.h.b16 %v4199
      %v4234 = vunpack.c.l.b16 %v4200
      %v4235 = vunpack.c.h.b16 %v4200
      %v4236 = vunpack.c.l.b16 %v4201
      %v4237 = vunpack.c.h.b16 %v4201
      %v4238 = vunpack.c.l.b16 %v4202
      %v4239 = vunpack.c.h.b16 %v4202
      %v4240 = vunpack.c.l.b16 %v4203
      %v4241 = vunpack.c.h.b16 %v4203
      %v4242 = vunpack.c.l.b16 %v4204
      %v4243 = vunpack.c.h.b16 %v4204
      %v4244 = vunpack.c.l.b16 %v4205
      %v4245 = vunpack.c.h.b16 %v4205
      %v4246 = vunpack.c.l.b16 %v4206
      %v4247 = vunpack.c.h.b16 %v4206
      %v4248 = vunpack.c.l.b16 %v4207
      %v4249 = vunpack.c.h.b16 %v4207
      %v4250 = vunpack.c.l.b16 %v4208
      %v4251 = vunpack.c.h.b16 %v4208
      %v4252 = vunpack.c.l.b16 %v4209
      %v4253 = vunpack.c.h.b16 %v4209
      %v4254 = vunpack.c.l.b16 %v4210
      %v4255 = vunpack.c.h.b16 %v4210
      %v4256 = vunpack.c.l.b16 %v4211
      %v4257 = vunpack.c.h.b16 %v4211
      %v4258 = vunpack.c.l.b16 %v4212
      %v4259 = vunpack.c.h.b16 %v4212
      %v4260 = vunpack.c.l.b16 %v4213
      %v4261 = vunpack.c.h.b16 %v4213
      %v4262 = vpack.c.b16 %v4232, %v4230
      %v4263 = vpack.c.b16 %v4233, %v4231
      %v4264 = vpack.c.b16 %v4236, %v4234
      %v4265 = vpack.c.b16 %v4237, %v4235
      %v4266 = vpack.c.b16 %v4240, %v4238
      %v4267 = vpack.c.b16 %v4241, %v4239
      %v4268 = vpack.c.b16 %v4244, %v4242
      %v4269 = vpack.c.b16 %v4245, %v4243
      %v4270 = vpack.c.b16 %v4248, %v4246
      %v4271 = vpack.c.b16 %v4249, %v4247
      %v4272 = vpack.c.b16 %v4252, %v4250
      %v4273 = vpack.c.b16 %v4253, %v4251
      %v4274 = vpack.c.b16 %v4256, %v4254
      %v4275 = vpack.c.b16 %v4257, %v4255
      %v4276 = vpack.c.b16 %v4260, %v4258
      %v4277 = vpack.c.b16 %v4261, %v4259
      %4294 = vmatprep.subr.bf16.mxu0 %v4263
      %4295 = vmatpush1.bf16.msra.mxu0 %v4262
      %4296 = vmatprep.subr.bf16.mxu0 %v4265
      %4297 = vmatpush1.bf16.msra.mxu0 %v4264
      %4298 = vmatprep.subr.bf16.mxu0 %v4267
      %4299 = vmatpush1.bf16.msra.mxu0 %v4266
      %4300 = vmatprep.subr.bf16.mxu0 %v4269
      %4301 = vmatpush1.bf16.msra.mxu0 %v4268
      %4302 = vmatprep.subr.bf16.mxu0 %v4271
      %4303 = vmatpush1.bf16.msra.mxu0 %v4270
      %4304 = vmatprep.subr.bf16.mxu0 %v4273
      %4305 = vmatpush1.bf16.msra.mxu0 %v4272
      %4306 = vmatprep.subr.bf16.mxu0 %v4275
      %4307 = vmatpush1.bf16.msra.mxu0 %v4274
      %4308 = vmatprep.subr.bf16.mxu0 %v4277
      %4309 = vmatpush1.bf16.msra.mxu0 %v4276
      %4310 = vmatprep.subr.bf16.mxu0 0
      %4311 = vmatpush1.bf16.msra.mxu0 0
      %4312 = vmatprep.subr.bf16.mxu0 0
      %4313 = vmatpush1.bf16.msra.mxu0 0
      %4314 = vmatprep.subr.bf16.mxu0 0
      %4315 = vmatpush1.bf16.msra.mxu0 0
      %4316 = vmatprep.subr.bf16.mxu0 0
      %4317 = vmatpush1.bf16.msra.mxu0 0
      %4318 = vmatprep.subr.bf16.mxu0 0
      %4319 = vmatpush1.bf16.msra.mxu0 0
      %4320 = vmatprep.subr.bf16.mxu0 0
      %4321 = vmatpush1.bf16.msra.mxu0 0
      %4322 = vmatprep.subr.bf16.mxu0 0
      %4323 = vmatpush1.bf16.msra.mxu0 0
      %4324 = vmatprep.subr.bf16.mxu0 0
      %4325 = vmatpush1.bf16.msra.mxu0 0
      %4326 = vmatprep.mubr.bf16.mxu0 0
      %4327 = vmatmul.mubr.bf16.gmra.mrb[0].mxu0 %v4117
      %v4328 = vpop.f32.mrb[0].mxu0
      %v4329 = vadd.f32 0.0, %v4328
      %v4330 = vpop.f32.mrb[0].mxu0
      %v4331 = vadd.f32 0.0, %v4330
      %v4332 = vpop.f32.mrb[0].mxu0
      %v4333 = vadd.f32 0.0, %v4332
      %v4334 = vpop.f32.mrb[0].mxu0
      %v4335 = vadd.f32 0.0, %v4334
      %4336 = vmatprep.mubr.bf16.mxu0 0
      %4337 = vmatmul.mubr.bf16.gmra.mrb[0].mxu0 %v4118
      %v4338 = vpop.f32.mrb[0].mxu0
      %v4339 = vadd.f32 0.0, %v4338
      %v4340 = vpop.f32.mrb[0].mxu0
      %v4341 = vadd.f32 0.0, %v4340
      %v4342 = vpop.f32.mrb[0].mxu0
      %v4343 = vadd.f32 0.0, %v4342
      %v4344 = vpop.f32.mrb[0].mxu0
      %v4345 = vadd.f32 0.0, %v4344
      %4346 = vmatprep.mubr.bf16.mxu0 0
      %4347 = vmatmul.mubr.bf16.gmra.mrb[0].mxu0 %v4119
      %v4348 = vpop.f32.mrb[0].mxu0
      %v4349 = vadd.f32 0.0, %v4348
      %v4350 = vpop.f32.mrb[0].mxu0
      %v4351 = vadd.f32 0.0, %v4350
      %v4352 = vpop.f32.mrb[0].mxu0
      %v4353 = vadd.f32 0.0, %v4352
      %v4354 = vpop.f32.mrb[0].mxu0
      %v4355 = vadd.f32 0.0, %v4354
      %4356 = vmatprep.mubr.bf16.mxu0 0
      %4357 = vmatmul.mubr.bf16.gmra.mrb[0].mxu0 %v4120
      %v4358 = vpop.f32.mrb[0].mxu0
      %v4359 = vadd.f32 0.0, %v4358
      %v4360 = vpop.f32.mrb[0].mxu0
      %v4361 = vadd.f32 0.0, %v4360
      %v4362 = vpop.f32.mrb[0].mxu0
      %v4363 = vadd.f32 0.0, %v4362
      %v4364 = vpop.f32.mrb[0].mxu0
      %v4365 = vadd.f32 0.0, %v4364
      %4366 = vmatprep.mubr.bf16.mxu0 0
      %4367 = vmatmul.mubr.bf16.gmra.mrb[0].mxu0 %v4121
      %v4368 = vpop.f32.mrb[0].mxu0
      %v4369 = vadd.f32 0.0, %v4368
      %v4370 = vpop.f32.mrb[0].mxu0
      %v4371 = vadd.f32 0.0, %v4370
      %v4372 = vpop.f32.mrb[0].mxu0
      %v4373 = vadd.f32 0.0, %v4372
      %v4374 = vpop.f32.mrb[0].mxu0
      %v4375 = vadd.f32 0.0, %v4374
      %4376 = vmatprep.mubr.bf16.mxu0 0
      %4377 = vmatmul.mubr.bf16.gmra.mrb[0].mxu0 %v4122
      %v4378 = vpop.f32.mrb[0].mxu0
      %v4379 = vadd.f32 0.0, %v4378
      %v4380 = vpop.f32.mrb[0].mxu0
      %v4381 = vadd.f32 0.0, %v4380
      %v4382 = vpop.f32.mrb[0].mxu0
      %v4383 = vadd.f32 0.0, %v4382
      %v4384 = vpop.f32.mrb[0].mxu0
      %v4385 = vadd.f32 0.0, %v4384
      %4386 = vmatprep.mubr.bf16.mxu0 0
      %4387 = vmatmul.mubr.bf16.gmra.mrb[0].mxu0 %v4123
      %v4388 = vpop.f32.mrb[0].mxu0
      %v4389 = vadd.f32 0.0, %v4388
      %v4390 = vpop.f32.mrb[0].mxu0
      %v4391 = vadd.f32 0.0, %v4390
      %v4392 = vpop.f32.mrb[0].mxu0
      %v4393 = vadd.f32 0.0, %v4392
      %v4394 = vpop.f32.mrb[0].mxu0
      %v4395 = vadd.f32 0.0, %v4394
      %4396 = vmatprep.mubr.bf16.mxu0 0
      %4397 = vmatmul.mubr.bf16.gmra.mrb[0].mxu0 %v4124
      %v4398 = vpop.f32.mrb[0].mxu0
      %v4399 = vadd.f32 0.0, %v4398
      %v4400 = vpop.f32.mrb[0].mxu0
      %v4401 = vadd.f32 0.0, %v4400
      %v4402 = vpop.f32.mrb[0].mxu0
      %v4403 = vadd.f32 0.0, %v4402
      %v4404 = vpop.f32.mrb[0].mxu0
      %v4405 = vadd.f32 0.0, %v4404
      %4406 = vmatprep.mubr.bf16.mxu0 0
      %4407 = vmatmul.mubr.bf16.gmra.mrb[0].mxu0 %v4125
      %v4408 = vpop.f32.mrb[0].mxu0
      %v4409 = vadd.f32 0.0, %v4408
      %v4410 = vpop.f32.mrb[0].mxu0
      %v4411 = vadd.f32 0.0, %v4410
      %v4412 = vpop.f32.mrb[0].mxu0
      %v4413 = vadd.f32 0.0, %v4412
      %v4414 = vpop.f32.mrb[0].mxu0
      %v4415 = vadd.f32 0.0, %v4414
      %4416 = vmatprep.mubr.bf16.mxu0 0
      %4417 = vmatmul.mubr.bf16.gmra.mrb[0].mxu0 %v4126
      %v4418 = vpop.f32.mrb[0].mxu0
      %v4419 = vadd.f32 0.0, %v4418
      %v4420 = vpop.f32.mrb[0].mxu0
      %v4421 = vadd.f32 0.0, %v4420
      %v4422 = vpop.f32.mrb[0].mxu0
      %v4423 = vadd.f32 0.0, %v4422
      %v4424 = vpop.f32.mrb[0].mxu0
      %v4425 = vadd.f32 0.0, %v4424
      %4426 = vmatprep.mubr.bf16.mxu0 0
      %4427 = vmatmul.mubr.bf16.gmra.mrb[0].mxu0 %v4127
      %v4428 = vpop.f32.mrb[0].mxu0
      %v4429 = vadd.f32 0.0, %v4428
      %v4430 = vpop.f32.mrb[0].mxu0
      %v4431 = vadd.f32 0.0, %v4430
      %v4432 = vpop.f32.mrb[0].mxu0
      %v4433 = vadd.f32 0.0, %v4432
      %v4434 = vpop.f32.mrb[0].mxu0
      %v4435 = vadd.f32 0.0, %v4434
      %4436 = vmatprep.mubr.bf16.mxu0 0
      %4437 = vmatmul.mubr.bf16.gmra.mrb[0].mxu0 %v4128
      %v4438 = vpop.f32.mrb[0].mxu0
      %v4439 = vadd.f32 0.0, %v4438
      %v4440 = vpop.f32.mrb[0].mxu0
      %v4441 = vadd.f32 0.0, %v4440
      %v4442 = vpop.f32.mrb[0].mxu0
      %v4443 = vadd.f32 0.0, %v4442
      %v4444 = vpop.f32.mrb[0].mxu0
      %v4445 = vadd.f32 0.0, %v4444
      %4446 = vmatprep.mubr.bf16.mxu0 0
      %4447 = vmatmul.mubr.bf16.gmra.mrb[0].mxu0 %v4129
      %v4448 = vpop.f32.mrb[0].mxu0
      %v4449 = vadd.f32 0.0, %v4448
      %v4450 = vpop.f32.mrb[0].mxu0
      %v4451 = vadd.f32 0.0, %v4450
      %v4452 = vpop.f32.mrb[0].mxu0
      %v4453 = vadd.f32 0.0, %v4452
      %v4454 = vpop.f32.mrb[0].mxu0
      %v4455 = vadd.f32 0.0, %v4454
      %4456 = vmatprep.mubr.bf16.mxu0 0
      %4457 = vmatmul.mubr.bf16.gmra.mrb[0].mxu0 %v4130
      %v4458 = vpop.f32.mrb[0].mxu0
      %v4459 = vadd.f32 0.0, %v4458
      %v4460 = vpop.f32.mrb[0].mxu0
      %v4461 = vadd.f32 0.0, %v4460
      %v4462 = vpop.f32.mrb[0].mxu0
      %v4463 = vadd.f32 0.0, %v4462
      %v4464 = vpop.f32.mrb[0].mxu0
      %v4465 = vadd.f32 0.0, %v4464
      %4466 = vmatprep.mubr.bf16.mxu0 0
      %4467 = vmatmul.mubr.bf16.gmra.mrb[0].mxu0 %v4131
      %v4468 = vpop.f32.mrb[0].mxu0
      %v4469 = vadd.f32 0.0, %v4468
      %v4470 = vpop.f32.mrb[0].mxu0
      %v4471 = vadd.f32 0.0, %v4470
      %v4472 = vpop.f32.mrb[0].mxu0
      %v4473 = vadd.f32 0.0, %v4472
      %v4474 = vpop.f32.mrb[0].mxu0
      %v4475 = vadd.f32 0.0, %v4474
      %4476 = vmatprep.mubr.bf16.mxu0 0
      %4477 = vmatmul.mubr.bf16.gmra.mrb[0].mxu0 %v4132
      %v4478 = vpop.f32.mrb[0].mxu0
      %v4479 = vadd.f32 0.0, %v4478
      %v4480 = vpop.f32.mrb[0].mxu0
      %v4481 = vadd.f32 0.0, %v4480
      %v4482 = vpop.f32.mrb[0].mxu0
      %v4483 = vadd.f32 0.0, %v4482
      %v4484 = vpop.f32.mrb[0].mxu0
      %v4485 = vadd.f32 0.0, %v4484
      %4486 = vdwg.mxu0
      %v4487 = vadd.f32 %v4133, %v4329
      %v4488 = vadd.f32 %v4134, %v4331
      %v4489 = vadd.f32 %v4135, %v4333
      %v4490 = vadd.f32 %v4136, %v4335
      %v4491 = vadd.f32 %v4137, %v4339
      %v4492 = vadd.f32 %v4138, %v4341
      %v4493 = vadd.f32 %v4139, %v4343
      %v4494 = vadd.f32 %v4140, %v4345
      %v4495 = vadd.f32 %v4141, %v4349
      %v4496 = vadd.f32 %v4142, %v4351
      %v4497 = vadd.f32 %v4143, %v4353
      %v4498 = vadd.f32 %v4144, %v4355
      %v4499 = vadd.f32 %v4145, %v4359
      %v4500 = vadd.f32 %v4146, %v4361
      %v4501 = vadd.f32 %v4147, %v4363
      %v4502 = vadd.f32 %v4148, %v4365
      %v4503 = vadd.f32 %v4149, %v4369
      %v4504 = vadd.f32 %v4150, %v4371
      %v4505 = vadd.f32 %v4151, %v4373
      %v4506 = vadd.f32 %v4152, %v4375
      %v4507 = vadd.f32 %v4153, %v4379
      %v4508 = vadd.f32 %v4154, %v4381
      %v4509 = vadd.f32 %v4155, %v4383
      %v4510 = vadd.f32 %v4156, %v4385
      %v4511 = vadd.f32 %v4157, %v4389
      %v4512 = vadd.f32 %v4158, %v4391
      %v4513 = vadd.f32 %v4159, %v4393
      %v4514 = vadd.f32 %v4160, %v4395
      %v4515 = vadd.f32 %v4161, %v4399
      %v4516 = vadd.f32 %v4162, %v4401
      %v4517 = vadd.f32 %v4163, %v4403
      %v4518 = vadd.f32 %v4164, %v4405
      %v4519 = vadd.f32 %v4165, %v4409
      %v4520 = vadd.f32 %v4166, %v4411
      %v4521 = vadd.f32 %v4167, %v4413
      %v4522 = vadd.f32 %v4168, %v4415
      %v4523 = vadd.f32 %v4169, %v4419
      %v4524 = vadd.f32 %v4170, %v4421
      %v4525 = vadd.f32 %v4171, %v4423
      %v4526 = vadd.f32 %v4172, %v4425
      %v4527 = vadd.f32 %v4173, %v4429
      %v4528 = vadd.f32 %v4174, %v4431
      %v4529 = vadd.f32 %v4175, %v4433
      %v4530 = vadd.f32 %v4176, %v4435
      %v4531 = vadd.f32 %v4177, %v4439
      %v4532 = vadd.f32 %v4178, %v4441
      %v4533 = vadd.f32 %v4179, %v4443
      %v4534 = vadd.f32 %v4180, %v4445
      %v4535 = vadd.f32 %v4181, %v4449
      %v4536 = vadd.f32 %v4182, %v4451
      %v4537 = vadd.f32 %v4183, %v4453
      %v4538 = vadd.f32 %v4184, %v4455
      %v4539 = vadd.f32 %v4185, %v4459
      %v4540 = vadd.f32 %v4186, %v4461
      %v4541 = vadd.f32 %v4187, %v4463
      %v4542 = vadd.f32 %v4188, %v4465
      %v4543 = vadd.f32 %v4189, %v4469
      %v4544 = vadd.f32 %v4190, %v4471
      %v4545 = vadd.f32 %v4191, %v4473
      %v4546 = vadd.f32 %v4192, %v4475
      %v4547 = vadd.f32 %v4193, %v4479
      %v4548 = vadd.f32 %v4194, %v4481
      %v4549 = vadd.f32 %v4195, %v4483
      %v4550 = vadd.f32 %v4196, %v4485
      %4551 = vst [vmem:[#allocation6] sm:$0xff] %v4487
      %4552 = vst [vmem:[#allocation6 + $0x8] sm:$0xff] %v4488
      %4553 = vst [vmem:[#allocation6 + $0x10] sm:$0xff] %v4489
      %4554 = vst [vmem:[#allocation6 + $0x18] sm:$0xff] %v4490
      %4555 = vst [vmem:[#allocation6 + $0x20] sm:$0xff] %v4491
      %4556 = vst [vmem:[#allocation6 + $0x28] sm:$0xff] %v4492
      %4557 = vst [vmem:[#allocation6 + $0x30] sm:$0xff] %v4493
      %4558 = vst [vmem:[#allocation6 + $0x38] sm:$0xff] %v4494
      %4559 = vst [vmem:[#allocation6 + $0x40] sm:$0xff] %v4495
      %4560 = vst [vmem:[#allocation6 + $0x48] sm:$0xff] %v4496
      %4561 = vst [vmem:[#allocation6 + $0x50] sm:$0xff] %v4497
      %4562 = vst [vmem:[#allocation6 + $0x58] sm:$0xff] %v4498
      %4563 = vst [vmem:[#allocation6 + $0x60] sm:$0xff] %v4499
      %4564 = vst [vmem:[#allocation6 + $0x68] sm:$0xff] %v4500
      %4565 = vst [vmem:[#allocation6 + $0x70] sm:$0xff] %v4501
      %4566 = vst [vmem:[#allocation6 + $0x78] sm:$0xff] %v4502
      %4567 = vst [vmem:[#allocation6 + $0x80] sm:$0xff] %v4503
      %4568 = vst [vmem:[#allocation6 + $0x88] sm:$0xff] %v4504
      %4569 = vst [vmem:[#allocation6 + $0x90] sm:$0xff] %v4505
      %4570 = vst [vmem:[#allocation6 + $0x98] sm:$0xff] %v4506
      %4571 = vst [vmem:[#allocation6 + $0xa0] sm:$0xff] %v4507
      %4572 = vst [vmem:[#allocation6 + $0xa8] sm:$0xff] %v4508
      %4573 = vst [vmem:[#allocation6 + $0xb0] sm:$0xff] %v4509
      %4574 = vst [vmem:[#allocation6 + $0xb8] sm:$0xff] %v4510
      %4575 = vst [vmem:[#allocation6 + $0xc0] sm:$0xff] %v4511
      %4576 = vst [vmem:[#allocation6 + $0xc8] sm:$0xff] %v4512
      %4577 = vst [vmem:[#allocation6 + $0xd0] sm:$0xff] %v4513
      %4578 = vst [vmem:[#allocation6 + $0xd8] sm:$0xff] %v4514
      %4579 = vst [vmem:[#allocation6 + $0xe0] sm:$0xff] %v4515
      %4580 = vst [vmem:[#allocation6 + $0xe8] sm:$0xff] %v4516
      %4581 = vst [vmem:[#allocation6 + $0xf0] sm:$0xff] %v4517
      %4582 = vst [vmem:[#allocation6 + $0xf8] sm:$0xff] %v4518
      %4583 = vst [vmem:[#allocation6 + $0x100] sm:$0xff] %v4519
      %4584 = vst [vmem:[#allocation6 + $0x108] sm:$0xff] %v4520
      %4585 = vst [vmem:[#allocation6 + $0x110] sm:$0xff] %v4521
      %4586 = vst [vmem:[#allocation6 + $0x118] sm:$0xff] %v4522
      %4587 = vst [vmem:[#allocation6 + $0x120] sm:$0xff] %v4523
      %4588 = vst [vmem:[#allocation6 + $0x128] sm:$0xff] %v4524
      %4589 = vst [vmem:[#allocation6 + $0x130] sm:$0xff] %v4525
      %4590 = vst [vmem:[#allocation6 + $0x138] sm:$0xff] %v4526
      %4591 = vst [vmem:[#allocation6 + $0x140] sm:$0xff] %v4527
      %4592 = vst [vmem:[#allocation6 + $0x148] sm:$0xff] %v4528
      %4593 = vst [vmem:[#allocation6 + $0x150] sm:$0xff] %v4529
      %4594 = vst [vmem:[#allocation6 + $0x158] sm:$0xff] %v4530
      %4595 = vst [vmem:[#allocation6 + $0x160] sm:$0xff] %v4531
      %4596 = vst [vmem:[#allocation6 + $0x168] sm:$0xff] %v4532
      %4597 = vst [vmem:[#allocation6 + $0x170] sm:$0xff] %v4533
      %4598 = vst [vmem:[#allocation6 + $0x178] sm:$0xff] %v4534
      %4599 = vst [vmem:[#allocation6 + $0x180] sm:$0xff] %v4535
      %4600 = vst [vmem:[#allocation6 + $0x188] sm:$0xff] %v4536
      %4601 = vst [vmem:[#allocation6 + $0x190] sm:$0xff] %v4537
      %4602 = vst [vmem:[#allocation6 + $0x198] sm:$0xff] %v4538
      %4603 = vst [vmem:[#allocation6 + $0x1a0] sm:$0xff] %v4539
      %4604 = vst [vmem:[#allocation6 + $0x1a8] sm:$0xff] %v4540
      %4605 = vst [vmem:[#allocation6 + $0x1b0] sm:$0xff] %v4541
      %4606 = vst [vmem:[#allocation6 + $0x1b8] sm:$0xff] %v4542
      %4607 = vst [vmem:[#allocation6 + $0x1c0] sm:$0xff] %v4543
      %4608 = vst [vmem:[#allocation6 + $0x1c8] sm:$0xff] %v4544
      %4609 = vst [vmem:[#allocation6 + $0x1d0] sm:$0xff] %v4545
      %4610 = vst [vmem:[#allocation6 + $0x1d8] sm:$0xff] %v4546
      %4611 = vst [vmem:[#allocation6 + $0x1e0] sm:$0xff] %v4547
      %4612 = vst [vmem:[#allocation6 + $0x1e8] sm:$0xff] %v4548
      %4613 = vst [vmem:[#allocation6 + $0x1f0] sm:$0xff] %v4549
      %4614 = vst [vmem:[#allocation6 + $0x1f8] sm:$0xff] %v4550
      %s4615 = scalar_lea.vmem [#allocation3], 304
      %v4616 = vld [vmem:[%s4615] sm:$0xff]
      %v4617 = vld [vmem:[%s4615 + $0x8] sm:$0xff]
      %v4618 = vld [vmem:[%s4615 + $0x10] sm:$0xff]
      %v4619 = vld [vmem:[%s4615 + $0x18] sm:$0xff]
      %v4620 = vld [vmem:[%s4615 + $0x20] sm:$0xff]
      %v4621 = vld [vmem:[%s4615 + $0x28] sm:$0xff]
      %v4622 = vld [vmem:[%s4615 + $0x30] sm:$0xff]
      %v4623 = vld [vmem:[%s4615 + $0x38] sm:$0xff]
      %v4624 = vld [vmem:[%s4615 + $0x40] sm:$0xff]
      %v4625 = vld [vmem:[%s4615 + $0x48] sm:$0xff]
      %v4626 = vld [vmem:[%s4615 + $0x50] sm:$0xff]
      %v4627 = vld [vmem:[%s4615 + $0x58] sm:$0xff]
      %v4628 = vld [vmem:[%s4615 + $0x60] sm:$0xff]
      %v4629 = vld [vmem:[%s4615 + $0x68] sm:$0xff]
      %v4630 = vld [vmem:[%s4615 + $0x70] sm:$0xff]
      %v4631 = vld [vmem:[%s4615 + $0x78] sm:$0xff]
      %v4632 = vld [vmem:[#allocation6] sm:$0xff]
      %v4633 = vld [vmem:[#allocation6 + $0x8] sm:$0xff]
      %v4634 = vld [vmem:[#allocation6 + $0x10] sm:$0xff]
      %v4635 = vld [vmem:[#allocation6 + $0x18] sm:$0xff]
      %v4636 = vld [vmem:[#allocation6 + $0x20] sm:$0xff]
      %v4637 = vld [vmem:[#allocation6 + $0x28] sm:$0xff]
      %v4638 = vld [vmem:[#allocation6 + $0x30] sm:$0xff]
      %v4639 = vld [vmem:[#allocation6 + $0x38] sm:$0xff]
      %v4640 = vld [vmem:[#allocation6 + $0x40] sm:$0xff]
      %v4641 = vld [vmem:[#allocation6 + $0x48] sm:$0xff]
      %v4642 = vld [vmem:[#allocation6 + $0x50] sm:$0xff]
      %v4643 = vld [vmem:[#allocation6 + $0x58] sm:$0xff]
      %v4644 = vld [vmem:[#allocation6 + $0x60] sm:$0xff]
      %v4645 = vld [vmem:[#allocation6 + $0x68] sm:$0xff]
      %v4646 = vld [vmem:[#allocation6 + $0x70] sm:$0xff]
      %v4647 = vld [vmem:[#allocation6 + $0x78] sm:$0xff]
      %v4648 = vld [vmem:[#allocation6 + $0x80] sm:$0xff]
      %v4649 = vld [vmem:[#allocation6 + $0x88] sm:$0xff]
      %v4650 = vld [vmem:[#allocation6 + $0x90] sm:$0xff]
      %v4651 = vld [vmem:[#allocation6 + $0x98] sm:$0xff]
      %v4652 = vld [vmem:[#allocation6 + $0xa0] sm:$0xff]
      %v4653 = vld [vmem:[#allocation6 + $0xa8] sm:$0xff]
      %v4654 = vld [vmem:[#allocation6 + $0xb0] sm:$0xff]
      %v4655 = vld [vmem:[#allocation6 + $0xb8] sm:$0xff]
      %v4656 = vld [vmem:[#allocation6 + $0xc0] sm:$0xff]
      %v4657 = vld [vmem:[#allocation6 + $0xc8] sm:$0xff]
      %v4658 = vld [vmem:[#allocation6 + $0xd0] sm:$0xff]
      %v4659 = vld [vmem:[#allocation6 + $0xd8] sm:$0xff]
      %v4660 = vld [vmem:[#allocation6 + $0xe0] sm:$0xff]
      %v4661 = vld [vmem:[#allocation6 + $0xe8] sm:$0xff]
      %v4662 = vld [vmem:[#allocation6 + $0xf0] sm:$0xff]
      %v4663 = vld [vmem:[#allocation6 + $0xf8] sm:$0xff]
      %v4664 = vld [vmem:[#allocation6 + $0x100] sm:$0xff]
      %v4665 = vld [vmem:[#allocation6 + $0x108] sm:$0xff]
      %v4666 = vld [vmem:[#allocation6 + $0x110] sm:$0xff]
      %v4667 = vld [vmem:[#allocation6 + $0x118] sm:$0xff]
      %v4668 = vld [vmem:[#allocation6 + $0x120] sm:$0xff]
      %v4669 = vld [vmem:[#allocation6 + $0x128] sm:$0xff]
      %v4670 = vld [vmem:[#allocation6 + $0x130] sm:$0xff]
      %v4671 = vld [vmem:[#allocation6 + $0x138] sm:$0xff]
      %v4672 = vld [vmem:[#allocation6 + $0x140] sm:$0xff]
      %v4673 = vld [vmem:[#allocation6 + $0x148] sm:$0xff]
      %v4674 = vld [vmem:[#allocation6 + $0x150] sm:$0xff]
      %v4675 = vld [vmem:[#allocation6 + $0x158] sm:$0xff]
      %v4676 = vld [vmem:[#allocation6 + $0x160] sm:$0xff]
      %v4677 = vld [vmem:[#allocation6 + $0x168] sm:$0xff]
      %v4678 = vld [vmem:[#allocation6 + $0x170] sm:$0xff]
      %v4679 = vld [vmem:[#allocation6 + $0x178] sm:$0xff]
      %v4680 = vld [vmem:[#allocation6 + $0x180] sm:$0xff]
      %v4681 = vld [vmem:[#allocation6 + $0x188] sm:$0xff]
      %v4682 = vld [vmem:[#allocation6 + $0x190] sm:$0xff]
      %v4683 = vld [vmem:[#allocation6 + $0x198] sm:$0xff]
      %v4684 = vld [vmem:[#allocation6 + $0x1a0] sm:$0xff]
      %v4685 = vld [vmem:[#allocation6 + $0x1a8] sm:$0xff]
      %v4686 = vld [vmem:[#allocation6 + $0x1b0] sm:$0xff]
      %v4687 = vld [vmem:[#allocation6 + $0x1b8] sm:$0xff]
      %v4688 = vld [vmem:[#allocation6 + $0x1c0] sm:$0xff]
      %v4689 = vld [vmem:[#allocation6 + $0x1c8] sm:$0xff]
      %v4690 = vld [vmem:[#allocation6 + $0x1d0] sm:$0xff]
      %v4691 = vld [vmem:[#allocation6 + $0x1d8] sm:$0xff]
      %v4692 = vld [vmem:[#allocation6 + $0x1e0] sm:$0xff]
      %v4693 = vld [vmem:[#allocation6 + $0x1e8] sm:$0xff]
      %v4694 = vld [vmem:[#allocation6 + $0x1f0] sm:$0xff]
      %v4695 = vld [vmem:[#allocation6 + $0x1f8] sm:$0xff]
      %s4696 = scalar_lea.vmem %s1, 1024
      %v4697 = vld [vmem:[%s4696] sm:$0xff]
      %v4698 = vld [vmem:[%s4696 + $0x8] sm:$0xff]
      %v4699 = vld [vmem:[%s4696 + $0x10] sm:$0xff]
      %v4700 = vld [vmem:[%s4696 + $0x18] sm:$0xff]
      %v4701 = vld [vmem:[%s4696 + $0x20] sm:$0xff]
      %v4702 = vld [vmem:[%s4696 + $0x28] sm:$0xff]
      %v4703 = vld [vmem:[%s4696 + $0x30] sm:$0xff]
      %v4704 = vld [vmem:[%s4696 + $0x38] sm:$0xff]
      %v4705 = vld [vmem:[%s4696 + $0x40] sm:$0xff]
      %v4706 = vld [vmem:[%s4696 + $0x48] sm:$0xff]
      %v4707 = vld [vmem:[%s4696 + $0x50] sm:$0xff]
      %v4708 = vld [vmem:[%s4696 + $0x58] sm:$0xff]
      %v4709 = vld [vmem:[%s4696 + $0x60] sm:$0xff]
      %v4710 = vld [vmem:[%s4696 + $0x68] sm:$0xff]
      %v4711 = vld [vmem:[%s4696 + $0x70] sm:$0xff]
      %v4712 = vld [vmem:[%s4696 + $0x78] sm:$0xff]
      %v4729 = vunpack.c.l.b16 %v4697
      %v4730 = vunpack.c.h.b16 %v4697
      %v4731 = vunpack.c.l.b16 %v4698
      %v4732 = vunpack.c.h.b16 %v4698
      %v4733 = vunpack.c.l.b16 %v4699
      %v4734 = vunpack.c.h.b16 %v4699
      %v4735 = vunpack.c.l.b16 %v4700
      %v4736 = vunpack.c.h.b16 %v4700
      %v4737 = vunpack.c.l.b16 %v4701
      %v4738 = vunpack.c.h.b16 %v4701
      %v4739 = vunpack.c.l.b16 %v4702
      %v4740 = vunpack.c.h.b16 %v4702
      %v4741 = vunpack.c.l.b16 %v4703
      %v4742 = vunpack.c.h.b16 %v4703
      %v4743 = vunpack.c.l.b16 %v4704
      %v4744 = vunpack.c.h.b16 %v4704
      %v4745 = vunpack.c.l.b16 %v4705
      %v4746 = vunpack.c.h.b16 %v4705
      %v4747 = vunpack.c.l.b16 %v4706
      %v4748 = vunpack.c.h.b16 %v4706
      %v4749 = vunpack.c.l.b16 %v4707
      %v4750 = vunpack.c.h.b16 %v4707
      %v4751 = vunpack.c.l.b16 %v4708
      %v4752 = vunpack.c.h.b16 %v4708
      %v4753 = vunpack.c.l.b16 %v4709
      %v4754 = vunpack.c.h.b16 %v4709
      %v4755 = vunpack.c.l.b16 %v4710
      %v4756 = vunpack.c.h.b16 %v4710
      %v4757 = vunpack.c.l.b16 %v4711
      %v4758 = vunpack.c.h.b16 %v4711
      %v4759 = vunpack.c.l.b16 %v4712
      %v4760 = vunpack.c.h.b16 %v4712
      %v4761 = vpack.c.b16 %v4731, %v4729
      %v4762 = vpack.c.b16 %v4732, %v4730
      %v4763 = vpack.c.b16 %v4735, %v4733
      %v4764 = vpack.c.b16 %v4736, %v4734
      %v4765 = vpack.c.b16 %v4739, %v4737
      %v4766 = vpack.c.b16 %v4740, %v4738
      %v4767 = vpack.c.b16 %v4743, %v4741
      %v4768 = vpack.c.b16 %v4744, %v4742
      %v4769 = vpack.c.b16 %v4747, %v4745
      %v4770 = vpack.c.b16 %v4748, %v4746
      %v4771 = vpack.c.b16 %v4751, %v4749
      %v4772 = vpack.c.b16 %v4752, %v4750
      %v4773 = vpack.c.b16 %v4755, %v4753
      %v4774 = vpack.c.b16 %v4756, %v4754
      %v4775 = vpack.c.b16 %v4759, %v4757
      %v4776 = vpack.c.b16 %v4760, %v4758
      %4793 = vmatprep.subr.bf16.mxu0 %v4762
      %4794 = vmatpush1.bf16.msra.mxu0 %v4761
      %4795 = vmatprep.subr.bf16.mxu0 %v4764
      %4796 = vmatpush1.bf16.msra.mxu0 %v4763
      %4797 = vmatprep.subr.bf16.mxu0 %v4766
      %4798 = vmatpush1.bf16.msra.mxu0 %v4765
      %4799 = vmatprep.subr.bf16.mxu0 %v4768
      %4800 = vmatpush1.bf16.msra.mxu0 %v4767
      %4801 = vmatprep.subr.bf16.mxu0 %v4770
      %4802 = vmatpush1.bf16.msra.mxu0 %v4769
      %4803 = vmatprep.subr.bf16.mxu0 %v4772
      %4804 = vmatpush1.bf16.msra.mxu0 %v4771
      %4805 = vmatprep.subr.bf16.mxu0 %v4774
      %4806 = vmatpush1.bf16.msra.mxu0 %v4773
      %4807 = vmatprep.subr.bf16.mxu0 %v4776
      %4808 = vmatpush1.bf16.msra.mxu0 %v4775
      %4809 = vmatprep.subr.bf16.mxu0 0
      %4810 = vmatpush1.bf16.msra.mxu0 0
      %4811 = vmatprep.subr.bf16.mxu0 0
      %4812 = vmatpush1.bf16.msra.mxu0 0
      %4813 = vmatprep.subr.bf16.mxu0 0
      %4814 = vmatpush1.bf16.msra.mxu0 0
      %4815 = vmatprep.subr.bf16.mxu0 0
      %4816 = vmatpush1.bf16.msra.mxu0 0
      %4817 = vmatprep.subr.bf16.mxu0 0
      %4818 = vmatpush1.bf16.msra.mxu0 0
      %4819 = vmatprep.subr.bf16.mxu0 0
      %4820 = vmatpush1.bf16.msra.mxu0 0
      %4821 = vmatprep.subr.bf16.mxu0 0
      %4822 = vmatpush1.bf16.msra.mxu0 0
      %4823 = vmatprep.subr.bf16.mxu0 0
      %4824 = vmatpush1.bf16.msra.mxu0 0
      %4825 = vmatprep.mubr.bf16.mxu0 0
      %4826 = vmatmul.mubr.bf16.gmra.mrb[0].mxu0 %v4616
      %v4827 = vpop.f32.mrb[0].mxu0
      %v4828 = vadd.f32 0.0, %v4827
      %v4829 = vpop.f32.mrb[0].mxu0
      %v4830 = vadd.f32 0.0, %v4829
      %v4831 = vpop.f32.mrb[0].mxu0
      %v4832 = vadd.f32 0.0, %v4831
      %v4833 = vpop.f32.mrb[0].mxu0
      %v4834 = vadd.f32 0.0, %v4833
      %4835 = vmatprep.mubr.bf16.mxu0 0
      %4836 = vmatmul.mubr.bf16.gmra.mrb[0].mxu0 %v4617
      %v4837 = vpop.f32.mrb[0].mxu0
      %v4838 = vadd.f32 0.0, %v4837
      %v4839 = vpop.f32.mrb[0].mxu0
      %v4840 = vadd.f32 0.0, %v4839
      %v4841 = vpop.f32.mrb[0].mxu0
      %v4842 = vadd.f32 0.0, %v4841
      %v4843 = vpop.f32.mrb[0].mxu0
      %v4844 = vadd.f32 0.0, %v4843
      %4845 = vmatprep.mubr.bf16.mxu0 0
      %4846 = vmatmul.mubr.bf16.gmra.mrb[0].mxu0 %v4618
      %v4847 = vpop.f32.mrb[0].mxu0
      %v4848 = vadd.f32 0.0, %v4847
      %v4849 = vpop.f32.mrb[0].mxu0
      %v4850 = vadd.f32 0.0, %v4849
      %v4851 = vpop.f32.mrb[0].mxu0
      %v4852 = vadd.f32 0.0, %v4851
      %v4853 = vpop.f32.mrb[0].mxu0
      %v4854 = vadd.f32 0.0, %v4853
      %4855 = vmatprep.mubr.bf16.mxu0 0
      %4856 = vmatmul.mubr.bf16.gmra.mrb[0].mxu0 %v4619
      %v4857 = vpop.f32.mrb[0].mxu0
      %v4858 = vadd.f32 0.0, %v4857
      %v4859 = vpop.f32.mrb[0].mxu0
      %v4860 = vadd.f32 0.0, %v4859
      %v4861 = vpop.f32.mrb[0].mxu0
      %v4862 = vadd.f32 0.0, %v4861
      %v4863 = vpop.f32.mrb[0].mxu0
      %v4864 = vadd.f32 0.0, %v4863
      %4865 = vmatprep.mubr.bf16.mxu0 0
      %4866 = vmatmul.mubr.bf16.gmra.mrb[0].mxu0 %v4620
      %v4867 = vpop.f32.mrb[0].mxu0
      %v4868 = vadd.f32 0.0, %v4867
      %v4869 = vpop.f32.mrb[0].mxu0
      %v4870 = vadd.f32 0.0, %v4869
      %v4871 = vpop.f32.mrb[0].mxu0
      %v4872 = vadd.f32 0.0, %v4871
      %v4873 = vpop.f32.mrb[0].mxu0
      %v4874 = vadd.f32 0.0, %v4873
      %4875 = vmatprep.mubr.bf16.mxu0 0
      %4876 = vmatmul.mubr.bf16.gmra.mrb[0].mxu0 %v4621
      %v4877 = vpop.f32.mrb[0].mxu0
      %v4878 = vadd.f32 0.0, %v4877
      %v4879 = vpop.f32.mrb[0].mxu0
      %v4880 = vadd.f32 0.0, %v4879
      %v4881 = vpop.f32.mrb[0].mxu0
      %v4882 = vadd.f32 0.0, %v4881
      %v4883 = vpop.f32.mrb[0].mxu0
      %v4884 = vadd.f32 0.0, %v4883
      %4885 = vmatprep.mubr.bf16.mxu0 0
      %4886 = vmatmul.mubr.bf16.gmra.mrb[0].mxu0 %v4622
      %v4887 = vpop.f32.mrb[0].mxu0
      %v4888 = vadd.f32 0.0, %v4887
      %v4889 = vpop.f32.mrb[0].mxu0
      %v4890 = vadd.f32 0.0, %v4889
      %v4891 = vpop.f32.mrb[0].mxu0
      %v4892 = vadd.f32 0.0, %v4891
      %v4893 = vpop.f32.mrb[0].mxu0
      %v4894 = vadd.f32 0.0, %v4893
      %4895 = vmatprep.mubr.bf16.mxu0 0
      %4896 = vmatmul.mubr.bf16.gmra.mrb[0].mxu0 %v4623
      %v4897 = vpop.f32.mrb[0].mxu0
      %v4898 = vadd.f32 0.0, %v4897
      %v4899 = vpop.f32.mrb[0].mxu0
      %v4900 = vadd.f32 0.0, %v4899
      %v4901 = vpop.f32.mrb[0].mxu0
      %v4902 = vadd.f32 0.0, %v4901
      %v4903 = vpop.f32.mrb[0].mxu0
      %v4904 = vadd.f32 0.0, %v4903
      %4905 = vmatprep.mubr.bf16.mxu0 0
      %4906 = vmatmul.mubr.bf16.gmra.mrb[0].mxu0 %v4624
      %v4907 = vpop.f32.mrb[0].mxu0
      %v4908 = vadd.f32 0.0, %v4907
      %v4909 = vpop.f32.mrb[0].mxu0
      %v4910 = vadd.f32 0.0, %v4909
      %v4911 = vpop.f32.mrb[0].mxu0
      %v4912 = vadd.f32 0.0, %v4911
      %v4913 = vpop.f32.mrb[0].mxu0
      %v4914 = vadd.f32 0.0, %v4913
      %4915 = vmatprep.mubr.bf16.mxu0 0
      %4916 = vmatmul.mubr.bf16.gmra.mrb[0].mxu0 %v4625
      %v4917 = vpop.f32.mrb[0].mxu0
      %v4918 = vadd.f32 0.0, %v4917
      %v4919 = vpop.f32.mrb[0].mxu0
      %v4920 = vadd.f32 0.0, %v4919
      %v4921 = vpop.f32.mrb[0].mxu0
      %v4922 = vadd.f32 0.0, %v4921
      %v4923 = vpop.f32.mrb[0].mxu0
      %v4924 = vadd.f32 0.0, %v4923
      %4925 = vmatprep.mubr.bf16.mxu0 0
      %4926 = vmatmul.mubr.bf16.gmra.mrb[0].mxu0 %v4626
      %v4927 = vpop.f32.mrb[0].mxu0
      %v4928 = vadd.f32 0.0, %v4927
      %v4929 = vpop.f32.mrb[0].mxu0
      %v4930 = vadd.f32 0.0, %v4929
      %v4931 = vpop.f32.mrb[0].mxu0
      %v4932 = vadd.f32 0.0, %v4931
      %v4933 = vpop.f32.mrb[0].mxu0
      %v4934 = vadd.f32 0.0, %v4933
      %4935 = vmatprep.mubr.bf16.mxu0 0
      %4936 = vmatmul.mubr.bf16.gmra.mrb[0].mxu0 %v4627
      %v4937 = vpop.f32.mrb[0].mxu0
      %v4938 = vadd.f32 0.0, %v4937
      %v4939 = vpop.f32.mrb[0].mxu0
      %v4940 = vadd.f32 0.0, %v4939
      %v4941 = vpop.f32.mrb[0].mxu0
      %v4942 = vadd.f32 0.0, %v4941
      %v4943 = vpop.f32.mrb[0].mxu0
      %v4944 = vadd.f32 0.0, %v4943
      %4945 = vmatprep.mubr.bf16.mxu0 0
      %4946 = vmatmul.mubr.bf16.gmra.mrb[0].mxu0 %v4628
      %v4947 = vpop.f32.mrb[0].mxu0
      %v4948 = vadd.f32 0.0, %v4947
      %v4949 = vpop.f32.mrb[0].mxu0
      %v4950 = vadd.f32 0.0, %v4949
      %v4951 = vpop.f32.mrb[0].mxu0
      %v4952 = vadd.f32 0.0, %v4951
      %v4953 = vpop.f32.mrb[0].mxu0
      %v4954 = vadd.f32 0.0, %v4953
      %4955 = vmatprep.mubr.bf16.mxu0 0
      %4956 = vmatmul.mubr.bf16.gmra.mrb[0].mxu0 %v4629
      %v4957 = vpop.f32.mrb[0].mxu0
      %v4958 = vadd.f32 0.0, %v4957
      %v4959 = vpop.f32.mrb[0].mxu0
      %v4960 = vadd.f32 0.0, %v4959
      %v4961 = vpop.f32.mrb[0].mxu0
      %v4962 = vadd.f32 0.0, %v4961
      %v4963 = vpop.f32.mrb[0].mxu0
      %v4964 = vadd.f32 0.0, %v4963
      %4965 = vmatprep.mubr.bf16.mxu0 0
      %4966 = vmatmul.mubr.bf16.gmra.mrb[0].mxu0 %v4630
      %v4967 = vpop.f32.mrb[0].mxu0
      %v4968 = vadd.f32 0.0, %v4967
      %v4969 = vpop.f32.mrb[0].mxu0
      %v4970 = vadd.f32 0.0, %v4969
      %v4971 = vpop.f32.mrb[0].mxu0
      %v4972 = vadd.f32 0.0, %v4971
      %v4973 = vpop.f32.mrb[0].mxu0
      %v4974 = vadd.f32 0.0, %v4973
      %4975 = vmatprep.mubr.bf16.mxu0 0
      %4976 = vmatmul.mubr.bf16.gmra.mrb[0].mxu0 %v4631
      %v4977 = vpop.f32.mrb[0].mxu0
      %v4978 = vadd.f32 0.0, %v4977
      %v4979 = vpop.f32.mrb[0].mxu0
      %v4980 = vadd.f32 0.0, %v4979
      %v4981 = vpop.f32.mrb[0].mxu0
      %v4982 = vadd.f32 0.0, %v4981
      %v4983 = vpop.f32.mrb[0].mxu0
      %v4984 = vadd.f32 0.0, %v4983
      %4985 = vdwg.mxu0
      %v4986 = vadd.f32 %v4632, %v4828
      %v4987 = vadd.f32 %v4633, %v4830
      %v4988 = vadd.f32 %v4634, %v4832
      %v4989 = vadd.f32 %v4635, %v4834
      %v4990 = vadd.f32 %v4636, %v4838
      %v4991 = vadd.f32 %v4637, %v4840
      %v4992 = vadd.f32 %v4638, %v4842
      %v4993 = vadd.f32 %v4639, %v4844
      %v4994 = vadd.f32 %v4640, %v4848
      %v4995 = vadd.f32 %v4641, %v4850
      %v4996 = vadd.f32 %v4642, %v4852
      %v4997 = vadd.f32 %v4643, %v4854
      %v4998 = vadd.f32 %v4644, %v4858
      %v4999 = vadd.f32 %v4645, %v4860
      %v5000 = vadd.f32 %v4646, %v4862
      %v5001 = vadd.f32 %v4647, %v4864
      %v5002 = vadd.f32 %v4648, %v4868
      %v5003 = vadd.f32 %v4649, %v4870
      %v5004 = vadd.f32 %v4650, %v4872
      %v5005 = vadd.f32 %v4651, %v4874
      %v5006 = vadd.f32 %v4652, %v4878
      %v5007 = vadd.f32 %v4653, %v4880
      %v5008 = vadd.f32 %v4654, %v4882
      %v5009 = vadd.f32 %v4655, %v4884
      %v5010 = vadd.f32 %v4656, %v4888
      %v5011 = vadd.f32 %v4657, %v4890
      %v5012 = vadd.f32 %v4658, %v4892
      %v5013 = vadd.f32 %v4659, %v4894
      %v5014 = vadd.f32 %v4660, %v4898
      %v5015 = vadd.f32 %v4661, %v4900
      %v5016 = vadd.f32 %v4662, %v4902
      %v5017 = vadd.f32 %v4663, %v4904
      %v5018 = vadd.f32 %v4664, %v4908
      %v5019 = vadd.f32 %v4665, %v4910
      %v5020 = vadd.f32 %v4666, %v4912
      %v5021 = vadd.f32 %v4667, %v4914
      %v5022 = vadd.f32 %v4668, %v4918
      %v5023 = vadd.f32 %v4669, %v4920
      %v5024 = vadd.f32 %v4670, %v4922
      %v5025 = vadd.f32 %v4671, %v4924
      %v5026 = vadd.f32 %v4672, %v4928
      %v5027 = vadd.f32 %v4673, %v4930
      %v5028 = vadd.f32 %v4674, %v4932
      %v5029 = vadd.f32 %v4675, %v4934
      %v5030 = vadd.f32 %v4676, %v4938
      %v5031 = vadd.f32 %v4677, %v4940
      %v5032 = vadd.f32 %v4678, %v4942
      %v5033 = vadd.f32 %v4679, %v4944
      %v5034 = vadd.f32 %v4680, %v4948
      %v5035 = vadd.f32 %v4681, %v4950
      %v5036 = vadd.f32 %v4682, %v4952
      %v5037 = vadd.f32 %v4683, %v4954
      %v5038 = vadd.f32 %v4684, %v4958
      %v5039 = vadd.f32 %v4685, %v4960
      %v5040 = vadd.f32 %v4686, %v4962
      %v5041 = vadd.f32 %v4687, %v4964
      %v5042 = vadd.f32 %v4688, %v4968
      %v5043 = vadd.f32 %v4689, %v4970
      %v5044 = vadd.f32 %v4690, %v4972
      %v5045 = vadd.f32 %v4691, %v4974
      %v5046 = vadd.f32 %v4692, %v4978
      %v5047 = vadd.f32 %v4693, %v4980
      %v5048 = vadd.f32 %v4694, %v4982
      %v5049 = vadd.f32 %v4695, %v4984
      %5050 = vst [vmem:[#allocation6] sm:$0xff] %v4986
      %5051 = vst [vmem:[#allocation6 + $0x8] sm:$0xff] %v4987
      %5052 = vst [vmem:[#allocation6 + $0x10] sm:$0xff] %v4988
      %5053 = vst [vmem:[#allocation6 + $0x18] sm:$0xff] %v4989
      %5054 = vst [vmem:[#allocation6 + $0x20] sm:$0xff] %v4990
      %5055 = vst [vmem:[#allocation6 + $0x28] sm:$0xff] %v4991
      %5056 = vst [vmem:[#allocation6 + $0x30] sm:$0xff] %v4992
      %5057 = vst [vmem:[#allocation6 + $0x38] sm:$0xff] %v4993
      %5058 = vst [vmem:[#allocation6 + $0x40] sm:$0xff] %v4994
      %5059 = vst [vmem:[#allocation6 + $0x48] sm:$0xff] %v4995
      %5060 = vst [vmem:[#allocation6 + $0x50] sm:$0xff] %v4996
      %5061 = vst [vmem:[#allocation6 + $0x58] sm:$0xff] %v4997
      %5062 = vst [vmem:[#allocation6 + $0x60] sm:$0xff] %v4998
      %5063 = vst [vmem:[#allocation6 + $0x68] sm:$0xff] %v4999
      %5064 = vst [vmem:[#allocation6 + $0x70] sm:$0xff] %v5000
      %5065 = vst [vmem:[#allocation6 + $0x78] sm:$0xff] %v5001
      %5066 = vst [vmem:[#allocation6 + $0x80] sm:$0xff] %v5002
      %5067 = vst [vmem:[#allocation6 + $0x88] sm:$0xff] %v5003
      %5068 = vst [vmem:[#allocation6 + $0x90] sm:$0xff] %v5004
      %5069 = vst [vmem:[#allocation6 + $0x98] sm:$0xff] %v5005
      %5070 = vst [vmem:[#allocation6 + $0xa0] sm:$0xff] %v5006
      %5071 = vst [vmem:[#allocation6 + $0xa8] sm:$0xff] %v5007
      %5072 = vst [vmem:[#allocation6 + $0xb0] sm:$0xff] %v5008
      %5073 = vst [vmem:[#allocation6 + $0xb8] sm:$0xff] %v5009
      %5074 = vst [vmem:[#allocation6 + $0xc0] sm:$0xff] %v5010
      %5075 = vst [vmem:[#allocation6 + $0xc8] sm:$0xff] %v5011
      %5076 = vst [vmem:[#allocation6 + $0xd0] sm:$0xff] %v5012
      %5077 = vst [vmem:[#allocation6 + $0xd8] sm:$0xff] %v5013
      %5078 = vst [vmem:[#allocation6 + $0xe0] sm:$0xff] %v5014
      %5079 = vst [vmem:[#allocation6 + $0xe8] sm:$0xff] %v5015
      %5080 = vst [vmem:[#allocation6 + $0xf0] sm:$0xff] %v5016
      %5081 = vst [vmem:[#allocation6 + $0xf8] sm:$0xff] %v5017
      %5082 = vst [vmem:[#allocation6 + $0x100] sm:$0xff] %v5018
      %5083 = vst [vmem:[#allocation6 + $0x108] sm:$0xff] %v5019
      %5084 = vst [vmem:[#allocation6 + $0x110] sm:$0xff] %v5020
      %5085 = vst [vmem:[#allocation6 + $0x118] sm:$0xff] %v5021
      %5086 = vst [vmem:[#allocation6 + $0x120] sm:$0xff] %v5022
      %5087 = vst [vmem:[#allocation6 + $0x128] sm:$0xff] %v5023
      %5088 = vst [vmem:[#allocation6 + $0x130] sm:$0xff] %v5024
      %5089 = vst [vmem:[#allocation6 + $0x138] sm:$0xff] %v5025
      %5090 = vst [vmem:[#allocation6 + $0x140] sm:$0xff] %v5026
      %5091 = vst [vmem:[#allocation6 + $0x148] sm:$0xff] %v5027
      %5092 = vst [vmem:[#allocation6 + $0x150] sm:$0xff] %v5028
      %5093 = vst [vmem:[#allocation6 + $0x158] sm:$0xff] %v5029
      %5094 = vst [vmem:[#allocation6 + $0x160] sm:$0xff] %v5030
      %5095 = vst [vmem:[#allocation6 + $0x168] sm:$0xff] %v5031
      %5096 = vst [vmem:[#allocation6 + $0x170] sm:$0xff] %v5032
      %5097 = vst [vmem:[#allocation6 + $0x178] sm:$0xff] %v5033
      %5098 = vst [vmem:[#allocation6 + $0x180] sm:$0xff] %v5034
      %5099 = vst [vmem:[#allocation6 + $0x188] sm:$0xff] %v5035
      %5100 = vst [vmem:[#allocation6 + $0x190] sm:$0xff] %v5036
      %5101 = vst [vmem:[#allocation6 + $0x198] sm:$0xff] %v5037
      %5102 = vst [vmem:[#allocation6 + $0x1a0] sm:$0xff] %v5038
      %5103 = vst [vmem:[#allocation6 + $0x1a8] sm:$0xff] %v5039
      %5104 = vst [vmem:[#allocation6 + $0x1b0] sm:$0xff] %v5040
      %5105 = vst [vmem:[#allocation6 + $0x1b8] sm:$0xff] %v5041
      %5106 = vst [vmem:[#allocation6 + $0x1c0] sm:$0xff] %v5042
      %5107 = vst [vmem:[#allocation6 + $0x1c8] sm:$0xff] %v5043
      %5108 = vst [vmem:[#allocation6 + $0x1d0] sm:$0xff] %v5044
      %5109 = vst [vmem:[#allocation6 + $0x1d8] sm:$0xff] %v5045
      %5110 = vst [vmem:[#allocation6 + $0x1e0] sm:$0xff] %v5046
      %5111 = vst [vmem:[#allocation6 + $0x1e8] sm:$0xff] %v5047
      %5112 = vst [vmem:[#allocation6 + $0x1f0] sm:$0xff] %v5048
      %5113 = vst [vmem:[#allocation6 + $0x1f8] sm:$0xff] %v5049
      %v5114 = vld [vmem:[#allocation6] sm:$0xff]
      %v5115 = vld [vmem:[#allocation6 + $0x8] sm:$0xff]
      %v5116 = vld [vmem:[#allocation6 + $0x10] sm:$0xff]
      %v5117 = vld [vmem:[#allocation6 + $0x18] sm:$0xff]
      %v5118 = vld [vmem:[#allocation6 + $0x20] sm:$0xff]
      %v5119 = vld [vmem:[#allocation6 + $0x28] sm:$0xff]
      %v5120 = vld [vmem:[#allocation6 + $0x30] sm:$0xff]
      %v5121 = vld [vmem:[#allocation6 + $0x38] sm:$0xff]
      %v5122 = vld [vmem:[#allocation6 + $0x40] sm:$0xff]
      %v5123 = vld [vmem:[#allocation6 + $0x48] sm:$0xff]
      %v5124 = vld [vmem:[#allocation6 + $0x50] sm:$0xff]
      %v5125 = vld [vmem:[#allocation6 + $0x58] sm:$0xff]
      %v5126 = vld [vmem:[#allocation6 + $0x60] sm:$0xff]
      %v5127 = vld [vmem:[#allocation6 + $0x68] sm:$0xff]
      %v5128 = vld [vmem:[#allocation6 + $0x70] sm:$0xff]
      %v5129 = vld [vmem:[#allocation6 + $0x78] sm:$0xff]
      %v5130 = vld [vmem:[#allocation6 + $0x80] sm:$0xff]
      %v5131 = vld [vmem:[#allocation6 + $0x88] sm:$0xff]
      %v5132 = vld [vmem:[#allocation6 + $0x90] sm:$0xff]
      %v5133 = vld [vmem:[#allocation6 + $0x98] sm:$0xff]
      %v5134 = vld [vmem:[#allocation6 + $0xa0] sm:$0xff]
      %v5135 = vld [vmem:[#allocation6 + $0xa8] sm:$0xff]
      %v5136 = vld [vmem:[#allocation6 + $0xb0] sm:$0xff]
      %v5137 = vld [vmem:[#allocation6 + $0xb8] sm:$0xff]
      %v5138 = vld [vmem:[#allocation6 + $0xc0] sm:$0xff]
      %v5139 = vld [vmem:[#allocation6 + $0xc8] sm:$0xff]
      %v5140 = vld [vmem:[#allocation6 + $0xd0] sm:$0xff]
      %v5141 = vld [vmem:[#allocation6 + $0xd8] sm:$0xff]
      %v5142 = vld [vmem:[#allocation6 + $0xe0] sm:$0xff]
      %v5143 = vld [vmem:[#allocation6 + $0xe8] sm:$0xff]
      %v5144 = vld [vmem:[#allocation6 + $0xf0] sm:$0xff]
      %v5145 = vld [vmem:[#allocation6 + $0xf8] sm:$0xff]
      %v5146 = vld [vmem:[#allocation6 + $0x100] sm:$0xff]
      %v5147 = vld [vmem:[#allocation6 + $0x108] sm:$0xff]
      %v5148 = vld [vmem:[#allocation6 + $0x110] sm:$0xff]
      %v5149 = vld [vmem:[#allocation6 + $0x118] sm:$0xff]
      %v5150 = vld [vmem:[#allocation6 + $0x120] sm:$0xff]
      %v5151 = vld [vmem:[#allocation6 + $0x128] sm:$0xff]
      %v5152 = vld [vmem:[#allocation6 + $0x130] sm:$0xff]
      %v5153 = vld [vmem:[#allocation6 + $0x138] sm:$0xff]
      %v5154 = vld [vmem:[#allocation6 + $0x140] sm:$0xff]
      %v5155 = vld [vmem:[#allocation6 + $0x148] sm:$0xff]
      %v5156 = vld [vmem:[#allocation6 + $0x150] sm:$0xff]
      %v5157 = vld [vmem:[#allocation6 + $0x158] sm:$0xff]
      %v5158 = vld [vmem:[#allocation6 + $0x160] sm:$0xff]
      %v5159 = vld [vmem:[#allocation6 + $0x168] sm:$0xff]
      %v5160 = vld [vmem:[#allocation6 + $0x170] sm:$0xff]
      %v5161 = vld [vmem:[#allocation6 + $0x178] sm:$0xff]
      %v5162 = vld [vmem:[#allocation6 + $0x180] sm:$0xff]
      %v5163 = vld [vmem:[#allocation6 + $0x188] sm:$0xff]
      %v5164 = vld [vmem:[#allocation6 + $0x190] sm:$0xff]
      %v5165 = vld [vmem:[#allocation6 + $0x198] sm:$0xff]
      %v5166 = vld [vmem:[#allocation6 + $0x1a0] sm:$0xff]
      %v5167 = vld [vmem:[#allocation6 + $0x1a8] sm:$0xff]
      %v5168 = vld [vmem:[#allocation6 + $0x1b0] sm:$0xff]
      %v5169 = vld [vmem:[#allocation6 + $0x1b8] sm:$0xff]
      %v5170 = vld [vmem:[#allocation6 + $0x1c0] sm:$0xff]
      %v5171 = vld [vmem:[#allocation6 + $0x1c8] sm:$0xff]
      %v5172 = vld [vmem:[#allocation6 + $0x1d0] sm:$0xff]
      %v5173 = vld [vmem:[#allocation6 + $0x1d8] sm:$0xff]
      %v5174 = vld [vmem:[#allocation6 + $0x1e0] sm:$0xff]
      %v5175 = vld [vmem:[#allocation6 + $0x1e8] sm:$0xff]
      %v5176 = vld [vmem:[#allocation6 + $0x1f0] sm:$0xff]
      %v5177 = vld [vmem:[#allocation6 + $0x1f8] sm:$0xff]
      %v5178 = vld [vmem:[%s2] sm:$0x3]
      %v5180 = vlaneseq
      %v5181 = vshrl.u32 %v5180, 7
      %v5182 = vsub.s32 0, %v5181
      %v5183 = vrot.slane %v5178, %v5182
      %v5184 = vlaneseq
      %v5185 = vshrl.u32 %v5184, 7
      %v5186 = vsub.s32 1, %v5185
      %v5187 = vrot.slane %v5178, %v5186
      %v5190 = vadd.f32 %v5114, %v5183
      %v5191 = vadd.f32 %v5115, %v5187
      %v5192 = vadd.f32 %v5116, %v5183
      %v5193 = vadd.f32 %v5117, %v5187
      %v5194 = vadd.f32 %v5118, %v5183
      %v5195 = vadd.f32 %v5119, %v5187
      %v5196 = vadd.f32 %v5120, %v5183
      %v5197 = vadd.f32 %v5121, %v5187
      %v5198 = vadd.f32 %v5122, %v5183
      %v5199 = vadd.f32 %v5123, %v5187
      %v5200 = vadd.f32 %v5124, %v5183
      %v5201 = vadd.f32 %v5125, %v5187
      %v5202 = vadd.f32 %v5126, %v5183
      %v5203 = vadd.f32 %v5127, %v5187
      %v5204 = vadd.f32 %v5128, %v5183
      %v5205 = vadd.f32 %v5129, %v5187
      %v5206 = vadd.f32 %v5130, %v5183
      %v5207 = vadd.f32 %v5131, %v5187
      %v5208 = vadd.f32 %v5132, %v5183
      %v5209 = vadd.f32 %v5133, %v5187
      %v5210 = vadd.f32 %v5134, %v5183
      %v5211 = vadd.f32 %v5135, %v5187
      %v5212 = vadd.f32 %v5136, %v5183
      %v5213 = vadd.f32 %v5137, %v5187
      %v5214 = vadd.f32 %v5138, %v5183
      %v5215 = vadd.f32 %v5139, %v5187
      %v5216 = vadd.f32 %v5140, %v5183
      %v5217 = vadd.f32 %v5141, %v5187
      %v5218 = vadd.f32 %v5142, %v5183
      %v5219 = vadd.f32 %v5143, %v5187
      %v5220 = vadd.f32 %v5144, %v5183
      %v5221 = vadd.f32 %v5145, %v5187
      %v5222 = vadd.f32 %v5146, %v5183
      %v5223 = vadd.f32 %v5147, %v5187
      %v5224 = vadd.f32 %v5148, %v5183
      %v5225 = vadd.f32 %v5149, %v5187
      %v5226 = vadd.f32 %v5150, %v5183
      %v5227 = vadd.f32 %v5151, %v5187
      %v5228 = vadd.f32 %v5152, %v5183
      %v5229 = vadd.f32 %v5153, %v5187
      %v5230 = vadd.f32 %v5154, %v5183
      %v5231 = vadd.f32 %v5155, %v5187
      %v5232 = vadd.f32 %v5156, %v5183
      %v5233 = vadd.f32 %v5157, %v5187
      %v5234 = vadd.f32 %v5158, %v5183
      %v5235 = vadd.f32 %v5159, %v5187
      %v5236 = vadd.f32 %v5160, %v5183
      %v5237 = vadd.f32 %v5161, %v5187
      %v5238 = vadd.f32 %v5162, %v5183
      %v5239 = vadd.f32 %v5163, %v5187
      %v5240 = vadd.f32 %v5164, %v5183
      %v5241 = vadd.f32 %v5165, %v5187
      %v5242 = vadd.f32 %v5166, %v5183
      %v5243 = vadd.f32 %v5167, %v5187
      %v5244 = vadd.f32 %v5168, %v5183
      %v5245 = vadd.f32 %v5169, %v5187
      %v5246 = vadd.f32 %v5170, %v5183
      %v5247 = vadd.f32 %v5171, %v5187
      %v5248 = vadd.f32 %v5172, %v5183
      %v5249 = vadd.f32 %v5173, %v5187
      %v5250 = vadd.f32 %v5174, %v5183
      %v5251 = vadd.f32 %v5175, %v5187
      %v5252 = vadd.f32 %v5176, %v5183
      %v5253 = vadd.f32 %v5177, %v5187
      %v5254 = vmax.f32 %v5190, 0.0
      %v5255 = vmax.f32 %v5191, 0.0
      %v5256 = vmax.f32 %v5192, 0.0
      %v5257 = vmax.f32 %v5193, 0.0
      %v5258 = vmax.f32 %v5194, 0.0
      %v5259 = vmax.f32 %v5195, 0.0
      %v5260 = vmax.f32 %v5196, 0.0
      %v5261 = vmax.f32 %v5197, 0.0
      %v5262 = vmax.f32 %v5198, 0.0
      %v5263 = vmax.f32 %v5199, 0.0
      %v5264 = vmax.f32 %v5200, 0.0
      %v5265 = vmax.f32 %v5201, 0.0
      %v5266 = vmax.f32 %v5202, 0.0
      %v5267 = vmax.f32 %v5203, 0.0
      %v5268 = vmax.f32 %v5204, 0.0
      %v5269 = vmax.f32 %v5205, 0.0
      %v5270 = vmax.f32 %v5206, 0.0
      %v5271 = vmax.f32 %v5207, 0.0
      %v5272 = vmax.f32 %v5208, 0.0
      %v5273 = vmax.f32 %v5209, 0.0
      %v5274 = vmax.f32 %v5210, 0.0
      %v5275 = vmax.f32 %v5211, 0.0
      %v5276 = vmax.f32 %v5212, 0.0
      %v5277 = vmax.f32 %v5213, 0.0
      %v5278 = vmax.f32 %v5214, 0.0
      %v5279 = vmax.f32 %v5215, 0.0
      %v5280 = vmax.f32 %v5216, 0.0
      %v5281 = vmax.f32 %v5217, 0.0
      %v5282 = vmax.f32 %v5218, 0.0
      %v5283 = vmax.f32 %v5219, 0.0
      %v5284 = vmax.f32 %v5220, 0.0
      %v5285 = vmax.f32 %v5221, 0.0
      %v5286 = vmax.f32 %v5222, 0.0
      %v5287 = vmax.f32 %v5223, 0.0
      %v5288 = vmax.f32 %v5224, 0.0
      %v5289 = vmax.f32 %v5225, 0.0
      %v5290 = vmax.f32 %v5226, 0.0
      %v5291 = vmax.f32 %v5227, 0.0
      %v5292 = vmax.f32 %v5228, 0.0
      %v5293 = vmax.f32 %v5229, 0.0
      %v5294 = vmax.f32 %v5230, 0.0
      %v5295 = vmax.f32 %v5231, 0.0
      %v5296 = vmax.f32 %v5232, 0.0
      %v5297 = vmax.f32 %v5233, 0.0
      %v5298 = vmax.f32 %v5234, 0.0
      %v5299 = vmax.f32 %v5235, 0.0
      %v5300 = vmax.f32 %v5236, 0.0
      %v5301 = vmax.f32 %v5237, 0.0
      %v5302 = vmax.f32 %v5238, 0.0
      %v5303 = vmax.f32 %v5239, 0.0
      %v5304 = vmax.f32 %v5240, 0.0
      %v5305 = vmax.f32 %v5241, 0.0
      %v5306 = vmax.f32 %v5242, 0.0
      %v5307 = vmax.f32 %v5243, 0.0
      %v5308 = vmax.f32 %v5244, 0.0
      %v5309 = vmax.f32 %v5245, 0.0
      %v5310 = vmax.f32 %v5246, 0.0
      %v5311 = vmax.f32 %v5247, 0.0
      %v5312 = vmax.f32 %v5248, 0.0
      %v5313 = vmax.f32 %v5249, 0.0
      %v5314 = vmax.f32 %v5250, 0.0
      %v5315 = vmax.f32 %v5251, 0.0
      %v5316 = vmax.f32 %v5252, 0.0
      %v5317 = vmax.f32 %v5253, 0.0
      %5318 = vst [vmem:[#allocation4] sm:$0xff] 0.0
      %5319 = vst [vmem:[#allocation4 + $0x8] sm:$0xff] 0.0
      %5320 = vst [vmem:[#allocation4 + $0x10] sm:$0xff] 0.0
      %5321 = vst [vmem:[#allocation4 + $0x18] sm:$0xff] 0.0
      %5322 = vst [vmem:[#allocation4 + $0x20] sm:$0x3] 0.0
      %5323 = vst [vmem:[#allocation4 + $0x28] sm:$0x3] 0.0
      %5324 = vst [vmem:[#allocation4 + $0x30] sm:$0xff] 0.0
      %5325 = vst [vmem:[#allocation4 + $0x38] sm:$0xff] 0.0
      %5326 = vst [vmem:[#allocation4 + $0x40] sm:$0xff] 0.0
      %5327 = vst [vmem:[#allocation4 + $0x48] sm:$0xff] 0.0
      %5328 = vst [vmem:[#allocation4 + $0x50] sm:$0x3] 0.0
      %5329 = vst [vmem:[#allocation4 + $0x58] sm:$0x3] 0.0
      %5330 = vst [vmem:[#allocation4 + $0x60] sm:$0xff] 0.0
      %5331 = vst [vmem:[#allocation4 + $0x68] sm:$0xff] 0.0
      %5332 = vst [vmem:[#allocation4 + $0x70] sm:$0xff] 0.0
      %5333 = vst [vmem:[#allocation4 + $0x78] sm:$0xff] 0.0
      %5334 = vst [vmem:[#allocation4 + $0x80] sm:$0x3] 0.0
      %5335 = vst [vmem:[#allocation4 + $0x88] sm:$0x3] 0.0
      %5336 = vst [vmem:[#allocation4 + $0x90] sm:$0xff] 0.0
      %5337 = vst [vmem:[#allocation4 + $0x98] sm:$0xff] 0.0
      %5338 = vst [vmem:[#allocation4 + $0xa0] sm:$0xff] 0.0
      %5339 = vst [vmem:[#allocation4 + $0xa8] sm:$0xff] 0.0
      %5340 = vst [vmem:[#allocation4 + $0xb0] sm:$0x3] 0.0
      %5341 = vst [vmem:[#allocation4 + $0xb8] sm:$0x3] 0.0
      %5342 = vst [vmem:[#allocation4 + $0xc0] sm:$0xff] 0.0
      %5343 = vst [vmem:[#allocation4 + $0xc8] sm:$0xff] 0.0
      %5344 = vst [vmem:[#allocation4 + $0xd0] sm:$0xff] 0.0
      %5345 = vst [vmem:[#allocation4 + $0xd8] sm:$0xff] 0.0
      %5346 = vst [vmem:[#allocation4 + $0xe0] sm:$0x3] 0.0
      %5347 = vst [vmem:[#allocation4 + $0xe8] sm:$0x3] 0.0
      %5348 = vst [vmem:[#allocation4 + $0xf0] sm:$0xff] 0.0
      %5349 = vst [vmem:[#allocation4 + $0xf8] sm:$0xff] 0.0
      %5350 = vst [vmem:[#allocation4 + $0x100] sm:$0xff] 0.0
      %5351 = vst [vmem:[#allocation4 + $0x108] sm:$0xff] 0.0
      %5352 = vst [vmem:[#allocation4 + $0x110] sm:$0x3] 0.0
      %5353 = vst [vmem:[#allocation4 + $0x118] sm:$0x3] 0.0
      %5354 = vst [vmem:[#allocation4 + $0x120] sm:$0xff] 0.0
      %5355 = vst [vmem:[#allocation4 + $0x128] sm:$0xff] 0.0
      %5356 = vst [vmem:[#allocation4 + $0x130] sm:$0xff] 0.0
      %5357 = vst [vmem:[#allocation4 + $0x138] sm:$0xff] 0.0
      %5358 = vst [vmem:[#allocation4 + $0x140] sm:$0x3] 0.0
      %5359 = vst [vmem:[#allocation4 + $0x148] sm:$0x3] 0.0
      %5360 = vst [vmem:[#allocation4 + $0x150] sm:$0xff] 0.0
      %5361 = vst [vmem:[#allocation4 + $0x158] sm:$0xff] 0.0
      %5362 = vst [vmem:[#allocation4 + $0x160] sm:$0xff] 0.0
      %5363 = vst [vmem:[#allocation4 + $0x168] sm:$0xff] 0.0
      %5364 = vst [vmem:[#allocation4 + $0x170] sm:$0x3] 0.0
      %5365 = vst [vmem:[#allocation4 + $0x178] sm:$0x3] 0.0
      %5366 = vst [vmem:[#allocation4 + $0x180] sm:$0xff] 0.0
      %5367 = vst [vmem:[#allocation4 + $0x188] sm:$0xff] 0.0
      %5368 = vst [vmem:[#allocation4 + $0x190] sm:$0xff] 0.0
      %5369 = vst [vmem:[#allocation4 + $0x198] sm:$0xff] 0.0
      %5370 = vst [vmem:[#allocation4 + $0x1a0] sm:$0x3] 0.0
      %5371 = vst [vmem:[#allocation4 + $0x1a8] sm:$0x3] 0.0
      %5372 = vst [vmem:[#allocation4 + $0x1b0] sm:$0xff] 0.0
      %5373 = vst [vmem:[#allocation4 + $0x1b8] sm:$0xff] 0.0
      %5374 = vst [vmem:[#allocation4 + $0x1c0] sm:$0xff] 0.0
      %5375 = vst [vmem:[#allocation4 + $0x1c8] sm:$0xff] 0.0
      %5376 = vst [vmem:[#allocation4 + $0x1d0] sm:$0x3] 0.0
      %5377 = vst [vmem:[#allocation4 + $0x1d8] sm:$0x3] 0.0
      %5378 = vst [vmem:[#allocation4 + $0x1e0] sm:$0xff] 0.0
      %5379 = vst [vmem:[#allocation4 + $0x1e8] sm:$0xff] 0.0
      %5380 = vst [vmem:[#allocation4 + $0x1f0] sm:$0xff] 0.0
      %5381 = vst [vmem:[#allocation4 + $0x1f8] sm:$0xff] 0.0
      %5382 = vst [vmem:[#allocation4 + $0x200] sm:$0x3] 0.0
      %5383 = vst [vmem:[#allocation4 + $0x208] sm:$0x3] 0.0
      %5384 = vst [vmem:[#allocation4 + $0x210] sm:$0xff] 0.0
      %5385 = vst [vmem:[#allocation4 + $0x218] sm:$0xff] 0.0
      %5386 = vst [vmem:[#allocation4 + $0x220] sm:$0xff] 0.0
      %5387 = vst [vmem:[#allocation4 + $0x228] sm:$0xff] 0.0
      %5388 = vst [vmem:[#allocation4 + $0x230] sm:$0x3] 0.0
      %5389 = vst [vmem:[#allocation4 + $0x238] sm:$0x3] 0.0
      %5390 = vst [vmem:[#allocation4 + $0x240] sm:$0xff] 0.0
      %5391 = vst [vmem:[#allocation4 + $0x248] sm:$0xff] 0.0
      %5392 = vst [vmem:[#allocation4 + $0x250] sm:$0xff] 0.0
      %5393 = vst [vmem:[#allocation4 + $0x258] sm:$0xff] 0.0
      %5394 = vst [vmem:[#allocation4 + $0x260] sm:$0x3] 0.0
      %5395 = vst [vmem:[#allocation4 + $0x268] sm:$0x3] 0.0
      %5396 = vst [vmem:[#allocation4 + $0x270] sm:$0xff] 0.0
      %5397 = vst [vmem:[#allocation4 + $0x278] sm:$0xff] 0.0
      %5398 = vst [vmem:[#allocation4 + $0x280] sm:$0xff] 0.0
      %5399 = vst [vmem:[#allocation4 + $0x288] sm:$0xff] 0.0
      %5400 = vst [vmem:[#allocation4 + $0x290] sm:$0x3] 0.0
      %5401 = vst [vmem:[#allocation4 + $0x298] sm:$0x3] 0.0
      %5402 = vst [vmem:[#allocation4 + $0x2a0] sm:$0xff] 0.0
      %5403 = vst [vmem:[#allocation4 + $0x2a8] sm:$0xff] 0.0
      %5404 = vst [vmem:[#allocation4 + $0x2b0] sm:$0xff] 0.0
      %5405 = vst [vmem:[#allocation4 + $0x2b8] sm:$0xff] 0.0
      %5406 = vst [vmem:[#allocation4 + $0x2c0] sm:$0x3] 0.0
      %5407 = vst [vmem:[#allocation4 + $0x2c8] sm:$0x3] 0.0
      %5408 = vst [vmem:[#allocation4 + $0x2d0] sm:$0xff] 0.0
      %5409 = vst [vmem:[#allocation4 + $0x2d8] sm:$0xff] 0.0
      %5410 = vst [vmem:[#allocation4 + $0x2e0] sm:$0xff] 0.0
      %5411 = vst [vmem:[#allocation4 + $0x2e8] sm:$0xff] 0.0
      %5412 = vst [vmem:[#allocation4 + $0x2f0] sm:$0x3] 0.0
      %5413 = vst [vmem:[#allocation4 + $0x2f8] sm:$0x3] 0.0
      %5414 = vst [vmem:[#allocation4 + $0x300] sm:$0xff] 0.0
      %5415 = vst [vmem:[#allocation4 + $0x308] sm:$0xff] 0.0
      %5416 = vst [vmem:[#allocation4 + $0x310] sm:$0xff] 0.0
      %5417 = vst [vmem:[#allocation4 + $0x318] sm:$0xff] 0.0
      %5418 = vst [vmem:[#allocation4 + $0x320] sm:$0x3] 0.0
      %5419 = vst [vmem:[#allocation4 + $0x328] sm:$0x3] 0.0
      %5420 = vst [vmem:[#allocation4 + $0x330] sm:$0xff] 0.0
      %5421 = vst [vmem:[#allocation4 + $0x338] sm:$0xff] 0.0
      %5422 = vst [vmem:[#allocation4 + $0x340] sm:$0xff] 0.0
      %5423 = vst [vmem:[#allocation4 + $0x348] sm:$0xff] 0.0
      %5424 = vst [vmem:[#allocation4 + $0x350] sm:$0x3] 0.0
      %5425 = vst [vmem:[#allocation4 + $0x358] sm:$0x3] 0.0
      %vm5490 = vcmask 1040384
      %v5491 = vrot.slane %v5254, 7
      %v5492 = vrot.slane %v5255, 7
      %v5493 = vrot.slane %v5256, 7
      %v5494 = vsel %vm5490, %v5491, %v5493
      %v5495 = vrot.slane %v5257, 7
      %v5496 = vsel %vm5490, %v5492, %v5495
      %v5497 = vrot.slane %v5258, 7
      %v5498 = vrot.slane %v5259, 7
      %v5499 = vrot.slane %v5260, 7
      %v5500 = vsel %vm5490, %v5497, %v5499
      %v5501 = vrot.slane %v5261, 7
      %v5502 = vsel %vm5490, %v5498, %v5501
      %v5503 = vrot.slane %v5262, 7
      %v5504 = vrot.slane %v5263, 7
      %v5505 = vrot.slane %v5264, 7
      %v5506 = vsel %vm5490, %v5503, %v5505
      %v5507 = vrot.slane %v5265, 7
      %v5508 = vsel %vm5490, %v5504, %v5507
      %v5509 = vrot.slane %v5266, 7
      %v5510 = vrot.slane %v5267, 7
      %v5511 = vrot.slane %v5268, 7
      %v5512 = vsel %vm5490, %v5509, %v5511
      %v5513 = vrot.slane %v5269, 7
      %v5514 = vsel %vm5490, %v5510, %v5513
      %v5515 = vrot.slane %v5270, 7
      %v5516 = vrot.slane %v5271, 7
      %v5517 = vrot.slane %v5272, 7
      %v5518 = vsel %vm5490, %v5515, %v5517
      %v5519 = vrot.slane %v5273, 7
      %v5520 = vsel %vm5490, %v5516, %v5519
      %v5521 = vrot.slane %v5274, 7
      %v5522 = vrot.slane %v5275, 7
      %v5523 = vrot.slane %v5276, 7
      %v5524 = vsel %vm5490, %v5521, %v5523
      %v5525 = vrot.slane %v5277, 7
      %v5526 = vsel %vm5490, %v5522, %v5525
      %v5527 = vrot.slane %v5278, 7
      %v5528 = vrot.slane %v5279, 7
      %v5529 = vrot.slane %v5280, 7
      %v5530 = vsel %vm5490, %v5527, %v5529
      %v5531 = vrot.slane %v5281, 7
      %v5532 = vsel %vm5490, %v5528, %v5531
      %v5533 = vrot.slane %v5282, 7
      %v5534 = vrot.slane %v5283, 7
      %v5535 = vrot.slane %v5284, 7
      %v5536 = vsel %vm5490, %v5533, %v5535
      %v5537 = vrot.slane %v5285, 7
      %v5538 = vsel %vm5490, %v5534, %v5537
      %v5539 = vrot.slane %v5286, 7
      %v5540 = vrot.slane %v5287, 7
      %v5541 = vrot.slane %v5288, 7
      %v5542 = vsel %vm5490, %v5539, %v5541
      %v5543 = vrot.slane %v5289, 7
      %v5544 = vsel %vm5490, %v5540, %v5543
      %v5545 = vrot.slane %v5290, 7
      %v5546 = vrot.slane %v5291, 7
      %v5547 = vrot.slane %v5292, 7
      %v5548 = vsel %vm5490, %v5545, %v5547
      %v5549 = vrot.slane %v5293, 7
      %v5550 = vsel %vm5490, %v5546, %v5549
      %v5551 = vrot.slane %v5294, 7
      %v5552 = vrot.slane %v5295, 7
      %v5553 = vrot.slane %v5296, 7
      %v5554 = vsel %vm5490, %v5551, %v5553
      %v5555 = vrot.slane %v5297, 7
      %v5556 = vsel %vm5490, %v5552, %v5555
      %v5557 = vrot.slane %v5298, 7
      %v5558 = vrot.slane %v5299, 7
      %v5559 = vrot.slane %v5300, 7
      %v5560 = vsel %vm5490, %v5557, %v5559
      %v5561 = vrot.slane %v5301, 7
      %v5562 = vsel %vm5490, %v5558, %v5561
      %v5563 = vrot.slane %v5302, 7
      %v5564 = vrot.slane %v5303, 7
      %v5565 = vrot.slane %v5304, 7
      %v5566 = vsel %vm5490, %v5563, %v5565
      %v5567 = vrot.slane %v5305, 7
      %v5568 = vsel %vm5490, %v5564, %v5567
      %v5569 = vrot.slane %v5306, 7
      %v5570 = vrot.slane %v5307, 7
      %v5571 = vrot.slane %v5308, 7
      %v5572 = vsel %vm5490, %v5569, %v5571
      %v5573 = vrot.slane %v5309, 7
      %v5574 = vsel %vm5490, %v5570, %v5573
      %v5575 = vrot.slane %v5310, 7
      %v5576 = vrot.slane %v5311, 7
      %v5577 = vrot.slane %v5312, 7
      %v5578 = vsel %vm5490, %v5575, %v5577
      %v5579 = vrot.slane %v5313, 7
      %v5580 = vsel %vm5490, %v5576, %v5579
      %v5581 = vrot.slane %v5314, 7
      %v5582 = vrot.slane %v5315, 7
      %v5583 = vrot.slane %v5316, 7
      %v5584 = vsel %vm5490, %v5581, %v5583
      %v5585 = vrot.slane %v5317, 7
      %v5586 = vsel %vm5490, %v5582, %v5585
      %s5683 = scalar_lea.vmem [#allocation4], 48
      %5684 = vst [vmem:[%s5683] sm:$0xfe] %v5491
      %5685 = vst [vmem:[%s5683 + $0x8] sm:$0xfe] %v5492
      %5686 = vst [vmem:[%s5683 + $0x10] sm:$0xff] %v5494
      %5687 = vst [vmem:[%s5683 + $0x18] sm:$0xff] %v5496
      %5688 = vst [vmem:[%s5683 + $0x20] sm:$0x1] %v5493
      %5689 = vst [vmem:[%s5683 + $0x28] sm:$0x1] %v5495
      %5690 = vst [vmem:[%s5683 + $0x30] sm:$0xfe] %v5497
      %5691 = vst [vmem:[%s5683 + $0x38] sm:$0xfe] %v5498
      %5692 = vst [vmem:[%s5683 + $0x40] sm:$0xff] %v5500
      %5693 = vst [vmem:[%s5683 + $0x48] sm:$0xff] %v5502
      %5694 = vst [vmem:[%s5683 + $0x50] sm:$0x1] %v5499
      %5695 = vst [vmem:[%s5683 + $0x58] sm:$0x1] %v5501
      %5696 = vst [vmem:[%s5683 + $0x60] sm:$0xfe] %v5503
      %5697 = vst [vmem:[%s5683 + $0x68] sm:$0xfe] %v5504
      %5698 = vst [vmem:[%s5683 + $0x70] sm:$0xff] %v5506
      %5699 = vst [vmem:[%s5683 + $0x78] sm:$0xff] %v5508
      %5700 = vst [vmem:[%s5683 + $0x80] sm:$0x1] %v5505
      %5701 = vst [vmem:[%s5683 + $0x88] sm:$0x1] %v5507
      %5702 = vst [vmem:[%s5683 + $0x90] sm:$0xfe] %v5509
      %5703 = vst [vmem:[%s5683 + $0x98] sm:$0xfe] %v5510
      %5704 = vst [vmem:[%s5683 + $0xa0] sm:$0xff] %v5512
      %5705 = vst [vmem:[%s5683 + $0xa8] sm:$0xff] %v5514
      %5706 = vst [vmem:[%s5683 + $0xb0] sm:$0x1] %v5511
      %5707 = vst [vmem:[%s5683 + $0xb8] sm:$0x1] %v5513
      %5708 = vst [vmem:[%s5683 + $0xc0] sm:$0xfe] %v5515
      %5709 = vst [vmem:[%s5683 + $0xc8] sm:$0xfe] %v5516
      %5710 = vst [vmem:[%s5683 + $0xd0] sm:$0xff] %v5518
      %5711 = vst [vmem:[%s5683 + $0xd8] sm:$0xff] %v5520
      %5712 = vst [vmem:[%s5683 + $0xe0] sm:$0x1] %v5517
      %5713 = vst [vmem:[%s5683 + $0xe8] sm:$0x1] %v5519
      %5714 = vst [vmem:[%s5683 + $0xf0] sm:$0xfe] %v5521
      %5715 = vst [vmem:[%s5683 + $0xf8] sm:$0xfe] %v5522
      %5716 = vst [vmem:[%s5683 + $0x100] sm:$0xff] %v5524
      %5717 = vst [vmem:[%s5683 + $0x108] sm:$0xff] %v5526
      %5718 = vst [vmem:[%s5683 + $0x110] sm:$0x1] %v5523
      %5719 = vst [vmem:[%s5683 + $0x118] sm:$0x1] %v5525
      %5720 = vst [vmem:[%s5683 + $0x120] sm:$0xfe] %v5527
      %5721 = vst [vmem:[%s5683 + $0x128] sm:$0xfe] %v5528
      %5722 = vst [vmem:[%s5683 + $0x130] sm:$0xff] %v5530
      %5723 = vst [vmem:[%s5683 + $0x138] sm:$0xff] %v5532
      %5724 = vst [vmem:[%s5683 + $0x140] sm:$0x1] %v5529
      %5725 = vst [vmem:[%s5683 + $0x148] sm:$0x1] %v5531
      %5726 = vst [vmem:[%s5683 + $0x150] sm:$0xfe] %v5533
      %5727 = vst [vmem:[%s5683 + $0x158] sm:$0xfe] %v5534
      %5728 = vst [vmem:[%s5683 + $0x160] sm:$0xff] %v5536
      %5729 = vst [vmem:[%s5683 + $0x168] sm:$0xff] %v5538
      %5730 = vst [vmem:[%s5683 + $0x170] sm:$0x1] %v5535
      %5731 = vst [vmem:[%s5683 + $0x178] sm:$0x1] %v5537
      %5732 = vst [vmem:[%s5683 + $0x180] sm:$0xfe] %v5539
      %5733 = vst [vmem:[%s5683 + $0x188] sm:$0xfe] %v5540
      %5734 = vst [vmem:[%s5683 + $0x190] sm:$0xff] %v5542
      %5735 = vst [vmem:[%s5683 + $0x198] sm:$0xff] %v5544
      %5736 = vst [vmem:[%s5683 + $0x1a0] sm:$0x1] %v5541
      %5737 = vst [vmem:[%s5683 + $0x1a8] sm:$0x1] %v5543
      %5738 = vst [vmem:[%s5683 + $0x1b0] sm:$0xfe] %v5545
      %5739 = vst [vmem:[%s5683 + $0x1b8] sm:$0xfe] %v5546
      %5740 = vst [vmem:[%s5683 + $0x1c0] sm:$0xff] %v5548
      %5741 = vst [vmem:[%s5683 + $0x1c8] sm:$0xff] %v5550
      %5742 = vst [vmem:[%s5683 + $0x1d0] sm:$0x1] %v5547
      %5743 = vst [vmem:[%s5683 + $0x1d8] sm:$0x1] %v5549
      %5744 = vst [vmem:[%s5683 + $0x1e0] sm:$0xfe] %v5551
      %5745 = vst [vmem:[%s5683 + $0x1e8] sm:$0xfe] %v5552
      %5746 = vst [vmem:[%s5683 + $0x1f0] sm:$0xff] %v5554
      %5747 = vst [vmem:[%s5683 + $0x1f8] sm:$0xff] %v5556
      %5748 = vst [vmem:[%s5683 + $0x200] sm:$0x1] %v5553
      %5749 = vst [vmem:[%s5683 + $0x208] sm:$0x1] %v5555
      %5750 = vst [vmem:[%s5683 + $0x210] sm:$0xfe] %v5557
      %5751 = vst [vmem:[%s5683 + $0x218] sm:$0xfe] %v5558
      %5752 = vst [vmem:[%s5683 + $0x220] sm:$0xff] %v5560
      %5753 = vst [vmem:[%s5683 + $0x228] sm:$0xff] %v5562
      %5754 = vst [vmem:[%s5683 + $0x230] sm:$0x1] %v5559
      %5755 = vst [vmem:[%s5683 + $0x238] sm:$0x1] %v5561
      %5756 = vst [vmem:[%s5683 + $0x240] sm:$0xfe] %v5563
      %5757 = vst [vmem:[%s5683 + $0x248] sm:$0xfe] %v5564
      %5758 = vst [vmem:[%s5683 + $0x250] sm:$0xff] %v5566
      %5759 = vst [vmem:[%s5683 + $0x258] sm:$0xff] %v5568
      %5760 = vst [vmem:[%s5683 + $0x260] sm:$0x1] %v5565
      %5761 = vst [vmem:[%s5683 + $0x268] sm:$0x1] %v5567
      %5762 = vst [vmem:[%s5683 + $0x270] sm:$0xfe] %v5569
      %5763 = vst [vmem:[%s5683 + $0x278] sm:$0xfe] %v5570
      %5764 = vst [vmem:[%s5683 + $0x280] sm:$0xff] %v5572
      %5765 = vst [vmem:[%s5683 + $0x288] sm:$0xff] %v5574
      %5766 = vst [vmem:[%s5683 + $0x290] sm:$0x1] %v5571
      %5767 = vst [vmem:[%s5683 + $0x298] sm:$0x1] %v5573
      %5768 = vst [vmem:[%s5683 + $0x2a0] sm:$0xfe] %v5575
      %5769 = vst [vmem:[%s5683 + $0x2a8] sm:$0xfe] %v5576
      %5770 = vst [vmem:[%s5683 + $0x2b0] sm:$0xff] %v5578
      %5771 = vst [vmem:[%s5683 + $0x2b8] sm:$0xff] %v5580
      %5772 = vst [vmem:[%s5683 + $0x2c0] sm:$0x1] %v5577
      %5773 = vst [vmem:[%s5683 + $0x2c8] sm:$0x1] %v5579
      %5774 = vst [vmem:[%s5683 + $0x2d0] sm:$0xfe] %v5581
      %5775 = vst [vmem:[%s5683 + $0x2d8] sm:$0xfe] %v5582
      %5776 = vst [vmem:[%s5683 + $0x2e0] sm:$0xff] %v5584
      %5777 = vst [vmem:[%s5683 + $0x2e8] sm:$0xff] %v5586
      %5778 = vst [vmem:[%s5683 + $0x2f0] sm:$0x1] %v5583
      %5779 = vst [vmem:[%s5683 + $0x2f8] sm:$0x1] %v5585
      %v5780 = vld [vmem:[#allocation4] sm:$0xff]
      %v5781 = vld [vmem:[#allocation4 + $0x8] sm:$0xff]
      %v5782 = vld [vmem:[#allocation4 + $0x10] sm:$0xff]
      %v5783 = vld [vmem:[#allocation4 + $0x18] sm:$0xff]
      %v5784 = vld [vmem:[#allocation4 + $0x30] sm:$0xff]
      %v5785 = vld [vmem:[#allocation4 + $0x38] sm:$0xff]
      %v5786 = vld [vmem:[#allocation4 + $0x40] sm:$0xff]
      %v5787 = vld [vmem:[#allocation4 + $0x48] sm:$0xff]
      %v5788 = vld [vmem:[#allocation4 + $0x60] sm:$0xff]
      %v5789 = vld [vmem:[#allocation4 + $0x68] sm:$0xff]
      %v5790 = vld [vmem:[#allocation4 + $0x70] sm:$0xff]
      %v5791 = vld [vmem:[#allocation4 + $0x78] sm:$0xff]
      %v5792 = vld [vmem:[#allocation4 + $0x90] sm:$0xff]
      %v5793 = vld [vmem:[#allocation4 + $0x98] sm:$0xff]
      %v5794 = vld [vmem:[#allocation4 + $0xa0] sm:$0xff]
      %v5795 = vld [vmem:[#allocation4 + $0xa8] sm:$0xff]
      %v5796 = vld [vmem:[#allocation4 + $0xc0] sm:$0xff]
      %v5797 = vld [vmem:[#allocation4 + $0xc8] sm:$0xff]
      %v5798 = vld [vmem:[#allocation4 + $0xd0] sm:$0xff]
      %v5799 = vld [vmem:[#allocation4 + $0xd8] sm:$0xff]
      %v5800 = vld [vmem:[#allocation4 + $0xf0] sm:$0xff]
      %v5801 = vld [vmem:[#allocation4 + $0xf8] sm:$0xff]
      %v5802 = vld [vmem:[#allocation4 + $0x100] sm:$0xff]
      %v5803 = vld [vmem:[#allocation4 + $0x108] sm:$0xff]
      %v5804 = vld [vmem:[#allocation4 + $0x120] sm:$0xff]
      %v5805 = vld [vmem:[#allocation4 + $0x128] sm:$0xff]
      %v5806 = vld [vmem:[#allocation4 + $0x130] sm:$0xff]
      %v5807 = vld [vmem:[#allocation4 + $0x138] sm:$0xff]
      %v5808 = vld [vmem:[#allocation4 + $0x150] sm:$0xff]
      %v5809 = vld [vmem:[#allocation4 + $0x158] sm:$0xff]
      %v5810 = vld [vmem:[#allocation4 + $0x160] sm:$0xff]
      %v5811 = vld [vmem:[#allocation4 + $0x168] sm:$0xff]
      %v5812 = vld [vmem:[#allocation4 + $0x180] sm:$0xff]
      %v5813 = vld [vmem:[#allocation4 + $0x188] sm:$0xff]
      %v5814 = vld [vmem:[#allocation4 + $0x190] sm:$0xff]
      %v5815 = vld [vmem:[#allocation4 + $0x198] sm:$0xff]
      %v5816 = vld [vmem:[#allocation4 + $0x1b0] sm:$0xff]
      %v5817 = vld [vmem:[#allocation4 + $0x1b8] sm:$0xff]
      %v5818 = vld [vmem:[#allocation4 + $0x1c0] sm:$0xff]
      %v5819 = vld [vmem:[#allocation4 + $0x1c8] sm:$0xff]
      %v5820 = vld [vmem:[#allocation4 + $0x1e0] sm:$0xff]
      %v5821 = vld [vmem:[#allocation4 + $0x1e8] sm:$0xff]
      %v5822 = vld [vmem:[#allocation4 + $0x1f0] sm:$0xff]
      %v5823 = vld [vmem:[#allocation4 + $0x1f8] sm:$0xff]
      %v5824 = vld [vmem:[#allocation4 + $0x210] sm:$0xff]
      %v5825 = vld [vmem:[#allocation4 + $0x218] sm:$0xff]
      %v5826 = vld [vmem:[#allocation4 + $0x220] sm:$0xff]
      %v5827 = vld [vmem:[#allocation4 + $0x228] sm:$0xff]
      %v5828 = vld [vmem:[#allocation4 + $0x240] sm:$0xff]
      %v5829 = vld [vmem:[#allocation4 + $0x248] sm:$0xff]
      %v5830 = vld [vmem:[#allocation4 + $0x250] sm:$0xff]
      %v5831 = vld [vmem:[#allocation4 + $0x258] sm:$0xff]
      %v5832 = vld [vmem:[#allocation4 + $0x270] sm:$0xff]
      %v5833 = vld [vmem:[#allocation4 + $0x278] sm:$0xff]
      %v5834 = vld [vmem:[#allocation4 + $0x280] sm:$0xff]
      %v5835 = vld [vmem:[#allocation4 + $0x288] sm:$0xff]
      %v5836 = vld [vmem:[#allocation4 + $0x2a0] sm:$0xff]
      %v5837 = vld [vmem:[#allocation4 + $0x2a8] sm:$0xff]
      %v5838 = vld [vmem:[#allocation4 + $0x2b0] sm:$0xff]
      %v5839 = vld [vmem:[#allocation4 + $0x2b8] sm:$0xff]
      %v5840 = vld [vmem:[#allocation4 + $0x2d0] sm:$0xff]
      %v5841 = vld [vmem:[#allocation4 + $0x2d8] sm:$0xff]
      %v5842 = vld [vmem:[#allocation4 + $0x2e0] sm:$0xff]
      %v5843 = vld [vmem:[#allocation4 + $0x2e8] sm:$0xff]
      %v5844 = vld [vmem:[#allocation4 + $0x300] sm:$0xff]
      %v5845 = vld [vmem:[#allocation4 + $0x308] sm:$0xff]
      %v5846 = vld [vmem:[#allocation4 + $0x310] sm:$0xff]
      %v5847 = vld [vmem:[#allocation4 + $0x318] sm:$0xff]
      %v5848 = vld [vmem:[#allocation4 + $0x330] sm:$0xff]
      %v5849 = vld [vmem:[#allocation4 + $0x338] sm:$0xff]
      %v5850 = vld [vmem:[#allocation4 + $0x340] sm:$0xff]
      %v5851 = vld [vmem:[#allocation4 + $0x348] sm:$0xff]
      %v5852 = vpack.c.bf16 %v5782, %v5780
      %v5853 = vpack.c.bf16 %v5783, %v5781
      %v5854 = vpack.c.bf16 %v5786, %v5784
      %v5855 = vpack.c.bf16 %v5787, %v5785
      %v5856 = vpack.c.bf16 %v5790, %v5788
      %v5857 = vpack.c.bf16 %v5791, %v5789
      %v5858 = vpack.c.bf16 %v5794, %v5792
      %v5859 = vpack.c.bf16 %v5795, %v5793
      %v5860 = vpack.c.bf16 %v5798, %v5796
      %v5861 = vpack.c.bf16 %v5799, %v5797
      %v5862 = vpack.c.bf16 %v5802, %v5800
      %v5863 = vpack.c.bf16 %v5803, %v5801
      %v5864 = vpack.c.bf16 %v5806, %v5804
      %v5865 = vpack.c.bf16 %v5807, %v5805
      %v5866 = vpack.c.bf16 %v5810, %v5808
      %v5867 = vpack.c.bf16 %v5811, %v5809
      %v5868 = vpack.c.bf16 %v5814, %v5812
      %v5869 = vpack.c.bf16 %v5815, %v5813
      %v5870 = vpack.c.bf16 %v5818, %v5816
      %v5871 = vpack.c.bf16 %v5819, %v5817
      %v5872 = vpack.c.bf16 %v5822, %v5820
      %v5873 = vpack.c.bf16 %v5823, %v5821
      %v5874 = vpack.c.bf16 %v5826, %v5824
      %v5875 = vpack.c.bf16 %v5827, %v5825
      %v5876 = vpack.c.bf16 %v5830, %v5828
      %v5877 = vpack.c.bf16 %v5831, %v5829
      %v5878 = vpack.c.bf16 %v5834, %v5832
      %v5879 = vpack.c.bf16 %v5835, %v5833
      %v5880 = vpack.c.bf16 %v5838, %v5836
      %v5881 = vpack.c.bf16 %v5839, %v5837
      %v5882 = vpack.c.bf16 %v5842, %v5840
      %v5883 = vpack.c.bf16 %v5843, %v5841
      %v5884 = vpack.c.bf16 %v5846, %v5844
      %v5885 = vpack.c.bf16 %v5847, %v5845
      %v5886 = vpack.c.bf16 %v5850, %v5848
      %v5887 = vpack.c.bf16 %v5851, %v5849
      %5888 = vst [vmem:[#allocation5] sm:$0xff] %v5852
      %5889 = vst [vmem:[#allocation5 + $0x8] sm:$0xff] %v5853
      %5890 = vst [vmem:[#allocation5 + $0x10] sm:$0xff] %v5854
      %5891 = vst [vmem:[#allocation5 + $0x18] sm:$0xff] %v5855
      %5892 = vst [vmem:[#allocation5 + $0x20] sm:$0xff] %v5856
      %5893 = vst [vmem:[#allocation5 + $0x28] sm:$0xff] %v5857
      %5894 = vst [vmem:[#allocation5 + $0x30] sm:$0xff] %v5858
      %5895 = vst [vmem:[#allocation5 + $0x38] sm:$0xff] %v5859
      %5896 = vst [vmem:[#allocation5 + $0x40] sm:$0xff] %v5860
      %5897 = vst [vmem:[#allocation5 + $0x48] sm:$0xff] %v5861
      %5898 = vst [vmem:[#allocation5 + $0x50] sm:$0xff] %v5862
      %5899 = vst [vmem:[#allocation5 + $0x58] sm:$0xff] %v5863
      %5900 = vst [vmem:[#allocation5 + $0x60] sm:$0xff] %v5864
      %5901 = vst [vmem:[#allocation5 + $0x68] sm:$0xff] %v5865
      %5902 = vst [vmem:[#allocation5 + $0x70] sm:$0xff] %v5866
      %5903 = vst [vmem:[#allocation5 + $0x78] sm:$0xff] %v5867
      %5904 = vst [vmem:[#allocation5 + $0x80] sm:$0xff] %v5868
      %5905 = vst [vmem:[#allocation5 + $0x88] sm:$0xff] %v5869
      %5906 = vst [vmem:[#allocation5 + $0x90] sm:$0xff] %v5870
      %5907 = vst [vmem:[#allocation5 + $0x98] sm:$0xff] %v5871
      %5908 = vst [vmem:[#allocation5 + $0xa0] sm:$0xff] %v5872
      %5909 = vst [vmem:[#allocation5 + $0xa8] sm:$0xff] %v5873
      %5910 = vst [vmem:[#allocation5 + $0xb0] sm:$0xff] %v5874
      %5911 = vst [vmem:[#allocation5 + $0xb8] sm:$0xff] %v5875
      %5912 = vst [vmem:[#allocation5 + $0xc0] sm:$0xff] %v5876
      %5913 = vst [vmem:[#allocation5 + $0xc8] sm:$0xff] %v5877
      %5914 = vst [vmem:[#allocation5 + $0xd0] sm:$0xff] %v5878
      %5915 = vst [vmem:[#allocation5 + $0xd8] sm:$0xff] %v5879
      %5916 = vst [vmem:[#allocation5 + $0xe0] sm:$0xff] %v5880
      %5917 = vst [vmem:[#allocation5 + $0xe8] sm:$0xff] %v5881
      %5918 = vst [vmem:[#allocation5 + $0xf0] sm:$0xff] %v5882
      %5919 = vst [vmem:[#allocation5 + $0xf8] sm:$0xff] %v5883
      %5920 = vst [vmem:[#allocation5 + $0x100] sm:$0xff] %v5884
      %5921 = vst [vmem:[#allocation5 + $0x108] sm:$0xff] %v5885
      %5922 = vst [vmem:[#allocation5 + $0x110] sm:$0xff] %v5886
      %5923 = vst [vmem:[#allocation5 + $0x118] sm:$0xff] %v5887
      %v5924 = vld [vmem:[#allocation4] sm:$0xfe]
      %v5925 = vld [vmem:[#allocation4 + $0x8] sm:$0xfe]
      %v5926 = vld [vmem:[#allocation4 + $0x10] sm:$0xff]
      %v5927 = vld [vmem:[#allocation4 + $0x18] sm:$0xff]
      %v5928 = vld [vmem:[#allocation4 + $0x20] sm:$0x1]
      %v5929 = vld [vmem:[#allocation4 + $0x28] sm:$0x1]
      %v5930 = vld [vmem:[#allocation4 + $0x30] sm:$0xfe]
      %v5931 = vld [vmem:[#allocation4 + $0x38] sm:$0xfe]
      %v5932 = vld [vmem:[#allocation4 + $0x40] sm:$0xff]
      %v5933 = vld [vmem:[#allocation4 + $0x48] sm:$0xff]
      %v5934 = vld [vmem:[#allocation4 + $0x50] sm:$0x1]
      %v5935 = vld [vmem:[#allocation4 + $0x58] sm:$0x1]
      %v5936 = vld [vmem:[#allocation4 + $0x60] sm:$0xfe]
      %v5937 = vld [vmem:[#allocation4 + $0x68] sm:$0xfe]
      %v5938 = vld [vmem:[#allocation4 + $0x70] sm:$0xff]
      %v5939 = vld [vmem:[#allocation4 + $0x78] sm:$0xff]
      %v5940 = vld [vmem:[#allocation4 + $0x80] sm:$0x1]
      %v5941 = vld [vmem:[#allocation4 + $0x88] sm:$0x1]
      %v5942 = vld [vmem:[#allocation4 + $0x90] sm:$0xfe]
      %v5943 = vld [vmem:[#allocation4 + $0x98] sm:$0xfe]
      %v5944 = vld [vmem:[#allocation4 + $0xa0] sm:$0xff]
      %v5945 = vld [vmem:[#allocation4 + $0xa8] sm:$0xff]
      %v5946 = vld [vmem:[#allocation4 + $0xb0] sm:$0x1]
      %v5947 = vld [vmem:[#allocation4 + $0xb8] sm:$0x1]
      %v5948 = vld [vmem:[#allocation4 + $0xc0] sm:$0xfe]
      %v5949 = vld [vmem:[#allocation4 + $0xc8] sm:$0xfe]
      %v5950 = vld [vmem:[#allocation4 + $0xd0] sm:$0xff]
      %v5951 = vld [vmem:[#allocation4 + $0xd8] sm:$0xff]
      %v5952 = vld [vmem:[#allocation4 + $0xe0] sm:$0x1]
      %v5953 = vld [vmem:[#allocation4 + $0xe8] sm:$0x1]
      %v5954 = vld [vmem:[#allocation4 + $0xf0] sm:$0xfe]
      %v5955 = vld [vmem:[#allocation4 + $0xf8] sm:$0xfe]
      %v5956 = vld [vmem:[#allocation4 + $0x100] sm:$0xff]
      %v5957 = vld [vmem:[#allocation4 + $0x108] sm:$0xff]
      %v5958 = vld [vmem:[#allocation4 + $0x110] sm:$0x1]
      %v5959 = vld [vmem:[#allocation4 + $0x118] sm:$0x1]
      %v5960 = vld [vmem:[#allocation4 + $0x120] sm:$0xfe]
      %v5961 = vld [vmem:[#allocation4 + $0x128] sm:$0xfe]
      %v5962 = vld [vmem:[#allocation4 + $0x130] sm:$0xff]
      %v5963 = vld [vmem:[#allocation4 + $0x138] sm:$0xff]
      %v5964 = vld [vmem:[#allocation4 + $0x140] sm:$0x1]
      %v5965 = vld [vmem:[#allocation4 + $0x148] sm:$0x1]
      %v5966 = vld [vmem:[#allocation4 + $0x150] sm:$0xfe]
      %v5967 = vld [vmem:[#allocation4 + $0x158] sm:$0xfe]
      %v5968 = vld [vmem:[#allocation4 + $0x160] sm:$0xff]
      %v5969 = vld [vmem:[#allocation4 + $0x168] sm:$0xff]
      %v5970 = vld [vmem:[#allocation4 + $0x170] sm:$0x1]
      %v5971 = vld [vmem:[#allocation4 + $0x178] sm:$0x1]
      %v5972 = vld [vmem:[#allocation4 + $0x180] sm:$0xfe]
      %v5973 = vld [vmem:[#allocation4 + $0x188] sm:$0xfe]
      %v5974 = vld [vmem:[#allocation4 + $0x190] sm:$0xff]
      %v5975 = vld [vmem:[#allocation4 + $0x198] sm:$0xff]
      %v5976 = vld [vmem:[#allocation4 + $0x1a0] sm:$0x1]
      %v5977 = vld [vmem:[#allocation4 + $0x1a8] sm:$0x1]
      %v5978 = vld [vmem:[#allocation4 + $0x1b0] sm:$0xfe]
      %v5979 = vld [vmem:[#allocation4 + $0x1b8] sm:$0xfe]
      %v5980 = vld [vmem:[#allocation4 + $0x1c0] sm:$0xff]
      %v5981 = vld [vmem:[#allocation4 + $0x1c8] sm:$0xff]
      %v5982 = vld [vmem:[#allocation4 + $0x1d0] sm:$0x1]
      %v5983 = vld [vmem:[#allocation4 + $0x1d8] sm:$0x1]
      %v5984 = vld [vmem:[#allocation4 + $0x1e0] sm:$0xfe]
      %v5985 = vld [vmem:[#allocation4 + $0x1e8] sm:$0xfe]
      %v5986 = vld [vmem:[#allocation4 + $0x1f0] sm:$0xff]
      %v5987 = vld [vmem:[#allocation4 + $0x1f8] sm:$0xff]
      %v5988 = vld [vmem:[#allocation4 + $0x200] sm:$0x1]
      %v5989 = vld [vmem:[#allocation4 + $0x208] sm:$0x1]
      %v5990 = vld [vmem:[#allocation4 + $0x210] sm:$0xfe]
      %v5991 = vld [vmem:[#allocation4 + $0x218] sm:$0xfe]
      %v5992 = vld [vmem:[#allocation4 + $0x220] sm:$0xff]
      %v5993 = vld [vmem:[#allocation4 + $0x228] sm:$0xff]
      %v5994 = vld [vmem:[#allocation4 + $0x230] sm:$0x1]
      %v5995 = vld [vmem:[#allocation4 + $0x238] sm:$0x1]
      %v5996 = vld [vmem:[#allocation4 + $0x240] sm:$0xfe]
      %v5997 = vld [vmem:[#allocation4 + $0x248] sm:$0xfe]
      %v5998 = vld [vmem:[#allocation4 + $0x250] sm:$0xff]
      %v5999 = vld [vmem:[#allocation4 + $0x258] sm:$0xff]
      %v6000 = vld [vmem:[#allocation4 + $0x260] sm:$0x1]
      %v6001 = vld [vmem:[#allocation4 + $0x268] sm:$0x1]
      %v6002 = vld [vmem:[#allocation4 + $0x270] sm:$0xfe]
      %v6003 = vld [vmem:[#allocation4 + $0x278] sm:$0xfe]
      %v6004 = vld [vmem:[#allocation4 + $0x280] sm:$0xff]
      %v6005 = vld [vmem:[#allocation4 + $0x288] sm:$0xff]
      %v6006 = vld [vmem:[#allocation4 + $0x290] sm:$0x1]
      %v6007 = vld [vmem:[#allocation4 + $0x298] sm:$0x1]
      %v6008 = vld [vmem:[#allocation4 + $0x2a0] sm:$0xfe]
      %v6009 = vld [vmem:[#allocation4 + $0x2a8] sm:$0xfe]
      %v6010 = vld [vmem:[#allocation4 + $0x2b0] sm:$0xff]
      %v6011 = vld [vmem:[#allocation4 + $0x2b8] sm:$0xff]
      %v6012 = vld [vmem:[#allocation4 + $0x2c0] sm:$0x1]
      %v6013 = vld [vmem:[#allocation4 + $0x2c8] sm:$0x1]
      %v6014 = vld [vmem:[#allocation4 + $0x2d0] sm:$0xfe]
      %v6015 = vld [vmem:[#allocation4 + $0x2d8] sm:$0xfe]
      %v6016 = vld [vmem:[#allocation4 + $0x2e0] sm:$0xff]
      %v6017 = vld [vmem:[#allocation4 + $0x2e8] sm:$0xff]
      %v6018 = vld [vmem:[#allocation4 + $0x2f0] sm:$0x1]
      %v6019 = vld [vmem:[#allocation4 + $0x2f8] sm:$0x1]
      %v6020 = vld [vmem:[#allocation4 + $0x300] sm:$0xfe]
      %v6021 = vld [vmem:[#allocation4 + $0x308] sm:$0xfe]
      %v6022 = vld [vmem:[#allocation4 + $0x310] sm:$0xff]
      %v6023 = vld [vmem:[#allocation4 + $0x318] sm:$0xff]
      %v6024 = vld [vmem:[#allocation4 + $0x320] sm:$0x1]
      %v6025 = vld [vmem:[#allocation4 + $0x328] sm:$0x1]
      %v6026 = vld [vmem:[#allocation4 + $0x330] sm:$0xfe]
      %v6027 = vld [vmem:[#allocation4 + $0x338] sm:$0xfe]
      %v6028 = vld [vmem:[#allocation4 + $0x340] sm:$0xff]
      %v6029 = vld [vmem:[#allocation4 + $0x348] sm:$0xff]
      %v6030 = vld [vmem:[#allocation4 + $0x350] sm:$0x1]
      %v6031 = vld [vmem:[#allocation4 + $0x358] sm:$0x1]
      %v6032 = vpack.c.bf16 %v5926, %v5924
      %v6033 = vpack.c.bf16 %v5927, %v5925
      %v6034 = vpack.c.bf16 %v5928, %v5928
      %v6035 = vpack.c.bf16 %v5929, %v5929
      %v6036 = vpack.c.bf16 %v5932, %v5930
      %v6037 = vpack.c.bf16 %v5933, %v5931
      %v6038 = vpack.c.bf16 %v5934, %v5934
      %v6039 = vpack.c.bf16 %v5935, %v5935
      %v6040 = vpack.c.bf16 %v5938, %v5936
      %v6041 = vpack.c.bf16 %v5939, %v5937
      %v6042 = vpack.c.bf16 %v5940, %v5940
      %v6043 = vpack.c.bf16 %v5941, %v5941
      %v6044 = vpack.c.bf16 %v5944, %v5942
      %v6045 = vpack.c.bf16 %v5945, %v5943
      %v6046 = vpack.c.bf16 %v5946, %v5946
      %v6047 = vpack.c.bf16 %v5947, %v5947
      %v6048 = vpack.c.bf16 %v5950, %v5948
      %v6049 = vpack.c.bf16 %v5951, %v5949
      %v6050 = vpack.c.bf16 %v5952, %v5952
      %v6051 = vpack.c.bf16 %v5953, %v5953
      %v6052 = vpack.c.bf16 %v5956, %v5954
      %v6053 = vpack.c.bf16 %v5957, %v5955
      %v6054 = vpack.c.bf16 %v5958, %v5958
      %v6055 = vpack.c.bf16 %v5959, %v5959
      %v6056 = vpack.c.bf16 %v5962, %v5960
      %v6057 = vpack.c.bf16 %v5963, %v5961
      %v6058 = vpack.c.bf16 %v5964, %v5964
      %v6059 = vpack.c.bf16 %v5965, %v5965
      %v6060 = vpack.c.bf16 %v5968, %v5966
      %v6061 = vpack.c.bf16 %v5969, %v5967
      %v6062 = vpack.c.bf16 %v5970, %v5970
      %v6063 = vpack.c.bf16 %v5971, %v5971
      %v6064 = vpack.c.bf16 %v5974, %v5972
      %v6065 = vpack.c.bf16 %v5975, %v5973
      %v6066 = vpack.c.bf16 %v5976, %v5976
      %v6067 = vpack.c.bf16 %v5977, %v5977
      %v6068 = vpack.c.bf16 %v5980, %v5978
      %v6069 = vpack.c.bf16 %v5981, %v5979
      %v6070 = vpack.c.bf16 %v5982, %v5982
      %v6071 = vpack.c.bf16 %v5983, %v5983
      %v6072 = vpack.c.bf16 %v5986, %v5984
      %v6073 = vpack.c.bf16 %v5987, %v5985
      %v6074 = vpack.c.bf16 %v5988, %v5988
      %v6075 = vpack.c.bf16 %v5989, %v5989
      %v6076 = vpack.c.bf16 %v5992, %v5990
      %v6077 = vpack.c.bf16 %v5993, %v5991
      %v6078 = vpack.c.bf16 %v5994, %v5994
      %v6079 = vpack.c.bf16 %v5995, %v5995
      %v6080 = vpack.c.bf16 %v5998, %v5996
      %v6081 = vpack.c.bf16 %v5999, %v5997
      %v6082 = vpack.c.bf16 %v6000, %v6000
      %v6083 = vpack.c.bf16 %v6001, %v6001
      %v6084 = vpack.c.bf16 %v6004, %v6002
      %v6085 = vpack.c.bf16 %v6005, %v6003
      %v6086 = vpack.c.bf16 %v6006, %v6006
      %v6087 = vpack.c.bf16 %v6007, %v6007
      %v6088 = vpack.c.bf16 %v6010, %v6008
      %v6089 = vpack.c.bf16 %v6011, %v6009
      %v6090 = vpack.c.bf16 %v6012, %v6012
      %v6091 = vpack.c.bf16 %v6013, %v6013
      %v6092 = vpack.c.bf16 %v6016, %v6014
      %v6093 = vpack.c.bf16 %v6017, %v6015
      %v6094 = vpack.c.bf16 %v6018, %v6018
      %v6095 = vpack.c.bf16 %v6019, %v6019
      %v6096 = vpack.c.bf16 %v6022, %v6020
      %v6097 = vpack.c.bf16 %v6023, %v6021
      %v6098 = vpack.c.bf16 %v6024, %v6024
      %v6099 = vpack.c.bf16 %v6025, %v6025
      %v6100 = vpack.c.bf16 %v6028, %v6026
      %v6101 = vpack.c.bf16 %v6029, %v6027
      %v6102 = vpack.c.bf16 %v6030, %v6030
      %v6103 = vpack.c.bf16 %v6031, %v6031
      %vm6104 = vsmask.f32 7424
      %v6106 = vshrl.u32 %v6032, 16
      %v6108 = vshll.u32 %v6032, 16
      %v6110 = vrot.slane %v6108, 1
      %v6111 = vor.u32 %v6106, %v6110
      %v6113 = vshll.u32 %v6034, 16
      %v6115 = vrot.slane %v6113, 1
      %v6116 = vsel %vm6104, %v6111, %v6115
      %v6118 = vshrl.u32 %v6033, 16
      %v6120 = vshll.u32 %v6033, 16
      %v6122 = vrot.slane %v6120, 1
      %v6123 = vor.u32 %v6118, %v6122
      %v6125 = vshll.u32 %v6035, 16
      %v6127 = vrot.slane %v6125, 1
      %v6128 = vsel %vm6104, %v6123, %v6127
      %v6130 = vshrl.u32 %v6036, 16
      %v6132 = vshll.u32 %v6036, 16
      %v6134 = vrot.slane %v6132, 1
      %v6135 = vor.u32 %v6130, %v6134
      %v6137 = vshll.u32 %v6038, 16
      %v6139 = vrot.slane %v6137, 1
      %v6140 = vsel %vm6104, %v6135, %v6139
      %v6142 = vshrl.u32 %v6037, 16
      %v6144 = vshll.u32 %v6037, 16
      %v6146 = vrot.slane %v6144, 1
      %v6147 = vor.u32 %v6142, %v6146
      %v6149 = vshll.u32 %v6039, 16
      %v6151 = vrot.slane %v6149, 1
      %v6152 = vsel %vm6104, %v6147, %v6151
      %v6154 = vshrl.u32 %v6040, 16
      %v6156 = vshll.u32 %v6040, 16
      %v6158 = vrot.slane %v6156, 1
      %v6159 = vor.u32 %v6154, %v6158
      %v6161 = vshll.u32 %v6042, 16
      %v6163 = vrot.slane %v6161, 1
      %v6164 = vsel %vm6104, %v6159, %v6163
      %v6166 = vshrl.u32 %v6041, 16
      %v6168 = vshll.u32 %v6041, 16
      %v6170 = vrot.slane %v6168, 1
      %v6171 = vor.u32 %v6166, %v6170
      %v6173 = vshll.u32 %v6043, 16
      %v6175 = vrot.slane %v6173, 1
      %v6176 = vsel %vm6104, %v6171, %v6175
      %v6178 = vshrl.u32 %v6044, 16
      %v6180 = vshll.u32 %v6044, 16
      %v6182 = vrot.slane %v6180, 1
      %v6183 = vor.u32 %v6178, %v6182
      %v6185 = vshll.u32 %v6046, 16
      %v6187 = vrot.slane %v6185, 1
      %v6188 = vsel %vm6104, %v6183, %v6187
      %v6190 = vshrl.u32 %v6045, 16
      %v6192 = vshll.u32 %v6045, 16
      %v6194 = vrot.slane %v6192, 1
      %v6195 = vor.u32 %v6190, %v6194
      %v6197 = vshll.u32 %v6047, 16
      %v6199 = vrot.slane %v6197, 1
      %v6200 = vsel %vm6104, %v6195, %v6199
      %v6202 = vshrl.u32 %v6048, 16
      %v6204 = vshll.u32 %v6048, 16
      %v6206 = vrot.slane %v6204, 1
      %v6207 = vor.u32 %v6202, %v6206
      %v6209 = vshll.u32 %v6050, 16
      %v6211 = vrot.slane %v6209, 1
      %v6212 = vsel %vm6104, %v6207, %v6211
      %v6214 = vshrl.u32 %v6049, 16
      %v6216 = vshll.u32 %v6049, 16
      %v6218 = vrot.slane %v6216, 1
      %v6219 = vor.u32 %v6214, %v6218
      %v6221 = vshll.u32 %v6051, 16
      %v6223 = vrot.slane %v6221, 1
      %v6224 = vsel %vm6104, %v6219, %v6223
      %v6226 = vshrl.u32 %v6052, 16
      %v6228 = vshll.u32 %v6052, 16
      %v6230 = vrot.slane %v6228, 1
      %v6231 = vor.u32 %v6226, %v6230
      %v6233 = vshll.u32 %v6054, 16
      %v6235 = vrot.slane %v6233, 1
      %v6236 = vsel %vm6104, %v6231, %v6235
      %v6238 = vshrl.u32 %v6053, 16
      %v6240 = vshll.u32 %v6053, 16
      %v6242 = vrot.slane %v6240, 1
      %v6243 = vor.u32 %v6238, %v6242
      %v6245 = vshll.u32 %v6055, 16
      %v6247 = vrot.slane %v6245, 1
      %v6248 = vsel %vm6104, %v6243, %v6247
      %v6250 = vshrl.u32 %v6056, 16
      %v6252 = vshll.u32 %v6056, 16
      %v6254 = vrot.slane %v6252, 1
      %v6255 = vor.u32 %v6250, %v6254
      %v6257 = vshll.u32 %v6058, 16
      %v6259 = vrot.slane %v6257, 1
      %v6260 = vsel %vm6104, %v6255, %v6259
      %v6262 = vshrl.u32 %v6057, 16
      %v6264 = vshll.u32 %v6057, 16
      %v6266 = vrot.slane %v6264, 1
      %v6267 = vor.u32 %v6262, %v6266
      %v6269 = vshll.u32 %v6059, 16
      %v6271 = vrot.slane %v6269, 1
      %v6272 = vsel %vm6104, %v6267, %v6271
      %v6274 = vshrl.u32 %v6060, 16
      %v6276 = vshll.u32 %v6060, 16
      %v6278 = vrot.slane %v6276, 1
      %v6279 = vor.u32 %v6274, %v6278
      %v6281 = vshll.u32 %v6062, 16
      %v6283 = vrot.slane %v6281, 1
      %v6284 = vsel %vm6104, %v6279, %v6283
      %v6286 = vshrl.u32 %v6061, 16
      %v6288 = vshll.u32 %v6061, 16
      %v6290 = vrot.slane %v6288, 1
      %v6291 = vor.u32 %v6286, %v6290
      %v6293 = vshll.u32 %v6063, 16
      %v6295 = vrot.slane %v6293, 1
      %v6296 = vsel %vm6104, %v6291, %v6295
      %v6298 = vshrl.u32 %v6064, 16
      %v6300 = vshll.u32 %v6064, 16
      %v6302 = vrot.slane %v6300, 1
      %v6303 = vor.u32 %v6298, %v6302
      %v6305 = vshll.u32 %v6066, 16
      %v6307 = vrot.slane %v6305, 1
      %v6308 = vsel %vm6104, %v6303, %v6307
      %v6310 = vshrl.u32 %v6065, 16
      %v6312 = vshll.u32 %v6065, 16
      %v6314 = vrot.slane %v6312, 1
      %v6315 = vor.u32 %v6310, %v6314
      %v6317 = vshll.u32 %v6067, 16
      %v6319 = vrot.slane %v6317, 1
      %v6320 = vsel %vm6104, %v6315, %v6319
      %v6322 = vshrl.u32 %v6068, 16
      %v6324 = vshll.u32 %v6068, 16
      %v6326 = vrot.slane %v6324, 1
      %v6327 = vor.u32 %v6322, %v6326
      %v6329 = vshll.u32 %v6070, 16
      %v6331 = vrot.slane %v6329, 1
      %v6332 = vsel %vm6104, %v6327, %v6331
      %v6334 = vshrl.u32 %v6069, 16
      %v6336 = vshll.u32 %v6069, 16
      %v6338 = vrot.slane %v6336, 1
      %v6339 = vor.u32 %v6334, %v6338
      %v6341 = vshll.u32 %v6071, 16
      %v6343 = vrot.slane %v6341, 1
      %v6344 = vsel %vm6104, %v6339, %v6343
      %v6346 = vshrl.u32 %v6072, 16
      %v6348 = vshll.u32 %v6072, 16
      %v6350 = vrot.slane %v6348, 1
      %v6351 = vor.u32 %v6346, %v6350
      %v6353 = vshll.u32 %v6074, 16
      %v6355 = vrot.slane %v6353, 1
      %v6356 = vsel %vm6104, %v6351, %v6355
      %v6358 = vshrl.u32 %v6073, 16
      %v6360 = vshll.u32 %v6073, 16
      %v6362 = vrot.slane %v6360, 1
      %v6363 = vor.u32 %v6358, %v6362
      %v6365 = vshll.u32 %v6075, 16
      %v6367 = vrot.slane %v6365, 1
      %v6368 = vsel %vm6104, %v6363, %v6367
      %v6370 = vshrl.u32 %v6076, 16
      %v6372 = vshll.u32 %v6076, 16
      %v6374 = vrot.slane %v6372, 1
      %v6375 = vor.u32 %v6370, %v6374
      %v6377 = vshll.u32 %v6078, 16
      %v6379 = vrot.slane %v6377, 1
      %v6380 = vsel %vm6104, %v6375, %v6379
      %v6382 = vshrl.u32 %v6077, 16
      %v6384 = vshll.u32 %v6077, 16
      %v6386 = vrot.slane %v6384, 1
      %v6387 = vor.u32 %v6382, %v6386
      %v6389 = vshll.u32 %v6079, 16
      %v6391 = vrot.slane %v6389, 1
      %v6392 = vsel %vm6104, %v6387, %v6391
      %v6394 = vshrl.u32 %v6080, 16
      %v6396 = vshll.u32 %v6080, 16
      %v6398 = vrot.slane %v6396, 1
      %v6399 = vor.u32 %v6394, %v6398
      %v6401 = vshll.u32 %v6082, 16
      %v6403 = vrot.slane %v6401, 1
      %v6404 = vsel %vm6104, %v6399, %v6403
      %v6406 = vshrl.u32 %v6081, 16
      %v6408 = vshll.u32 %v6081, 16
      %v6410 = vrot.slane %v6408, 1
      %v6411 = vor.u32 %v6406, %v6410
      %v6413 = vshll.u32 %v6083, 16
      %v6415 = vrot.slane %v6413, 1
      %v6416 = vsel %vm6104, %v6411, %v6415
      %v6418 = vshrl.u32 %v6084, 16
      %v6420 = vshll.u32 %v6084, 16
      %v6422 = vrot.slane %v6420, 1
      %v6423 = vor.u32 %v6418, %v6422
      %v6425 = vshll.u32 %v6086, 16
      %v6427 = vrot.slane %v6425, 1
      %v6428 = vsel %vm6104, %v6423, %v6427
      %v6430 = vshrl.u32 %v6085, 16
      %v6432 = vshll.u32 %v6085, 16
      %v6434 = vrot.slane %v6432, 1
      %v6435 = vor.u32 %v6430, %v6434
      %v6437 = vshll.u32 %v6087, 16
      %v6439 = vrot.slane %v6437, 1
      %v6440 = vsel %vm6104, %v6435, %v6439
      %v6442 = vshrl.u32 %v6088, 16
      %v6444 = vshll.u32 %v6088, 16
      %v6446 = vrot.slane %v6444, 1
      %v6447 = vor.u32 %v6442, %v6446
      %v6449 = vshll.u32 %v6090, 16
      %v6451 = vrot.slane %v6449, 1
      %v6452 = vsel %vm6104, %v6447, %v6451
      %v6454 = vshrl.u32 %v6089, 16
      %v6456 = vshll.u32 %v6089, 16
      %v6458 = vrot.slane %v6456, 1
      %v6459 = vor.u32 %v6454, %v6458
      %v6461 = vshll.u32 %v6091, 16
      %v6463 = vrot.slane %v6461, 1
      %v6464 = vsel %vm6104, %v6459, %v6463
      %v6466 = vshrl.u32 %v6092, 16
      %v6468 = vshll.u32 %v6092, 16
      %v6470 = vrot.slane %v6468, 1
      %v6471 = vor.u32 %v6466, %v6470
      %v6473 = vshll.u32 %v6094, 16
      %v6475 = vrot.slane %v6473, 1
      %v6476 = vsel %vm6104, %v6471, %v6475
      %v6478 = vshrl.u32 %v6093, 16
      %v6480 = vshll.u32 %v6093, 16
      %v6482 = vrot.slane %v6480, 1
      %v6483 = vor.u32 %v6478, %v6482
      %v6485 = vshll.u32 %v6095, 16
      %v6487 = vrot.slane %v6485, 1
      %v6488 = vsel %vm6104, %v6483, %v6487
      %v6490 = vshrl.u32 %v6096, 16
      %v6492 = vshll.u32 %v6096, 16
      %v6494 = vrot.slane %v6492, 1
      %v6495 = vor.u32 %v6490, %v6494
      %v6497 = vshll.u32 %v6098, 16
      %v6499 = vrot.slane %v6497, 1
      %v6500 = vsel %vm6104, %v6495, %v6499
      %v6502 = vshrl.u32 %v6097, 16
      %v6504 = vshll.u32 %v6097, 16
      %v6506 = vrot.slane %v6504, 1
      %v6507 = vor.u32 %v6502, %v6506
      %v6509 = vshll.u32 %v6099, 16
      %v6511 = vrot.slane %v6509, 1
      %v6512 = vsel %vm6104, %v6507, %v6511
      %v6514 = vshrl.u32 %v6100, 16
      %v6516 = vshll.u32 %v6100, 16
      %v6518 = vrot.slane %v6516, 1
      %v6519 = vor.u32 %v6514, %v6518
      %v6521 = vshll.u32 %v6102, 16
      %v6523 = vrot.slane %v6521, 1
      %v6524 = vsel %vm6104, %v6519, %v6523
      %v6526 = vshrl.u32 %v6101, 16
      %v6528 = vshll.u32 %v6101, 16
      %v6530 = vrot.slane %v6528, 1
      %v6531 = vor.u32 %v6526, %v6530
      %v6533 = vshll.u32 %v6103, 16
      %v6535 = vrot.slane %v6533, 1
      %v6536 = vsel %vm6104, %v6531, %v6535
      %s6573 = scalar_lea.vmem [#allocation5], 288
      %6574 = vst [vmem:[%s6573] sm:$0xff] %v6116
      %6575 = vst [vmem:[%s6573 + $0x8] sm:$0xff] %v6128
      %6576 = vst [vmem:[%s6573 + $0x10] sm:$0xff] %v6140
      %6577 = vst [vmem:[%s6573 + $0x18] sm:$0xff] %v6152
      %6578 = vst [vmem:[%s6573 + $0x20] sm:$0xff] %v6164
      %6579 = vst [vmem:[%s6573 + $0x28] sm:$0xff] %v6176
      %6580 = vst [vmem:[%s6573 + $0x30] sm:$0xff] %v6188
      %6581 = vst [vmem:[%s6573 + $0x38] sm:$0xff] %v6200
      %6582 = vst [vmem:[%s6573 + $0x40] sm:$0xff] %v6212
      %6583 = vst [vmem:[%s6573 + $0x48] sm:$0xff] %v6224
      %6584 = vst [vmem:[%s6573 + $0x50] sm:$0xff] %v6236
      %6585 = vst [vmem:[%s6573 + $0x58] sm:$0xff] %v6248
      %6586 = vst [vmem:[%s6573 + $0x60] sm:$0xff] %v6260
      %6587 = vst [vmem:[%s6573 + $0x68] sm:$0xff] %v6272
      %6588 = vst [vmem:[%s6573 + $0x70] sm:$0xff] %v6284
      %6589 = vst [vmem:[%s6573 + $0x78] sm:$0xff] %v6296
      %6590 = vst [vmem:[%s6573 + $0x80] sm:$0xff] %v6308
      %6591 = vst [vmem:[%s6573 + $0x88] sm:$0xff] %v6320
      %6592 = vst [vmem:[%s6573 + $0x90] sm:$0xff] %v6332
      %6593 = vst [vmem:[%s6573 + $0x98] sm:$0xff] %v6344
      %6594 = vst [vmem:[%s6573 + $0xa0] sm:$0xff] %v6356
      %6595 = vst [vmem:[%s6573 + $0xa8] sm:$0xff] %v6368
      %6596 = vst [vmem:[%s6573 + $0xb0] sm:$0xff] %v6380
      %6597 = vst [vmem:[%s6573 + $0xb8] sm:$0xff] %v6392
      %6598 = vst [vmem:[%s6573 + $0xc0] sm:$0xff] %v6404
      %6599 = vst [vmem:[%s6573 + $0xc8] sm:$0xff] %v6416
      %6600 = vst [vmem:[%s6573 + $0xd0] sm:$0xff] %v6428
      %6601 = vst [vmem:[%s6573 + $0xd8] sm:$0xff] %v6440
      %6602 = vst [vmem:[%s6573 + $0xe0] sm:$0xff] %v6452
      %6603 = vst [vmem:[%s6573 + $0xe8] sm:$0xff] %v6464
      %6604 = vst [vmem:[%s6573 + $0xf0] sm:$0xff] %v6476
      %6605 = vst [vmem:[%s6573 + $0xf8] sm:$0xff] %v6488
      %6606 = vst [vmem:[%s6573 + $0x100] sm:$0xff] %v6500
      %6607 = vst [vmem:[%s6573 + $0x108] sm:$0xff] %v6512
      %6608 = vst [vmem:[%s6573 + $0x110] sm:$0xff] %v6524
      %6609 = vst [vmem:[%s6573 + $0x118] sm:$0xff] %v6536
      %v6610 = vld [vmem:[#allocation4] sm:$0xfc]
      %v6611 = vld [vmem:[#allocation4 + $0x8] sm:$0xfc]
      %v6612 = vld [vmem:[#allocation4 + $0x10] sm:$0xff]
      %v6613 = vld [vmem:[#allocation4 + $0x18] sm:$0xff]
      %v6614 = vld [vmem:[#allocation4 + $0x20] sm:$0x3]
      %v6615 = vld [vmem:[#allocation4 + $0x28] sm:$0x3]
      %v6616 = vld [vmem:[#allocation4 + $0x30] sm:$0xfc]
      %v6617 = vld [vmem:[#allocation4 + $0x38] sm:$0xfc]
      %v6618 = vld [vmem:[#allocation4 + $0x40] sm:$0xff]
      %v6619 = vld [vmem:[#allocation4 + $0x48] sm:$0xff]
      %v6620 = vld [vmem:[#allocation4 + $0x50] sm:$0x3]
      %v6621 = vld [vmem:[#allocation4 + $0x58] sm:$0x3]
      %v6622 = vld [vmem:[#allocation4 + $0x60] sm:$0xfc]
      %v6623 = vld [vmem:[#allocation4 + $0x68] sm:$0xfc]
      %v6624 = vld [vmem:[#allocation4 + $0x70] sm:$0xff]
      %v6625 = vld [vmem:[#allocation4 + $0x78] sm:$0xff]
      %v6626 = vld [vmem:[#allocation4 + $0x80] sm:$0x3]
      %v6627 = vld [vmem:[#allocation4 + $0x88] sm:$0x3]
      %v6628 = vld [vmem:[#allocation4 + $0x90] sm:$0xfc]
      %v6629 = vld [vmem:[#allocation4 + $0x98] sm:$0xfc]
      %v6630 = vld [vmem:[#allocation4 + $0xa0] sm:$0xff]
      %v6631 = vld [vmem:[#allocation4 + $0xa8] sm:$0xff]
      %v6632 = vld [vmem:[#allocation4 + $0xb0] sm:$0x3]
      %v6633 = vld [vmem:[#allocation4 + $0xb8] sm:$0x3]
      %v6634 = vld [vmem:[#allocation4 + $0xc0] sm:$0xfc]
      %v6635 = vld [vmem:[#allocation4 + $0xc8] sm:$0xfc]
      %v6636 = vld [vmem:[#allocation4 + $0xd0] sm:$0xff]
      %v6637 = vld [vmem:[#allocation4 + $0xd8] sm:$0xff]
      %v6638 = vld [vmem:[#allocation4 + $0xe0] sm:$0x3]
      %v6639 = vld [vmem:[#allocation4 + $0xe8] sm:$0x3]
      %v6640 = vld [vmem:[#allocation4 + $0xf0] sm:$0xfc]
      %v6641 = vld [vmem:[#allocation4 + $0xf8] sm:$0xfc]
      %v6642 = vld [vmem:[#allocation4 + $0x100] sm:$0xff]
      %v6643 = vld [vmem:[#allocation4 + $0x108] sm:$0xff]
      %v6644 = vld [vmem:[#allocation4 + $0x110] sm:$0x3]
      %v6645 = vld [vmem:[#allocation4 + $0x118] sm:$0x3]
      %v6646 = vld [vmem:[#allocation4 + $0x120] sm:$0xfc]
      %v6647 = vld [vmem:[#allocation4 + $0x128] sm:$0xfc]
      %v6648 = vld [vmem:[#allocation4 + $0x130] sm:$0xff]
      %v6649 = vld [vmem:[#allocation4 + $0x138] sm:$0xff]
      %v6650 = vld [vmem:[#allocation4 + $0x140] sm:$0x3]
      %v6651 = vld [vmem:[#allocation4 + $0x148] sm:$0x3]
      %v6652 = vld [vmem:[#allocation4 + $0x150] sm:$0xfc]
      %v6653 = vld [vmem:[#allocation4 + $0x158] sm:$0xfc]
      %v6654 = vld [vmem:[#allocation4 + $0x160] sm:$0xff]
      %v6655 = vld [vmem:[#allocation4 + $0x168] sm:$0xff]
      %v6656 = vld [vmem:[#allocation4 + $0x170] sm:$0x3]
      %v6657 = vld [vmem:[#allocation4 + $0x178] sm:$0x3]
      %v6658 = vld [vmem:[#allocation4 + $0x180] sm:$0xfc]
      %v6659 = vld [vmem:[#allocation4 + $0x188] sm:$0xfc]
      %v6660 = vld [vmem:[#allocation4 + $0x190] sm:$0xff]
      %v6661 = vld [vmem:[#allocation4 + $0x198] sm:$0xff]
      %v6662 = vld [vmem:[#allocation4 + $0x1a0] sm:$0x3]
      %v6663 = vld [vmem:[#allocation4 + $0x1a8] sm:$0x3]
      %v6664 = vld [vmem:[#allocation4 + $0x1b0] sm:$0xfc]
      %v6665 = vld [vmem:[#allocation4 + $0x1b8] sm:$0xfc]
      %v6666 = vld [vmem:[#allocation4 + $0x1c0] sm:$0xff]
      %v6667 = vld [vmem:[#allocation4 + $0x1c8] sm:$0xff]
      %v6668 = vld [vmem:[#allocation4 + $0x1d0] sm:$0x3]
      %v6669 = vld [vmem:[#allocation4 + $0x1d8] sm:$0x3]
      %v6670 = vld [vmem:[#allocation4 + $0x1e0] sm:$0xfc]
      %v6671 = vld [vmem:[#allocation4 + $0x1e8] sm:$0xfc]
      %v6672 = vld [vmem:[#allocation4 + $0x1f0] sm:$0xff]
      %v6673 = vld [vmem:[#allocation4 + $0x1f8] sm:$0xff]
      %v6674 = vld [vmem:[#allocation4 + $0x200] sm:$0x3]
      %v6675 = vld [vmem:[#allocation4 + $0x208] sm:$0x3]
      %v6676 = vld [vmem:[#allocation4 + $0x210] sm:$0xfc]
      %v6677 = vld [vmem:[#allocation4 + $0x218] sm:$0xfc]
      %v6678 = vld [vmem:[#allocation4 + $0x220] sm:$0xff]
      %v6679 = vld [vmem:[#allocation4 + $0x228] sm:$0xff]
      %v6680 = vld [vmem:[#allocation4 + $0x230] sm:$0x3]
      %v6681 = vld [vmem:[#allocation4 + $0x238] sm:$0x3]
      %v6682 = vld [vmem:[#allocation4 + $0x240] sm:$0xfc]
      %v6683 = vld [vmem:[#allocation4 + $0x248] sm:$0xfc]
      %v6684 = vld [vmem:[#allocation4 + $0x250] sm:$0xff]
      %v6685 = vld [vmem:[#allocation4 + $0x258] sm:$0xff]
      %v6686 = vld [vmem:[#allocation4 + $0x260] sm:$0x3]
      %v6687 = vld [vmem:[#allocation4 + $0x268] sm:$0x3]
      %v6688 = vld [vmem:[#allocation4 + $0x270] sm:$0xfc]
      %v6689 = vld [vmem:[#allocation4 + $0x278] sm:$0xfc]
      %v6690 = vld [vmem:[#allocation4 + $0x280] sm:$0xff]
      %v6691 = vld [vmem:[#allocation4 + $0x288] sm:$0xff]
      %v6692 = vld [vmem:[#allocation4 + $0x290] sm:$0x3]
      %v6693 = vld [vmem:[#allocation4 + $0x298] sm:$0x3]
      %v6694 = vld [vmem:[#allocation4 + $0x2a0] sm:$0xfc]
      %v6695 = vld [vmem:[#allocation4 + $0x2a8] sm:$0xfc]
      %v6696 = vld [vmem:[#allocation4 + $0x2b0] sm:$0xff]
      %v6697 = vld [vmem:[#allocation4 + $0x2b8] sm:$0xff]
      %v6698 = vld [vmem:[#allocation4 + $0x2c0] sm:$0x3]
      %v6699 = vld [vmem:[#allocation4 + $0x2c8] sm:$0x3]
      %v6700 = vld [vmem:[#allocation4 + $0x2d0] sm:$0xfc]
      %v6701 = vld [vmem:[#allocation4 + $0x2d8] sm:$0xfc]
      %v6702 = vld [vmem:[#allocation4 + $0x2e0] sm:$0xff]
      %v6703 = vld [vmem:[#allocation4 + $0x2e8] sm:$0xff]
      %v6704 = vld [vmem:[#allocation4 + $0x2f0] sm:$0x3]
      %v6705 = vld [vmem:[#allocation4 + $0x2f8] sm:$0x3]
      %v6706 = vld [vmem:[#allocation4 + $0x300] sm:$0xfc]
      %v6707 = vld [vmem:[#allocation4 + $0x308] sm:$0xfc]
      %v6708 = vld [vmem:[#allocation4 + $0x310] sm:$0xff]
      %v6709 = vld [vmem:[#allocation4 + $0x318] sm:$0xff]
      %v6710 = vld [vmem:[#allocation4 + $0x320] sm:$0x3]
      %v6711 = vld [vmem:[#allocation4 + $0x328] sm:$0x3]
      %v6712 = vld [vmem:[#allocation4 + $0x330] sm:$0xfc]
      %v6713 = vld [vmem:[#allocation4 + $0x338] sm:$0xfc]
      %v6714 = vld [vmem:[#allocation4 + $0x340] sm:$0xff]
      %v6715 = vld [vmem:[#allocation4 + $0x348] sm:$0xff]
      %v6716 = vld [vmem:[#allocation4 + $0x350] sm:$0x3]
      %v6717 = vld [vmem:[#allocation4 + $0x358] sm:$0x3]
      %v6718 = vpack.c.bf16 %v6612, %v6610
      %v6719 = vpack.c.bf16 %v6613, %v6611
      %v6720 = vpack.c.bf16 %v6614, %v6614
      %v6721 = vpack.c.bf16 %v6615, %v6615
      %v6722 = vpack.c.bf16 %v6618, %v6616
      %v6723 = vpack.c.bf16 %v6619, %v6617
      %v6724 = vpack.c.bf16 %v6620, %v6620
      %v6725 = vpack.c.bf16 %v6621, %v6621
      %v6726 = vpack.c.bf16 %v6624, %v6622
      %v6727 = vpack.c.bf16 %v6625, %v6623
      %v6728 = vpack.c.bf16 %v6626, %v6626
      %v6729 = vpack.c.bf16 %v6627, %v6627
      %v6730 = vpack.c.bf16 %v6630, %v6628
      %v6731 = vpack.c.bf16 %v6631, %v6629
      %v6732 = vpack.c.bf16 %v6632, %v6632
      %v6733 = vpack.c.bf16 %v6633, %v6633
      %v6734 = vpack.c.bf16 %v6636, %v6634
      %v6735 = vpack.c.bf16 %v6637, %v6635
      %v6736 = vpack.c.bf16 %v6638, %v6638
      %v6737 = vpack.c.bf16 %v6639, %v6639
      %v6738 = vpack.c.bf16 %v6642, %v6640
      %v6739 = vpack.c.bf16 %v6643, %v6641
      %v6740 = vpack.c.bf16 %v6644, %v6644
      %v6741 = vpack.c.bf16 %v6645, %v6645
      %v6742 = vpack.c.bf16 %v6648, %v6646
      %v6743 = vpack.c.bf16 %v6649, %v6647
      %v6744 = vpack.c.bf16 %v6650, %v6650
      %v6745 = vpack.c.bf16 %v6651, %v6651
      %v6746 = vpack.c.bf16 %v6654, %v6652
      %v6747 = vpack.c.bf16 %v6655, %v6653
      %v6748 = vpack.c.bf16 %v6656, %v6656
      %v6749 = vpack.c.bf16 %v6657, %v6657
      %v6750 = vpack.c.bf16 %v6660, %v6658
      %v6751 = vpack.c.bf16 %v6661, %v6659
      %v6752 = vpack.c.bf16 %v6662, %v6662
      %v6753 = vpack.c.bf16 %v6663, %v6663
      %v6754 = vpack.c.bf16 %v6666, %v6664
      %v6755 = vpack.c.bf16 %v6667, %v6665
      %v6756 = vpack.c.bf16 %v6668, %v6668
      %v6757 = vpack.c.bf16 %v6669, %v6669
      %v6758 = vpack.c.bf16 %v6672, %v6670
      %v6759 = vpack.c.bf16 %v6673, %v6671
      %v6760 = vpack.c.bf16 %v6674, %v6674
      %v6761 = vpack.c.bf16 %v6675, %v6675
      %v6762 = vpack.c.bf16 %v6678, %v6676
      %v6763 = vpack.c.bf16 %v6679, %v6677
      %v6764 = vpack.c.bf16 %v6680, %v6680
      %v6765 = vpack.c.bf16 %v6681, %v6681
      %v6766 = vpack.c.bf16 %v6684, %v6682
      %v6767 = vpack.c.bf16 %v6685, %v6683
      %v6768 = vpack.c.bf16 %v6686, %v6686
      %v6769 = vpack.c.bf16 %v6687, %v6687
      %v6770 = vpack.c.bf16 %v6690, %v6688
      %v6771 = vpack.c.bf16 %v6691, %v6689
      %v6772 = vpack.c.bf16 %v6692, %v6692
      %v6773 = vpack.c.bf16 %v6693, %v6693
      %v6774 = vpack.c.bf16 %v6696, %v6694
      %v6775 = vpack.c.bf16 %v6697, %v6695
      %v6776 = vpack.c.bf16 %v6698, %v6698
      %v6777 = vpack.c.bf16 %v6699, %v6699
      %v6778 = vpack.c.bf16 %v6702, %v6700
      %v6779 = vpack.c.bf16 %v6703, %v6701
      %v6780 = vpack.c.bf16 %v6704, %v6704
      %v6781 = vpack.c.bf16 %v6705, %v6705
      %v6782 = vpack.c.bf16 %v6708, %v6706
      %v6783 = vpack.c.bf16 %v6709, %v6707
      %v6784 = vpack.c.bf16 %v6710, %v6710
      %v6785 = vpack.c.bf16 %v6711, %v6711
      %v6786 = vpack.c.bf16 %v6714, %v6712
      %v6787 = vpack.c.bf16 %v6715, %v6713
      %v6788 = vpack.c.bf16 %v6716, %v6716
      %v6789 = vpack.c.bf16 %v6717, %v6717
      %vm6862 = vcmask 1046528
      %v6863 = vrot.slane %v6718, 1
      %v6864 = vrot.slane %v6720, 1
      %v6865 = vsel %vm6862, %v6863, %v6864
      %v6866 = vrot.slane %v6719, 1
      %v6867 = vrot.slane %v6721, 1
      %v6868 = vsel %vm6862, %v6866, %v6867
      %v6869 = vrot.slane %v6722, 1
      %v6870 = vrot.slane %v6724, 1
      %v6871 = vsel %vm6862, %v6869, %v6870
      %v6872 = vrot.slane %v6723, 1
      %v6873 = vrot.slane %v6725, 1
      %v6874 = vsel %vm6862, %v6872, %v6873
      %v6875 = vrot.slane %v6726, 1
      %v6876 = vrot.slane %v6728, 1
      %v6877 = vsel %vm6862, %v6875, %v6876
      %v6878 = vrot.slane %v6727, 1
      %v6879 = vrot.slane %v6729, 1
      %v6880 = vsel %vm6862, %v6878, %v6879
      %v6881 = vrot.slane %v6730, 1
      %v6882 = vrot.slane %v6732, 1
      %v6883 = vsel %vm6862, %v6881, %v6882
      %v6884 = vrot.slane %v6731, 1
      %v6885 = vrot.slane %v6733, 1
      %v6886 = vsel %vm6862, %v6884, %v6885
      %v6887 = vrot.slane %v6734, 1
      %v6888 = vrot.slane %v6736, 1
      %v6889 = vsel %vm6862, %v6887, %v6888
      %v6890 = vrot.slane %v6735, 1
      %v6891 = vrot.slane %v6737, 1
      %v6892 = vsel %vm6862, %v6890, %v6891
      %v6893 = vrot.slane %v6738, 1
      %v6894 = vrot.slane %v6740, 1
      %v6895 = vsel %vm6862, %v6893, %v6894
      %v6896 = vrot.slane %v6739, 1
      %v6897 = vrot.slane %v6741, 1
      %v6898 = vsel %vm6862, %v6896, %v6897
      %v6899 = vrot.slane %v6742, 1
      %v6900 = vrot.slane %v6744, 1
      %v6901 = vsel %vm6862, %v6899, %v6900
      %v6902 = vrot.slane %v6743, 1
      %v6903 = vrot.slane %v6745, 1
      %v6904 = vsel %vm6862, %v6902, %v6903
      %v6905 = vrot.slane %v6746, 1
      %v6906 = vrot.slane %v6748, 1
      %v6907 = vsel %vm6862, %v6905, %v6906
      %v6908 = vrot.slane %v6747, 1
      %v6909 = vrot.slane %v6749, 1
      %v6910 = vsel %vm6862, %v6908, %v6909
      %v6911 = vrot.slane %v6750, 1
      %v6912 = vrot.slane %v6752, 1
      %v6913 = vsel %vm6862, %v6911, %v6912
      %v6914 = vrot.slane %v6751, 1
      %v6915 = vrot.slane %v6753, 1
      %v6916 = vsel %vm6862, %v6914, %v6915
      %v6917 = vrot.slane %v6754, 1
      %v6918 = vrot.slane %v6756, 1
      %v6919 = vsel %vm6862, %v6917, %v6918
      %v6920 = vrot.slane %v6755, 1
      %v6921 = vrot.slane %v6757, 1
      %v6922 = vsel %vm6862, %v6920, %v6921
      %v6923 = vrot.slane %v6758, 1
      %v6924 = vrot.slane %v6760, 1
      %v6925 = vsel %vm6862, %v6923, %v6924
      %v6926 = vrot.slane %v6759, 1
      %v6927 = vrot.slane %v6761, 1
      %v6928 = vsel %vm6862, %v6926, %v6927
      %v6929 = vrot.slane %v6762, 1
      %v6930 = vrot.slane %v6764, 1
      %v6931 = vsel %vm6862, %v6929, %v6930
      %v6932 = vrot.slane %v6763, 1
      %v6933 = vrot.slane %v6765, 1
      %v6934 = vsel %vm6862, %v6932, %v6933
      %v6935 = vrot.slane %v6766, 1
      %v6936 = vrot.slane %v6768, 1
      %v6937 = vsel %vm6862, %v6935, %v6936
      %v6938 = vrot.slane %v6767, 1
      %v6939 = vrot.slane %v6769, 1
      %v6940 = vsel %vm6862, %v6938, %v6939
      %v6941 = vrot.slane %v6770, 1
      %v6942 = vrot.slane %v6772, 1
      %v6943 = vsel %vm6862, %v6941, %v6942
      %v6944 = vrot.slane %v6771, 1
      %v6945 = vrot.slane %v6773, 1
      %v6946 = vsel %vm6862, %v6944, %v6945
      %v6947 = vrot.slane %v6774, 1
      %v6948 = vrot.slane %v6776, 1
      %v6949 = vsel %vm6862, %v6947, %v6948
      %v6950 = vrot.slane %v6775, 1
      %v6951 = vrot.slane %v6777, 1
      %v6952 = vsel %vm6862, %v6950, %v6951
      %v6953 = vrot.slane %v6778, 1
      %v6954 = vrot.slane %v6780, 1
      %v6955 = vsel %vm6862, %v6953, %v6954
      %v6956 = vrot.slane %v6779, 1
      %v6957 = vrot.slane %v6781, 1
      %v6958 = vsel %vm6862, %v6956, %v6957
      %v6959 = vrot.slane %v6782, 1
      %v6960 = vrot.slane %v6784, 1
      %v6961 = vsel %vm6862, %v6959, %v6960
      %v6962 = vrot.slane %v6783, 1
      %v6963 = vrot.slane %v6785, 1
      %v6964 = vsel %vm6862, %v6962, %v6963
      %v6965 = vrot.slane %v6786, 1
      %v6966 = vrot.slane %v6788, 1
      %v6967 = vsel %vm6862, %v6965, %v6966
      %v6968 = vrot.slane %v6787, 1
      %v6969 = vrot.slane %v6789, 1
      %v6970 = vsel %vm6862, %v6968, %v6969
      %s7007 = scalar_lea.vmem [#allocation5], 576
      %7008 = vst [vmem:[%s7007] sm:$0xff] %v6865
      %7009 = vst [vmem:[%s7007 + $0x8] sm:$0xff] %v6868
      %7010 = vst [vmem:[%s7007 + $0x10] sm:$0xff] %v6871
      %7011 = vst [vmem:[%s7007 + $0x18] sm:$0xff] %v6874
      %7012 = vst [vmem:[%s7007 + $0x20] sm:$0xff] %v6877
      %7013 = vst [vmem:[%s7007 + $0x28] sm:$0xff] %v6880
      %7014 = vst [vmem:[%s7007 + $0x30] sm:$0xff] %v6883
      %7015 = vst [vmem:[%s7007 + $0x38] sm:$0xff] %v6886
      %7016 = vst [vmem:[%s7007 + $0x40] sm:$0xff] %v6889
      %7017 = vst [vmem:[%s7007 + $0x48] sm:$0xff] %v6892
      %7018 = vst [vmem:[%s7007 + $0x50] sm:$0xff] %v6895
      %7019 = vst [vmem:[%s7007 + $0x58] sm:$0xff] %v6898
      %7020 = vst [vmem:[%s7007 + $0x60] sm:$0xff] %v6901
      %7021 = vst [vmem:[%s7007 + $0x68] sm:$0xff] %v6904
      %7022 = vst [vmem:[%s7007 + $0x70] sm:$0xff] %v6907
      %7023 = vst [vmem:[%s7007 + $0x78] sm:$0xff] %v6910
      %7024 = vst [vmem:[%s7007 + $0x80] sm:$0xff] %v6913
      %7025 = vst [vmem:[%s7007 + $0x88] sm:$0xff] %v6916
      %7026 = vst [vmem:[%s7007 + $0x90] sm:$0xff] %v6919
      %7027 = vst [vmem:[%s7007 + $0x98] sm:$0xff] %v6922
      %7028 = vst [vmem:[%s7007 + $0xa0] sm:$0xff] %v6925
      %7029 = vst [vmem:[%s7007 + $0xa8] sm:$0xff] %v6928
      %7030 = vst [vmem:[%s7007 + $0xb0] sm:$0xff] %v6931
      %7031 = vst [vmem:[%s7007 + $0xb8] sm:$0xff] %v6934
      %7032 = vst [vmem:[%s7007 + $0xc0] sm:$0xff] %v6937
      %7033 = vst [vmem:[%s7007 + $0xc8] sm:$0xff] %v6940
      %7034 = vst [vmem:[%s7007 + $0xd0] sm:$0xff] %v6943
      %7035 = vst [vmem:[%s7007 + $0xd8] sm:$0xff] %v6946
      %7036 = vst [vmem:[%s7007 + $0xe0] sm:$0xff] %v6949
      %7037 = vst [vmem:[%s7007 + $0xe8] sm:$0xff] %v6952
      %7038 = vst [vmem:[%s7007 + $0xf0] sm:$0xff] %v6955
      %7039 = vst [vmem:[%s7007 + $0xf8] sm:$0xff] %v6958
      %7040 = vst [vmem:[%s7007 + $0x100] sm:$0xff] %v6961
      %7041 = vst [vmem:[%s7007 + $0x108] sm:$0xff] %v6964
      %7042 = vst [vmem:[%s7007 + $0x110] sm:$0xff] %v6967
      %7043 = vst [vmem:[%s7007 + $0x118] sm:$0xff] %v6970
      %v7044 = vld [vmem:[#allocation5] sm:$0xff]
      %v7045 = vld [vmem:[#allocation5 + $0x8] sm:$0xff]
      %v7046 = vld [vmem:[#allocation5 + $0x10] sm:$0xff]
      %v7047 = vld [vmem:[#allocation5 + $0x18] sm:$0xff]
      %v7048 = vld [vmem:[#allocation5 + $0x20] sm:$0xff]
      %v7049 = vld [vmem:[#allocation5 + $0x28] sm:$0xff]
      %v7050 = vld [vmem:[#allocation5 + $0x30] sm:$0xff]
      %v7051 = vld [vmem:[#allocation5 + $0x38] sm:$0xff]
      %v7052 = vld [vmem:[#allocation5 + $0x40] sm:$0xff]
      %v7053 = vld [vmem:[#allocation5 + $0x48] sm:$0xff]
      %v7054 = vld [vmem:[#allocation5 + $0x50] sm:$0xff]
      %v7055 = vld [vmem:[#allocation5 + $0x58] sm:$0xff]
      %v7056 = vld [vmem:[#allocation5 + $0x60] sm:$0xff]
      %v7057 = vld [vmem:[#allocation5 + $0x68] sm:$0xff]
      %v7058 = vld [vmem:[#allocation5 + $0x70] sm:$0xff]
      %v7059 = vld [vmem:[#allocation5 + $0x78] sm:$0xff]
      %v7060 = vld [vmem:[#allocation5 + $0x80] sm:$0xff]
      %v7061 = vld [vmem:[#allocation5 + $0x88] sm:$0xff]
      %v7062 = vld [vmem:[#allocation5 + $0x90] sm:$0xff]
      %v7063 = vld [vmem:[#allocation5 + $0x98] sm:$0xff]
      %v7064 = vld [vmem:[#allocation5 + $0xa0] sm:$0xff]
      %v7065 = vld [vmem:[#allocation5 + $0xa8] sm:$0xff]
      %v7066 = vld [vmem:[#allocation5 + $0xb0] sm:$0xff]
      %v7067 = vld [vmem:[#allocation5 + $0xb8] sm:$0xff]
      %v7068 = vld [vmem:[#allocation5 + $0xc0] sm:$0xff]
      %v7069 = vld [vmem:[#allocation5 + $0xc8] sm:$0xff]
      %v7070 = vld [vmem:[#allocation5 + $0xd0] sm:$0xff]
      %v7071 = vld [vmem:[#allocation5 + $0xd8] sm:$0xff]
      %v7072 = vld [vmem:[#allocation5 + $0xe0] sm:$0xff]
      %v7073 = vld [vmem:[#allocation5 + $0xe8] sm:$0xff]
      %v7074 = vld [vmem:[#allocation5 + $0xf0] sm:$0xff]
      %v7075 = vld [vmem:[#allocation5 + $0xf8] sm:$0xff]
      %v7076 = vld [vmem:[%s3] sm:$0xf]
      %v7077 = vld [vmem:[%s3 + $0x4] sm:$0xf]
      %v7078 = vld [vmem:[%s3 + $0x8] sm:$0xf]
      %v7079 = vld [vmem:[%s3 + $0xc] sm:$0xf]
      %v7080 = vld [vmem:[%s3 + $0x10] sm:$0xf]
      %v7081 = vld [vmem:[%s3 + $0x14] sm:$0xf]
      %v7082 = vld [vmem:[%s3 + $0x18] sm:$0xf]
      %v7083 = vld [vmem:[%s3 + $0x1c] sm:$0xf]
      %v7084 = vld [vmem:[%s3 + $0x20] sm:$0xf]
      %v7085 = vld [vmem:[%s3 + $0x24] sm:$0xf]
      %v7086 = vld [vmem:[%s3 + $0x28] sm:$0xf]
      %v7087 = vld [vmem:[%s3 + $0x2c] sm:$0xf]
      %v7088 = vld [vmem:[%s3 + $0x30] sm:$0xf]
      %v7089 = vld [vmem:[%s3 + $0x34] sm:$0xf]
      %v7090 = vld [vmem:[%s3 + $0x38] sm:$0xf]
      %v7091 = vld [vmem:[%s3 + $0x3c] sm:$0xf]
      %v7092 = vld [vmem:[%s3 + $0x40] sm:$0xf]
      %v7093 = vld [vmem:[%s3 + $0x44] sm:$0xf]
      %v7094 = vld [vmem:[%s3 + $0x48] sm:$0xf]
      %v7095 = vld [vmem:[%s3 + $0x4c] sm:$0xf]
      %v7096 = vld [vmem:[%s3 + $0x50] sm:$0xf]
      %v7097 = vld [vmem:[%s3 + $0x54] sm:$0xf]
      %v7098 = vld [vmem:[%s3 + $0x58] sm:$0xf]
      %v7099 = vld [vmem:[%s3 + $0x5c] sm:$0xf]
      %v7100 = vld [vmem:[%s3 + $0x60] sm:$0xf]
      %v7101 = vld [vmem:[%s3 + $0x64] sm:$0xf]
      %v7102 = vld [vmem:[%s3 + $0x68] sm:$0xf]
      %v7103 = vld [vmem:[%s3 + $0x6c] sm:$0xf]
      %v7104 = vld [vmem:[%s3 + $0x70] sm:$0xf]
      %v7105 = vld [vmem:[%s3 + $0x74] sm:$0xf]
      %v7106 = vld [vmem:[%s3 + $0x78] sm:$0xf]
      %v7107 = vld [vmem:[%s3 + $0x7c] sm:$0xf]
      %v7108 = vld [vmem:[%s6573] sm:$0xff]
      %v7109 = vld [vmem:[%s6573 + $0x8] sm:$0xff]
      %v7110 = vld [vmem:[%s6573 + $0x10] sm:$0xff]
      %v7111 = vld [vmem:[%s6573 + $0x18] sm:$0xff]
      %v7112 = vld [vmem:[%s6573 + $0x20] sm:$0xff]
      %v7113 = vld [vmem:[%s6573 + $0x28] sm:$0xff]
      %v7114 = vld [vmem:[%s6573 + $0x30] sm:$0xff]
      %v7115 = vld [vmem:[%s6573 + $0x38] sm:$0xff]
      %v7116 = vld [vmem:[%s6573 + $0x40] sm:$0xff]
      %v7117 = vld [vmem:[%s6573 + $0x48] sm:$0xff]
      %v7118 = vld [vmem:[%s6573 + $0x50] sm:$0xff]
      %v7119 = vld [vmem:[%s6573 + $0x58] sm:$0xff]
      %v7120 = vld [vmem:[%s6573 + $0x60] sm:$0xff]
      %v7121 = vld [vmem:[%s6573 + $0x68] sm:$0xff]
      %v7122 = vld [vmem:[%s6573 + $0x70] sm:$0xff]
      %v7123 = vld [vmem:[%s6573 + $0x78] sm:$0xff]
      %v7124 = vld [vmem:[%s6573 + $0x80] sm:$0xff]
      %v7125 = vld [vmem:[%s6573 + $0x88] sm:$0xff]
      %v7126 = vld [vmem:[%s6573 + $0x90] sm:$0xff]
      %v7127 = vld [vmem:[%s6573 + $0x98] sm:$0xff]
      %v7128 = vld [vmem:[%s6573 + $0xa0] sm:$0xff]
      %v7129 = vld [vmem:[%s6573 + $0xa8] sm:$0xff]
      %v7130 = vld [vmem:[%s6573 + $0xb0] sm:$0xff]
      %v7131 = vld [vmem:[%s6573 + $0xb8] sm:$0xff]
      %v7132 = vld [vmem:[%s6573 + $0xc0] sm:$0xff]
      %v7133 = vld [vmem:[%s6573 + $0xc8] sm:$0xff]
      %v7134 = vld [vmem:[%s6573 + $0xd0] sm:$0xff]
      %v7135 = vld [vmem:[%s6573 + $0xd8] sm:$0xff]
      %v7136 = vld [vmem:[%s6573 + $0xe0] sm:$0xff]
      %v7137 = vld [vmem:[%s6573 + $0xe8] sm:$0xff]
      %v7138 = vld [vmem:[%s6573 + $0xf0] sm:$0xff]
      %v7139 = vld [vmem:[%s6573 + $0xf8] sm:$0xff]
      %s7140 = scalar_lea.vmem %s3, 128
      %v7141 = vld [vmem:[%s7140] sm:$0xf]
      %v7142 = vld [vmem:[%s7140 + $0x4] sm:$0xf]
      %v7143 = vld [vmem:[%s7140 + $0x8] sm:$0xf]
      %v7144 = vld [vmem:[%s7140 + $0xc] sm:$0xf]
      %v7145 = vld [vmem:[%s7140 + $0x10] sm:$0xf]
      %v7146 = vld [vmem:[%s7140 + $0x14] sm:$0xf]
      %v7147 = vld [vmem:[%s7140 + $0x18] sm:$0xf]
      %v7148 = vld [vmem:[%s7140 + $0x1c] sm:$0xf]
      %v7149 = vld [vmem:[%s7140 + $0x20] sm:$0xf]
      %v7150 = vld [vmem:[%s7140 + $0x24] sm:$0xf]
      %v7151 = vld [vmem:[%s7140 + $0x28] sm:$0xf]
      %v7152 = vld [vmem:[%s7140 + $0x2c] sm:$0xf]
      %v7153 = vld [vmem:[%s7140 + $0x30] sm:$0xf]
      %v7154 = vld [vmem:[%s7140 + $0x34] sm:$0xf]
      %v7155 = vld [vmem:[%s7140 + $0x38] sm:$0xf]
      %v7156 = vld [vmem:[%s7140 + $0x3c] sm:$0xf]
      %v7157 = vld [vmem:[%s7140 + $0x40] sm:$0xf]
      %v7158 = vld [vmem:[%s7140 + $0x44] sm:$0xf]
      %v7159 = vld [vmem:[%s7140 + $0x48] sm:$0xf]
      %v7160 = vld [vmem:[%s7140 + $0x4c] sm:$0xf]
      %v7161 = vld [vmem:[%s7140 + $0x50] sm:$0xf]
      %v7162 = vld [vmem:[%s7140 + $0x54] sm:$0xf]
      %v7163 = vld [vmem:[%s7140 + $0x58] sm:$0xf]
      %v7164 = vld [vmem:[%s7140 + $0x5c] sm:$0xf]
      %v7165 = vld [vmem:[%s7140 + $0x60] sm:$0xf]
      %v7166 = vld [vmem:[%s7140 + $0x64] sm:$0xf]
      %v7167 = vld [vmem:[%s7140 + $0x68] sm:$0xf]
      %v7168 = vld [vmem:[%s7140 + $0x6c] sm:$0xf]
      %v7169 = vld [vmem:[%s7140 + $0x70] sm:$0xf]
      %v7170 = vld [vmem:[%s7140 + $0x74] sm:$0xf]
      %v7171 = vld [vmem:[%s7140 + $0x78] sm:$0xf]
      %v7172 = vld [vmem:[%s7140 + $0x7c] sm:$0xf]
      %v7205 = vunpack.c.l.b16 %v7141
      %v7206 = vunpack.c.l.b16 %v7142
      %v7207 = vunpack.c.l.b16 %v7143
      %v7208 = vunpack.c.l.b16 %v7144
      %v7209 = vunpack.c.l.b16 %v7145
      %v7210 = vunpack.c.l.b16 %v7146
      %v7211 = vunpack.c.l.b16 %v7147
      %v7212 = vunpack.c.l.b16 %v7148
      %v7213 = vunpack.c.l.b16 %v7149
      %v7214 = vunpack.c.l.b16 %v7150
      %v7215 = vunpack.c.l.b16 %v7151
      %v7216 = vunpack.c.l.b16 %v7152
      %v7217 = vunpack.c.l.b16 %v7153
      %v7218 = vunpack.c.l.b16 %v7154
      %v7219 = vunpack.c.l.b16 %v7155
      %v7220 = vunpack.c.l.b16 %v7156
      %v7221 = vunpack.c.l.b16 %v7157
      %v7222 = vunpack.c.l.b16 %v7158
      %v7223 = vunpack.c.l.b16 %v7159
      %v7224 = vunpack.c.l.b16 %v7160
      %v7225 = vunpack.c.l.b16 %v7161
      %v7226 = vunpack.c.l.b16 %v7162
      %v7227 = vunpack.c.l.b16 %v7163
      %v7228 = vunpack.c.l.b16 %v7164
      %v7229 = vunpack.c.l.b16 %v7165
      %v7230 = vunpack.c.l.b16 %v7166
      %v7231 = vunpack.c.l.b16 %v7167
      %v7232 = vunpack.c.l.b16 %v7168
      %v7233 = vunpack.c.l.b16 %v7169
      %v7234 = vunpack.c.l.b16 %v7170
      %v7235 = vunpack.c.l.b16 %v7171
      %v7236 = vunpack.c.l.b16 %v7172
      %v7237 = vpack.c.b16 %v7206, %v7205
      %v7238 = vpack.c.b16 %v7208, %v7207
      %v7239 = vpack.c.b16 %v7210, %v7209
      %v7240 = vpack.c.b16 %v7212, %v7211
      %v7241 = vpack.c.b16 %v7214, %v7213
      %v7242 = vpack.c.b16 %v7216, %v7215
      %v7243 = vpack.c.b16 %v7218, %v7217
      %v7244 = vpack.c.b16 %v7220, %v7219
      %v7245 = vpack.c.b16 %v7222, %v7221
      %v7246 = vpack.c.b16 %v7224, %v7223
      %v7247 = vpack.c.b16 %v7226, %v7225
      %v7248 = vpack.c.b16 %v7228, %v7227
      %v7249 = vpack.c.b16 %v7230, %v7229
      %v7250 = vpack.c.b16 %v7232, %v7231
      %v7251 = vpack.c.b16 %v7234, %v7233
      %v7252 = vpack.c.b16 %v7236, %v7235
      %7269 = vmatprep.subr.bf16.mxu0 0
      %7270 = vmatpush1.bf16.msra.mxu0 %v7237
      %7271 = vmatprep.subr.bf16.mxu0 0
      %7272 = vmatpush1.bf16.msra.mxu0 %v7238
      %7273 = vmatprep.subr.bf16.mxu0 0
      %7274 = vmatpush1.bf16.msra.mxu0 %v7239
      %7275 = vmatprep.subr.bf16.mxu0 0
      %7276 = vmatpush1.bf16.msra.mxu0 %v7240
      %7277 = vmatprep.subr.bf16.mxu0 0
      %7278 = vmatpush1.bf16.msra.mxu0 %v7241
      %7279 = vmatprep.subr.bf16.mxu0 0
      %7280 = vmatpush1.bf16.msra.mxu0 %v7242
      %7281 = vmatprep.subr.bf16.mxu0 0
      %7282 = vmatpush1.bf16.msra.mxu0 %v7243
      %7283 = vmatprep.subr.bf16.mxu0 0
      %7284 = vmatpush1.bf16.msra.mxu0 %v7244
      %7285 = vmatprep.subr.bf16.mxu0 0
      %7286 = vmatpush1.bf16.msra.mxu0 %v7245
      %7287 = vmatprep.subr.bf16.mxu0 0
      %7288 = vmatpush1.bf16.msra.mxu0 %v7246
      %7289 = vmatprep.subr.bf16.mxu0 0
      %7290 = vmatpush1.bf16.msra.mxu0 %v7247
      %7291 = vmatprep.subr.bf16.mxu0 0
      %7292 = vmatpush1.bf16.msra.mxu0 %v7248
      %7293 = vmatprep.subr.bf16.mxu0 0
      %7294 = vmatpush1.bf16.msra.mxu0 %v7249
      %7295 = vmatprep.subr.bf16.mxu0 0
      %7296 = vmatpush1.bf16.msra.mxu0 %v7250
      %7297 = vmatprep.subr.bf16.mxu0 0
      %7298 = vmatpush1.bf16.msra.mxu0 %v7251
      %7299 = vmatprep.subr.bf16.mxu0 0
      %7300 = vmatpush1.bf16.msra.mxu0 %v7252
      %7301 = vmatprep.mubr.bf16.mxu0 %v7109
      %7302 = vmatmul.mubr.bf16.gmra.mrb[0].mxu0 %v7108
      %v7303 = vpop.f32.mrb[0].mxu0
      %v7304 = vadd.f32 0.0, %v7303
      %v7305 = vpop.f32.mrb[0].mxu0
      %v7306 = vpop.f32.mrb[0].mxu0
      %v7307 = vadd.f32 0.0, %v7306
      %v7308 = vpop.f32.mrb[0].mxu0
      %7309 = vmatprep.mubr.bf16.mxu0 %v7111
      %7310 = vmatmul.mubr.bf16.gmra.mrb[0].mxu0 %v7110
      %v7311 = vpop.f32.mrb[0].mxu0
      %v7312 = vadd.f32 0.0, %v7311
      %v7313 = vpop.f32.mrb[0].mxu0
      %v7314 = vpop.f32.mrb[0].mxu0
      %v7315 = vadd.f32 0.0, %v7314
      %v7316 = vpop.f32.mrb[0].mxu0
      %7317 = vmatprep.mubr.bf16.mxu0 %v7113
      %7318 = vmatmul.mubr.bf16.gmra.mrb[0].mxu0 %v7112
      %v7319 = vpop.f32.mrb[0].mxu0
      %v7320 = vadd.f32 0.0, %v7319
      %v7321 = vpop.f32.mrb[0].mxu0
      %v7322 = vpop.f32.mrb[0].mxu0
      %v7323 = vadd.f32 0.0, %v7322
      %v7324 = vpop.f32.mrb[0].mxu0
      %7325 = vmatprep.mubr.bf16.mxu0 %v7115
      %7326 = vmatmul.mubr.bf16.gmra.mrb[0].mxu0 %v7114
      %v7327 = vpop.f32.mrb[0].mxu0
      %v7328 = vadd.f32 0.0, %v7327
      %v7329 = vpop.f32.mrb[0].mxu0
      %v7330 = vpop.f32.mrb[0].mxu0
      %v7331 = vadd.f32 0.0, %v7330
      %v7332 = vpop.f32.mrb[0].mxu0
      %7333 = vmatprep.mubr.bf16.mxu0 %v7117
      %7334 = vmatmul.mubr.bf16.gmra.mrb[0].mxu0 %v7116
      %v7335 = vpop.f32.mrb[0].mxu0
      %v7336 = vadd.f32 0.0, %v7335
      %v7337 = vpop.f32.mrb[0].mxu0
      %v7338 = vpop.f32.mrb[0].mxu0
      %v7339 = vadd.f32 0.0, %v7338
      %v7340 = vpop.f32.mrb[0].mxu0
      %7341 = vmatprep.mubr.bf16.mxu0 %v7119
      %7342 = vmatmul.mubr.bf16.gmra.mrb[0].mxu0 %v7118
      %v7343 = vpop.f32.mrb[0].mxu0
      %v7344 = vadd.f32 0.0, %v7343
      %v7345 = vpop.f32.mrb[0].mxu0
      %v7346 = vpop.f32.mrb[0].mxu0
      %v7347 = vadd.f32 0.0, %v7346
      %v7348 = vpop.f32.mrb[0].mxu0
      %7349 = vmatprep.mubr.bf16.mxu0 %v7121
      %7350 = vmatmul.mubr.bf16.gmra.mrb[0].mxu0 %v7120
      %v7351 = vpop.f32.mrb[0].mxu0
      %v7352 = vadd.f32 0.0, %v7351
      %v7353 = vpop.f32.mrb[0].mxu0
      %v7354 = vpop.f32.mrb[0].mxu0
      %v7355 = vadd.f32 0.0, %v7354
      %v7356 = vpop.f32.mrb[0].mxu0
      %7357 = vmatprep.mubr.bf16.mxu0 %v7123
      %7358 = vmatmul.mubr.bf16.gmra.mrb[0].mxu0 %v7122
      %v7359 = vpop.f32.mrb[0].mxu0
      %v7360 = vadd.f32 0.0, %v7359
      %v7361 = vpop.f32.mrb[0].mxu0
      %v7362 = vpop.f32.mrb[0].mxu0
      %v7363 = vadd.f32 0.0, %v7362
      %v7364 = vpop.f32.mrb[0].mxu0
      %7365 = vmatprep.mubr.bf16.mxu0 %v7125
      %7366 = vmatmul.mubr.bf16.gmra.mrb[0].mxu0 %v7124
      %v7367 = vpop.f32.mrb[0].mxu0
      %v7368 = vadd.f32 0.0, %v7367
      %v7369 = vpop.f32.mrb[0].mxu0
      %v7370 = vpop.f32.mrb[0].mxu0
      %v7371 = vadd.f32 0.0, %v7370
      %v7372 = vpop.f32.mrb[0].mxu0
      %7373 = vmatprep.mubr.bf16.mxu0 %v7127
      %7374 = vmatmul.mubr.bf16.gmra.mrb[0].mxu0 %v7126
      %v7375 = vpop.f32.mrb[0].mxu0
      %v7376 = vadd.f32 0.0, %v7375
      %v7377 = vpop.f32.mrb[0].mxu0
      %v7378 = vpop.f32.mrb[0].mxu0
      %v7379 = vadd.f32 0.0, %v7378
      %v7380 = vpop.f32.mrb[0].mxu0
      %7381 = vmatprep.mubr.bf16.mxu0 %v7129
      %7382 = vmatmul.mubr.bf16.gmra.mrb[0].mxu0 %v7128
      %v7383 = vpop.f32.mrb[0].mxu0
      %v7384 = vadd.f32 0.0, %v7383
      %v7385 = vpop.f32.mrb[0].mxu0
      %v7386 = vpop.f32.mrb[0].mxu0
      %v7387 = vadd.f32 0.0, %v7386
      %v7388 = vpop.f32.mrb[0].mxu0
      %7389 = vmatprep.mubr.bf16.mxu0 %v7131
      %7390 = vmatmul.mubr.bf16.gmra.mrb[0].mxu0 %v7130
      %v7391 = vpop.f32.mrb[0].mxu0
      %v7392 = vadd.f32 0.0, %v7391
      %v7393 = vpop.f32.mrb[0].mxu0
      %v7394 = vpop.f32.mrb[0].mxu0
      %v7395 = vadd.f32 0.0, %v7394
      %v7396 = vpop.f32.mrb[0].mxu0
      %7397 = vmatprep.mubr.bf16.mxu0 %v7133
      %7398 = vmatmul.mubr.bf16.gmra.mrb[0].mxu0 %v7132
      %v7399 = vpop.f32.mrb[0].mxu0
      %v7400 = vadd.f32 0.0, %v7399
      %v7401 = vpop.f32.mrb[0].mxu0
      %v7402 = vpop.f32.mrb[0].mxu0
      %v7403 = vadd.f32 0.0, %v7402
      %v7404 = vpop.f32.mrb[0].mxu0
      %7405 = vmatprep.mubr.bf16.mxu0 %v7135
      %7406 = vmatmul.mubr.bf16.gmra.mrb[0].mxu0 %v7134
      %v7407 = vpop.f32.mrb[0].mxu0
      %v7408 = vadd.f32 0.0, %v7407
      %v7409 = vpop.f32.mrb[0].mxu0
      %v7410 = vpop.f32.mrb[0].mxu0
      %v7411 = vadd.f32 0.0, %v7410
      %v7412 = vpop.f32.mrb[0].mxu0
      %7413 = vmatprep.mubr.bf16.mxu0 %v7137
      %7414 = vmatmul.mubr.bf16.gmra.mrb[0].mxu0 %v7136
      %v7415 = vpop.f32.mrb[0].mxu0
      %v7416 = vadd.f32 0.0, %v7415
      %v7417 = vpop.f32.mrb[0].mxu0
      %v7418 = vpop.f32.mrb[0].mxu0
      %v7419 = vadd.f32 0.0, %v7418
      %v7420 = vpop.f32.mrb[0].mxu0
      %7421 = vmatprep.mubr.bf16.mxu0 %v7139
      %7422 = vmatmul.mubr.bf16.gmra.mrb[0].mxu0 %v7138
      %v7423 = vpop.f32.mrb[0].mxu0
      %v7424 = vadd.f32 0.0, %v7423
      %v7425 = vpop.f32.mrb[0].mxu0
      %v7426 = vpop.f32.mrb[0].mxu0
      %v7427 = vadd.f32 0.0, %v7426
      %v7428 = vpop.f32.mrb[0].mxu0
      %7429 = vdwg.mxu0
      %v7462 = vunpack.c.l.b16 %v7076
      %v7463 = vunpack.c.l.b16 %v7077
      %v7464 = vunpack.c.l.b16 %v7078
      %v7465 = vunpack.c.l.b16 %v7079
      %v7466 = vunpack.c.l.b16 %v7080
      %v7467 = vunpack.c.l.b16 %v7081
      %v7468 = vunpack.c.l.b16 %v7082
      %v7469 = vunpack.c.l.b16 %v7083
      %v7470 = vunpack.c.l.b16 %v7084
      %v7471 = vunpack.c.l.b16 %v7085
      %v7472 = vunpack.c.l.b16 %v7086
      %v7473 = vunpack.c.l.b16 %v7087
      %v7474 = vunpack.c.l.b16 %v7088
      %v7475 = vunpack.c.l.b16 %v7089
      %v7476 = vunpack.c.l.b16 %v7090
      %v7477 = vunpack.c.l.b16 %v7091
      %v7478 = vunpack.c.l.b16 %v7092
      %v7479 = vunpack.c.l.b16 %v7093
      %v7480 = vunpack.c.l.b16 %v7094
      %v7481 = vunpack.c.l.b16 %v7095
      %v7482 = vunpack.c.l.b16 %v7096
      %v7483 = vunpack.c.l.b16 %v7097
      %v7484 = vunpack.c.l.b16 %v7098
      %v7485 = vunpack.c.l.b16 %v7099
      %v7486 = vunpack.c.l.b16 %v7100
      %v7487 = vunpack.c.l.b16 %v7101
      %v7488 = vunpack.c.l.b16 %v7102
      %v7489 = vunpack.c.l.b16 %v7103
      %v7490 = vunpack.c.l.b16 %v7104
      %v7491 = vunpack.c.l.b16 %v7105
      %v7492 = vunpack.c.l.b16 %v7106
      %v7493 = vunpack.c.l.b16 %v7107
      %v7494 = vpack.c.b16 %v7463, %v7462
      %v7495 = vpack.c.b16 %v7465, %v7464
      %v7496 = vpack.c.b16 %v7467, %v7466
      %v7497 = vpack.c.b16 %v7469, %v7468
      %v7498 = vpack.c.b16 %v7471, %v7470
      %v7499 = vpack.c.b16 %v7473, %v7472
      %v7500 = vpack.c.b16 %v7475, %v7474
      %v7501 = vpack.c.b16 %v7477, %v7476
      %v7502 = vpack.c.b16 %v7479, %v7478
      %v7503 = vpack.c.b16 %v7481, %v7480
      %v7504 = vpack.c.b16 %v7483, %v7482
      %v7505 = vpack.c.b16 %v7485, %v7484
      %v7506 = vpack.c.b16 %v7487, %v7486
      %v7507 = vpack.c.b16 %v7489, %v7488
      %v7508 = vpack.c.b16 %v7491, %v7490
      %v7509 = vpack.c.b16 %v7493, %v7492
      %7526 = vmatprep.subr.bf16.mxu0 0
      %7527 = vmatpush1.bf16.msra.mxu0 %v7494
      %7528 = vmatprep.subr.bf16.mxu0 0
      %7529 = vmatpush1.bf16.msra.mxu0 %v7495
      %7530 = vmatprep.subr.bf16.mxu0 0
      %7531 = vmatpush1.bf16.msra.mxu0 %v7496
      %7532 = vmatprep.subr.bf16.mxu0 0
      %7533 = vmatpush1.bf16.msra.mxu0 %v7497
      %7534 = vmatprep.subr.bf16.mxu0 0
      %7535 = vmatpush1.bf16.msra.mxu0 %v7498
      %7536 = vmatprep.subr.bf16.mxu0 0
      %7537 = vmatpush1.bf16.msra.mxu0 %v7499
      %7538 = vmatprep.subr.bf16.mxu0 0
      %7539 = vmatpush1.bf16.msra.mxu0 %v7500
      %7540 = vmatprep.subr.bf16.mxu0 0
      %7541 = vmatpush1.bf16.msra.mxu0 %v7501
      %7542 = vmatprep.subr.bf16.mxu0 0
      %7543 = vmatpush1.bf16.msra.mxu0 %v7502
      %7544 = vmatprep.subr.bf16.mxu0 0
      %7545 = vmatpush1.bf16.msra.mxu0 %v7503
      %7546 = vmatprep.subr.bf16.mxu0 0
      %7547 = vmatpush1.bf16.msra.mxu0 %v7504
      %7548 = vmatprep.subr.bf16.mxu0 0
      %7549 = vmatpush1.bf16.msra.mxu0 %v7505
      %7550 = vmatprep.subr.bf16.mxu0 0
      %7551 = vmatpush1.bf16.msra.mxu0 %v7506
      %7552 = vmatprep.subr.bf16.mxu0 0
      %7553 = vmatpush1.bf16.msra.mxu0 %v7507
      %7554 = vmatprep.subr.bf16.mxu0 0
      %7555 = vmatpush1.bf16.msra.mxu0 %v7508
      %7556 = vmatprep.subr.bf16.mxu0 0
      %7557 = vmatpush1.bf16.msra.mxu0 %v7509
      %7558 = vmatprep.mubr.bf16.mxu0 %v7045
      %7559 = vmatmul.mubr.bf16.gmra.mrb[0].mxu0 %v7044
      %v7560 = vpop.f32.mrb[0].mxu0
      %v7561 = vadd.f32 %v7304, %v7560
      %v7562 = vpop.f32.mrb[0].mxu0
      %v7563 = vpop.f32.mrb[0].mxu0
      %v7564 = vadd.f32 %v7307, %v7563
      %v7565 = vpop.f32.mrb[0].mxu0
      %7566 = vmatprep.mubr.bf16.mxu0 %v7047
      %7567 = vmatmul.mubr.bf16.gmra.mrb[0].mxu0 %v7046
      %v7568 = vpop.f32.mrb[0].mxu0
      %v7569 = vadd.f32 %v7312, %v7568
      %v7570 = vpop.f32.mrb[0].mxu0
      %v7571 = vpop.f32.mrb[0].mxu0
      %v7572 = vadd.f32 %v7315, %v7571
      %v7573 = vpop.f32.mrb[0].mxu0
      %7574 = vmatprep.mubr.bf16.mxu0 %v7049
      %7575 = vmatmul.mubr.bf16.gmra.mrb[0].mxu0 %v7048
      %v7576 = vpop.f32.mrb[0].mxu0
      %v7577 = vadd.f32 %v7320, %v7576
      %v7578 = vpop.f32.mrb[0].mxu0
      %v7579 = vpop.f32.mrb[0].mxu0
      %v7580 = vadd.f32 %v7323, %v7579
      %v7581 = vpop.f32.mrb[0].mxu0
      %7582 = vmatprep.mubr.bf16.mxu0 %v7051
      %7583 = vmatmul.mubr.bf16.gmra.mrb[0].mxu0 %v7050
      %v7584 = vpop.f32.mrb[0].mxu0
      %v7585 = vadd.f32 %v7328, %v7584
      %v7586 = vpop.f32.mrb[0].mxu0
      %v7587 = vpop.f32.mrb[0].mxu0
      %v7588 = vadd.f32 %v7331, %v7587
      %v7589 = vpop.f32.mrb[0].mxu0
      %7590 = vmatprep.mubr.bf16.mxu0 %v7053
      %7591 = vmatmul.mubr.bf16.gmra.mrb[0].mxu0 %v7052
      %v7592 = vpop.f32.mrb[0].mxu0
      %v7593 = vadd.f32 %v7336, %v7592
      %v7594 = vpop.f32.mrb[0].mxu0
      %v7595 = vpop.f32.mrb[0].mxu0
      %v7596 = vadd.f32 %v7339, %v7595
      %v7597 = vpop.f32.mrb[0].mxu0
      %7598 = vmatprep.mubr.bf16.mxu0 %v7055
      %7599 = vmatmul.mubr.bf16.gmra.mrb[0].mxu0 %v7054
      %v7600 = vpop.f32.mrb[0].mxu0
      %v7601 = vadd.f32 %v7344, %v7600
      %v7602 = vpop.f32.mrb[0].mxu0
      %v7603 = vpop.f32.mrb[0].mxu0
      %v7604 = vadd.f32 %v7347, %v7603
      %v7605 = vpop.f32.mrb[0].mxu0
      %7606 = vmatprep.mubr.bf16.mxu0 %v7057
      %7607 = vmatmul.mubr.bf16.gmra.mrb[0].mxu0 %v7056
      %v7608 = vpop.f32.mrb[0].mxu0
      %v7609 = vadd.f32 %v7352, %v7608
      %v7610 = vpop.f32.mrb[0].mxu0
      %v7611 = vpop.f32.mrb[0].mxu0
      %v7612 = vadd.f32 %v7355, %v7611
      %v7613 = vpop.f32.mrb[0].mxu0
      %7614 = vmatprep.mubr.bf16.mxu0 %v7059
      %7615 = vmatmul.mubr.bf16.gmra.mrb[0].mxu0 %v7058
      %v7616 = vpop.f32.mrb[0].mxu0
      %v7617 = vadd.f32 %v7360, %v7616
      %v7618 = vpop.f32.mrb[0].mxu0
      %v7619 = vpop.f32.mrb[0].mxu0
      %v7620 = vadd.f32 %v7363, %v7619
      %v7621 = vpop.f32.mrb[0].mxu0
      %7622 = vmatprep.mubr.bf16.mxu0 %v7061
      %7623 = vmatmul.mubr.bf16.gmra.mrb[0].mxu0 %v7060
      %v7624 = vpop.f32.mrb[0].mxu0
      %v7625 = vadd.f32 %v7368, %v7624
      %v7626 = vpop.f32.mrb[0].mxu0
      %v7627 = vpop.f32.mrb[0].mxu0
      %v7628 = vadd.f32 %v7371, %v7627
      %v7629 = vpop.f32.mrb[0].mxu0
      %7630 = vmatprep.mubr.bf16.mxu0 %v7063
      %7631 = vmatmul.mubr.bf16.gmra.mrb[0].mxu0 %v7062
      %v7632 = vpop.f32.mrb[0].mxu0
      %v7633 = vadd.f32 %v7376, %v7632
      %v7634 = vpop.f32.mrb[0].mxu0
      %v7635 = vpop.f32.mrb[0].mxu0
      %v7636 = vadd.f32 %v7379, %v7635
      %v7637 = vpop.f32.mrb[0].mxu0
      %7638 = vmatprep.mubr.bf16.mxu0 %v7065
      %7639 = vmatmul.mubr.bf16.gmra.mrb[0].mxu0 %v7064
      %v7640 = vpop.f32.mrb[0].mxu0
      %v7641 = vadd.f32 %v7384, %v7640
      %v7642 = vpop.f32.mrb[0].mxu0
      %v7643 = vpop.f32.mrb[0].mxu0
      %v7644 = vadd.f32 %v7387, %v7643
      %v7645 = vpop.f32.mrb[0].mxu0
      %7646 = vmatprep.mubr.bf16.mxu0 %v7067
      %7647 = vmatmul.mubr.bf16.gmra.mrb[0].mxu0 %v7066
      %v7648 = vpop.f32.mrb[0].mxu0
      %v7649 = vadd.f32 %v7392, %v7648
      %v7650 = vpop.f32.mrb[0].mxu0
      %v7651 = vpop.f32.mrb[0].mxu0
      %v7652 = vadd.f32 %v7395, %v7651
      %v7653 = vpop.f32.mrb[0].mxu0
      %7654 = vmatprep.mubr.bf16.mxu0 %v7069
      %7655 = vmatmul.mubr.bf16.gmra.mrb[0].mxu0 %v7068
      %v7656 = vpop.f32.mrb[0].mxu0
      %v7657 = vadd.f32 %v7400, %v7656
      %v7658 = vpop.f32.mrb[0].mxu0
      %v7659 = vpop.f32.mrb[0].mxu0
      %v7660 = vadd.f32 %v7403, %v7659
      %v7661 = vpop.f32.mrb[0].mxu0
      %7662 = vmatprep.mubr.bf16.mxu0 %v7071
      %7663 = vmatmul.mubr.bf16.gmra.mrb[0].mxu0 %v7070
      %v7664 = vpop.f32.mrb[0].mxu0
      %v7665 = vadd.f32 %v7408, %v7664
      %v7666 = vpop.f32.mrb[0].mxu0
      %v7667 = vpop.f32.mrb[0].mxu0
      %v7668 = vadd.f32 %v7411, %v7667
      %v7669 = vpop.f32.mrb[0].mxu0
      %7670 = vmatprep.mubr.bf16.mxu0 %v7073
      %7671 = vmatmul.mubr.bf16.gmra.mrb[0].mxu0 %v7072
      %v7672 = vpop.f32.mrb[0].mxu0
      %v7673 = vadd.f32 %v7416, %v7672
      %v7674 = vpop.f32.mrb[0].mxu0
      %v7675 = vpop.f32.mrb[0].mxu0
      %v7676 = vadd.f32 %v7419, %v7675
      %v7677 = vpop.f32.mrb[0].mxu0
      %7678 = vmatprep.mubr.bf16.mxu0 %v7075
      %7679 = vmatmul.mubr.bf16.gmra.mrb[0].mxu0 %v7074
      %v7680 = vpop.f32.mrb[0].mxu0
      %v7681 = vadd.f32 %v7424, %v7680
      %v7682 = vpop.f32.mrb[0].mxu0
      %v7683 = vpop.f32.mrb[0].mxu0
      %v7684 = vadd.f32 %v7427, %v7683
      %v7685 = vpop.f32.mrb[0].mxu0
      %7686 = vdwg.mxu0
      %v7687 = vld [vmem:[%s7007] sm:$0xff]
      %v7688 = vld [vmem:[%s7007 + $0x8] sm:$0xff]
      %v7689 = vld [vmem:[%s7007 + $0x10] sm:$0xff]
      %v7690 = vld [vmem:[%s7007 + $0x18] sm:$0xff]
      %v7691 = vld [vmem:[%s7007 + $0x20] sm:$0xff]
      %v7692 = vld [vmem:[%s7007 + $0x28] sm:$0xff]
      %v7693 = vld [vmem:[%s7007 + $0x30] sm:$0xff]
      %v7694 = vld [vmem:[%s7007 + $0x38] sm:$0xff]
      %v7695 = vld [vmem:[%s7007 + $0x40] sm:$0xff]
      %v7696 = vld [vmem:[%s7007 + $0x48] sm:$0xff]
      %v7697 = vld [vmem:[%s7007 + $0x50] sm:$0xff]
      %v7698 = vld [vmem:[%s7007 + $0x58] sm:$0xff]
      %v7699 = vld [vmem:[%s7007 + $0x60] sm:$0xff]
      %v7700 = vld [vmem:[%s7007 + $0x68] sm:$0xff]
      %v7701 = vld [vmem:[%s7007 + $0x70] sm:$0xff]
      %v7702 = vld [vmem:[%s7007 + $0x78] sm:$0xff]
      %v7703 = vld [vmem:[%s7007 + $0x80] sm:$0xff]
      %v7704 = vld [vmem:[%s7007 + $0x88] sm:$0xff]
      %v7705 = vld [vmem:[%s7007 + $0x90] sm:$0xff]
      %v7706 = vld [vmem:[%s7007 + $0x98] sm:$0xff]
      %v7707 = vld [vmem:[%s7007 + $0xa0] sm:$0xff]
      %v7708 = vld [vmem:[%s7007 + $0xa8] sm:$0xff]
      %v7709 = vld [vmem:[%s7007 + $0xb0] sm:$0xff]
      %v7710 = vld [vmem:[%s7007 + $0xb8] sm:$0xff]
      %v7711 = vld [vmem:[%s7007 + $0xc0] sm:$0xff]
      %v7712 = vld [vmem:[%s7007 + $0xc8] sm:$0xff]
      %v7713 = vld [vmem:[%s7007 + $0xd0] sm:$0xff]
      %v7714 = vld [vmem:[%s7007 + $0xd8] sm:$0xff]
      %v7715 = vld [vmem:[%s7007 + $0xe0] sm:$0xff]
      %v7716 = vld [vmem:[%s7007 + $0xe8] sm:$0xff]
      %v7717 = vld [vmem:[%s7007 + $0xf0] sm:$0xff]
      %v7718 = vld [vmem:[%s7007 + $0xf8] sm:$0xff]
      %s7719 = scalar_lea.vmem %s3, 256
      %v7720 = vld [vmem:[%s7719] sm:$0xf]
      %v7721 = vld [vmem:[%s7719 + $0x4] sm:$0xf]
      %v7722 = vld [vmem:[%s7719 + $0x8] sm:$0xf]
      %v7723 = vld [vmem:[%s7719 + $0xc] sm:$0xf]
      %v7724 = vld [vmem:[%s7719 + $0x10] sm:$0xf]
      %v7725 = vld [vmem:[%s7719 + $0x14] sm:$0xf]
      %v7726 = vld [vmem:[%s7719 + $0x18] sm:$0xf]
      %v7727 = vld [vmem:[%s7719 + $0x1c] sm:$0xf]
      %v7728 = vld [vmem:[%s7719 + $0x20] sm:$0xf]
      %v7729 = vld [vmem:[%s7719 + $0x24] sm:$0xf]
      %v7730 = vld [vmem:[%s7719 + $0x28] sm:$0xf]
      %v7731 = vld [vmem:[%s7719 + $0x2c] sm:$0xf]
      %v7732 = vld [vmem:[%s7719 + $0x30] sm:$0xf]
      %v7733 = vld [vmem:[%s7719 + $0x34] sm:$0xf]
      %v7734 = vld [vmem:[%s7719 + $0x38] sm:$0xf]
      %v7735 = vld [vmem:[%s7719 + $0x3c] sm:$0xf]
      %v7736 = vld [vmem:[%s7719 + $0x40] sm:$0xf]
      %v7737 = vld [vmem:[%s7719 + $0x44] sm:$0xf]
      %v7738 = vld [vmem:[%s7719 + $0x48] sm:$0xf]
      %v7739 = vld [vmem:[%s7719 + $0x4c] sm:$0xf]
      %v7740 = vld [vmem:[%s7719 + $0x50] sm:$0xf]
      %v7741 = vld [vmem:[%s7719 + $0x54] sm:$0xf]
      %v7742 = vld [vmem:[%s7719 + $0x58] sm:$0xf]
      %v7743 = vld [vmem:[%s7719 + $0x5c] sm:$0xf]
      %v7744 = vld [vmem:[%s7719 + $0x60] sm:$0xf]
      %v7745 = vld [vmem:[%s7719 + $0x64] sm:$0xf]
      %v7746 = vld [vmem:[%s7719 + $0x68] sm:$0xf]
      %v7747 = vld [vmem:[%s7719 + $0x6c] sm:$0xf]
      %v7748 = vld [vmem:[%s7719 + $0x70] sm:$0xf]
      %v7749 = vld [vmem:[%s7719 + $0x74] sm:$0xf]
      %v7750 = vld [vmem:[%s7719 + $0x78] sm:$0xf]
      %v7751 = vld [vmem:[%s7719 + $0x7c] sm:$0xf]
      %v7784 = vunpack.c.l.b16 %v7720
      %v7785 = vunpack.c.l.b16 %v7721
      %v7786 = vunpack.c.l.b16 %v7722
      %v7787 = vunpack.c.l.b16 %v7723
      %v7788 = vunpack.c.l.b16 %v7724
      %v7789 = vunpack.c.l.b16 %v7725
      %v7790 = vunpack.c.l.b16 %v7726
      %v7791 = vunpack.c.l.b16 %v7727
      %v7792 = vunpack.c.l.b16 %v7728
      %v7793 = vunpack.c.l.b16 %v7729
      %v7794 = vunpack.c.l.b16 %v7730
      %v7795 = vunpack.c.l.b16 %v7731
      %v7796 = vunpack.c.l.b16 %v7732
      %v7797 = vunpack.c.l.b16 %v7733
      %v7798 = vunpack.c.l.b16 %v7734
      %v7799 = vunpack.c.l.b16 %v7735
      %v7800 = vunpack.c.l.b16 %v7736
      %v7801 = vunpack.c.l.b16 %v7737
      %v7802 = vunpack.c.l.b16 %v7738
      %v7803 = vunpack.c.l.b16 %v7739
      %v7804 = vunpack.c.l.b16 %v7740
      %v7805 = vunpack.c.l.b16 %v7741
      %v7806 = vunpack.c.l.b16 %v7742
      %v7807 = vunpack.c.l.b16 %v7743
      %v7808 = vunpack.c.l.b16 %v7744
      %v7809 = vunpack.c.l.b16 %v7745
      %v7810 = vunpack.c.l.b16 %v7746
      %v7811 = vunpack.c.l.b16 %v7747
      %v7812 = vunpack.c.l.b16 %v7748
      %v7813 = vunpack.c.l.b16 %v7749
      %v7814 = vunpack.c.l.b16 %v7750
      %v7815 = vunpack.c.l.b16 %v7751
      %v7816 = vpack.c.b16 %v7785, %v7784
      %v7817 = vpack.c.b16 %v7787, %v7786
      %v7818 = vpack.c.b16 %v7789, %v7788
      %v7819 = vpack.c.b16 %v7791, %v7790
      %v7820 = vpack.c.b16 %v7793, %v7792
      %v7821 = vpack.c.b16 %v7795, %v7794
      %v7822 = vpack.c.b16 %v7797, %v7796
      %v7823 = vpack.c.b16 %v7799, %v7798
      %v7824 = vpack.c.b16 %v7801, %v7800
      %v7825 = vpack.c.b16 %v7803, %v7802
      %v7826 = vpack.c.b16 %v7805, %v7804
      %v7827 = vpack.c.b16 %v7807, %v7806
      %v7828 = vpack.c.b16 %v7809, %v7808
      %v7829 = vpack.c.b16 %v7811, %v7810
      %v7830 = vpack.c.b16 %v7813, %v7812
      %v7831 = vpack.c.b16 %v7815, %v7814
      %7848 = vmatprep.subr.bf16.mxu0 0
      %7849 = vmatpush1.bf16.msra.mxu0 %v7816
      %7850 = vmatprep.subr.bf16.mxu0 0
      %7851 = vmatpush1.bf16.msra.mxu0 %v7817
      %7852 = vmatprep.subr.bf16.mxu0 0
      %7853 = vmatpush1.bf16.msra.mxu0 %v7818
      %7854 = vmatprep.subr.bf16.mxu0 0
      %7855 = vmatpush1.bf16.msra.mxu0 %v7819
      %7856 = vmatprep.subr.bf16.mxu0 0
      %7857 = vmatpush1.bf16.msra.mxu0 %v7820
      %7858 = vmatprep.subr.bf16.mxu0 0
      %7859 = vmatpush1.bf16.msra.mxu0 %v7821
      %7860 = vmatprep.subr.bf16.mxu0 0
      %7861 = vmatpush1.bf16.msra.mxu0 %v7822
      %7862 = vmatprep.subr.bf16.mxu0 0
      %7863 = vmatpush1.bf16.msra.mxu0 %v7823
      %7864 = vmatprep.subr.bf16.mxu0 0
      %7865 = vmatpush1.bf16.msra.mxu0 %v7824
      %7866 = vmatprep.subr.bf16.mxu0 0
      %7867 = vmatpush1.bf16.msra.mxu0 %v7825
      %7868 = vmatprep.subr.bf16.mxu0 0
      %7869 = vmatpush1.bf16.msra.mxu0 %v7826
      %7870 = vmatprep.subr.bf16.mxu0 0
      %7871 = vmatpush1.bf16.msra.mxu0 %v7827
      %7872 = vmatprep.subr.bf16.mxu0 0
      %7873 = vmatpush1.bf16.msra.mxu0 %v7828
      %7874 = vmatprep.subr.bf16.mxu0 0
      %7875 = vmatpush1.bf16.msra.mxu0 %v7829
      %7876 = vmatprep.subr.bf16.mxu0 0
      %7877 = vmatpush1.bf16.msra.mxu0 %v7830
      %7878 = vmatprep.subr.bf16.mxu0 0
      %7879 = vmatpush1.bf16.msra.mxu0 %v7831
      %7880 = vmatprep.mubr.bf16.mxu0 %v7688
      %7881 = vmatmul.mubr.bf16.gmra.mrb[0].mxu0 %v7687
      %v7882 = vpop.f32.mrb[0].mxu0
      %v7883 = vadd.f32 0.0, %v7882
      %v7884 = vpop.f32.mrb[0].mxu0
      %v7885 = vpop.f32.mrb[0].mxu0
      %v7886 = vadd.f32 0.0, %v7885
      %v7887 = vpop.f32.mrb[0].mxu0
      %7888 = vmatprep.mubr.bf16.mxu0 %v7690
      %7889 = vmatmul.mubr.bf16.gmra.mrb[0].mxu0 %v7689
      %v7890 = vpop.f32.mrb[0].mxu0
      %v7891 = vadd.f32 0.0, %v7890
      %v7892 = vpop.f32.mrb[0].mxu0
      %v7893 = vpop.f32.mrb[0].mxu0
      %v7894 = vadd.f32 0.0, %v7893
      %v7895 = vpop.f32.mrb[0].mxu0
      %7896 = vmatprep.mubr.bf16.mxu0 %v7692
      %7897 = vmatmul.mubr.bf16.gmra.mrb[0].mxu0 %v7691
      %v7898 = vpop.f32.mrb[0].mxu0
      %v7899 = vadd.f32 0.0, %v7898
      %v7900 = vpop.f32.mrb[0].mxu0
      %v7901 = vpop.f32.mrb[0].mxu0
      %v7902 = vadd.f32 0.0, %v7901
      %v7903 = vpop.f32.mrb[0].mxu0
      %7904 = vmatprep.mubr.bf16.mxu0 %v7694
      %7905 = vmatmul.mubr.bf16.gmra.mrb[0].mxu0 %v7693
      %v7906 = vpop.f32.mrb[0].mxu0
      %v7907 = vadd.f32 0.0, %v7906
      %v7908 = vpop.f32.mrb[0].mxu0
      %v7909 = vpop.f32.mrb[0].mxu0
      %v7910 = vadd.f32 0.0, %v7909
      %v7911 = vpop.f32.mrb[0].mxu0
      %7912 = vmatprep.mubr.bf16.mxu0 %v7696
      %7913 = vmatmul.mubr.bf16.gmra.mrb[0].mxu0 %v7695
      %v7914 = vpop.f32.mrb[0].mxu0
      %v7915 = vadd.f32 0.0, %v7914
      %v7916 = vpop.f32.mrb[0].mxu0
      %v7917 = vpop.f32.mrb[0].mxu0
      %v7918 = vadd.f32 0.0, %v7917
      %v7919 = vpop.f32.mrb[0].mxu0
      %7920 = vmatprep.mubr.bf16.mxu0 %v7698
      %7921 = vmatmul.mubr.bf16.gmra.mrb[0].mxu0 %v7697
      %v7922 = vpop.f32.mrb[0].mxu0
      %v7923 = vadd.f32 0.0, %v7922
      %v7924 = vpop.f32.mrb[0].mxu0
      %v7925 = vpop.f32.mrb[0].mxu0
      %v7926 = vadd.f32 0.0, %v7925
      %v7927 = vpop.f32.mrb[0].mxu0
      %7928 = vmatprep.mubr.bf16.mxu0 %v7700
      %7929 = vmatmul.mubr.bf16.gmra.mrb[0].mxu0 %v7699
      %v7930 = vpop.f32.mrb[0].mxu0
      %v7931 = vadd.f32 0.0, %v7930
      %v7932 = vpop.f32.mrb[0].mxu0
      %v7933 = vpop.f32.mrb[0].mxu0
      %v7934 = vadd.f32 0.0, %v7933
      %v7935 = vpop.f32.mrb[0].mxu0
      %7936 = vmatprep.mubr.bf16.mxu0 %v7702
      %7937 = vmatmul.mubr.bf16.gmra.mrb[0].mxu0 %v7701
      %v7938 = vpop.f32.mrb[0].mxu0
      %v7939 = vadd.f32 0.0, %v7938
      %v7940 = vpop.f32.mrb[0].mxu0
      %v7941 = vpop.f32.mrb[0].mxu0
      %v7942 = vadd.f32 0.0, %v7941
      %v7943 = vpop.f32.mrb[0].mxu0
      %7944 = vmatprep.mubr.bf16.mxu0 %v7704
      %7945 = vmatmul.mubr.bf16.gmra.mrb[0].mxu0 %v7703
      %v7946 = vpop.f32.mrb[0].mxu0
      %v7947 = vadd.f32 0.0, %v7946
      %v7948 = vpop.f32.mrb[0].mxu0
      %v7949 = vpop.f32.mrb[0].mxu0
      %v7950 = vadd.f32 0.0, %v7949
      %v7951 = vpop.f32.mrb[0].mxu0
      %7952 = vmatprep.mubr.bf16.mxu0 %v7706
      %7953 = vmatmul.mubr.bf16.gmra.mrb[0].mxu0 %v7705
      %v7954 = vpop.f32.mrb[0].mxu0
      %v7955 = vadd.f32 0.0, %v7954
      %v7956 = vpop.f32.mrb[0].mxu0
      %v7957 = vpop.f32.mrb[0].mxu0
      %v7958 = vadd.f32 0.0, %v7957
      %v7959 = vpop.f32.mrb[0].mxu0
      %7960 = vmatprep.mubr.bf16.mxu0 %v7708
      %7961 = vmatmul.mubr.bf16.gmra.mrb[0].mxu0 %v7707
      %v7962 = vpop.f32.mrb[0].mxu0
      %v7963 = vadd.f32 0.0, %v7962
      %v7964 = vpop.f32.mrb[0].mxu0
      %v7965 = vpop.f32.mrb[0].mxu0
      %v7966 = vadd.f32 0.0, %v7965
      %v7967 = vpop.f32.mrb[0].mxu0
      %7968 = vmatprep.mubr.bf16.mxu0 %v7710
      %7969 = vmatmul.mubr.bf16.gmra.mrb[0].mxu0 %v7709
      %v7970 = vpop.f32.mrb[0].mxu0
      %v7971 = vadd.f32 0.0, %v7970
      %v7972 = vpop.f32.mrb[0].mxu0
      %v7973 = vpop.f32.mrb[0].mxu0
      %v7974 = vadd.f32 0.0, %v7973
      %v7975 = vpop.f32.mrb[0].mxu0
      %7976 = vmatprep.mubr.bf16.mxu0 %v7712
      %7977 = vmatmul.mubr.bf16.gmra.mrb[0].mxu0 %v7711
      %v7978 = vpop.f32.mrb[0].mxu0
      %v7979 = vadd.f32 0.0, %v7978
      %v7980 = vpop.f32.mrb[0].mxu0
      %v7981 = vpop.f32.mrb[0].mxu0
      %v7982 = vadd.f32 0.0, %v7981
      %v7983 = vpop.f32.mrb[0].mxu0
      %7984 = vmatprep.mubr.bf16.mxu0 %v7714
      %7985 = vmatmul.mubr.bf16.gmra.mrb[0].mxu0 %v7713
      %v7986 = vpop.f32.mrb[0].mxu0
      %v7987 = vadd.f32 0.0, %v7986
      %v7988 = vpop.f32.mrb[0].mxu0
      %v7989 = vpop.f32.mrb[0].mxu0
      %v7990 = vadd.f32 0.0, %v7989
      %v7991 = vpop.f32.mrb[0].mxu0
      %7992 = vmatprep.mubr.bf16.mxu0 %v7716
      %7993 = vmatmul.mubr.bf16.gmra.mrb[0].mxu0 %v7715
      %v7994 = vpop.f32.mrb[0].mxu0
      %v7995 = vadd.f32 0.0, %v7994
      %v7996 = vpop.f32.mrb[0].mxu0
      %v7997 = vpop.f32.mrb[0].mxu0
      %v7998 = vadd.f32 0.0, %v7997
      %v7999 = vpop.f32.mrb[0].mxu0
      %8000 = vmatprep.mubr.bf16.mxu0 %v7718
      %8001 = vmatmul.mubr.bf16.gmra.mrb[0].mxu0 %v7717
      %v8002 = vpop.f32.mrb[0].mxu0
      %v8003 = vadd.f32 0.0, %v8002
      %v8004 = vpop.f32.mrb[0].mxu0
      %v8005 = vpop.f32.mrb[0].mxu0
      %v8006 = vadd.f32 0.0, %v8005
      %v8007 = vpop.f32.mrb[0].mxu0
      %8008 = vdwg.mxu0
      %v8009 = vadd.f32 %v7561, %v7883
      %v8010 = vadd.f32 %v7564, %v7886
      %v8011 = vadd.f32 %v7569, %v7891
      %v8012 = vadd.f32 %v7572, %v7894
      %v8013 = vadd.f32 %v7577, %v7899
      %v8014 = vadd.f32 %v7580, %v7902
      %v8015 = vadd.f32 %v7585, %v7907
      %v8016 = vadd.f32 %v7588, %v7910
      %v8017 = vadd.f32 %v7593, %v7915
      %v8018 = vadd.f32 %v7596, %v7918
      %v8019 = vadd.f32 %v7601, %v7923
      %v8020 = vadd.f32 %v7604, %v7926
      %v8021 = vadd.f32 %v7609, %v7931
      %v8022 = vadd.f32 %v7612, %v7934
      %v8023 = vadd.f32 %v7617, %v7939
      %v8024 = vadd.f32 %v7620, %v7942
      %v8025 = vadd.f32 %v7625, %v7947
      %v8026 = vadd.f32 %v7628, %v7950
      %v8027 = vadd.f32 %v7633, %v7955
      %v8028 = vadd.f32 %v7636, %v7958
      %v8029 = vadd.f32 %v7641, %v7963
      %v8030 = vadd.f32 %v7644, %v7966
      %v8031 = vadd.f32 %v7649, %v7971
      %v8032 = vadd.f32 %v7652, %v7974
      %v8033 = vadd.f32 %v7657, %v7979
      %v8034 = vadd.f32 %v7660, %v7982
      %v8035 = vadd.f32 %v7665, %v7987
      %v8036 = vadd.f32 %v7668, %v7990
      %v8037 = vadd.f32 %v7673, %v7995
      %v8038 = vadd.f32 %v7676, %v7998
      %v8039 = vadd.f32 %v7681, %v8003
      %v8040 = vadd.f32 %v7684, %v8006
      %s8041 = scalar_lea.vmem [#allocation5], 16
      %v8042 = vld [vmem:[%s8041] sm:$0xff]
      %v8043 = vld [vmem:[%s8041 + $0x8] sm:$0xff]
      %v8044 = vld [vmem:[%s8041 + $0x10] sm:$0xff]
      %v8045 = vld [vmem:[%s8041 + $0x18] sm:$0xff]
      %v8046 = vld [vmem:[%s8041 + $0x20] sm:$0xff]
      %v8047 = vld [vmem:[%s8041 + $0x28] sm:$0xff]
      %v8048 = vld [vmem:[%s8041 + $0x30] sm:$0xff]
      %v8049 = vld [vmem:[%s8041 + $0x38] sm:$0xff]
      %v8050 = vld [vmem:[%s8041 + $0x40] sm:$0xff]
      %v8051 = vld [vmem:[%s8041 + $0x48] sm:$0xff]
      %v8052 = vld [vmem:[%s8041 + $0x50] sm:$0xff]
      %v8053 = vld [vmem:[%s8041 + $0x58] sm:$0xff]
      %v8054 = vld [vmem:[%s8041 + $0x60] sm:$0xff]
      %v8055 = vld [vmem:[%s8041 + $0x68] sm:$0xff]
      %v8056 = vld [vmem:[%s8041 + $0x70] sm:$0xff]
      %v8057 = vld [vmem:[%s8041 + $0x78] sm:$0xff]
      %v8058 = vld [vmem:[%s8041 + $0x80] sm:$0xff]
      %v8059 = vld [vmem:[%s8041 + $0x88] sm:$0xff]
      %v8060 = vld [vmem:[%s8041 + $0x90] sm:$0xff]
      %v8061 = vld [vmem:[%s8041 + $0x98] sm:$0xff]
      %v8062 = vld [vmem:[%s8041 + $0xa0] sm:$0xff]
      %v8063 = vld [vmem:[%s8041 + $0xa8] sm:$0xff]
      %v8064 = vld [vmem:[%s8041 + $0xb0] sm:$0xff]
      %v8065 = vld [vmem:[%s8041 + $0xb8] sm:$0xff]
      %v8066 = vld [vmem:[%s8041 + $0xc0] sm:$0xff]
      %v8067 = vld [vmem:[%s8041 + $0xc8] sm:$0xff]
      %v8068 = vld [vmem:[%s8041 + $0xd0] sm:$0xff]
      %v8069 = vld [vmem:[%s8041 + $0xd8] sm:$0xff]
      %v8070 = vld [vmem:[%s8041 + $0xe0] sm:$0xff]
      %v8071 = vld [vmem:[%s8041 + $0xe8] sm:$0xff]
      %v8072 = vld [vmem:[%s8041 + $0xf0] sm:$0xff]
      %v8073 = vld [vmem:[%s8041 + $0xf8] sm:$0xff]
      %s8074 = scalar_lea.vmem %s3, 384
      %v8075 = vld [vmem:[%s8074] sm:$0xf]
      %v8076 = vld [vmem:[%s8074 + $0x4] sm:$0xf]
      %v8077 = vld [vmem:[%s8074 + $0x8] sm:$0xf]
      %v8078 = vld [vmem:[%s8074 + $0xc] sm:$0xf]
      %v8079 = vld [vmem:[%s8074 + $0x10] sm:$0xf]
      %v8080 = vld [vmem:[%s8074 + $0x14] sm:$0xf]
      %v8081 = vld [vmem:[%s8074 + $0x18] sm:$0xf]
      %v8082 = vld [vmem:[%s8074 + $0x1c] sm:$0xf]
      %v8083 = vld [vmem:[%s8074 + $0x20] sm:$0xf]
      %v8084 = vld [vmem:[%s8074 + $0x24] sm:$0xf]
      %v8085 = vld [vmem:[%s8074 + $0x28] sm:$0xf]
      %v8086 = vld [vmem:[%s8074 + $0x2c] sm:$0xf]
      %v8087 = vld [vmem:[%s8074 + $0x30] sm:$0xf]
      %v8088 = vld [vmem:[%s8074 + $0x34] sm:$0xf]
      %v8089 = vld [vmem:[%s8074 + $0x38] sm:$0xf]
      %v8090 = vld [vmem:[%s8074 + $0x3c] sm:$0xf]
      %v8091 = vld [vmem:[%s8074 + $0x40] sm:$0xf]
      %v8092 = vld [vmem:[%s8074 + $0x44] sm:$0xf]
      %v8093 = vld [vmem:[%s8074 + $0x48] sm:$0xf]
      %v8094 = vld [vmem:[%s8074 + $0x4c] sm:$0xf]
      %v8095 = vld [vmem:[%s8074 + $0x50] sm:$0xf]
      %v8096 = vld [vmem:[%s8074 + $0x54] sm:$0xf]
      %v8097 = vld [vmem:[%s8074 + $0x58] sm:$0xf]
      %v8098 = vld [vmem:[%s8074 + $0x5c] sm:$0xf]
      %v8099 = vld [vmem:[%s8074 + $0x60] sm:$0xf]
      %v8100 = vld [vmem:[%s8074 + $0x64] sm:$0xf]
      %v8101 = vld [vmem:[%s8074 + $0x68] sm:$0xf]
      %v8102 = vld [vmem:[%s8074 + $0x6c] sm:$0xf]
      %v8103 = vld [vmem:[%s8074 + $0x70] sm:$0xf]
      %v8104 = vld [vmem:[%s8074 + $0x74] sm:$0xf]
      %v8105 = vld [vmem:[%s8074 + $0x78] sm:$0xf]
      %v8106 = vld [vmem:[%s8074 + $0x7c] sm:$0xf]
      %v8139 = vunpack.c.l.b16 %v8075
      %v8140 = vunpack.c.l.b16 %v8076
      %v8141 = vunpack.c.l.b16 %v8077
      %v8142 = vunpack.c.l.b16 %v8078
      %v8143 = vunpack.c.l.b16 %v8079
      %v8144 = vunpack.c.l.b16 %v8080
      %v8145 = vunpack.c.l.b16 %v8081
      %v8146 = vunpack.c.l.b16 %v8082
      %v8147 = vunpack.c.l.b16 %v8083
      %v8148 = vunpack.c.l.b16 %v8084
      %v8149 = vunpack.c.l.b16 %v8085
      %v8150 = vunpack.c.l.b16 %v8086
      %v8151 = vunpack.c.l.b16 %v8087
      %v8152 = vunpack.c.l.b16 %v8088
      %v8153 = vunpack.c.l.b16 %v8089
      %v8154 = vunpack.c.l.b16 %v8090
      %v8155 = vunpack.c.l.b16 %v8091
      %v8156 = vunpack.c.l.b16 %v8092
      %v8157 = vunpack.c.l.b16 %v8093
      %v8158 = vunpack.c.l.b16 %v8094
      %v8159 = vunpack.c.l.b16 %v8095
      %v8160 = vunpack.c.l.b16 %v8096
      %v8161 = vunpack.c.l.b16 %v8097
      %v8162 = vunpack.c.l.b16 %v8098
      %v8163 = vunpack.c.l.b16 %v8099
      %v8164 = vunpack.c.l.b16 %v8100
      %v8165 = vunpack.c.l.b16 %v8101
      %v8166 = vunpack.c.l.b16 %v8102
      %v8167 = vunpack.c.l.b16 %v8103
      %v8168 = vunpack.c.l.b16 %v8104
      %v8169 = vunpack.c.l.b16 %v8105
      %v8170 = vunpack.c.l.b16 %v8106
      %v8171 = vpack.c.b16 %v8140, %v8139
      %v8172 = vpack.c.b16 %v8142, %v8141
      %v8173 = vpack.c.b16 %v8144, %v8143
      %v8174 = vpack.c.b16 %v8146, %v8145
      %v8175 = vpack.c.b16 %v8148, %v8147
      %v8176 = vpack.c.b16 %v8150, %v8149
      %v8177 = vpack.c.b16 %v8152, %v8151
      %v8178 = vpack.c.b16 %v8154, %v8153
      %v8179 = vpack.c.b16 %v8156, %v8155
      %v8180 = vpack.c.b16 %v8158, %v8157
      %v8181 = vpack.c.b16 %v8160, %v8159
      %v8182 = vpack.c.b16 %v8162, %v8161
      %v8183 = vpack.c.b16 %v8164, %v8163
      %v8184 = vpack.c.b16 %v8166, %v8165
      %v8185 = vpack.c.b16 %v8168, %v8167
      %v8186 = vpack.c.b16 %v8170, %v8169
      %8203 = vmatprep.subr.bf16.mxu0 0
      %8204 = vmatpush1.bf16.msra.mxu0 %v8171
      %8205 = vmatprep.subr.bf16.mxu0 0
      %8206 = vmatpush1.bf16.msra.mxu0 %v8172
      %8207 = vmatprep.subr.bf16.mxu0 0
      %8208 = vmatpush1.bf16.msra.mxu0 %v8173
      %8209 = vmatprep.subr.bf16.mxu0 0
      %8210 = vmatpush1.bf16.msra.mxu0 %v8174
      %8211 = vmatprep.subr.bf16.mxu0 0
      %8212 = vmatpush1.bf16.msra.mxu0 %v8175
      %8213 = vmatprep.subr.bf16.mxu0 0
      %8214 = vmatpush1.bf16.msra.mxu0 %v8176
      %8215 = vmatprep.subr.bf16.mxu0 0
      %8216 = vmatpush1.bf16.msra.mxu0 %v8177
      %8217 = vmatprep.subr.bf16.mxu0 0
      %8218 = vmatpush1.bf16.msra.mxu0 %v8178
      %8219 = vmatprep.subr.bf16.mxu0 0
      %8220 = vmatpush1.bf16.msra.mxu0 %v8179
      %8221 = vmatprep.subr.bf16.mxu0 0
      %8222 = vmatpush1.bf16.msra.mxu0 %v8180
      %8223 = vmatprep.subr.bf16.mxu0 0
      %8224 = vmatpush1.bf16.msra.mxu0 %v8181
      %8225 = vmatprep.subr.bf16.mxu0 0
      %8226 = vmatpush1.bf16.msra.mxu0 %v8182
      %8227 = vmatprep.subr.bf16.mxu0 0
      %8228 = vmatpush1.bf16.msra.mxu0 %v8183
      %8229 = vmatprep.subr.bf16.mxu0 0
      %8230 = vmatpush1.bf16.msra.mxu0 %v8184
      %8231 = vmatprep.subr.bf16.mxu0 0
      %8232 = vmatpush1.bf16.msra.mxu0 %v8185
      %8233 = vmatprep.subr.bf16.mxu0 0
      %8234 = vmatpush1.bf16.msra.mxu0 %v8186
      %8235 = vmatprep.mubr.bf16.mxu0 %v8043
      %8236 = vmatmul.mubr.bf16.gmra.mrb[0].mxu0 %v8042
      %v8237 = vpop.f32.mrb[0].mxu0
      %v8238 = vadd.f32 0.0, %v8237
      %v8239 = vpop.f32.mrb[0].mxu0
      %v8240 = vpop.f32.mrb[0].mxu0
      %v8241 = vadd.f32 0.0, %v8240
      %v8242 = vpop.f32.mrb[0].mxu0
      %8243 = vmatprep.mubr.bf16.mxu0 %v8045
      %8244 = vmatmul.mubr.bf16.gmra.mrb[0].mxu0 %v8044
      %v8245 = vpop.f32.mrb[0].mxu0
      %v8246 = vadd.f32 0.0, %v8245
      %v8247 = vpop.f32.mrb[0].mxu0
      %v8248 = vpop.f32.mrb[0].mxu0
      %v8249 = vadd.f32 0.0, %v8248
      %v8250 = vpop.f32.mrb[0].mxu0
      %8251 = vmatprep.mubr.bf16.mxu0 %v8047
      %8252 = vmatmul.mubr.bf16.gmra.mrb[0].mxu0 %v8046
      %v8253 = vpop.f32.mrb[0].mxu0
      %v8254 = vadd.f32 0.0, %v8253
      %v8255 = vpop.f32.mrb[0].mxu0
      %v8256 = vpop.f32.mrb[0].mxu0
      %v8257 = vadd.f32 0.0, %v8256
      %v8258 = vpop.f32.mrb[0].mxu0
      %8259 = vmatprep.mubr.bf16.mxu0 %v8049
      %8260 = vmatmul.mubr.bf16.gmra.mrb[0].mxu0 %v8048
      %v8261 = vpop.f32.mrb[0].mxu0
      %v8262 = vadd.f32 0.0, %v8261
      %v8263 = vpop.f32.mrb[0].mxu0
      %v8264 = vpop.f32.mrb[0].mxu0
      %v8265 = vadd.f32 0.0, %v8264
      %v8266 = vpop.f32.mrb[0].mxu0
      %8267 = vmatprep.mubr.bf16.mxu0 %v8051
      %8268 = vmatmul.mubr.bf16.gmra.mrb[0].mxu0 %v8050
      %v8269 = vpop.f32.mrb[0].mxu0
      %v8270 = vadd.f32 0.0, %v8269
      %v8271 = vpop.f32.mrb[0].mxu0
      %v8272 = vpop.f32.mrb[0].mxu0
      %v8273 = vadd.f32 0.0, %v8272
      %v8274 = vpop.f32.mrb[0].mxu0
      %8275 = vmatprep.mubr.bf16.mxu0 %v8053
      %8276 = vmatmul.mubr.bf16.gmra.mrb[0].mxu0 %v8052
      %v8277 = vpop.f32.mrb[0].mxu0
      %v8278 = vadd.f32 0.0, %v8277
      %v8279 = vpop.f32.mrb[0].mxu0
      %v8280 = vpop.f32.mrb[0].mxu0
      %v8281 = vadd.f32 0.0, %v8280
      %v8282 = vpop.f32.mrb[0].mxu0
      %8283 = vmatprep.mubr.bf16.mxu0 %v8055
      %8284 = vmatmul.mubr.bf16.gmra.mrb[0].mxu0 %v8054
      %v8285 = vpop.f32.mrb[0].mxu0
      %v8286 = vadd.f32 0.0, %v8285
      %v8287 = vpop.f32.mrb[0].mxu0
      %v8288 = vpop.f32.mrb[0].mxu0
      %v8289 = vadd.f32 0.0, %v8288
      %v8290 = vpop.f32.mrb[0].mxu0
      %8291 = vmatprep.mubr.bf16.mxu0 %v8057
      %8292 = vmatmul.mubr.bf16.gmra.mrb[0].mxu0 %v8056
      %v8293 = vpop.f32.mrb[0].mxu0
      %v8294 = vadd.f32 0.0, %v8293
      %v8295 = vpop.f32.mrb[0].mxu0
      %v8296 = vpop.f32.mrb[0].mxu0
      %v8297 = vadd.f32 0.0, %v8296
      %v8298 = vpop.f32.mrb[0].mxu0
      %8299 = vmatprep.mubr.bf16.mxu0 %v8059
      %8300 = vmatmul.mubr.bf16.gmra.mrb[0].mxu0 %v8058
      %v8301 = vpop.f32.mrb[0].mxu0
      %v8302 = vadd.f32 0.0, %v8301
      %v8303 = vpop.f32.mrb[0].mxu0
      %v8304 = vpop.f32.mrb[0].mxu0
      %v8305 = vadd.f32 0.0, %v8304
      %v8306 = vpop.f32.mrb[0].mxu0
      %8307 = vmatprep.mubr.bf16.mxu0 %v8061
      %8308 = vmatmul.mubr.bf16.gmra.mrb[0].mxu0 %v8060
      %v8309 = vpop.f32.mrb[0].mxu0
      %v8310 = vadd.f32 0.0, %v8309
      %v8311 = vpop.f32.mrb[0].mxu0
      %v8312 = vpop.f32.mrb[0].mxu0
      %v8313 = vadd.f32 0.0, %v8312
      %v8314 = vpop.f32.mrb[0].mxu0
      %8315 = vmatprep.mubr.bf16.mxu0 %v8063
      %8316 = vmatmul.mubr.bf16.gmra.mrb[0].mxu0 %v8062
      %v8317 = vpop.f32.mrb[0].mxu0
      %v8318 = vadd.f32 0.0, %v8317
      %v8319 = vpop.f32.mrb[0].mxu0
      %v8320 = vpop.f32.mrb[0].mxu0
      %v8321 = vadd.f32 0.0, %v8320
      %v8322 = vpop.f32.mrb[0].mxu0
      %8323 = vmatprep.mubr.bf16.mxu0 %v8065
      %8324 = vmatmul.mubr.bf16.gmra.mrb[0].mxu0 %v8064
      %v8325 = vpop.f32.mrb[0].mxu0
      %v8326 = vadd.f32 0.0, %v8325
      %v8327 = vpop.f32.mrb[0].mxu0
      %v8328 = vpop.f32.mrb[0].mxu0
      %v8329 = vadd.f32 0.0, %v8328
      %v8330 = vpop.f32.mrb[0].mxu0
      %8331 = vmatprep.mubr.bf16.mxu0 %v8067
      %8332 = vmatmul.mubr.bf16.gmra.mrb[0].mxu0 %v8066
      %v8333 = vpop.f32.mrb[0].mxu0
      %v8334 = vadd.f32 0.0, %v8333
      %v8335 = vpop.f32.mrb[0].mxu0
      %v8336 = vpop.f32.mrb[0].mxu0
      %v8337 = vadd.f32 0.0, %v8336
      %v8338 = vpop.f32.mrb[0].mxu0
      %8339 = vmatprep.mubr.bf16.mxu0 %v8069
      %8340 = vmatmul.mubr.bf16.gmra.mrb[0].mxu0 %v8068
      %v8341 = vpop.f32.mrb[0].mxu0
      %v8342 = vadd.f32 0.0, %v8341
      %v8343 = vpop.f32.mrb[0].mxu0
      %v8344 = vpop.f32.mrb[0].mxu0
      %v8345 = vadd.f32 0.0, %v8344
      %v8346 = vpop.f32.mrb[0].mxu0
      %8347 = vmatprep.mubr.bf16.mxu0 %v8071
      %8348 = vmatmul.mubr.bf16.gmra.mrb[0].mxu0 %v8070
      %v8349 = vpop.f32.mrb[0].mxu0
      %v8350 = vadd.f32 0.0, %v8349
      %v8351 = vpop.f32.mrb[0].mxu0
      %v8352 = vpop.f32.mrb[0].mxu0
      %v8353 = vadd.f32 0.0, %v8352
      %v8354 = vpop.f32.mrb[0].mxu0
      %8355 = vmatprep.mubr.bf16.mxu0 %v8073
      %8356 = vmatmul.mubr.bf16.gmra.mrb[0].mxu0 %v8072
      %v8357 = vpop.f32.mrb[0].mxu0
      %v8358 = vadd.f32 0.0, %v8357
      %v8359 = vpop.f32.mrb[0].mxu0
      %v8360 = vpop.f32.mrb[0].mxu0
      %v8361 = vadd.f32 0.0, %v8360
      %v8362 = vpop.f32.mrb[0].mxu0
      %8363 = vdwg.mxu0
      %v8364 = vadd.f32 %v8009, %v8238
      %v8365 = vadd.f32 %v8010, %v8241
      %v8366 = vadd.f32 %v8011, %v8246
      %v8367 = vadd.f32 %v8012, %v8249
      %v8368 = vadd.f32 %v8013, %v8254
      %v8369 = vadd.f32 %v8014, %v8257
      %v8370 = vadd.f32 %v8015, %v8262
      %v8371 = vadd.f32 %v8016, %v8265
      %v8372 = vadd.f32 %v8017, %v8270
      %v8373 = vadd.f32 %v8018, %v8273
      %v8374 = vadd.f32 %v8019, %v8278
      %v8375 = vadd.f32 %v8020, %v8281
      %v8376 = vadd.f32 %v8021, %v8286
      %v8377 = vadd.f32 %v8022, %v8289
      %v8378 = vadd.f32 %v8023, %v8294
      %v8379 = vadd.f32 %v8024, %v8297
      %v8380 = vadd.f32 %v8025, %v8302
      %v8381 = vadd.f32 %v8026, %v8305
      %v8382 = vadd.f32 %v8027, %v8310
      %v8383 = vadd.f32 %v8028, %v8313
      %v8384 = vadd.f32 %v8029, %v8318
      %v8385 = vadd.f32 %v8030, %v8321
      %v8386 = vadd.f32 %v8031, %v8326
      %v8387 = vadd.f32 %v8032, %v8329
      %v8388 = vadd.f32 %v8033, %v8334
      %v8389 = vadd.f32 %v8034, %v8337
      %v8390 = vadd.f32 %v8035, %v8342
      %v8391 = vadd.f32 %v8036, %v8345
      %v8392 = vadd.f32 %v8037, %v8350
      %v8393 = vadd.f32 %v8038, %v8353
      %v8394 = vadd.f32 %v8039, %v8358
      %v8395 = vadd.f32 %v8040, %v8361
      %s8396 = scalar_lea.vmem [#allocation5], 304
      %v8397 = vld [vmem:[%s8396] sm:$0xff]
      %v8398 = vld [vmem:[%s8396 + $0x8] sm:$0xff]
      %v8399 = vld [vmem:[%s8396 + $0x10] sm:$0xff]
      %v8400 = vld [vmem:[%s8396 + $0x18] sm:$0xff]
      %v8401 = vld [vmem:[%s8396 + $0x20] sm:$0xff]
      %v8402 = vld [vmem:[%s8396 + $0x28] sm:$0xff]
      %v8403 = vld [vmem:[%s8396 + $0x30] sm:$0xff]
      %v8404 = vld [vmem:[%s8396 + $0x38] sm:$0xff]
      %v8405 = vld [vmem:[%s8396 + $0x40] sm:$0xff]
      %v8406 = vld [vmem:[%s8396 + $0x48] sm:$0xff]
      %v8407 = vld [vmem:[%s8396 + $0x50] sm:$0xff]
      %v8408 = vld [vmem:[%s8396 + $0x58] sm:$0xff]
      %v8409 = vld [vmem:[%s8396 + $0x60] sm:$0xff]
      %v8410 = vld [vmem:[%s8396 + $0x68] sm:$0xff]
      %v8411 = vld [vmem:[%s8396 + $0x70] sm:$0xff]
      %v8412 = vld [vmem:[%s8396 + $0x78] sm:$0xff]
      %v8413 = vld [vmem:[%s8396 + $0x80] sm:$0xff]
      %v8414 = vld [vmem:[%s8396 + $0x88] sm:$0xff]
      %v8415 = vld [vmem:[%s8396 + $0x90] sm:$0xff]
      %v8416 = vld [vmem:[%s8396 + $0x98] sm:$0xff]
      %v8417 = vld [vmem:[%s8396 + $0xa0] sm:$0xff]
      %v8418 = vld [vmem:[%s8396 + $0xa8] sm:$0xff]
      %v8419 = vld [vmem:[%s8396 + $0xb0] sm:$0xff]
      %v8420 = vld [vmem:[%s8396 + $0xb8] sm:$0xff]
      %v8421 = vld [vmem:[%s8396 + $0xc0] sm:$0xff]
      %v8422 = vld [vmem:[%s8396 + $0xc8] sm:$0xff]
      %v8423 = vld [vmem:[%s8396 + $0xd0] sm:$0xff]
      %v8424 = vld [vmem:[%s8396 + $0xd8] sm:$0xff]
      %v8425 = vld [vmem:[%s8396 + $0xe0] sm:$0xff]
      %v8426 = vld [vmem:[%s8396 + $0xe8] sm:$0xff]
      %v8427 = vld [vmem:[%s8396 + $0xf0] sm:$0xff]
      %v8428 = vld [vmem:[%s8396 + $0xf8] sm:$0xff]
      %s8429 = scalar_lea.vmem %s3, 512
      %v8430 = vld [vmem:[%s8429] sm:$0xf]
      %v8431 = vld [vmem:[%s8429 + $0x4] sm:$0xf]
      %v8432 = vld [vmem:[%s8429 + $0x8] sm:$0xf]
      %v8433 = vld [vmem:[%s8429 + $0xc] sm:$0xf]
      %v8434 = vld [vmem:[%s8429 + $0x10] sm:$0xf]
      %v8435 = vld [vmem:[%s8429 + $0x14] sm:$0xf]
      %v8436 = vld [vmem:[%s8429 + $0x18] sm:$0xf]
      %v8437 = vld [vmem:[%s8429 + $0x1c] sm:$0xf]
      %v8438 = vld [vmem:[%s8429 + $0x20] sm:$0xf]
      %v8439 = vld [vmem:[%s8429 + $0x24] sm:$0xf]
      %v8440 = vld [vmem:[%s8429 + $0x28] sm:$0xf]
      %v8441 = vld [vmem:[%s8429 + $0x2c] sm:$0xf]
      %v8442 = vld [vmem:[%s8429 + $0x30] sm:$0xf]
      %v8443 = vld [vmem:[%s8429 + $0x34] sm:$0xf]
      %v8444 = vld [vmem:[%s8429 + $0x38] sm:$0xf]
      %v8445 = vld [vmem:[%s8429 + $0x3c] sm:$0xf]
      %v8446 = vld [vmem:[%s8429 + $0x40] sm:$0xf]
      %v8447 = vld [vmem:[%s8429 + $0x44] sm:$0xf]
      %v8448 = vld [vmem:[%s8429 + $0x48] sm:$0xf]
      %v8449 = vld [vmem:[%s8429 + $0x4c] sm:$0xf]
      %v8450 = vld [vmem:[%s8429 + $0x50] sm:$0xf]
      %v8451 = vld [vmem:[%s8429 + $0x54] sm:$0xf]
      %v8452 = vld [vmem:[%s8429 + $0x58] sm:$0xf]
      %v8453 = vld [vmem:[%s8429 + $0x5c] sm:$0xf]
      %v8454 = vld [vmem:[%s8429 + $0x60] sm:$0xf]
      %v8455 = vld [vmem:[%s8429 + $0x64] sm:$0xf]
      %v8456 = vld [vmem:[%s8429 + $0x68] sm:$0xf]
      %v8457 = vld [vmem:[%s8429 + $0x6c] sm:$0xf]
      %v8458 = vld [vmem:[%s8429 + $0x70] sm:$0xf]
      %v8459 = vld [vmem:[%s8429 + $0x74] sm:$0xf]
      %v8460 = vld [vmem:[%s8429 + $0x78] sm:$0xf]
      %v8461 = vld [vmem:[%s8429 + $0x7c] sm:$0xf]
      %v8494 = vunpack.c.l.b16 %v8430
      %v8495 = vunpack.c.l.b16 %v8431
      %v8496 = vunpack.c.l.b16 %v8432
      %v8497 = vunpack.c.l.b16 %v8433
      %v8498 = vunpack.c.l.b16 %v8434
      %v8499 = vunpack.c.l.b16 %v8435
      %v8500 = vunpack.c.l.b16 %v8436
      %v8501 = vunpack.c.l.b16 %v8437
      %v8502 = vunpack.c.l.b16 %v8438
      %v8503 = vunpack.c.l.b16 %v8439
      %v8504 = vunpack.c.l.b16 %v8440
      %v8505 = vunpack.c.l.b16 %v8441
      %v8506 = vunpack.c.l.b16 %v8442
      %v8507 = vunpack.c.l.b16 %v8443
      %v8508 = vunpack.c.l.b16 %v8444
      %v8509 = vunpack.c.l.b16 %v8445
      %v8510 = vunpack.c.l.b16 %v8446
      %v8511 = vunpack.c.l.b16 %v8447
      %v8512 = vunpack.c.l.b16 %v8448
      %v8513 = vunpack.c.l.b16 %v8449
      %v8514 = vunpack.c.l.b16 %v8450
      %v8515 = vunpack.c.l.b16 %v8451
      %v8516 = vunpack.c.l.b16 %v8452
      %v8517 = vunpack.c.l.b16 %v8453
      %v8518 = vunpack.c.l.b16 %v8454
      %v8519 = vunpack.c.l.b16 %v8455
      %v8520 = vunpack.c.l.b16 %v8456
      %v8521 = vunpack.c.l.b16 %v8457
      %v8522 = vunpack.c.l.b16 %v8458
      %v8523 = vunpack.c.l.b16 %v8459
      %v8524 = vunpack.c.l.b16 %v8460
      %v8525 = vunpack.c.l.b16 %v8461
      %v8526 = vpack.c.b16 %v8495, %v8494
      %v8527 = vpack.c.b16 %v8497, %v8496
      %v8528 = vpack.c.b16 %v8499, %v8498
      %v8529 = vpack.c.b16 %v8501, %v8500
      %v8530 = vpack.c.b16 %v8503, %v8502
      %v8531 = vpack.c.b16 %v8505, %v8504
      %v8532 = vpack.c.b16 %v8507, %v8506
      %v8533 = vpack.c.b16 %v8509, %v8508
      %v8534 = vpack.c.b16 %v8511, %v8510
      %v8535 = vpack.c.b16 %v8513, %v8512
      %v8536 = vpack.c.b16 %v8515, %v8514
      %v8537 = vpack.c.b16 %v8517, %v8516
      %v8538 = vpack.c.b16 %v8519, %v8518
      %v8539 = vpack.c.b16 %v8521, %v8520
      %v8540 = vpack.c.b16 %v8523, %v8522
      %v8541 = vpack.c.b16 %v8525, %v8524
      %8558 = vmatprep.subr.bf16.mxu0 0
      %8559 = vmatpush1.bf16.msra.mxu0 %v8526
      %8560 = vmatprep.subr.bf16.mxu0 0
      %8561 = vmatpush1.bf16.msra.mxu0 %v8527
      %8562 = vmatprep.subr.bf16.mxu0 0
      %8563 = vmatpush1.bf16.msra.mxu0 %v8528
      %8564 = vmatprep.subr.bf16.mxu0 0
      %8565 = vmatpush1.bf16.msra.mxu0 %v8529
      %8566 = vmatprep.subr.bf16.mxu0 0
      %8567 = vmatpush1.bf16.msra.mxu0 %v8530
      %8568 = vmatprep.subr.bf16.mxu0 0
      %8569 = vmatpush1.bf16.msra.mxu0 %v8531
      %8570 = vmatprep.subr.bf16.mxu0 0
      %8571 = vmatpush1.bf16.msra.mxu0 %v8532
      %8572 = vmatprep.subr.bf16.mxu0 0
      %8573 = vmatpush1.bf16.msra.mxu0 %v8533
      %8574 = vmatprep.subr.bf16.mxu0 0
      %8575 = vmatpush1.bf16.msra.mxu0 %v8534
      %8576 = vmatprep.subr.bf16.mxu0 0
      %8577 = vmatpush1.bf16.msra.mxu0 %v8535
      %8578 = vmatprep.subr.bf16.mxu0 0
      %8579 = vmatpush1.bf16.msra.mxu0 %v8536
      %8580 = vmatprep.subr.bf16.mxu0 0
      %8581 = vmatpush1.bf16.msra.mxu0 %v8537
      %8582 = vmatprep.subr.bf16.mxu0 0
      %8583 = vmatpush1.bf16.msra.mxu0 %v8538
      %8584 = vmatprep.subr.bf16.mxu0 0
      %8585 = vmatpush1.bf16.msra.mxu0 %v8539
      %8586 = vmatprep.subr.bf16.mxu0 0
      %8587 = vmatpush1.bf16.msra.mxu0 %v8540
      %8588 = vmatprep.subr.bf16.mxu0 0
      %8589 = vmatpush1.bf16.msra.mxu0 %v8541
      %8590 = vmatprep.mubr.bf16.mxu0 %v8398
      %8591 = vmatmul.mubr.bf16.gmra.mrb[0].mxu0 %v8397
      %v8592 = vpop.f32.mrb[0].mxu0
      %v8593 = vadd.f32 0.0, %v8592
      %v8594 = vpop.f32.mrb[0].mxu0
      %v8595 = vpop.f32.mrb[0].mxu0
      %v8596 = vadd.f32 0.0, %v8595
      %v8597 = vpop.f32.mrb[0].mxu0
      %8598 = vmatprep.mubr.bf16.mxu0 %v8400
      %8599 = vmatmul.mubr.bf16.gmra.mrb[0].mxu0 %v8399
      %v8600 = vpop.f32.mrb[0].mxu0
      %v8601 = vadd.f32 0.0, %v8600
      %v8602 = vpop.f32.mrb[0].mxu0
      %v8603 = vpop.f32.mrb[0].mxu0
      %v8604 = vadd.f32 0.0, %v8603
      %v8605 = vpop.f32.mrb[0].mxu0
      %8606 = vmatprep.mubr.bf16.mxu0 %v8402
      %8607 = vmatmul.mubr.bf16.gmra.mrb[0].mxu0 %v8401
      %v8608 = vpop.f32.mrb[0].mxu0
      %v8609 = vadd.f32 0.0, %v8608
      %v8610 = vpop.f32.mrb[0].mxu0
      %v8611 = vpop.f32.mrb[0].mxu0
      %v8612 = vadd.f32 0.0, %v8611
      %v8613 = vpop.f32.mrb[0].mxu0
      %8614 = vmatprep.mubr.bf16.mxu0 %v8404
      %8615 = vmatmul.mubr.bf16.gmra.mrb[0].mxu0 %v8403
      %v8616 = vpop.f32.mrb[0].mxu0
      %v8617 = vadd.f32 0.0, %v8616
      %v8618 = vpop.f32.mrb[0].mxu0
      %v8619 = vpop.f32.mrb[0].mxu0
      %v8620 = vadd.f32 0.0, %v8619
      %v8621 = vpop.f32.mrb[0].mxu0
      %8622 = vmatprep.mubr.bf16.mxu0 %v8406
      %8623 = vmatmul.mubr.bf16.gmra.mrb[0].mxu0 %v8405
      %v8624 = vpop.f32.mrb[0].mxu0
      %v8625 = vadd.f32 0.0, %v8624
      %v8626 = vpop.f32.mrb[0].mxu0
      %v8627 = vpop.f32.mrb[0].mxu0
      %v8628 = vadd.f32 0.0, %v8627
      %v8629 = vpop.f32.mrb[0].mxu0
      %8630 = vmatprep.mubr.bf16.mxu0 %v8408
      %8631 = vmatmul.mubr.bf16.gmra.mrb[0].mxu0 %v8407
      %v8632 = vpop.f32.mrb[0].mxu0
      %v8633 = vadd.f32 0.0, %v8632
      %v8634 = vpop.f32.mrb[0].mxu0
      %v8635 = vpop.f32.mrb[0].mxu0
      %v8636 = vadd.f32 0.0, %v8635
      %v8637 = vpop.f32.mrb[0].mxu0
      %8638 = vmatprep.mubr.bf16.mxu0 %v8410
      %8639 = vmatmul.mubr.bf16.gmra.mrb[0].mxu0 %v8409
      %v8640 = vpop.f32.mrb[0].mxu0
      %v8641 = vadd.f32 0.0, %v8640
      %v8642 = vpop.f32.mrb[0].mxu0
      %v8643 = vpop.f32.mrb[0].mxu0
      %v8644 = vadd.f32 0.0, %v8643
      %v8645 = vpop.f32.mrb[0].mxu0
      %8646 = vmatprep.mubr.bf16.mxu0 %v8412
      %8647 = vmatmul.mubr.bf16.gmra.mrb[0].mxu0 %v8411
      %v8648 = vpop.f32.mrb[0].mxu0
      %v8649 = vadd.f32 0.0, %v8648
      %v8650 = vpop.f32.mrb[0].mxu0
      %v8651 = vpop.f32.mrb[0].mxu0
      %v8652 = vadd.f32 0.0, %v8651
      %v8653 = vpop.f32.mrb[0].mxu0
      %8654 = vmatprep.mubr.bf16.mxu0 %v8414
      %8655 = vmatmul.mubr.bf16.gmra.mrb[0].mxu0 %v8413
      %v8656 = vpop.f32.mrb[0].mxu0
      %v8657 = vadd.f32 0.0, %v8656
      %v8658 = vpop.f32.mrb[0].mxu0
      %v8659 = vpop.f32.mrb[0].mxu0
      %v8660 = vadd.f32 0.0, %v8659
      %v8661 = vpop.f32.mrb[0].mxu0
      %8662 = vmatprep.mubr.bf16.mxu0 %v8416
      %8663 = vmatmul.mubr.bf16.gmra.mrb[0].mxu0 %v8415
      %v8664 = vpop.f32.mrb[0].mxu0
      %v8665 = vadd.f32 0.0, %v8664
      %v8666 = vpop.f32.mrb[0].mxu0
      %v8667 = vpop.f32.mrb[0].mxu0
      %v8668 = vadd.f32 0.0, %v8667
      %v8669 = vpop.f32.mrb[0].mxu0
      %8670 = vmatprep.mubr.bf16.mxu0 %v8418
      %8671 = vmatmul.mubr.bf16.gmra.mrb[0].mxu0 %v8417
      %v8672 = vpop.f32.mrb[0].mxu0
      %v8673 = vadd.f32 0.0, %v8672
      %v8674 = vpop.f32.mrb[0].mxu0
      %v8675 = vpop.f32.mrb[0].mxu0
      %v8676 = vadd.f32 0.0, %v8675
      %v8677 = vpop.f32.mrb[0].mxu0
      %8678 = vmatprep.mubr.bf16.mxu0 %v8420
      %8679 = vmatmul.mubr.bf16.gmra.mrb[0].mxu0 %v8419
      %v8680 = vpop.f32.mrb[0].mxu0
      %v8681 = vadd.f32 0.0, %v8680
      %v8682 = vpop.f32.mrb[0].mxu0
      %v8683 = vpop.f32.mrb[0].mxu0
      %v8684 = vadd.f32 0.0, %v8683
      %v8685 = vpop.f32.mrb[0].mxu0
      %8686 = vmatprep.mubr.bf16.mxu0 %v8422
      %8687 = vmatmul.mubr.bf16.gmra.mrb[0].mxu0 %v8421
      %v8688 = vpop.f32.mrb[0].mxu0
      %v8689 = vadd.f32 0.0, %v8688
      %v8690 = vpop.f32.mrb[0].mxu0
      %v8691 = vpop.f32.mrb[0].mxu0
      %v8692 = vadd.f32 0.0, %v8691
      %v8693 = vpop.f32.mrb[0].mxu0
      %8694 = vmatprep.mubr.bf16.mxu0 %v8424
      %8695 = vmatmul.mubr.bf16.gmra.mrb[0].mxu0 %v8423
      %v8696 = vpop.f32.mrb[0].mxu0
      %v8697 = vadd.f32 0.0, %v8696
      %v8698 = vpop.f32.mrb[0].mxu0
      %v8699 = vpop.f32.mrb[0].mxu0
      %v8700 = vadd.f32 0.0, %v8699
      %v8701 = vpop.f32.mrb[0].mxu0
      %8702 = vmatprep.mubr.bf16.mxu0 %v8426
      %8703 = vmatmul.mubr.bf16.gmra.mrb[0].mxu0 %v8425
      %v8704 = vpop.f32.mrb[0].mxu0
      %v8705 = vadd.f32 0.0, %v8704
      %v8706 = vpop.f32.mrb[0].mxu0
      %v8707 = vpop.f32.mrb[0].mxu0
      %v8708 = vadd.f32 0.0, %v8707
      %v8709 = vpop.f32.mrb[0].mxu0
      %8710 = vmatprep.mubr.bf16.mxu0 %v8428
      %8711 = vmatmul.mubr.bf16.gmra.mrb[0].mxu0 %v8427
      %v8712 = vpop.f32.mrb[0].mxu0
      %v8713 = vadd.f32 0.0, %v8712
      %v8714 = vpop.f32.mrb[0].mxu0
      %v8715 = vpop.f32.mrb[0].mxu0
      %v8716 = vadd.f32 0.0, %v8715
      %v8717 = vpop.f32.mrb[0].mxu0
      %8718 = vdwg.mxu0
      %v8719 = vadd.f32 %v8364, %v8593
      %v8720 = vadd.f32 %v8365, %v8596
      %v8721 = vadd.f32 %v8366, %v8601
      %v8722 = vadd.f32 %v8367, %v8604
      %v8723 = vadd.f32 %v8368, %v8609
      %v8724 = vadd.f32 %v8369, %v8612
      %v8725 = vadd.f32 %v8370, %v8617
      %v8726 = vadd.f32 %v8371, %v8620
      %v8727 = vadd.f32 %v8372, %v8625
      %v8728 = vadd.f32 %v8373, %v8628
      %v8729 = vadd.f32 %v8374, %v8633
      %v8730 = vadd.f32 %v8375, %v8636
      %v8731 = vadd.f32 %v8376, %v8641
      %v8732 = vadd.f32 %v8377, %v8644
      %v8733 = vadd.f32 %v8378, %v8649
      %v8734 = vadd.f32 %v8379, %v8652
      %v8735 = vadd.f32 %v8380, %v8657
      %v8736 = vadd.f32 %v8381, %v8660
      %v8737 = vadd.f32 %v8382, %v8665
      %v8738 = vadd.f32 %v8383, %v8668
      %v8739 = vadd.f32 %v8384, %v8673
      %v8740 = vadd.f32 %v8385, %v8676
      %v8741 = vadd.f32 %v8386, %v8681
      %v8742 = vadd.f32 %v8387, %v8684
      %v8743 = vadd.f32 %v8388, %v8689
      %v8744 = vadd.f32 %v8389, %v8692
      %v8745 = vadd.f32 %v8390, %v8697
      %v8746 = vadd.f32 %v8391, %v8700
      %v8747 = vadd.f32 %v8392, %v8705
      %v8748 = vadd.f32 %v8393, %v8708
      %v8749 = vadd.f32 %v8394, %v8713
      %v8750 = vadd.f32 %v8395, %v8716
      %s8751 = scalar_lea.vmem [#allocation5], 592
      %v8752 = vld [vmem:[%s8751] sm:$0xff]
      %v8753 = vld [vmem:[%s8751 + $0x8] sm:$0xff]
      %v8754 = vld [vmem:[%s8751 + $0x10] sm:$0xff]
      %v8755 = vld [vmem:[%s8751 + $0x18] sm:$0xff]
      %v8756 = vld [vmem:[%s8751 + $0x20] sm:$0xff]
      %v8757 = vld [vmem:[%s8751 + $0x28] sm:$0xff]
      %v8758 = vld [vmem:[%s8751 + $0x30] sm:$0xff]
      %v8759 = vld [vmem:[%s8751 + $0x38] sm:$0xff]
      %v8760 = vld [vmem:[%s8751 + $0x40] sm:$0xff]
      %v8761 = vld [vmem:[%s8751 + $0x48] sm:$0xff]
      %v8762 = vld [vmem:[%s8751 + $0x50] sm:$0xff]
      %v8763 = vld [vmem:[%s8751 + $0x58] sm:$0xff]
      %v8764 = vld [vmem:[%s8751 + $0x60] sm:$0xff]
      %v8765 = vld [vmem:[%s8751 + $0x68] sm:$0xff]
      %v8766 = vld [vmem:[%s8751 + $0x70] sm:$0xff]
      %v8767 = vld [vmem:[%s8751 + $0x78] sm:$0xff]
      %v8768 = vld [vmem:[%s8751 + $0x80] sm:$0xff]
      %v8769 = vld [vmem:[%s8751 + $0x88] sm:$0xff]
      %v8770 = vld [vmem:[%s8751 + $0x90] sm:$0xff]
      %v8771 = vld [vmem:[%s8751 + $0x98] sm:$0xff]
      %v8772 = vld [vmem:[%s8751 + $0xa0] sm:$0xff]
      %v8773 = vld [vmem:[%s8751 + $0xa8] sm:$0xff]
      %v8774 = vld [vmem:[%s8751 + $0xb0] sm:$0xff]
      %v8775 = vld [vmem:[%s8751 + $0xb8] sm:$0xff]
      %v8776 = vld [vmem:[%s8751 + $0xc0] sm:$0xff]
      %v8777 = vld [vmem:[%s8751 + $0xc8] sm:$0xff]
      %v8778 = vld [vmem:[%s8751 + $0xd0] sm:$0xff]
      %v8779 = vld [vmem:[%s8751 + $0xd8] sm:$0xff]
      %v8780 = vld [vmem:[%s8751 + $0xe0] sm:$0xff]
      %v8781 = vld [vmem:[%s8751 + $0xe8] sm:$0xff]
      %v8782 = vld [vmem:[%s8751 + $0xf0] sm:$0xff]
      %v8783 = vld [vmem:[%s8751 + $0xf8] sm:$0xff]
      %s8784 = scalar_lea.vmem %s3, 640
      %v8785 = vld [vmem:[%s8784] sm:$0xf]
      %v8786 = vld [vmem:[%s8784 + $0x4] sm:$0xf]
      %v8787 = vld [vmem:[%s8784 + $0x8] sm:$0xf]
      %v8788 = vld [vmem:[%s8784 + $0xc] sm:$0xf]
      %v8789 = vld [vmem:[%s8784 + $0x10] sm:$0xf]
      %v8790 = vld [vmem:[%s8784 + $0x14] sm:$0xf]
      %v8791 = vld [vmem:[%s8784 + $0x18] sm:$0xf]
      %v8792 = vld [vmem:[%s8784 + $0x1c] sm:$0xf]
      %v8793 = vld [vmem:[%s8784 + $0x20] sm:$0xf]
      %v8794 = vld [vmem:[%s8784 + $0x24] sm:$0xf]
      %v8795 = vld [vmem:[%s8784 + $0x28] sm:$0xf]
      %v8796 = vld [vmem:[%s8784 + $0x2c] sm:$0xf]
      %v8797 = vld [vmem:[%s8784 + $0x30] sm:$0xf]
      %v8798 = vld [vmem:[%s8784 + $0x34] sm:$0xf]
      %v8799 = vld [vmem:[%s8784 + $0x38] sm:$0xf]
      %v8800 = vld [vmem:[%s8784 + $0x3c] sm:$0xf]
      %v8801 = vld [vmem:[%s8784 + $0x40] sm:$0xf]
      %v8802 = vld [vmem:[%s8784 + $0x44] sm:$0xf]
      %v8803 = vld [vmem:[%s8784 + $0x48] sm:$0xf]
      %v8804 = vld [vmem:[%s8784 + $0x4c] sm:$0xf]
      %v8805 = vld [vmem:[%s8784 + $0x50] sm:$0xf]
      %v8806 = vld [vmem:[%s8784 + $0x54] sm:$0xf]
      %v8807 = vld [vmem:[%s8784 + $0x58] sm:$0xf]
      %v8808 = vld [vmem:[%s8784 + $0x5c] sm:$0xf]
      %v8809 = vld [vmem:[%s8784 + $0x60] sm:$0xf]
      %v8810 = vld [vmem:[%s8784 + $0x64] sm:$0xf]
      %v8811 = vld [vmem:[%s8784 + $0x68] sm:$0xf]
      %v8812 = vld [vmem:[%s8784 + $0x6c] sm:$0xf]
      %v8813 = vld [vmem:[%s8784 + $0x70] sm:$0xf]
      %v8814 = vld [vmem:[%s8784 + $0x74] sm:$0xf]
      %v8815 = vld [vmem:[%s8784 + $0x78] sm:$0xf]
      %v8816 = vld [vmem:[%s8784 + $0x7c] sm:$0xf]
      %v8849 = vunpack.c.l.b16 %v8785
      %v8850 = vunpack.c.l.b16 %v8786
      %v8851 = vunpack.c.l.b16 %v8787
      %v8852 = vunpack.c.l.b16 %v8788
      %v8853 = vunpack.c.l.b16 %v8789
      %v8854 = vunpack.c.l.b16 %v8790
      %v8855 = vunpack.c.l.b16 %v8791
      %v8856 = vunpack.c.l.b16 %v8792
      %v8857 = vunpack.c.l.b16 %v8793
      %v8858 = vunpack.c.l.b16 %v8794
      %v8859 = vunpack.c.l.b16 %v8795
      %v8860 = vunpack.c.l.b16 %v8796
      %v8861 = vunpack.c.l.b16 %v8797
      %v8862 = vunpack.c.l.b16 %v8798
      %v8863 = vunpack.c.l.b16 %v8799
      %v8864 = vunpack.c.l.b16 %v8800
      %v8865 = vunpack.c.l.b16 %v8801
      %v8866 = vunpack.c.l.b16 %v8802
      %v8867 = vunpack.c.l.b16 %v8803
      %v8868 = vunpack.c.l.b16 %v8804
      %v8869 = vunpack.c.l.b16 %v8805
      %v8870 = vunpack.c.l.b16 %v8806
      %v8871 = vunpack.c.l.b16 %v8807
      %v8872 = vunpack.c.l.b16 %v8808
      %v8873 = vunpack.c.l.b16 %v8809
      %v8874 = vunpack.c.l.b16 %v8810
      %v8875 = vunpack.c.l.b16 %v8811
      %v8876 = vunpack.c.l.b16 %v8812
      %v8877 = vunpack.c.l.b16 %v8813
      %v8878 = vunpack.c.l.b16 %v8814
      %v8879 = vunpack.c.l.b16 %v8815
      %v8880 = vunpack.c.l.b16 %v8816
      %v8881 = vpack.c.b16 %v8850, %v8849
      %v8882 = vpack.c.b16 %v8852, %v8851
      %v8883 = vpack.c.b16 %v8854, %v8853
      %v8884 = vpack.c.b16 %v8856, %v8855
      %v8885 = vpack.c.b16 %v8858, %v8857
      %v8886 = vpack.c.b16 %v8860, %v8859
      %v8887 = vpack.c.b16 %v8862, %v8861
      %v8888 = vpack.c.b16 %v8864, %v8863
      %v8889 = vpack.c.b16 %v8866, %v8865
      %v8890 = vpack.c.b16 %v8868, %v8867
      %v8891 = vpack.c.b16 %v8870, %v8869
      %v8892 = vpack.c.b16 %v8872, %v8871
      %v8893 = vpack.c.b16 %v8874, %v8873
      %v8894 = vpack.c.b16 %v8876, %v8875
      %v8895 = vpack.c.b16 %v8878, %v8877
      %v8896 = vpack.c.b16 %v8880, %v8879
      %8913 = vmatprep.subr.bf16.mxu0 0
      %8914 = vmatpush1.bf16.msra.mxu0 %v8881
      %8915 = vmatprep.subr.bf16.mxu0 0
      %8916 = vmatpush1.bf16.msra.mxu0 %v8882
      %8917 = vmatprep.subr.bf16.mxu0 0
      %8918 = vmatpush1.bf16.msra.mxu0 %v8883
      %8919 = vmatprep.subr.bf16.mxu0 0
      %8920 = vmatpush1.bf16.msra.mxu0 %v8884
      %8921 = vmatprep.subr.bf16.mxu0 0
      %8922 = vmatpush1.bf16.msra.mxu0 %v8885
      %8923 = vmatprep.subr.bf16.mxu0 0
      %8924 = vmatpush1.bf16.msra.mxu0 %v8886
      %8925 = vmatprep.subr.bf16.mxu0 0
      %8926 = vmatpush1.bf16.msra.mxu0 %v8887
      %8927 = vmatprep.subr.bf16.mxu0 0
      %8928 = vmatpush1.bf16.msra.mxu0 %v8888
      %8929 = vmatprep.subr.bf16.mxu0 0
      %8930 = vmatpush1.bf16.msra.mxu0 %v8889
      %8931 = vmatprep.subr.bf16.mxu0 0
      %8932 = vmatpush1.bf16.msra.mxu0 %v8890
      %8933 = vmatprep.subr.bf16.mxu0 0
      %8934 = vmatpush1.bf16.msra.mxu0 %v8891
      %8935 = vmatprep.subr.bf16.mxu0 0
      %8936 = vmatpush1.bf16.msra.mxu0 %v8892
      %8937 = vmatprep.subr.bf16.mxu0 0
      %8938 = vmatpush1.bf16.msra.mxu0 %v8893
      %8939 = vmatprep.subr.bf16.mxu0 0
      %8940 = vmatpush1.bf16.msra.mxu0 %v8894
      %8941 = vmatprep.subr.bf16.mxu0 0
      %8942 = vmatpush1.bf16.msra.mxu0 %v8895
      %8943 = vmatprep.subr.bf16.mxu0 0
      %8944 = vmatpush1.bf16.msra.mxu0 %v8896
      %8945 = vmatprep.mubr.bf16.mxu0 %v8753
      %8946 = vmatmul.mubr.bf16.gmra.mrb[0].mxu0 %v8752
      %v8947 = vpop.f32.mrb[0].mxu0
      %v8948 = vadd.f32 0.0, %v8947
      %v8949 = vpop.f32.mrb[0].mxu0
      %v8950 = vpop.f32.mrb[0].mxu0
      %v8951 = vadd.f32 0.0, %v8950
      %v8952 = vpop.f32.mrb[0].mxu0
      %8953 = vmatprep.mubr.bf16.mxu0 %v8755
      %8954 = vmatmul.mubr.bf16.gmra.mrb[0].mxu0 %v8754
      %v8955 = vpop.f32.mrb[0].mxu0
      %v8956 = vadd.f32 0.0, %v8955
      %v8957 = vpop.f32.mrb[0].mxu0
      %v8958 = vpop.f32.mrb[0].mxu0
      %v8959 = vadd.f32 0.0, %v8958
      %v8960 = vpop.f32.mrb[0].mxu0
      %8961 = vmatprep.mubr.bf16.mxu0 %v8757
      %8962 = vmatmul.mubr.bf16.gmra.mrb[0].mxu0 %v8756
      %v8963 = vpop.f32.mrb[0].mxu0
      %v8964 = vadd.f32 0.0, %v8963
      %v8965 = vpop.f32.mrb[0].mxu0
      %v8966 = vpop.f32.mrb[0].mxu0
      %v8967 = vadd.f32 0.0, %v8966
      %v8968 = vpop.f32.mrb[0].mxu0
      %8969 = vmatprep.mubr.bf16.mxu0 %v8759
      %8970 = vmatmul.mubr.bf16.gmra.mrb[0].mxu0 %v8758
      %v8971 = vpop.f32.mrb[0].mxu0
      %v8972 = vadd.f32 0.0, %v8971
      %v8973 = vpop.f32.mrb[0].mxu0
      %v8974 = vpop.f32.mrb[0].mxu0
      %v8975 = vadd.f32 0.0, %v8974
      %v8976 = vpop.f32.mrb[0].mxu0
      %8977 = vmatprep.mubr.bf16.mxu0 %v8761
      %8978 = vmatmul.mubr.bf16.gmra.mrb[0].mxu0 %v8760
      %v8979 = vpop.f32.mrb[0].mxu0
      %v8980 = vadd.f32 0.0, %v8979
      %v8981 = vpop.f32.mrb[0].mxu0
      %v8982 = vpop.f32.mrb[0].mxu0
      %v8983 = vadd.f32 0.0, %v8982
      %v8984 = vpop.f32.mrb[0].mxu0
      %8985 = vmatprep.mubr.bf16.mxu0 %v8763
      %8986 = vmatmul.mubr.bf16.gmra.mrb[0].mxu0 %v8762
      %v8987 = vpop.f32.mrb[0].mxu0
      %v8988 = vadd.f32 0.0, %v8987
      %v8989 = vpop.f32.mrb[0].mxu0
      %v8990 = vpop.f32.mrb[0].mxu0
      %v8991 = vadd.f32 0.0, %v8990
      %v8992 = vpop.f32.mrb[0].mxu0
      %8993 = vmatprep.mubr.bf16.mxu0 %v8765
      %8994 = vmatmul.mubr.bf16.gmra.mrb[0].mxu0 %v8764
      %v8995 = vpop.f32.mrb[0].mxu0
      %v8996 = vadd.f32 0.0, %v8995
      %v8997 = vpop.f32.mrb[0].mxu0
      %v8998 = vpop.f32.mrb[0].mxu0
      %v8999 = vadd.f32 0.0, %v8998
      %v9000 = vpop.f32.mrb[0].mxu0
      %9001 = vmatprep.mubr.bf16.mxu0 %v8767
      %9002 = vmatmul.mubr.bf16.gmra.mrb[0].mxu0 %v8766
      %v9003 = vpop.f32.mrb[0].mxu0
      %v9004 = vadd.f32 0.0, %v9003
      %v9005 = vpop.f32.mrb[0].mxu0
      %v9006 = vpop.f32.mrb[0].mxu0
      %v9007 = vadd.f32 0.0, %v9006
      %v9008 = vpop.f32.mrb[0].mxu0
      %9009 = vmatprep.mubr.bf16.mxu0 %v8769
      %9010 = vmatmul.mubr.bf16.gmra.mrb[0].mxu0 %v8768
      %v9011 = vpop.f32.mrb[0].mxu0
      %v9012 = vadd.f32 0.0, %v9011
      %v9013 = vpop.f32.mrb[0].mxu0
      %v9014 = vpop.f32.mrb[0].mxu0
      %v9015 = vadd.f32 0.0, %v9014
      %v9016 = vpop.f32.mrb[0].mxu0
      %9017 = vmatprep.mubr.bf16.mxu0 %v8771
      %9018 = vmatmul.mubr.bf16.gmra.mrb[0].mxu0 %v8770
      %v9019 = vpop.f32.mrb[0].mxu0
      %v9020 = vadd.f32 0.0, %v9019
      %v9021 = vpop.f32.mrb[0].mxu0
      %v9022 = vpop.f32.mrb[0].mxu0
      %v9023 = vadd.f32 0.0, %v9022
      %v9024 = vpop.f32.mrb[0].mxu0
      %9025 = vmatprep.mubr.bf16.mxu0 %v8773
      %9026 = vmatmul.mubr.bf16.gmra.mrb[0].mxu0 %v8772
      %v9027 = vpop.f32.mrb[0].mxu0
      %v9028 = vadd.f32 0.0, %v9027
      %v9029 = vpop.f32.mrb[0].mxu0
      %v9030 = vpop.f32.mrb[0].mxu0
      %v9031 = vadd.f32 0.0, %v9030
      %v9032 = vpop.f32.mrb[0].mxu0
      %9033 = vmatprep.mubr.bf16.mxu0 %v8775
      %9034 = vmatmul.mubr.bf16.gmra.mrb[0].mxu0 %v8774
      %v9035 = vpop.f32.mrb[0].mxu0
      %v9036 = vadd.f32 0.0, %v9035
      %v9037 = vpop.f32.mrb[0].mxu0
      %v9038 = vpop.f32.mrb[0].mxu0
      %v9039 = vadd.f32 0.0, %v9038
      %v9040 = vpop.f32.mrb[0].mxu0
      %9041 = vmatprep.mubr.bf16.mxu0 %v8777
      %9042 = vmatmul.mubr.bf16.gmra.mrb[0].mxu0 %v8776
      %v9043 = vpop.f32.mrb[0].mxu0
      %v9044 = vadd.f32 0.0, %v9043
      %v9045 = vpop.f32.mrb[0].mxu0
      %v9046 = vpop.f32.mrb[0].mxu0
      %v9047 = vadd.f32 0.0, %v9046
      %v9048 = vpop.f32.mrb[0].mxu0
      %9049 = vmatprep.mubr.bf16.mxu0 %v8779
      %9050 = vmatmul.mubr.bf16.gmra.mrb[0].mxu0 %v8778
      %v9051 = vpop.f32.mrb[0].mxu0
      %v9052 = vadd.f32 0.0, %v9051
      %v9053 = vpop.f32.mrb[0].mxu0
      %v9054 = vpop.f32.mrb[0].mxu0
      %v9055 = vadd.f32 0.0, %v9054
      %v9056 = vpop.f32.mrb[0].mxu0
      %9057 = vmatprep.mubr.bf16.mxu0 %v8781
      %9058 = vmatmul.mubr.bf16.gmra.mrb[0].mxu0 %v8780
      %v9059 = vpop.f32.mrb[0].mxu0
      %v9060 = vadd.f32 0.0, %v9059
      %v9061 = vpop.f32.mrb[0].mxu0
      %v9062 = vpop.f32.mrb[0].mxu0
      %v9063 = vadd.f32 0.0, %v9062
      %v9064 = vpop.f32.mrb[0].mxu0
      %9065 = vmatprep.mubr.bf16.mxu0 %v8783
      %9066 = vmatmul.mubr.bf16.gmra.mrb[0].mxu0 %v8782
      %v9067 = vpop.f32.mrb[0].mxu0
      %v9068 = vadd.f32 0.0, %v9067
      %v9069 = vpop.f32.mrb[0].mxu0
      %v9070 = vpop.f32.mrb[0].mxu0
      %v9071 = vadd.f32 0.0, %v9070
      %v9072 = vpop.f32.mrb[0].mxu0
      %9073 = vdwg.mxu0
      %v9074 = vadd.f32 %v8719, %v8948
      %v9075 = vadd.f32 %v8720, %v8951
      %v9076 = vadd.f32 %v8721, %v8956
      %v9077 = vadd.f32 %v8722, %v8959
      %v9078 = vadd.f32 %v8723, %v8964
      %v9079 = vadd.f32 %v8724, %v8967
      %v9080 = vadd.f32 %v8725, %v8972
      %v9081 = vadd.f32 %v8726, %v8975
      %v9082 = vadd.f32 %v8727, %v8980
      %v9083 = vadd.f32 %v8728, %v8983
      %v9084 = vadd.f32 %v8729, %v8988
      %v9085 = vadd.f32 %v8730, %v8991
      %v9086 = vadd.f32 %v8731, %v8996
      %v9087 = vadd.f32 %v8732, %v8999
      %v9088 = vadd.f32 %v8733, %v9004
      %v9089 = vadd.f32 %v8734, %v9007
      %v9090 = vadd.f32 %v8735, %v9012
      %v9091 = vadd.f32 %v8736, %v9015
      %v9092 = vadd.f32 %v8737, %v9020
      %v9093 = vadd.f32 %v8738, %v9023
      %v9094 = vadd.f32 %v8739, %v9028
      %v9095 = vadd.f32 %v8740, %v9031
      %v9096 = vadd.f32 %v8741, %v9036
      %v9097 = vadd.f32 %v8742, %v9039
      %v9098 = vadd.f32 %v8743, %v9044
      %v9099 = vadd.f32 %v8744, %v9047
      %v9100 = vadd.f32 %v8745, %v9052
      %v9101 = vadd.f32 %v8746, %v9055
      %v9102 = vadd.f32 %v8747, %v9060
      %v9103 = vadd.f32 %v8748, %v9063
      %v9104 = vadd.f32 %v8749, %v9068
      %v9105 = vadd.f32 %v8750, %v9071
      %s9106 = scalar_lea.vmem [#allocation5], 32
      %v9107 = vld [vmem:[%s9106] sm:$0xff]
      %v9108 = vld [vmem:[%s9106 + $0x8] sm:$0xff]
      %v9109 = vld [vmem:[%s9106 + $0x10] sm:$0xff]
      %v9110 = vld [vmem:[%s9106 + $0x18] sm:$0xff]
      %v9111 = vld [vmem:[%s9106 + $0x20] sm:$0xff]
      %v9112 = vld [vmem:[%s9106 + $0x28] sm:$0xff]
      %v9113 = vld [vmem:[%s9106 + $0x30] sm:$0xff]
      %v9114 = vld [vmem:[%s9106 + $0x38] sm:$0xff]
      %v9115 = vld [vmem:[%s9106 + $0x40] sm:$0xff]
      %v9116 = vld [vmem:[%s9106 + $0x48] sm:$0xff]
      %v9117 = vld [vmem:[%s9106 + $0x50] sm:$0xff]
      %v9118 = vld [vmem:[%s9106 + $0x58] sm:$0xff]
      %v9119 = vld [vmem:[%s9106 + $0x60] sm:$0xff]
      %v9120 = vld [vmem:[%s9106 + $0x68] sm:$0xff]
      %v9121 = vld [vmem:[%s9106 + $0x70] sm:$0xff]
      %v9122 = vld [vmem:[%s9106 + $0x78] sm:$0xff]
      %v9123 = vld [vmem:[%s9106 + $0x80] sm:$0xff]
      %v9124 = vld [vmem:[%s9106 + $0x88] sm:$0xff]
      %v9125 = vld [vmem:[%s9106 + $0x90] sm:$0xff]
      %v9126 = vld [vmem:[%s9106 + $0x98] sm:$0xff]
      %v9127 = vld [vmem:[%s9106 + $0xa0] sm:$0xff]
      %v9128 = vld [vmem:[%s9106 + $0xa8] sm:$0xff]
      %v9129 = vld [vmem:[%s9106 + $0xb0] sm:$0xff]
      %v9130 = vld [vmem:[%s9106 + $0xb8] sm:$0xff]
      %v9131 = vld [vmem:[%s9106 + $0xc0] sm:$0xff]
      %v9132 = vld [vmem:[%s9106 + $0xc8] sm:$0xff]
      %v9133 = vld [vmem:[%s9106 + $0xd0] sm:$0xff]
      %v9134 = vld [vmem:[%s9106 + $0xd8] sm:$0xff]
      %v9135 = vld [vmem:[%s9106 + $0xe0] sm:$0xff]
      %v9136 = vld [vmem:[%s9106 + $0xe8] sm:$0xff]
      %v9137 = vld [vmem:[%s9106 + $0xf0] sm:$0xff]
      %v9138 = vld [vmem:[%s9106 + $0xf8] sm:$0xff]
      %s9139 = scalar_lea.vmem %s3, 768
      %v9140 = vld [vmem:[%s9139] sm:$0xf]
      %v9141 = vld [vmem:[%s9139 + $0x4] sm:$0xf]
      %v9142 = vld [vmem:[%s9139 + $0x8] sm:$0xf]
      %v9143 = vld [vmem:[%s9139 + $0xc] sm:$0xf]
      %v9144 = vld [vmem:[%s9139 + $0x10] sm:$0xf]
      %v9145 = vld [vmem:[%s9139 + $0x14] sm:$0xf]
      %v9146 = vld [vmem:[%s9139 + $0x18] sm:$0xf]
      %v9147 = vld [vmem:[%s9139 + $0x1c] sm:$0xf]
      %v9148 = vld [vmem:[%s9139 + $0x20] sm:$0xf]
      %v9149 = vld [vmem:[%s9139 + $0x24] sm:$0xf]
      %v9150 = vld [vmem:[%s9139 + $0x28] sm:$0xf]
      %v9151 = vld [vmem:[%s9139 + $0x2c] sm:$0xf]
      %v9152 = vld [vmem:[%s9139 + $0x30] sm:$0xf]
      %v9153 = vld [vmem:[%s9139 + $0x34] sm:$0xf]
      %v9154 = vld [vmem:[%s9139 + $0x38] sm:$0xf]
      %v9155 = vld [vmem:[%s9139 + $0x3c] sm:$0xf]
      %v9156 = vld [vmem:[%s9139 + $0x40] sm:$0xf]
      %v9157 = vld [vmem:[%s9139 + $0x44] sm:$0xf]
      %v9158 = vld [vmem:[%s9139 + $0x48] sm:$0xf]
      %v9159 = vld [vmem:[%s9139 + $0x4c] sm:$0xf]
      %v9160 = vld [vmem:[%s9139 + $0x50] sm:$0xf]
      %v9161 = vld [vmem:[%s9139 + $0x54] sm:$0xf]
      %v9162 = vld [vmem:[%s9139 + $0x58] sm:$0xf]
      %v9163 = vld [vmem:[%s9139 + $0x5c] sm:$0xf]
      %v9164 = vld [vmem:[%s9139 + $0x60] sm:$0xf]
      %v9165 = vld [vmem:[%s9139 + $0x64] sm:$0xf]
      %v9166 = vld [vmem:[%s9139 + $0x68] sm:$0xf]
      %v9167 = vld [vmem:[%s9139 + $0x6c] sm:$0xf]
      %v9168 = vld [vmem:[%s9139 + $0x70] sm:$0xf]
      %v9169 = vld [vmem:[%s9139 + $0x74] sm:$0xf]
      %v9170 = vld [vmem:[%s9139 + $0x78] sm:$0xf]
      %v9171 = vld [vmem:[%s9139 + $0x7c] sm:$0xf]
      %v9204 = vunpack.c.l.b16 %v9140
      %v9205 = vunpack.c.l.b16 %v9141
      %v9206 = vunpack.c.l.b16 %v9142
      %v9207 = vunpack.c.l.b16 %v9143
      %v9208 = vunpack.c.l.b16 %v9144
      %v9209 = vunpack.c.l.b16 %v9145
      %v9210 = vunpack.c.l.b16 %v9146
      %v9211 = vunpack.c.l.b16 %v9147
      %v9212 = vunpack.c.l.b16 %v9148
      %v9213 = vunpack.c.l.b16 %v9149
      %v9214 = vunpack.c.l.b16 %v9150
      %v9215 = vunpack.c.l.b16 %v9151
      %v9216 = vunpack.c.l.b16 %v9152
      %v9217 = vunpack.c.l.b16 %v9153
      %v9218 = vunpack.c.l.b16 %v9154
      %v9219 = vunpack.c.l.b16 %v9155
      %v9220 = vunpack.c.l.b16 %v9156
      %v9221 = vunpack.c.l.b16 %v9157
      %v9222 = vunpack.c.l.b16 %v9158
      %v9223 = vunpack.c.l.b16 %v9159
      %v9224 = vunpack.c.l.b16 %v9160
      %v9225 = vunpack.c.l.b16 %v9161
      %v9226 = vunpack.c.l.b16 %v9162
      %v9227 = vunpack.c.l.b16 %v9163
      %v9228 = vunpack.c.l.b16 %v9164
      %v9229 = vunpack.c.l.b16 %v9165
      %v9230 = vunpack.c.l.b16 %v9166
      %v9231 = vunpack.c.l.b16 %v9167
      %v9232 = vunpack.c.l.b16 %v9168
      %v9233 = vunpack.c.l.b16 %v9169
      %v9234 = vunpack.c.l.b16 %v9170
      %v9235 = vunpack.c.l.b16 %v9171
      %v9236 = vpack.c.b16 %v9205, %v9204
      %v9237 = vpack.c.b16 %v9207, %v9206
      %v9238 = vpack.c.b16 %v9209, %v9208
      %v9239 = vpack.c.b16 %v9211, %v9210
      %v9240 = vpack.c.b16 %v9213, %v9212
      %v9241 = vpack.c.b16 %v9215, %v9214
      %v9242 = vpack.c.b16 %v9217, %v9216
      %v9243 = vpack.c.b16 %v9219, %v9218
      %v9244 = vpack.c.b16 %v9221, %v9220
      %v9245 = vpack.c.b16 %v9223, %v9222
      %v9246 = vpack.c.b16 %v9225, %v9224
      %v9247 = vpack.c.b16 %v9227, %v9226
      %v9248 = vpack.c.b16 %v9229, %v9228
      %v9249 = vpack.c.b16 %v9231, %v9230
      %v9250 = vpack.c.b16 %v9233, %v9232
      %v9251 = vpack.c.b16 %v9235, %v9234
      %9268 = vmatprep.subr.bf16.mxu0 0
      %9269 = vmatpush1.bf16.msra.mxu0 %v9236
      %9270 = vmatprep.subr.bf16.mxu0 0
      %9271 = vmatpush1.bf16.msra.mxu0 %v9237
      %9272 = vmatprep.subr.bf16.mxu0 0
      %9273 = vmatpush1.bf16.msra.mxu0 %v9238
      %9274 = vmatprep.subr.bf16.mxu0 0
      %9275 = vmatpush1.bf16.msra.mxu0 %v9239
      %9276 = vmatprep.subr.bf16.mxu0 0
      %9277 = vmatpush1.bf16.msra.mxu0 %v9240
      %9278 = vmatprep.subr.bf16.mxu0 0
      %9279 = vmatpush1.bf16.msra.mxu0 %v9241
      %9280 = vmatprep.subr.bf16.mxu0 0
      %9281 = vmatpush1.bf16.msra.mxu0 %v9242
      %9282 = vmatprep.subr.bf16.mxu0 0
      %9283 = vmatpush1.bf16.msra.mxu0 %v9243
      %9284 = vmatprep.subr.bf16.mxu0 0
      %9285 = vmatpush1.bf16.msra.mxu0 %v9244
      %9286 = vmatprep.subr.bf16.mxu0 0
      %9287 = vmatpush1.bf16.msra.mxu0 %v9245
      %9288 = vmatprep.subr.bf16.mxu0 0
      %9289 = vmatpush1.bf16.msra.mxu0 %v9246
      %9290 = vmatprep.subr.bf16.mxu0 0
      %9291 = vmatpush1.bf16.msra.mxu0 %v9247
      %9292 = vmatprep.subr.bf16.mxu0 0
      %9293 = vmatpush1.bf16.msra.mxu0 %v9248
      %9294 = vmatprep.subr.bf16.mxu0 0
      %9295 = vmatpush1.bf16.msra.mxu0 %v9249
      %9296 = vmatprep.subr.bf16.mxu0 0
      %9297 = vmatpush1.bf16.msra.mxu0 %v9250
      %9298 = vmatprep.subr.bf16.mxu0 0
      %9299 = vmatpush1.bf16.msra.mxu0 %v9251
      %9300 = vmatprep.mubr.bf16.mxu0 %v9108
      %9301 = vmatmul.mubr.bf16.gmra.mrb[0].mxu0 %v9107
      %v9302 = vpop.f32.mrb[0].mxu0
      %v9303 = vadd.f32 0.0, %v9302
      %v9304 = vpop.f32.mrb[0].mxu0
      %v9305 = vpop.f32.mrb[0].mxu0
      %v9306 = vadd.f32 0.0, %v9305
      %v9307 = vpop.f32.mrb[0].mxu0
      %9308 = vmatprep.mubr.bf16.mxu0 %v9110
      %9309 = vmatmul.mubr.bf16.gmra.mrb[0].mxu0 %v9109
      %v9310 = vpop.f32.mrb[0].mxu0
      %v9311 = vadd.f32 0.0, %v9310
      %v9312 = vpop.f32.mrb[0].mxu0
      %v9313 = vpop.f32.mrb[0].mxu0
      %v9314 = vadd.f32 0.0, %v9313
      %v9315 = vpop.f32.mrb[0].mxu0
      %9316 = vmatprep.mubr.bf16.mxu0 %v9112
      %9317 = vmatmul.mubr.bf16.gmra.mrb[0].mxu0 %v9111
      %v9318 = vpop.f32.mrb[0].mxu0
      %v9319 = vadd.f32 0.0, %v9318
      %v9320 = vpop.f32.mrb[0].mxu0
      %v9321 = vpop.f32.mrb[0].mxu0
      %v9322 = vadd.f32 0.0, %v9321
      %v9323 = vpop.f32.mrb[0].mxu0
      %9324 = vmatprep.mubr.bf16.mxu0 %v9114
      %9325 = vmatmul.mubr.bf16.gmra.mrb[0].mxu0 %v9113
      %v9326 = vpop.f32.mrb[0].mxu0
      %v9327 = vadd.f32 0.0, %v9326
      %v9328 = vpop.f32.mrb[0].mxu0
      %v9329 = vpop.f32.mrb[0].mxu0
      %v9330 = vadd.f32 0.0, %v9329
      %v9331 = vpop.f32.mrb[0].mxu0
      %9332 = vmatprep.mubr.bf16.mxu0 %v9116
      %9333 = vmatmul.mubr.bf16.gmra.mrb[0].mxu0 %v9115
      %v9334 = vpop.f32.mrb[0].mxu0
      %v9335 = vadd.f32 0.0, %v9334
      %v9336 = vpop.f32.mrb[0].mxu0
      %v9337 = vpop.f32.mrb[0].mxu0
      %v9338 = vadd.f32 0.0, %v9337
      %v9339 = vpop.f32.mrb[0].mxu0
      %9340 = vmatprep.mubr.bf16.mxu0 %v9118
      %9341 = vmatmul.mubr.bf16.gmra.mrb[0].mxu0 %v9117
      %v9342 = vpop.f32.mrb[0].mxu0
      %v9343 = vadd.f32 0.0, %v9342
      %v9344 = vpop.f32.mrb[0].mxu0
      %v9345 = vpop.f32.mrb[0].mxu0
      %v9346 = vadd.f32 0.0, %v9345
      %v9347 = vpop.f32.mrb[0].mxu0
      %9348 = vmatprep.mubr.bf16.mxu0 %v9120
      %9349 = vmatmul.mubr.bf16.gmra.mrb[0].mxu0 %v9119
      %v9350 = vpop.f32.mrb[0].mxu0
      %v9351 = vadd.f32 0.0, %v9350
      %v9352 = vpop.f32.mrb[0].mxu0
      %v9353 = vpop.f32.mrb[0].mxu0
      %v9354 = vadd.f32 0.0, %v9353
      %v9355 = vpop.f32.mrb[0].mxu0
      %9356 = vmatprep.mubr.bf16.mxu0 %v9122
      %9357 = vmatmul.mubr.bf16.gmra.mrb[0].mxu0 %v9121
      %v9358 = vpop.f32.mrb[0].mxu0
      %v9359 = vadd.f32 0.0, %v9358
      %v9360 = vpop.f32.mrb[0].mxu0
      %v9361 = vpop.f32.mrb[0].mxu0
      %v9362 = vadd.f32 0.0, %v9361
      %v9363 = vpop.f32.mrb[0].mxu0
      %9364 = vmatprep.mubr.bf16.mxu0 %v9124
      %9365 = vmatmul.mubr.bf16.gmra.mrb[0].mxu0 %v9123
      %v9366 = vpop.f32.mrb[0].mxu0
      %v9367 = vadd.f32 0.0, %v9366
      %v9368 = vpop.f32.mrb[0].mxu0
      %v9369 = vpop.f32.mrb[0].mxu0
      %v9370 = vadd.f32 0.0, %v9369
      %v9371 = vpop.f32.mrb[0].mxu0
      %9372 = vmatprep.mubr.bf16.mxu0 %v9126
      %9373 = vmatmul.mubr.bf16.gmra.mrb[0].mxu0 %v9125
      %v9374 = vpop.f32.mrb[0].mxu0
      %v9375 = vadd.f32 0.0, %v9374
      %v9376 = vpop.f32.mrb[0].mxu0
      %v9377 = vpop.f32.mrb[0].mxu0
      %v9378 = vadd.f32 0.0, %v9377
      %v9379 = vpop.f32.mrb[0].mxu0
      %9380 = vmatprep.mubr.bf16.mxu0 %v9128
      %9381 = vmatmul.mubr.bf16.gmra.mrb[0].mxu0 %v9127
      %v9382 = vpop.f32.mrb[0].mxu0
      %v9383 = vadd.f32 0.0, %v9382
      %v9384 = vpop.f32.mrb[0].mxu0
      %v9385 = vpop.f32.mrb[0].mxu0
      %v9386 = vadd.f32 0.0, %v9385
      %v9387 = vpop.f32.mrb[0].mxu0
      %9388 = vmatprep.mubr.bf16.mxu0 %v9130
      %9389 = vmatmul.mubr.bf16.gmra.mrb[0].mxu0 %v9129
      %v9390 = vpop.f32.mrb[0].mxu0
      %v9391 = vadd.f32 0.0, %v9390
      %v9392 = vpop.f32.mrb[0].mxu0
      %v9393 = vpop.f32.mrb[0].mxu0
      %v9394 = vadd.f32 0.0, %v9393
      %v9395 = vpop.f32.mrb[0].mxu0
      %9396 = vmatprep.mubr.bf16.mxu0 %v9132
      %9397 = vmatmul.mubr.bf16.gmra.mrb[0].mxu0 %v9131
      %v9398 = vpop.f32.mrb[0].mxu0
      %v9399 = vadd.f32 0.0, %v9398
      %v9400 = vpop.f32.mrb[0].mxu0
      %v9401 = vpop.f32.mrb[0].mxu0
      %v9402 = vadd.f32 0.0, %v9401
      %v9403 = vpop.f32.mrb[0].mxu0
      %9404 = vmatprep.mubr.bf16.mxu0 %v9134
      %9405 = vmatmul.mubr.bf16.gmra.mrb[0].mxu0 %v9133
      %v9406 = vpop.f32.mrb[0].mxu0
      %v9407 = vadd.f32 0.0, %v9406
      %v9408 = vpop.f32.mrb[0].mxu0
      %v9409 = vpop.f32.mrb[0].mxu0
      %v9410 = vadd.f32 0.0, %v9409
      %v9411 = vpop.f32.mrb[0].mxu0
      %9412 = vmatprep.mubr.bf16.mxu0 %v9136
      %9413 = vmatmul.mubr.bf16.gmra.mrb[0].mxu0 %v9135
      %v9414 = vpop.f32.mrb[0].mxu0
      %v9415 = vadd.f32 0.0, %v9414
      %v9416 = vpop.f32.mrb[0].mxu0
      %v9417 = vpop.f32.mrb[0].mxu0
      %v9418 = vadd.f32 0.0, %v9417
      %v9419 = vpop.f32.mrb[0].mxu0
      %9420 = vmatprep.mubr.bf16.mxu0 %v9138
      %9421 = vmatmul.mubr.bf16.gmra.mrb[0].mxu0 %v9137
      %v9422 = vpop.f32.mrb[0].mxu0
      %v9423 = vadd.f32 0.0, %v9422
      %v9424 = vpop.f32.mrb[0].mxu0
      %v9425 = vpop.f32.mrb[0].mxu0
      %v9426 = vadd.f32 0.0, %v9425
      %v9427 = vpop.f32.mrb[0].mxu0
      %9428 = vdwg.mxu0
      %v9429 = vadd.f32 %v9074, %v9303
      %v9430 = vadd.f32 %v9075, %v9306
      %v9431 = vadd.f32 %v9076, %v9311
      %v9432 = vadd.f32 %v9077, %v9314
      %v9433 = vadd.f32 %v9078, %v9319
      %v9434 = vadd.f32 %v9079, %v9322
      %v9435 = vadd.f32 %v9080, %v9327
      %v9436 = vadd.f32 %v9081, %v9330
      %v9437 = vadd.f32 %v9082, %v9335
      %v9438 = vadd.f32 %v9083, %v9338
      %v9439 = vadd.f32 %v9084, %v9343
      %v9440 = vadd.f32 %v9085, %v9346
      %v9441 = vadd.f32 %v9086, %v9351
      %v9442 = vadd.f32 %v9087, %v9354
      %v9443 = vadd.f32 %v9088, %v9359
      %v9444 = vadd.f32 %v9089, %v9362
      %v9445 = vadd.f32 %v9090, %v9367
      %v9446 = vadd.f32 %v9091, %v9370
      %v9447 = vadd.f32 %v9092, %v9375
      %v9448 = vadd.f32 %v9093, %v9378
      %v9449 = vadd.f32 %v9094, %v9383
      %v9450 = vadd.f32 %v9095, %v9386
      %v9451 = vadd.f32 %v9096, %v9391
      %v9452 = vadd.f32 %v9097, %v9394
      %v9453 = vadd.f32 %v9098, %v9399
      %v9454 = vadd.f32 %v9099, %v9402
      %v9455 = vadd.f32 %v9100, %v9407
      %v9456 = vadd.f32 %v9101, %v9410
      %v9457 = vadd.f32 %v9102, %v9415
      %v9458 = vadd.f32 %v9103, %v9418
      %v9459 = vadd.f32 %v9104, %v9423
      %v9460 = vadd.f32 %v9105, %v9426
      %s9461 = scalar_lea.vmem [#allocation5], 320
      %v9462 = vld [vmem:[%s9461] sm:$0xff]
      %v9463 = vld [vmem:[%s9461 + $0x8] sm:$0xff]
      %v9464 = vld [vmem:[%s9461 + $0x10] sm:$0xff]
      %v9465 = vld [vmem:[%s9461 + $0x18] sm:$0xff]
      %v9466 = vld [vmem:[%s9461 + $0x20] sm:$0xff]
      %v9467 = vld [vmem:[%s9461 + $0x28] sm:$0xff]
      %v9468 = vld [vmem:[%s9461 + $0x30] sm:$0xff]
      %v9469 = vld [vmem:[%s9461 + $0x38] sm:$0xff]
      %v9470 = vld [vmem:[%s9461 + $0x40] sm:$0xff]
      %v9471 = vld [vmem:[%s9461 + $0x48] sm:$0xff]
      %v9472 = vld [vmem:[%s9461 + $0x50] sm:$0xff]
      %v9473 = vld [vmem:[%s9461 + $0x58] sm:$0xff]
      %v9474 = vld [vmem:[%s9461 + $0x60] sm:$0xff]
      %v9475 = vld [vmem:[%s9461 + $0x68] sm:$0xff]
      %v9476 = vld [vmem:[%s9461 + $0x70] sm:$0xff]
      %v9477 = vld [vmem:[%s9461 + $0x78] sm:$0xff]
      %v9478 = vld [vmem:[%s9461 + $0x80] sm:$0xff]
      %v9479 = vld [vmem:[%s9461 + $0x88] sm:$0xff]
      %v9480 = vld [vmem:[%s9461 + $0x90] sm:$0xff]
      %v9481 = vld [vmem:[%s9461 + $0x98] sm:$0xff]
      %v9482 = vld [vmem:[%s9461 + $0xa0] sm:$0xff]
      %v9483 = vld [vmem:[%s9461 + $0xa8] sm:$0xff]
      %v9484 = vld [vmem:[%s9461 + $0xb0] sm:$0xff]
      %v9485 = vld [vmem:[%s9461 + $0xb8] sm:$0xff]
      %v9486 = vld [vmem:[%s9461 + $0xc0] sm:$0xff]
      %v9487 = vld [vmem:[%s9461 + $0xc8] sm:$0xff]
      %v9488 = vld [vmem:[%s9461 + $0xd0] sm:$0xff]
      %v9489 = vld [vmem:[%s9461 + $0xd8] sm:$0xff]
      %v9490 = vld [vmem:[%s9461 + $0xe0] sm:$0xff]
      %v9491 = vld [vmem:[%s9461 + $0xe8] sm:$0xff]
      %v9492 = vld [vmem:[%s9461 + $0xf0] sm:$0xff]
      %v9493 = vld [vmem:[%s9461 + $0xf8] sm:$0xff]
      %s9494 = scalar_lea.vmem %s3, 896
      %v9495 = vld [vmem:[%s9494] sm:$0xf]
      %v9496 = vld [vmem:[%s9494 + $0x4] sm:$0xf]
      %v9497 = vld [vmem:[%s9494 + $0x8] sm:$0xf]
      %v9498 = vld [vmem:[%s9494 + $0xc] sm:$0xf]
      %v9499 = vld [vmem:[%s9494 + $0x10] sm:$0xf]
      %v9500 = vld [vmem:[%s9494 + $0x14] sm:$0xf]
      %v9501 = vld [vmem:[%s9494 + $0x18] sm:$0xf]
      %v9502 = vld [vmem:[%s9494 + $0x1c] sm:$0xf]
      %v9503 = vld [vmem:[%s9494 + $0x20] sm:$0xf]
      %v9504 = vld [vmem:[%s9494 + $0x24] sm:$0xf]
      %v9505 = vld [vmem:[%s9494 + $0x28] sm:$0xf]
      %v9506 = vld [vmem:[%s9494 + $0x2c] sm:$0xf]
      %v9507 = vld [vmem:[%s9494 + $0x30] sm:$0xf]
      %v9508 = vld [vmem:[%s9494 + $0x34] sm:$0xf]
      %v9509 = vld [vmem:[%s9494 + $0x38] sm:$0xf]
      %v9510 = vld [vmem:[%s9494 + $0x3c] sm:$0xf]
      %v9511 = vld [vmem:[%s9494 + $0x40] sm:$0xf]
      %v9512 = vld [vmem:[%s9494 + $0x44] sm:$0xf]
      %v9513 = vld [vmem:[%s9494 + $0x48] sm:$0xf]
      %v9514 = vld [vmem:[%s9494 + $0x4c] sm:$0xf]
      %v9515 = vld [vmem:[%s9494 + $0x50] sm:$0xf]
      %v9516 = vld [vmem:[%s9494 + $0x54] sm:$0xf]
      %v9517 = vld [vmem:[%s9494 + $0x58] sm:$0xf]
      %v9518 = vld [vmem:[%s9494 + $0x5c] sm:$0xf]
      %v9519 = vld [vmem:[%s9494 + $0x60] sm:$0xf]
      %v9520 = vld [vmem:[%s9494 + $0x64] sm:$0xf]
      %v9521 = vld [vmem:[%s9494 + $0x68] sm:$0xf]
      %v9522 = vld [vmem:[%s9494 + $0x6c] sm:$0xf]
      %v9523 = vld [vmem:[%s9494 + $0x70] sm:$0xf]
      %v9524 = vld [vmem:[%s9494 + $0x74] sm:$0xf]
      %v9525 = vld [vmem:[%s9494 + $0x78] sm:$0xf]
      %v9526 = vld [vmem:[%s9494 + $0x7c] sm:$0xf]
      %v9559 = vunpack.c.l.b16 %v9495
      %v9560 = vunpack.c.l.b16 %v9496
      %v9561 = vunpack.c.l.b16 %v9497
      %v9562 = vunpack.c.l.b16 %v9498
      %v9563 = vunpack.c.l.b16 %v9499
      %v9564 = vunpack.c.l.b16 %v9500
      %v9565 = vunpack.c.l.b16 %v9501
      %v9566 = vunpack.c.l.b16 %v9502
      %v9567 = vunpack.c.l.b16 %v9503
      %v9568 = vunpack.c.l.b16 %v9504
      %v9569 = vunpack.c.l.b16 %v9505
      %v9570 = vunpack.c.l.b16 %v9506
      %v9571 = vunpack.c.l.b16 %v9507
      %v9572 = vunpack.c.l.b16 %v9508
      %v9573 = vunpack.c.l.b16 %v9509
      %v9574 = vunpack.c.l.b16 %v9510
      %v9575 = vunpack.c.l.b16 %v9511
      %v9576 = vunpack.c.l.b16 %v9512
      %v9577 = vunpack.c.l.b16 %v9513
      %v9578 = vunpack.c.l.b16 %v9514
      %v9579 = vunpack.c.l.b16 %v9515
      %v9580 = vunpack.c.l.b16 %v9516
      %v9581 = vunpack.c.l.b16 %v9517
      %v9582 = vunpack.c.l.b16 %v9518
      %v9583 = vunpack.c.l.b16 %v9519
      %v9584 = vunpack.c.l.b16 %v9520
      %v9585 = vunpack.c.l.b16 %v9521
      %v9586 = vunpack.c.l.b16 %v9522
      %v9587 = vunpack.c.l.b16 %v9523
      %v9588 = vunpack.c.l.b16 %v9524
      %v9589 = vunpack.c.l.b16 %v9525
      %v9590 = vunpack.c.l.b16 %v9526
      %v9591 = vpack.c.b16 %v9560, %v9559
      %v9592 = vpack.c.b16 %v9562, %v9561
      %v9593 = vpack.c.b16 %v9564, %v9563
      %v9594 = vpack.c.b16 %v9566, %v9565
      %v9595 = vpack.c.b16 %v9568, %v9567
      %v9596 = vpack.c.b16 %v9570, %v9569
      %v9597 = vpack.c.b16 %v9572, %v9571
      %v9598 = vpack.c.b16 %v9574, %v9573
      %v9599 = vpack.c.b16 %v9576, %v9575
      %v9600 = vpack.c.b16 %v9578, %v9577
      %v9601 = vpack.c.b16 %v9580, %v9579
      %v9602 = vpack.c.b16 %v9582, %v9581
      %v9603 = vpack.c.b16 %v9584, %v9583
      %v9604 = vpack.c.b16 %v9586, %v9585
      %v9605 = vpack.c.b16 %v9588, %v9587
      %v9606 = vpack.c.b16 %v9590, %v9589
      %9623 = vmatprep.subr.bf16.mxu0 0
      %9624 = vmatpush1.bf16.msra.mxu0 %v9591
      %9625 = vmatprep.subr.bf16.mxu0 0
      %9626 = vmatpush1.bf16.msra.mxu0 %v9592
      %9627 = vmatprep.subr.bf16.mxu0 0
      %9628 = vmatpush1.bf16.msra.mxu0 %v9593
      %9629 = vmatprep.subr.bf16.mxu0 0
      %9630 = vmatpush1.bf16.msra.mxu0 %v9594
      %9631 = vmatprep.subr.bf16.mxu0 0
      %9632 = vmatpush1.bf16.msra.mxu0 %v9595
      %9633 = vmatprep.subr.bf16.mxu0 0
      %9634 = vmatpush1.bf16.msra.mxu0 %v9596
      %9635 = vmatprep.subr.bf16.mxu0 0
      %9636 = vmatpush1.bf16.msra.mxu0 %v9597
      %9637 = vmatprep.subr.bf16.mxu0 0
      %9638 = vmatpush1.bf16.msra.mxu0 %v9598
      %9639 = vmatprep.subr.bf16.mxu0 0
      %9640 = vmatpush1.bf16.msra.mxu0 %v9599
      %9641 = vmatprep.subr.bf16.mxu0 0
      %9642 = vmatpush1.bf16.msra.mxu0 %v9600
      %9643 = vmatprep.subr.bf16.mxu0 0
      %9644 = vmatpush1.bf16.msra.mxu0 %v9601
      %9645 = vmatprep.subr.bf16.mxu0 0
      %9646 = vmatpush1.bf16.msra.mxu0 %v9602
      %9647 = vmatprep.subr.bf16.mxu0 0
      %9648 = vmatpush1.bf16.msra.mxu0 %v9603
      %9649 = vmatprep.subr.bf16.mxu0 0
      %9650 = vmatpush1.bf16.msra.mxu0 %v9604
      %9651 = vmatprep.subr.bf16.mxu0 0
      %9652 = vmatpush1.bf16.msra.mxu0 %v9605
      %9653 = vmatprep.subr.bf16.mxu0 0
      %9654 = vmatpush1.bf16.msra.mxu0 %v9606
      %9655 = vmatprep.mubr.bf16.mxu0 %v9463
      %9656 = vmatmul.mubr.bf16.gmra.mrb[0].mxu0 %v9462
      %v9657 = vpop.f32.mrb[0].mxu0
      %v9658 = vadd.f32 0.0, %v9657
      %v9659 = vpop.f32.mrb[0].mxu0
      %v9660 = vpop.f32.mrb[0].mxu0
      %v9661 = vadd.f32 0.0, %v9660
      %v9662 = vpop.f32.mrb[0].mxu0
      %9663 = vmatprep.mubr.bf16.mxu0 %v9465
      %9664 = vmatmul.mubr.bf16.gmra.mrb[0].mxu0 %v9464
      %v9665 = vpop.f32.mrb[0].mxu0
      %v9666 = vadd.f32 0.0, %v9665
      %v9667 = vpop.f32.mrb[0].mxu0
      %v9668 = vpop.f32.mrb[0].mxu0
      %v9669 = vadd.f32 0.0, %v9668
      %v9670 = vpop.f32.mrb[0].mxu0
      %9671 = vmatprep.mubr.bf16.mxu0 %v9467
      %9672 = vmatmul.mubr.bf16.gmra.mrb[0].mxu0 %v9466
      %v9673 = vpop.f32.mrb[0].mxu0
      %v9674 = vadd.f32 0.0, %v9673
      %v9675 = vpop.f32.mrb[0].mxu0
      %v9676 = vpop.f32.mrb[0].mxu0
      %v9677 = vadd.f32 0.0, %v9676
      %v9678 = vpop.f32.mrb[0].mxu0
      %9679 = vmatprep.mubr.bf16.mxu0 %v9469
      %9680 = vmatmul.mubr.bf16.gmra.mrb[0].mxu0 %v9468
      %v9681 = vpop.f32.mrb[0].mxu0
      %v9682 = vadd.f32 0.0, %v9681
      %v9683 = vpop.f32.mrb[0].mxu0
      %v9684 = vpop.f32.mrb[0].mxu0
      %v9685 = vadd.f32 0.0, %v9684
      %v9686 = vpop.f32.mrb[0].mxu0
      %9687 = vmatprep.mubr.bf16.mxu0 %v9471
      %9688 = vmatmul.mubr.bf16.gmra.mrb[0].mxu0 %v9470
      %v9689 = vpop.f32.mrb[0].mxu0
      %v9690 = vadd.f32 0.0, %v9689
      %v9691 = vpop.f32.mrb[0].mxu0
      %v9692 = vpop.f32.mrb[0].mxu0
      %v9693 = vadd.f32 0.0, %v9692
      %v9694 = vpop.f32.mrb[0].mxu0
      %9695 = vmatprep.mubr.bf16.mxu0 %v9473
      %9696 = vmatmul.mubr.bf16.gmra.mrb[0].mxu0 %v9472
      %v9697 = vpop.f32.mrb[0].mxu0
      %v9698 = vadd.f32 0.0, %v9697
      %v9699 = vpop.f32.mrb[0].mxu0
      %v9700 = vpop.f32.mrb[0].mxu0
      %v9701 = vadd.f32 0.0, %v9700
      %v9702 = vpop.f32.mrb[0].mxu0
      %9703 = vmatprep.mubr.bf16.mxu0 %v9475
      %9704 = vmatmul.mubr.bf16.gmra.mrb[0].mxu0 %v9474
      %v9705 = vpop.f32.mrb[0].mxu0
      %v9706 = vadd.f32 0.0, %v9705
      %v9707 = vpop.f32.mrb[0].mxu0
      %v9708 = vpop.f32.mrb[0].mxu0
      %v9709 = vadd.f32 0.0, %v9708
      %v9710 = vpop.f32.mrb[0].mxu0
      %9711 = vmatprep.mubr.bf16.mxu0 %v9477
      %9712 = vmatmul.mubr.bf16.gmra.mrb[0].mxu0 %v9476
      %v9713 = vpop.f32.mrb[0].mxu0
      %v9714 = vadd.f32 0.0, %v9713
      %v9715 = vpop.f32.mrb[0].mxu0
      %v9716 = vpop.f32.mrb[0].mxu0
      %v9717 = vadd.f32 0.0, %v9716
      %v9718 = vpop.f32.mrb[0].mxu0
      %9719 = vmatprep.mubr.bf16.mxu0 %v9479
      %9720 = vmatmul.mubr.bf16.gmra.mrb[0].mxu0 %v9478
      %v9721 = vpop.f32.mrb[0].mxu0
      %v9722 = vadd.f32 0.0, %v9721
      %v9723 = vpop.f32.mrb[0].mxu0
      %v9724 = vpop.f32.mrb[0].mxu0
      %v9725 = vadd.f32 0.0, %v9724
      %v9726 = vpop.f32.mrb[0].mxu0
      %9727 = vmatprep.mubr.bf16.mxu0 %v9481
      %9728 = vmatmul.mubr.bf16.gmra.mrb[0].mxu0 %v9480
      %v9729 = vpop.f32.mrb[0].mxu0
      %v9730 = vadd.f32 0.0, %v9729
      %v9731 = vpop.f32.mrb[0].mxu0
      %v9732 = vpop.f32.mrb[0].mxu0
      %v9733 = vadd.f32 0.0, %v9732
      %v9734 = vpop.f32.mrb[0].mxu0
      %9735 = vmatprep.mubr.bf16.mxu0 %v9483
      %9736 = vmatmul.mubr.bf16.gmra.mrb[0].mxu0 %v9482
      %v9737 = vpop.f32.mrb[0].mxu0
      %v9738 = vadd.f32 0.0, %v9737
      %v9739 = vpop.f32.mrb[0].mxu0
      %v9740 = vpop.f32.mrb[0].mxu0
      %v9741 = vadd.f32 0.0, %v9740
      %v9742 = vpop.f32.mrb[0].mxu0
      %9743 = vmatprep.mubr.bf16.mxu0 %v9485
      %9744 = vmatmul.mubr.bf16.gmra.mrb[0].mxu0 %v9484
      %v9745 = vpop.f32.mrb[0].mxu0
      %v9746 = vadd.f32 0.0, %v9745
      %v9747 = vpop.f32.mrb[0].mxu0
      %v9748 = vpop.f32.mrb[0].mxu0
      %v9749 = vadd.f32 0.0, %v9748
      %v9750 = vpop.f32.mrb[0].mxu0
      %9751 = vmatprep.mubr.bf16.mxu0 %v9487
      %9752 = vmatmul.mubr.bf16.gmra.mrb[0].mxu0 %v9486
      %v9753 = vpop.f32.mrb[0].mxu0
      %v9754 = vadd.f32 0.0, %v9753
      %v9755 = vpop.f32.mrb[0].mxu0
      %v9756 = vpop.f32.mrb[0].mxu0
      %v9757 = vadd.f32 0.0, %v9756
      %v9758 = vpop.f32.mrb[0].mxu0
      %9759 = vmatprep.mubr.bf16.mxu0 %v9489
      %9760 = vmatmul.mubr.bf16.gmra.mrb[0].mxu0 %v9488
      %v9761 = vpop.f32.mrb[0].mxu0
      %v9762 = vadd.f32 0.0, %v9761
      %v9763 = vpop.f32.mrb[0].mxu0
      %v9764 = vpop.f32.mrb[0].mxu0
      %v9765 = vadd.f32 0.0, %v9764
      %v9766 = vpop.f32.mrb[0].mxu0
      %9767 = vmatprep.mubr.bf16.mxu0 %v9491
      %9768 = vmatmul.mubr.bf16.gmra.mrb[0].mxu0 %v9490
      %v9769 = vpop.f32.mrb[0].mxu0
      %v9770 = vadd.f32 0.0, %v9769
      %v9771 = vpop.f32.mrb[0].mxu0
      %v9772 = vpop.f32.mrb[0].mxu0
      %v9773 = vadd.f32 0.0, %v9772
      %v9774 = vpop.f32.mrb[0].mxu0
      %9775 = vmatprep.mubr.bf16.mxu0 %v9493
      %9776 = vmatmul.mubr.bf16.gmra.mrb[0].mxu0 %v9492
      %v9777 = vpop.f32.mrb[0].mxu0
      %v9778 = vadd.f32 0.0, %v9777
      %v9779 = vpop.f32.mrb[0].mxu0
      %v9780 = vpop.f32.mrb[0].mxu0
      %v9781 = vadd.f32 0.0, %v9780
      %v9782 = vpop.f32.mrb[0].mxu0
      %9783 = vdwg.mxu0
      %v9784 = vadd.f32 %v9429, %v9658
      %v9785 = vadd.f32 %v9430, %v9661
      %v9786 = vadd.f32 %v9431, %v9666
      %v9787 = vadd.f32 %v9432, %v9669
      %v9788 = vadd.f32 %v9433, %v9674
      %v9789 = vadd.f32 %v9434, %v9677
      %v9790 = vadd.f32 %v9435, %v9682
      %v9791 = vadd.f32 %v9436, %v9685
      %v9792 = vadd.f32 %v9437, %v9690
      %v9793 = vadd.f32 %v9438, %v9693
      %v9794 = vadd.f32 %v9439, %v9698
      %v9795 = vadd.f32 %v9440, %v9701
      %v9796 = vadd.f32 %v9441, %v9706
      %v9797 = vadd.f32 %v9442, %v9709
      %v9798 = vadd.f32 %v9443, %v9714
      %v9799 = vadd.f32 %v9444, %v9717
      %v9800 = vadd.f32 %v9445, %v9722
      %v9801 = vadd.f32 %v9446, %v9725
      %v9802 = vadd.f32 %v9447, %v9730
      %v9803 = vadd.f32 %v9448, %v9733
      %v9804 = vadd.f32 %v9449, %v9738
      %v9805 = vadd.f32 %v9450, %v9741
      %v9806 = vadd.f32 %v9451, %v9746
      %v9807 = vadd.f32 %v9452, %v9749
      %v9808 = vadd.f32 %v9453, %v9754
      %v9809 = vadd.f32 %v9454, %v9757
      %v9810 = vadd.f32 %v9455, %v9762
      %v9811 = vadd.f32 %v9456, %v9765
      %v9812 = vadd.f32 %v9457, %v9770
      %v9813 = vadd.f32 %v9458, %v9773
      %v9814 = vadd.f32 %v9459, %v9778
      %v9815 = vadd.f32 %v9460, %v9781
      %s9816 = scalar_lea.vmem [#allocation5], 608
      %v9817 = vld [vmem:[%s9816] sm:$0xff]
      %v9818 = vld [vmem:[%s9816 + $0x8] sm:$0xff]
      %v9819 = vld [vmem:[%s9816 + $0x10] sm:$0xff]
      %v9820 = vld [vmem:[%s9816 + $0x18] sm:$0xff]
      %v9821 = vld [vmem:[%s9816 + $0x20] sm:$0xff]
      %v9822 = vld [vmem:[%s9816 + $0x28] sm:$0xff]
      %v9823 = vld [vmem:[%s9816 + $0x30] sm:$0xff]
      %v9824 = vld [vmem:[%s9816 + $0x38] sm:$0xff]
      %v9825 = vld [vmem:[%s9816 + $0x40] sm:$0xff]
      %v9826 = vld [vmem:[%s9816 + $0x48] sm:$0xff]
      %v9827 = vld [vmem:[%s9816 + $0x50] sm:$0xff]
      %v9828 = vld [vmem:[%s9816 + $0x58] sm:$0xff]
      %v9829 = vld [vmem:[%s9816 + $0x60] sm:$0xff]
      %v9830 = vld [vmem:[%s9816 + $0x68] sm:$0xff]
      %v9831 = vld [vmem:[%s9816 + $0x70] sm:$0xff]
      %v9832 = vld [vmem:[%s9816 + $0x78] sm:$0xff]
      %v9833 = vld [vmem:[%s9816 + $0x80] sm:$0xff]
      %v9834 = vld [vmem:[%s9816 + $0x88] sm:$0xff]
      %v9835 = vld [vmem:[%s9816 + $0x90] sm:$0xff]
      %v9836 = vld [vmem:[%s9816 + $0x98] sm:$0xff]
      %v9837 = vld [vmem:[%s9816 + $0xa0] sm:$0xff]
      %v9838 = vld [vmem:[%s9816 + $0xa8] sm:$0xff]
      %v9839 = vld [vmem:[%s9816 + $0xb0] sm:$0xff]
      %v9840 = vld [vmem:[%s9816 + $0xb8] sm:$0xff]
      %v9841 = vld [vmem:[%s9816 + $0xc0] sm:$0xff]
      %v9842 = vld [vmem:[%s9816 + $0xc8] sm:$0xff]
      %v9843 = vld [vmem:[%s9816 + $0xd0] sm:$0xff]
      %v9844 = vld [vmem:[%s9816 + $0xd8] sm:$0xff]
      %v9845 = vld [vmem:[%s9816 + $0xe0] sm:$0xff]
      %v9846 = vld [vmem:[%s9816 + $0xe8] sm:$0xff]
      %v9847 = vld [vmem:[%s9816 + $0xf0] sm:$0xff]
      %v9848 = vld [vmem:[%s9816 + $0xf8] sm:$0xff]
      %s9849 = scalar_lea.vmem %s3, 1024
      %v9850 = vld [vmem:[%s9849] sm:$0xf]
      %v9851 = vld [vmem:[%s9849 + $0x4] sm:$0xf]
      %v9852 = vld [vmem:[%s9849 + $0x8] sm:$0xf]
      %v9853 = vld [vmem:[%s9849 + $0xc] sm:$0xf]
      %v9854 = vld [vmem:[%s9849 + $0x10] sm:$0xf]
      %v9855 = vld [vmem:[%s9849 + $0x14] sm:$0xf]
      %v9856 = vld [vmem:[%s9849 + $0x18] sm:$0xf]
      %v9857 = vld [vmem:[%s9849 + $0x1c] sm:$0xf]
      %v9858 = vld [vmem:[%s9849 + $0x20] sm:$0xf]
      %v9859 = vld [vmem:[%s9849 + $0x24] sm:$0xf]
      %v9860 = vld [vmem:[%s9849 + $0x28] sm:$0xf]
      %v9861 = vld [vmem:[%s9849 + $0x2c] sm:$0xf]
      %v9862 = vld [vmem:[%s9849 + $0x30] sm:$0xf]
      %v9863 = vld [vmem:[%s9849 + $0x34] sm:$0xf]
      %v9864 = vld [vmem:[%s9849 + $0x38] sm:$0xf]
      %v9865 = vld [vmem:[%s9849 + $0x3c] sm:$0xf]
      %v9866 = vld [vmem:[%s9849 + $0x40] sm:$0xf]
      %v9867 = vld [vmem:[%s9849 + $0x44] sm:$0xf]
      %v9868 = vld [vmem:[%s9849 + $0x48] sm:$0xf]
      %v9869 = vld [vmem:[%s9849 + $0x4c] sm:$0xf]
      %v9870 = vld [vmem:[%s9849 + $0x50] sm:$0xf]
      %v9871 = vld [vmem:[%s9849 + $0x54] sm:$0xf]
      %v9872 = vld [vmem:[%s9849 + $0x58] sm:$0xf]
      %v9873 = vld [vmem:[%s9849 + $0x5c] sm:$0xf]
      %v9874 = vld [vmem:[%s9849 + $0x60] sm:$0xf]
      %v9875 = vld [vmem:[%s9849 + $0x64] sm:$0xf]
      %v9876 = vld [vmem:[%s9849 + $0x68] sm:$0xf]
      %v9877 = vld [vmem:[%s9849 + $0x6c] sm:$0xf]
      %v9878 = vld [vmem:[%s9849 + $0x70] sm:$0xf]
      %v9879 = vld [vmem:[%s9849 + $0x74] sm:$0xf]
      %v9880 = vld [vmem:[%s9849 + $0x78] sm:$0xf]
      %v9881 = vld [vmem:[%s9849 + $0x7c] sm:$0xf]
      %v9914 = vunpack.c.l.b16 %v9850
      %v9915 = vunpack.c.l.b16 %v9851
      %v9916 = vunpack.c.l.b16 %v9852
      %v9917 = vunpack.c.l.b16 %v9853
      %v9918 = vunpack.c.l.b16 %v9854
      %v9919 = vunpack.c.l.b16 %v9855
      %v9920 = vunpack.c.l.b16 %v9856
      %v9921 = vunpack.c.l.b16 %v9857
      %v9922 = vunpack.c.l.b16 %v9858
      %v9923 = vunpack.c.l.b16 %v9859
      %v9924 = vunpack.c.l.b16 %v9860
      %v9925 = vunpack.c.l.b16 %v9861
      %v9926 = vunpack.c.l.b16 %v9862
      %v9927 = vunpack.c.l.b16 %v9863
      %v9928 = vunpack.c.l.b16 %v9864
      %v9929 = vunpack.c.l.b16 %v9865
      %v9930 = vunpack.c.l.b16 %v9866
      %v9931 = vunpack.c.l.b16 %v9867
      %v9932 = vunpack.c.l.b16 %v9868
      %v9933 = vunpack.c.l.b16 %v9869
      %v9934 = vunpack.c.l.b16 %v9870
      %v9935 = vunpack.c.l.b16 %v9871
      %v9936 = vunpack.c.l.b16 %v9872
      %v9937 = vunpack.c.l.b16 %v9873
      %v9938 = vunpack.c.l.b16 %v9874
      %v9939 = vunpack.c.l.b16 %v9875
      %v9940 = vunpack.c.l.b16 %v9876
      %v9941 = vunpack.c.l.b16 %v9877
      %v9942 = vunpack.c.l.b16 %v9878
      %v9943 = vunpack.c.l.b16 %v9879
      %v9944 = vunpack.c.l.b16 %v9880
      %v9945 = vunpack.c.l.b16 %v9881
      %v9946 = vpack.c.b16 %v9915, %v9914
      %v9947 = vpack.c.b16 %v9917, %v9916
      %v9948 = vpack.c.b16 %v9919, %v9918
      %v9949 = vpack.c.b16 %v9921, %v9920
      %v9950 = vpack.c.b16 %v9923, %v9922
      %v9951 = vpack.c.b16 %v9925, %v9924
      %v9952 = vpack.c.b16 %v9927, %v9926
      %v9953 = vpack.c.b16 %v9929, %v9928
      %v9954 = vpack.c.b16 %v9931, %v9930
      %v9955 = vpack.c.b16 %v9933, %v9932
      %v9956 = vpack.c.b16 %v9935, %v9934
      %v9957 = vpack.c.b16 %v9937, %v9936
      %v9958 = vpack.c.b16 %v9939, %v9938
      %v9959 = vpack.c.b16 %v9941, %v9940
      %v9960 = vpack.c.b16 %v9943, %v9942
      %v9961 = vpack.c.b16 %v9945, %v9944
      %9978 = vmatprep.subr.bf16.mxu0 0
      %9979 = vmatpush1.bf16.msra.mxu0 %v9946
      %9980 = vmatprep.subr.bf16.mxu0 0
      %9981 = vmatpush1.bf16.msra.mxu0 %v9947
      %9982 = vmatprep.subr.bf16.mxu0 0
      %9983 = vmatpush1.bf16.msra.mxu0 %v9948
      %9984 = vmatprep.subr.bf16.mxu0 0
      %9985 = vmatpush1.bf16.msra.mxu0 %v9949
      %9986 = vmatprep.subr.bf16.mxu0 0
      %9987 = vmatpush1.bf16.msra.mxu0 %v9950
      %9988 = vmatprep.subr.bf16.mxu0 0
      %9989 = vmatpush1.bf16.msra.mxu0 %v9951
      %9990 = vmatprep.subr.bf16.mxu0 0
      %9991 = vmatpush1.bf16.msra.mxu0 %v9952
      %9992 = vmatprep.subr.bf16.mxu0 0
      %9993 = vmatpush1.bf16.msra.mxu0 %v9953
      %9994 = vmatprep.subr.bf16.mxu0 0
      %9995 = vmatpush1.bf16.msra.mxu0 %v9954
      %9996 = vmatprep.subr.bf16.mxu0 0
      %9997 = vmatpush1.bf16.msra.mxu0 %v9955
      %9998 = vmatprep.subr.bf16.mxu0 0
      %9999 = vmatpush1.bf16.msra.mxu0 %v9956
      %10000 = vmatprep.subr.bf16.mxu0 0
      %10001 = vmatpush1.bf16.msra.mxu0 %v9957
      %10002 = vmatprep.subr.bf16.mxu0 0
      %10003 = vmatpush1.bf16.msra.mxu0 %v9958
      %10004 = vmatprep.subr.bf16.mxu0 0
      %10005 = vmatpush1.bf16.msra.mxu0 %v9959
      %10006 = vmatprep.subr.bf16.mxu0 0
      %10007 = vmatpush1.bf16.msra.mxu0 %v9960
      %10008 = vmatprep.subr.bf16.mxu0 0
      %10009 = vmatpush1.bf16.msra.mxu0 %v9961
      %10010 = vmatprep.mubr.bf16.mxu0 %v9818
      %10011 = vmatmul.mubr.bf16.gmra.mrb[0].mxu0 %v9817
      %v10012 = vpop.f32.mrb[0].mxu0
      %v10013 = vadd.f32 0.0, %v10012
      %v10014 = vpop.f32.mrb[0].mxu0
      %v10015 = vpop.f32.mrb[0].mxu0
      %v10016 = vadd.f32 0.0, %v10015
      %v10017 = vpop.f32.mrb[0].mxu0
      %10018 = vmatprep.mubr.bf16.mxu0 %v9820
      %10019 = vmatmul.mubr.bf16.gmra.mrb[0].mxu0 %v9819
      %v10020 = vpop.f32.mrb[0].mxu0
      %v10021 = vadd.f32 0.0, %v10020
      %v10022 = vpop.f32.mrb[0].mxu0
      %v10023 = vpop.f32.mrb[0].mxu0
      %v10024 = vadd.f32 0.0, %v10023
      %v10025 = vpop.f32.mrb[0].mxu0
      %10026 = vmatprep.mubr.bf16.mxu0 %v9822
      %10027 = vmatmul.mubr.bf16.gmra.mrb[0].mxu0 %v9821
      %v10028 = vpop.f32.mrb[0].mxu0
      %v10029 = vadd.f32 0.0, %v10028
      %v10030 = vpop.f32.mrb[0].mxu0
      %v10031 = vpop.f32.mrb[0].mxu0
      %v10032 = vadd.f32 0.0, %v10031
      %v10033 = vpop.f32.mrb[0].mxu0
      %10034 = vmatprep.mubr.bf16.mxu0 %v9824
      %10035 = vmatmul.mubr.bf16.gmra.mrb[0].mxu0 %v9823
      %v10036 = vpop.f32.mrb[0].mxu0
      %v10037 = vadd.f32 0.0, %v10036
      %v10038 = vpop.f32.mrb[0].mxu0
      %v10039 = vpop.f32.mrb[0].mxu0
      %v10040 = vadd.f32 0.0, %v10039
      %v10041 = vpop.f32.mrb[0].mxu0
      %10042 = vmatprep.mubr.bf16.mxu0 %v9826
      %10043 = vmatmul.mubr.bf16.gmra.mrb[0].mxu0 %v9825
      %v10044 = vpop.f32.mrb[0].mxu0
      %v10045 = vadd.f32 0.0, %v10044
      %v10046 = vpop.f32.mrb[0].mxu0
      %v10047 = vpop.f32.mrb[0].mxu0
      %v10048 = vadd.f32 0.0, %v10047
      %v10049 = vpop.f32.mrb[0].mxu0
      %10050 = vmatprep.mubr.bf16.mxu0 %v9828
      %10051 = vmatmul.mubr.bf16.gmra.mrb[0].mxu0 %v9827
      %v10052 = vpop.f32.mrb[0].mxu0
      %v10053 = vadd.f32 0.0, %v10052
      %v10054 = vpop.f32.mrb[0].mxu0
      %v10055 = vpop.f32.mrb[0].mxu0
      %v10056 = vadd.f32 0.0, %v10055
      %v10057 = vpop.f32.mrb[0].mxu0
      %10058 = vmatprep.mubr.bf16.mxu0 %v9830
      %10059 = vmatmul.mubr.bf16.gmra.mrb[0].mxu0 %v9829
      %v10060 = vpop.f32.mrb[0].mxu0
      %v10061 = vadd.f32 0.0, %v10060
      %v10062 = vpop.f32.mrb[0].mxu0
      %v10063 = vpop.f32.mrb[0].mxu0
      %v10064 = vadd.f32 0.0, %v10063
      %v10065 = vpop.f32.mrb[0].mxu0
      %10066 = vmatprep.mubr.bf16.mxu0 %v9832
      %10067 = vmatmul.mubr.bf16.gmra.mrb[0].mxu0 %v9831
      %v10068 = vpop.f32.mrb[0].mxu0
      %v10069 = vadd.f32 0.0, %v10068
      %v10070 = vpop.f32.mrb[0].mxu0
      %v10071 = vpop.f32.mrb[0].mxu0
      %v10072 = vadd.f32 0.0, %v10071
      %v10073 = vpop.f32.mrb[0].mxu0
      %10074 = vmatprep.mubr.bf16.mxu0 %v9834
      %10075 = vmatmul.mubr.bf16.gmra.mrb[0].mxu0 %v9833
      %v10076 = vpop.f32.mrb[0].mxu0
      %v10077 = vadd.f32 0.0, %v10076
      %v10078 = vpop.f32.mrb[0].mxu0
      %v10079 = vpop.f32.mrb[0].mxu0
      %v10080 = vadd.f32 0.0, %v10079
      %v10081 = vpop.f32.mrb[0].mxu0
      %10082 = vmatprep.mubr.bf16.mxu0 %v9836
      %10083 = vmatmul.mubr.bf16.gmra.mrb[0].mxu0 %v9835
      %v10084 = vpop.f32.mrb[0].mxu0
      %v10085 = vadd.f32 0.0, %v10084
      %v10086 = vpop.f32.mrb[0].mxu0
      %v10087 = vpop.f32.mrb[0].mxu0
      %v10088 = vadd.f32 0.0, %v10087
      %v10089 = vpop.f32.mrb[0].mxu0
      %10090 = vmatprep.mubr.bf16.mxu0 %v9838
      %10091 = vmatmul.mubr.bf16.gmra.mrb[0].mxu0 %v9837
      %v10092 = vpop.f32.mrb[0].mxu0
      %v10093 = vadd.f32 0.0, %v10092
      %v10094 = vpop.f32.mrb[0].mxu0
      %v10095 = vpop.f32.mrb[0].mxu0
      %v10096 = vadd.f32 0.0, %v10095
      %v10097 = vpop.f32.mrb[0].mxu0
      %10098 = vmatprep.mubr.bf16.mxu0 %v9840
      %10099 = vmatmul.mubr.bf16.gmra.mrb[0].mxu0 %v9839
      %v10100 = vpop.f32.mrb[0].mxu0
      %v10101 = vadd.f32 0.0, %v10100
      %v10102 = vpop.f32.mrb[0].mxu0
      %v10103 = vpop.f32.mrb[0].mxu0
      %v10104 = vadd.f32 0.0, %v10103
      %v10105 = vpop.f32.mrb[0].mxu0
      %10106 = vmatprep.mubr.bf16.mxu0 %v9842
      %10107 = vmatmul.mubr.bf16.gmra.mrb[0].mxu0 %v9841
      %v10108 = vpop.f32.mrb[0].mxu0
      %v10109 = vadd.f32 0.0, %v10108
      %v10110 = vpop.f32.mrb[0].mxu0
      %v10111 = vpop.f32.mrb[0].mxu0
      %v10112 = vadd.f32 0.0, %v10111
      %v10113 = vpop.f32.mrb[0].mxu0
      %10114 = vmatprep.mubr.bf16.mxu0 %v9844
      %10115 = vmatmul.mubr.bf16.gmra.mrb[0].mxu0 %v9843
      %v10116 = vpop.f32.mrb[0].mxu0
      %v10117 = vadd.f32 0.0, %v10116
      %v10118 = vpop.f32.mrb[0].mxu0
      %v10119 = vpop.f32.mrb[0].mxu0
      %v10120 = vadd.f32 0.0, %v10119
      %v10121 = vpop.f32.mrb[0].mxu0
      %10122 = vmatprep.mubr.bf16.mxu0 %v9846
      %10123 = vmatmul.mubr.bf16.gmra.mrb[0].mxu0 %v9845
      %v10124 = vpop.f32.mrb[0].mxu0
      %v10125 = vadd.f32 0.0, %v10124
      %v10126 = vpop.f32.mrb[0].mxu0
      %v10127 = vpop.f32.mrb[0].mxu0
      %v10128 = vadd.f32 0.0, %v10127
      %v10129 = vpop.f32.mrb[0].mxu0
      %10130 = vmatprep.mubr.bf16.mxu0 %v9848
      %10131 = vmatmul.mubr.bf16.gmra.mrb[0].mxu0 %v9847
      %v10132 = vpop.f32.mrb[0].mxu0
      %v10133 = vadd.f32 0.0, %v10132
      %v10134 = vpop.f32.mrb[0].mxu0
      %v10135 = vpop.f32.mrb[0].mxu0
      %v10136 = vadd.f32 0.0, %v10135
      %v10137 = vpop.f32.mrb[0].mxu0
      %10138 = vdwg.mxu0
      %v10139 = vadd.f32 %v9784, %v10013
      %v10140 = vadd.f32 %v9785, %v10016
      %v10141 = vadd.f32 %v9786, %v10021
      %v10142 = vadd.f32 %v9787, %v10024
      %v10143 = vadd.f32 %v9788, %v10029
      %v10144 = vadd.f32 %v9789, %v10032
      %v10145 = vadd.f32 %v9790, %v10037
      %v10146 = vadd.f32 %v9791, %v10040
      %v10147 = vadd.f32 %v9792, %v10045
      %v10148 = vadd.f32 %v9793, %v10048
      %v10149 = vadd.f32 %v9794, %v10053
      %v10150 = vadd.f32 %v9795, %v10056
      %v10151 = vadd.f32 %v9796, %v10061
      %v10152 = vadd.f32 %v9797, %v10064
      %v10153 = vadd.f32 %v9798, %v10069
      %v10154 = vadd.f32 %v9799, %v10072
      %v10155 = vadd.f32 %v9800, %v10077
      %v10156 = vadd.f32 %v9801, %v10080
      %v10157 = vadd.f32 %v9802, %v10085
      %v10158 = vadd.f32 %v9803, %v10088
      %v10159 = vadd.f32 %v9804, %v10093
      %v10160 = vadd.f32 %v9805, %v10096
      %v10161 = vadd.f32 %v9806, %v10101
      %v10162 = vadd.f32 %v9807, %v10104
      %v10163 = vadd.f32 %v9808, %v10109
      %v10164 = vadd.f32 %v9809, %v10112
      %v10165 = vadd.f32 %v9810, %v10117
      %v10166 = vadd.f32 %v9811, %v10120
      %v10167 = vadd.f32 %v9812, %v10125
      %v10168 = vadd.f32 %v9813, %v10128
      %v10169 = vadd.f32 %v9814, %v10133
      %v10170 = vadd.f32 %v9815, %v10136
      %v10171 = vld [vmem:[%s4] sm:$0x1]
      %v10173 = vlaneseq
      %v10174 = vshrl.u32 %v10173, 7
      %v10175 = vsub.s32 0, %v10174
      %v10176 = vrot.slane %v10171, %v10175
      %v10178 = vadd.f32 %v10139, %v10176
      %v10179 = vadd.f32 %v10140, %v10176
      %v10180 = vadd.f32 %v10141, %v10176
      %v10181 = vadd.f32 %v10142, %v10176
      %v10182 = vadd.f32 %v10143, %v10176
      %v10183 = vadd.f32 %v10144, %v10176
      %v10184 = vadd.f32 %v10145, %v10176
      %v10185 = vadd.f32 %v10146, %v10176
      %v10186 = vadd.f32 %v10147, %v10176
      %v10187 = vadd.f32 %v10148, %v10176
      %v10188 = vadd.f32 %v10149, %v10176
      %v10189 = vadd.f32 %v10150, %v10176
      %v10190 = vadd.f32 %v10151, %v10176
      %v10191 = vadd.f32 %v10152, %v10176
      %v10192 = vadd.f32 %v10153, %v10176
      %v10193 = vadd.f32 %v10154, %v10176
      %v10194 = vadd.f32 %v10155, %v10176
      %v10195 = vadd.f32 %v10156, %v10176
      %v10196 = vadd.f32 %v10157, %v10176
      %v10197 = vadd.f32 %v10158, %v10176
      %v10198 = vadd.f32 %v10159, %v10176
      %v10199 = vadd.f32 %v10160, %v10176
      %v10200 = vadd.f32 %v10161, %v10176
      %v10201 = vadd.f32 %v10162, %v10176
      %v10202 = vadd.f32 %v10163, %v10176
      %v10203 = vadd.f32 %v10164, %v10176
      %v10204 = vadd.f32 %v10165, %v10176
      %v10205 = vadd.f32 %v10166, %v10176
      %v10206 = vadd.f32 %v10167, %v10176
      %v10207 = vadd.f32 %v10168, %v10176
      %v10208 = vadd.f32 %v10169, %v10176
      %v10209 = vadd.f32 %v10170, %v10176
      %vm10210 = vcmask 15360
      %10211 = vst.msk [vmem:[%s224] sm:$0xff] %vm10210, %v10178
      %10212 = vst.msk [vmem:[%s224 + $0x8] sm:$0xff] %vm10210, %v10179
      %10213 = vst.msk [vmem:[%s224 + $0x10] sm:$0xff] %vm10210, %v10180
      %10214 = vst.msk [vmem:[%s224 + $0x18] sm:$0xff] %vm10210, %v10181
      %10215 = vst.msk [vmem:[%s224 + $0x20] sm:$0xff] %vm10210, %v10182
      %10216 = vst.msk [vmem:[%s224 + $0x28] sm:$0xff] %vm10210, %v10183
      %10217 = vst.msk [vmem:[%s224 + $0x30] sm:$0xff] %vm10210, %v10184
      %10218 = vst.msk [vmem:[%s224 + $0x38] sm:$0xff] %vm10210, %v10185
      %10219 = vst.msk [vmem:[%s224 + $0x40] sm:$0xff] %vm10210, %v10186
      %10220 = vst.msk [vmem:[%s224 + $0x48] sm:$0xff] %vm10210, %v10187
      %10221 = vst.msk [vmem:[%s224 + $0x50] sm:$0xff] %vm10210, %v10188
      %10222 = vst.msk [vmem:[%s224 + $0x58] sm:$0xff] %vm10210, %v10189
      %10223 = vst.msk [vmem:[%s224 + $0x60] sm:$0xff] %vm10210, %v10190
      %10224 = vst.msk [vmem:[%s224 + $0x68] sm:$0xff] %vm10210, %v10191
      %10225 = vst.msk [vmem:[%s224 + $0x70] sm:$0xff] %vm10210, %v10192
      %10226 = vst.msk [vmem:[%s224 + $0x78] sm:$0xff] %vm10210, %v10193
      %10227 = vst.msk [vmem:[%s224 + $0x80] sm:$0xff] %vm10210, %v10194
      %10228 = vst.msk [vmem:[%s224 + $0x88] sm:$0xff] %vm10210, %v10195
      %10229 = vst.msk [vmem:[%s224 + $0x90] sm:$0xff] %vm10210, %v10196
      %10230 = vst.msk [vmem:[%s224 + $0x98] sm:$0xff] %vm10210, %v10197
      %10231 = vst.msk [vmem:[%s224 + $0xa0] sm:$0xff] %vm10210, %v10198
      %10232 = vst.msk [vmem:[%s224 + $0xa8] sm:$0xff] %vm10210, %v10199
      %10233 = vst.msk [vmem:[%s224 + $0xb0] sm:$0xff] %vm10210, %v10200
      %10234 = vst.msk [vmem:[%s224 + $0xb8] sm:$0xff] %vm10210, %v10201
      %10235 = vst.msk [vmem:[%s224 + $0xc0] sm:$0xff] %vm10210, %v10202
      %10236 = vst.msk [vmem:[%s224 + $0xc8] sm:$0xff] %vm10210, %v10203
      %10237 = vst.msk [vmem:[%s224 + $0xd0] sm:$0xff] %vm10210, %v10204
      %10238 = vst.msk [vmem:[%s224 + $0xd8] sm:$0xff] %vm10210, %v10205
      %10239 = vst.msk [vmem:[%s224 + $0xe0] sm:$0xff] %vm10210, %v10206
      %10240 = vst.msk [vmem:[%s224 + $0xe8] sm:$0xff] %vm10210, %v10207
      %10241 = vst.msk [vmem:[%s224 + $0xf0] sm:$0xff] %vm10210, %v10208
      %10242 = vst.msk [vmem:[%s224 + $0xf8] sm:$0xff] %vm10210, %v10209
      %p10243 = scmp.lt.s32.totalorder %s16, 1
      %s10244 = scalar_select %p10243, %s16, 1
      %s10245 = smul.addr %s10244, 32
      %s10246 = smul.addr %s10245, 8
      %s10247 = scalar_lea.vmem %s5, %s10246
      // Predicated region
      $region41: #{flow_head.1} parent=39 // pred_check
        %p10248 = pneg %p144
      $region42: #{flow_head.1} parent=39 // pred_check_branch
        %10250 = sbr.rel (%p10248) target = $region44
      $region43: #{flow_head.1} parent=39 // pred_region
        _
      $region44: #{flow_head.1} parent=39 // pred_fallthru
        _
    $region40: #{flow_head.1} parent=5 // pred_fallthru
      _
    %p10251 = scmp.le.s32.totalorder 2, %s11
    // Predicated region
    $region45: #{flow_head.1} parent=5 // pred_check
      %p10252 = pneg %p10251
    $region46: #{flow_head.1} parent=5 // pred_check_branch
      %10254 = sbr.rel (%p10252) target = $region48
    $region47: #{flow_head.1} parent=5 // pred_region
      %s10255 = ssub.s32 %s11, 2
      // Predicated region
      $region49: #{flow_head.1} parent=47 // pred_check
        %p10256 = pneg %p150
      $region50: #{flow_head.1} parent=47 // pred_check_branch
        %10258 = sbr.rel (%p10256) target = $region52
      $region51: #{flow_head.1} parent=47 // pred_region
        %p10259 = scmp.lt.s32.totalorder %s17, 1
        %s10260 = scalar_select %p10259, %s17, 1
        %s10261 = smul.addr %s10260, 32
        %s10262 = smul.addr %s10261, 8
        %s10263 = scalar_lea.vmem %s5, %s10262
      $region52: #{flow_head.1} parent=47 // pred_fallthru
        _
    $region48: #{flow_head.1} parent=5 // pred_fallthru
      _
  $region6: #{flow_head.1} parent=0 // loop_footer
    %s15 = sadd.s32 1, %s11
  $region7: #{flow_head.1} parent=0 // loop_footer_branch
    %10 = sbr.rel target = $region3
  $region8: #{flow_head.1} parent=0 // loop_exit
    _

</llo_original>
